<compile_context>
chip_gen: v7x
topology: tpu7x:2x2x1
jax: 0.10.0
libtpu: 0.0.40
codegen_flags: <defaults>
</compile_context>

<pallas_src>
import numpy as np
import jax
import jax.numpy as jnp
from jax.experimental import pallas as pl
from jax.experimental.pallas import tpu as pltpu

# ----------------------------- config -----------------------------
CHAR2NUMY = {c: i for i, c in enumerate(["<GO>", "<EOS>", "a", "b", "c", "d", "e", "f"])}
VOCAB = len(CHAR2NUMY)            # 8
N_CHANNELS = 4
L0 = 24                           # per-channel length -> final conv length 7 (matches 128*7)
INPUT_DEPTH = N_CHANNELS * L0     # 96
NUM_UNITS = 32                    # LSTM hidden size H
MAX_TIME = 8
EMBED = 8
BATCH = 2
DEC_LEN = 8
ENC_IN = 128 * 7                  # 896 (module's hard-coded encoder_input_size)

NSAMP = BATCH * MAX_TIME          # 16 conv samples, sample n = t*B + b (time-major)
L3 = 7                            # conv3 output positions / sample
ROWS1 = 16                        # padded pooled-1 rows per sample (multiple of 8)
F32 = jnp.float32

# Per-sample pooled-1 row ordering (16 rows). Entry j means "pooled position q_j", -1 means a
# structural zero row.  This ordering makes every conv2 tap group a contiguous slice:
#   rows[0:6]  = [0,  q1, q3, q5, q7, q9 ]   (tap0 of even conv2 outputs, incl. left zero pad)
#   rows[8:14] = [q0, q2, q4, q6, q8, q10]   (tap1 of even outputs == tap0 of odd outputs)
#   rows[1:7]  = [q1, q3, q5, q7, q9, q11]   (tap1 of odd conv2 outputs)
_ORD = np.array([-1, 1, 3, 5, 7, 9, 11, -1, 0, 2, 4, 6, 8, 10, -1, -1], np.int32)
_VALID = (_ORD >= 0).astype(np.float32)                       # (16,)
_POS_E = np.where(_ORD >= 0, 2 * np.maximum(_ORD, 0), 0).astype(np.int32)   # conv1 even pos
_POS_O = (_POS_E + 1).astype(np.int32)                                       # conv1 odd pos


# ----------------------------- fused kernel -----------------------------
def _fused_kernel(m1_ref, ids_ref,
                  w1_ref, w2_ref, b2_ref, w3_ref, b3_ref,
                  wenc_ref, encb_ref, encwh_ref,
                  embp_ref, decb_ref, decwh_ref,
                  fcw_ref, fcb_ref,
                  out_ref):
    H = NUM_UNITS
    NS = NSAMP
    NR = NS * ROWS1                                             # 256

    # ---- conv1 (bias folded via indicator column) + pool1 as elementwise max of halves ----
    y1 = jnp.maximum(jnp.dot(m1_ref[...], w1_ref[...],
                             preferred_element_type=F32), 0.0)   # (512, 32)
    p1 = jnp.maximum(y1[0:NR], y1[NR:2 * NR])                    # (256, 32)
    p1 = p1.reshape(NS, ROWS1, 32)                               # (16, 16, 32)

    # ---- conv2: tap-concat (K=64), even/odd output halves, pool2 = elementwise max ----
    x2e = jnp.concatenate([p1[:, 0:6, :], p1[:, 8:14, :]], axis=2).reshape(NS * 6, 64)
    x2o = jnp.concatenate([p1[:, 8:14, :], p1[:, 1:7, :]], axis=2).reshape(NS * 6, 64)
    w2 = w2_ref[...]
    b2 = b2_ref[...]
    y2e = jnp.maximum(jnp.dot(x2e, w2, preferred_element_type=F32) + b2, 0.0)   # (96, 64)
    y2o = jnp.maximum(jnp.dot(x2o, w2, preferred_element_type=F32) + b2, 0.0)   # (96, 64)
    p2 = jnp.maximum(y2e, y2o).reshape(NS, 6, 64)                # (16, 6, 64)

    # ---- conv3: tap-concat (K=128), single (112,128)x(128,128) matmul ----
    z = jnp.zeros((NS, 1, 64), F32)
    t0 = jnp.concatenate([z, p2], axis=1)                        # (16, 7, 64)  = [0, r0..r5]
    t1 = jnp.concatenate([p2, z], axis=1)                        # (16, 7, 64)  = [r0..r5, 0]
    x3 = jnp.concatenate([t0, t1], axis=2).reshape(NS * L3, 128)  # (112, 128)
    y3 = jnp.maximum(jnp.dot(x3, w3_ref[...], preferred_element_type=F32)
                     + b3_ref[...], 0.0)                         # (112, 128)

    # ---- encoder input projection: one (16,896)x(896,4H) matmul ----
    y3r = y3.reshape(NS, L3, 128)
    y3f = jnp.concatenate([y3r[:, l, :] for l in range(L3)], axis=1)   # (16, 896), f = l*128+c
    gx = jnp.dot(y3f, wenc_ref[...], preferred_element_type=F32) + encb_ref[...]   # (16, 4H)
    gx = gx.reshape(MAX_TIME, BATCH, 4 * H)                      # time-major -> contiguous xg

    # ---- gate activation constants: one tanh per step; sigmoid(x) = 0.5*tanh(x/2)+0.5 ----
    lane = jax.lax.broadcasted_iota(jnp.int32, (1, 4 * H), 1)
    is_g = jnp.logical_and(lane >= 2 * H, lane < 3 * H)          # the "g" (tanh) gate lanes
    g_scale = jnp.where(is_g, 1.0, 0.5)                          # pre-scale
    g_add = jnp.where(is_g, 0.0, 0.5)                            # post-affine

    def lstm_step(h, c, xg, whh):
        g = xg + jnp.dot(h, whh, preferred_element_type=F32)     # (B, 4H)
        a = jnp.tanh(g * g_scale) * g_scale + g_add              # i,f,o=sigmoid ; g=tanh
        i = a[:, 0:H]
        f = a[:, H:2 * H]
        gg = a[:, 2 * H:3 * H]
        o = a[:, 3 * H:4 * H]
        c = f * c + i * gg
        h = o * jnp.tanh(c)
        return h, c

    # ---- encoder LSTM ----
    h = jnp.zeros((BATCH, H), F32)
    c = jnp.zeros((BATCH, H), F32)
    whe = encwh_ref[...]                                         # (H, 4H)
    for t in range(MAX_TIME):
        h, c = lstm_step(h, c, gx[t], whe)

    # ---- decoder: in-kernel one-hot embedding, projection folded into embp (V, 4H) ----
    ids = ids_ref[...]                                           # (Td*B, 1) int32, time-major
    iot = jax.lax.broadcasted_iota(jnp.int32, (DEC_LEN * BATCH, VOCAB), 1)
    onehot = (iot == ids).astype(F32)                            # (16, 8)
    gd = jnp.dot(onehot, embp_ref[...], preferred_element_type=F32) + decb_ref[...]   # (16, 4H)
    gd = gd.reshape(DEC_LEN, BATCH, 4 * H)

    whd = decwh_ref[...]
    hs = []
    for t in range(DEC_LEN):
        h, c = lstm_step(h, c, gd[t], whd)
        hs.append(h)

    # ---- final FC: one matmul, one store; wrapper reshapes to (B, Td, V) ----
    hcat = jnp.concatenate(hs, axis=0)                           # (Td*B, H), time-major
    out_ref[...] = jnp.dot(hcat, fcw_ref[...], preferred_element_type=F32) + fcb_ref[...]


# ----------------------------- parameter construction -----------------------------
def _uniform(key, shape, bound):
    return jax.random.uniform(key, shape, F32, -bound, bound)


def make_params(key):
    ks = jax.random.split(key, 17)
    raw = {}
    raw["conv1_w"] = _uniform(ks[0], (32, N_CHANNELS, 2), 1.0 / np.sqrt(N_CHANNELS * 2))
    raw["conv1_b"] = _uniform(ks[1], (32,), 1.0 / np.sqrt(N_CHANNELS * 2))
    raw["conv2_w"] = _uniform(ks[2], (64, 32, 2), 1.0 / np.sqrt(32 * 2))
    raw["conv2_b"] = _uniform(ks[3], (64,), 1.0 / np.sqrt(32 * 2))
    raw["conv3_w"] = _uniform(ks[4], (128, 64, 2), 1.0 / np.sqrt(64 * 2))
    raw["conv3_b"] = _uniform(ks[5], (128,), 1.0 / np.sqrt(64 * 2))
    kb = 1.0 / np.sqrt(NUM_UNITS)
    raw["enc_wih"] = _uniform(ks[6], (4 * NUM_UNITS, ENC_IN), kb)
    raw["enc_whh"] = _uniform(ks[7], (4 * NUM_UNITS, NUM_UNITS), kb)
    raw["enc_bih"] = _uniform(ks[8], (4 * NUM_UNITS,), kb)
    raw["enc_bhh"] = _uniform(ks[9], (4 * NUM_UNITS,), kb)
    raw["emb"] = jax.random.normal(ks[10], (VOCAB, EMBED), F32)
    raw["dec_wih"] = _uniform(ks[11], (4 * NUM_UNITS, EMBED), kb)
    raw["dec_whh"] = _uniform(ks[12], (4 * NUM_UNITS, NUM_UNITS), kb)
    raw["dec_bih"] = _uniform(ks[13], (4 * NUM_UNITS,), kb)
    raw["dec_bhh"] = _uniform(ks[14], (4 * NUM_UNITS,), kb)
    raw["fc_w"] = _uniform(ks[15], (VOCAB, NUM_UNITS), 1.0 / np.sqrt(NUM_UNITS))
    raw["fc_b"] = _uniform(ks[16], (VOCAB,), 1.0 / np.sqrt(NUM_UNITS))

    # conv1 weight with bias folded as a 9th input row (pairs with the 0/1 indicator column).
    w1 = jnp.concatenate([raw["conv1_w"][:, :, 0].T, raw["conv1_w"][:, :, 1].T,
                          raw["conv1_b"][None, :]], axis=0)                       # (9, 32)
    # tap-concatenated conv2 / conv3 weights (rows 0..C-1 = tap0, rows C..2C-1 = tap1).
    w2 = jnp.concatenate([raw["conv2_w"][:, :, 0].T, raw["conv2_w"][:, :, 1].T], axis=0)  # (64, 64)
    w3 = jnp.concatenate([raw["conv3_w"][:, :, 0].T, raw["conv3_w"][:, :, 1].T], axis=0)  # (128, 128)

    # encoder input weight permuted from PyTorch feature order (c*7 + l) to kernel order (l*128 + c).
    enc_wx = raw["enc_wih"].T                                                     # (896, 4H)
    wenc = jnp.transpose(enc_wx.reshape(128, L3, 4 * NUM_UNITS), (1, 0, 2))
    wenc = wenc.reshape(L3 * 128, 4 * NUM_UNITS)                                  # (896, 4H)

    kern = {
        "w1": w1,
        "w2": w2, "b2": raw["conv2_b"][None, :],
        "w3": w3, "b3": raw["conv3_b"][None, :],
        "wenc": wenc,
        "enc_b": (raw["enc_bih"] + raw["enc_bhh"])[None, :],
        "enc_wh": raw["enc_whh"].T,
        "embp": raw["emb"] @ raw["dec_wih"].T,                                    # (V, 4H)
        "dec_b": (raw["dec_bih"] + raw["dec_bhh"])[None, :],
        "dec_wh": raw["dec_whh"].T,
        "fc_w": raw["fc_w"].T, "fc_b": raw["fc_b"][None, :],
    }
    return raw, kern


# ----------------------------- forward (single fused pallas_call) -----------------------------
def _im2col_half(xpad, pos):
    """One (even or odd) conv1 im2col half: (NS, 16 rows, 9 cols = 2 taps x 4 ch + indicator)."""
    t0 = xpad[:, :, pos]                                          # (NS, C, 16)
    t1 = xpad[:, :, pos + 1]                                      # (NS, C, 16)
    rows = jnp.concatenate([t0, t1], axis=1)                      # (NS, 2C, 16)
    rows = jnp.transpose(rows, (0, 2, 1))                         # (NS, 16, 2C)
    valid = jnp.asarray(_VALID)[None, :, None]                    # (1, 16, 1)
    ones = jnp.broadcast_to(valid, rows.shape[:2] + (1,))
    rows = jnp.concatenate([rows, ones], axis=2)                  # (NS, 16, 9)
    return rows * valid                                           # zero the structural pad rows


def forward(inputs, dec_inputs, P):
    b_sz, t_sz, d_sz = inputs.shape
    assert b_sz == BATCH and t_sz == MAX_TIME and d_sz == INPUT_DEPTH

    # Layout prep (pure XLA plumbing, ~20 KB): time-major samples, zero-pad, even/odd im2col.
    x = inputs.reshape(b_sz, t_sz, N_CHANNELS, L0)
    x = jnp.transpose(x, (1, 0, 2, 3)).reshape(NSAMP, N_CHANNELS, L0)   # sample n = t*B + b
    xpad = jnp.pad(x, ((0, 0), (0, 0), (1, 1)))                         # (NS, C, 26)
    m1 = jnp.concatenate([_im2col_half(xpad, _POS_E), _im2col_half(xpad, _POS_O)], axis=0)
    m1 = m1.reshape(2 * NSAMP * ROWS1, 2 * N_CHANNELS + 1)              # (512, 9)

    ids = jnp.transpose(dec_inputs.astype(jnp.int32), (1, 0)).reshape(DEC_LEN * BATCH, 1)

    vmem = pltpu.MemorySpace.VMEM
    args = (m1, ids,
            P["w1"], P["w2"], P["b2"], P["w3"], P["b3"],
            P["wenc"], P["enc_b"], P["enc_wh"],
            P["embp"], P["dec_b"], P["dec_wh"],
            P["fc_w"], P["fc_b"])

    out2d = pl.pallas_call(
        _fused_kernel,
        out_shape=jax.ShapeDtypeStruct((DEC_LEN * BATCH, VOCAB), F32),
        in_specs=[pl.BlockSpec(memory_space=vmem)] * len(args),
        out_specs=pl.BlockSpec(memory_space=vmem),
        cost_estimate=pl.CostEstimate(flops=10_000_000, transcendentals=6_000,
                                      bytes_accessed=800_000),
    )(*args)

    # time-major (Td*B, V) -> (B, Td, V)
    return jnp.transpose(out2d.reshape(DEC_LEN, BATCH, VOCAB), (1, 0, 2))


# ----------------------------- numpy reference (float64) -----------------------------
def np_forward(inputs, dec_inputs, raw):
    r = {k: np.asarray(v, np.float64) for k, v in raw.items()}
    sig = lambda x: 1.0 / (1.0 + np.exp(-x))

    def conv1d(x, w, b):
        n, cin, l = x.shape
        cout, _, k = w.shape
        xp = np.pad(x, ((0, 0), (0, 0), (1, 1)))
        lout = l + 2 - k + 1
        out = np.zeros((n, cout, lout))
        for kk in range(k):
            out += np.einsum("oc,ncl->nol", w[:, :, kk], xp[:, :, kk:kk + lout])
        return out + b[None, :, None]

    def pool(x):
        lp = x.shape[2] // 2
        return np.maximum(x[:, :, 0:2 * lp:2], x[:, :, 1:2 * lp:2])

    def lstm(x, wih, whh, bih, bhh, h, c):
        b_sz, t_sz, _ = x.shape
        hdim = whh.shape[1]
        outs = []
        for t in range(t_sz):
            g = x[:, t] @ wih.T + h @ whh.T + bih + bhh
            i = sig(g[:, :hdim]); f = sig(g[:, hdim:2 * hdim])
            gg = np.tanh(g[:, 2 * hdim:3 * hdim]); o = sig(g[:, 3 * hdim:])
            c = f * c + i * gg
            h = o * np.tanh(c)
            outs.append(h)
        return np.stack(outs, 1), h, c

    x = np.asarray(inputs, np.float64)
    b_sz, t_sz, _ = x.shape
    x = x.reshape(b_sz * t_sz, N_CHANNELS, L0)
    x = pool(np.maximum(conv1d(x, r["conv1_w"], r["conv1_b"]), 0.0))
    x = pool(np.maximum(conv1d(x, r["conv2_w"], r["conv2_b"]), 0.0))
    x = np.maximum(conv1d(x, r["conv3_w"], r["conv3_b"]), 0.0)
    x = x.reshape(b_sz, t_sz, ENC_IN)
    z = np.zeros((b_sz, NUM_UNITS))
    _, h_enc, c_enc = lstm(x, r["enc_wih"], r["enc_whh"], r["enc_bih"], r["enc_bhh"], z, z)
    emb = r["emb"][np.asarray(dec_inputs)]
    out_dec, _, _ = lstm(emb, r["dec_wih"], r["dec_whh"], r["dec_bih"], r["dec_bhh"], h_enc, c_enc)
    return out_dec @ r["fc_w"].T + r["fc_b"]


# ----------------------------- main -----------------------------
if __name__ == "__main__":
    key = jax.random.PRNGKey(0)
    k_in, k_dec, k_par = jax.random.split(key, 3)
    inputs = jax.random.normal(k_in, (BATCH, MAX_TIME, INPUT_DEPTH), F32)
    dec_inputs = jax.random.randint(k_dec, (BATCH, DEC_LEN), 0, VOCAB, jnp.int32)
    raw, kern = make_params(k_par)

    logits = jax.jit(forward)(inputs, dec_inputs, kern)
    logits = jax.block_until_ready(logits)

    ref = np_forward(np.asarray(inputs), np.asarray(dec_inputs), raw)
    np.testing.assert_allclose(np.asarray(logits, np.float64), ref, rtol=2e-3, atol=2e-3)
    assert logits.shape == (BATCH, DEC_LEN, VOCAB)
    print("KERNEL_OK")
</pallas_src>

<mosaic_0001>
module attributes {stable_mosaic.version = 11 : i64} {
  func.func @_fused_kernel(%arg0: memref<512x9xf32, #tpu.memory_space<vmem>>, %arg1: memref<16x1xi32, #tpu.memory_space<vmem>>, %arg2: memref<9x32xf32, #tpu.memory_space<vmem>>, %arg3: memref<64x64xf32, #tpu.memory_space<vmem>>, %arg4: memref<1x64xf32, #tpu.memory_space<vmem>>, %arg5: memref<128x128xf32, #tpu.memory_space<vmem>>, %arg6: memref<1x128xf32, #tpu.memory_space<vmem>>, %arg7: memref<896x128xf32, #tpu.memory_space<vmem>>, %arg8: memref<1x128xf32, #tpu.memory_space<vmem>>, %arg9: memref<32x128xf32, #tpu.memory_space<vmem>>, %arg10: memref<8x128xf32, #tpu.memory_space<vmem>>, %arg11: memref<1x128xf32, #tpu.memory_space<vmem>>, %arg12: memref<32x128xf32, #tpu.memory_space<vmem>>, %arg13: memref<32x8xf32, #tpu.memory_space<vmem>>, %arg14: memref<1x8xf32, #tpu.memory_space<vmem>>, %arg15: memref<16x8xf32, #tpu.memory_space<vmem>>) attributes {dimension_semantics = [], scalar_prefetch = 0 : i64, scratch_operands = 0 : i64, tpu.core_type = #tpu.core_type<tc>} {
    %c0 = arith.constant 0 : index
    %c0_0 = arith.constant 0 : index
    %0 = vector.load %arg0[%c0, %c0_0] : memref<512x9xf32, #tpu.memory_space<vmem>>, vector<512x9xf32>
    %c0_1 = arith.constant 0 : index
    %c0_2 = arith.constant 0 : index
    %1 = vector.load %arg2[%c0_1, %c0_2] : memref<9x32xf32, #tpu.memory_space<vmem>>, vector<9x32xf32>
    %cst = arith.constant dense<0.000000e+00> : vector<512x32xf32>
    %2 = tpu.matmul %0, %1, %cst {dimension_numbers = #tpu.dot_dimension_numbers<[1], [0], [0], [1], [0, 0, 1, 1], [], []>} : vector<512x9xf32>, vector<9x32xf32>, vector<512x32xf32> -> vector<512x32xf32>
    %cst_3 = arith.constant 0.000000e+00 : f32
    %3 = vector.broadcast %cst_3 : f32 to vector<512x32xf32>
    %4 = arith.maximumf %2, %3 : vector<512x32xf32>
    %5 = vector.extract_strided_slice %4 {offsets = [0, 0], sizes = [256, 32], strides = [1, 1]} : vector<512x32xf32> to vector<256x32xf32>
    %6 = vector.extract_strided_slice %4 {offsets = [256, 0], sizes = [256, 32], strides = [1, 1]} : vector<512x32xf32> to vector<256x32xf32>
    %7 = arith.maximumf %5, %6 : vector<256x32xf32>
    %8 = vector.shape_cast %7 : vector<256x32xf32> to vector<16x16x32xf32>
    %9 = vector.extract_strided_slice %8 {offsets = [0, 0, 0], sizes = [16, 6, 32], strides = [1, 1, 1]} : vector<16x16x32xf32> to vector<16x6x32xf32>
    %10 = vector.extract_strided_slice %8 {offsets = [0, 8, 0], sizes = [16, 6, 32], strides = [1, 1, 1]} : vector<16x16x32xf32> to vector<16x6x32xf32>
    %11 = tpu.concatenate %9, %10 in 2 : vector<16x6x32xf32>, vector<16x6x32xf32> -> vector<16x6x64xf32>
    %12 = vector.shape_cast %11 : vector<16x6x64xf32> to vector<96x64xf32>
    %13 = vector.extract_strided_slice %8 {offsets = [0, 8, 0], sizes = [16, 6, 32], strides = [1, 1, 1]} : vector<16x16x32xf32> to vector<16x6x32xf32>
    %14 = vector.extract_strided_slice %8 {offsets = [0, 1, 0], sizes = [16, 6, 32], strides = [1, 1, 1]} : vector<16x16x32xf32> to vector<16x6x32xf32>
    %15 = tpu.concatenate %13, %14 in 2 : vector<16x6x32xf32>, vector<16x6x32xf32> -> vector<16x6x64xf32>
    %16 = vector.shape_cast %15 : vector<16x6x64xf32> to vector<96x64xf32>
    %c0_4 = arith.constant 0 : index
    %c0_5 = arith.constant 0 : index
    %17 = vector.load %arg3[%c0_4, %c0_5] : memref<64x64xf32, #tpu.memory_space<vmem>>, vector<64x64xf32>
    %c0_6 = arith.constant 0 : index
    %c0_7 = arith.constant 0 : index
    %18 = vector.load %arg4[%c0_6, %c0_7] : memref<1x64xf32, #tpu.memory_space<vmem>>, vector<1x64xf32>
    %cst_8 = arith.constant dense<0.000000e+00> : vector<96x64xf32>
    %19 = tpu.matmul %12, %17, %cst_8 {dimension_numbers = #tpu.dot_dimension_numbers<[1], [0], [0], [1], [0, 0, 1, 1], [], []>} : vector<96x64xf32>, vector<64x64xf32>, vector<96x64xf32> -> vector<96x64xf32>
    %20 = vector.broadcast %18 : vector<1x64xf32> to vector<96x64xf32>
    %21 = arith.addf %19, %20 : vector<96x64xf32>
    %cst_9 = arith.constant 0.000000e+00 : f32
    %22 = vector.broadcast %cst_9 : f32 to vector<96x64xf32>
    %23 = arith.maximumf %21, %22 : vector<96x64xf32>
    %cst_10 = arith.constant dense<0.000000e+00> : vector<96x64xf32>
    %24 = tpu.matmul %16, %17, %cst_10 {dimension_numbers = #tpu.dot_dimension_numbers<[1], [0], [0], [1], [0, 0, 1, 1], [], []>} : vector<96x64xf32>, vector<64x64xf32>, vector<96x64xf32> -> vector<96x64xf32>
    %25 = vector.broadcast %18 : vector<1x64xf32> to vector<96x64xf32>
    %26 = arith.addf %24, %25 : vector<96x64xf32>
    %cst_11 = arith.constant 0.000000e+00 : f32
    %27 = vector.broadcast %cst_11 : f32 to vector<96x64xf32>
    %28 = arith.maximumf %26, %27 : vector<96x64xf32>
    %29 = arith.maximumf %23, %28 : vector<96x64xf32>
    %30 = vector.shape_cast %29 : vector<96x64xf32> to vector<16x6x64xf32>
    %cst_12 = arith.constant 0.000000e+00 : f32
    %31 = vector.broadcast %cst_12 : f32 to vector<16x1x64xf32>
    %32 = tpu.concatenate %31, %30 in 1 : vector<16x1x64xf32>, vector<16x6x64xf32> -> vector<16x7x64xf32>
    %33 = tpu.concatenate %30, %31 in 1 : vector<16x6x64xf32>, vector<16x1x64xf32> -> vector<16x7x64xf32>
    %34 = tpu.concatenate %32, %33 in 2 : vector<16x7x64xf32>, vector<16x7x64xf32> -> vector<16x7x128xf32>
    %35 = vector.shape_cast %34 : vector<16x7x128xf32> to vector<112x128xf32>
    %c0_13 = arith.constant 0 : index
    %c0_14 = arith.constant 0 : index
    %36 = vector.load %arg5[%c0_13, %c0_14] : memref<128x128xf32, #tpu.memory_space<vmem>>, vector<128x128xf32>
    %cst_15 = arith.constant dense<0.000000e+00> : vector<112x128xf32>
    %37 = tpu.matmul %35, %36, %cst_15 {dimension_numbers = #tpu.dot_dimension_numbers<[1], [0], [0], [1], [0, 0, 1, 1], [], []>} : vector<112x128xf32>, vector<128x128xf32>, vector<112x128xf32> -> vector<112x128xf32>
    %c0_16 = arith.constant 0 : index
    %c0_17 = arith.constant 0 : index
    %38 = vector.load %arg6[%c0_16, %c0_17] : memref<1x128xf32, #tpu.memory_space<vmem>>, vector<1x128xf32>
    %39 = vector.broadcast %38 : vector<1x128xf32> to vector<112x128xf32>
    %40 = arith.addf %37, %39 : vector<112x128xf32>
    %cst_18 = arith.constant 0.000000e+00 : f32
    %41 = vector.broadcast %cst_18 : f32 to vector<112x128xf32>
    %42 = arith.maximumf %40, %41 : vector<112x128xf32>
    %43 = vector.shape_cast %42 : vector<112x128xf32> to vector<16x7x128xf32>
    %44 = vector.extract_strided_slice %43 {offsets = [0, 0, 0], sizes = [16, 1, 128], strides = [1, 1, 1]} : vector<16x7x128xf32> to vector<16x1x128xf32>
    %45 = vector.shape_cast %44 : vector<16x1x128xf32> to vector<16x128xf32>
    %46 = vector.extract_strided_slice %43 {offsets = [0, 1, 0], sizes = [16, 1, 128], strides = [1, 1, 1]} : vector<16x7x128xf32> to vector<16x1x128xf32>
    %47 = vector.shape_cast %46 : vector<16x1x128xf32> to vector<16x128xf32>
    %48 = vector.extract_strided_slice %43 {offsets = [0, 2, 0], sizes = [16, 1, 128], strides = [1, 1, 1]} : vector<16x7x128xf32> to vector<16x1x128xf32>
    %49 = vector.shape_cast %48 : vector<16x1x128xf32> to vector<16x128xf32>
    %50 = vector.extract_strided_slice %43 {offsets = [0, 3, 0], sizes = [16, 1, 128], strides = [1, 1, 1]} : vector<16x7x128xf32> to vector<16x1x128xf32>
    %51 = vector.shape_cast %50 : vector<16x1x128xf32> to vector<16x128xf32>
    %52 = vector.extract_strided_slice %43 {offsets = [0, 4, 0], sizes = [16, 1, 128], strides = [1, 1, 1]} : vector<16x7x128xf32> to vector<16x1x128xf32>
    %53 = vector.shape_cast %52 : vector<16x1x128xf32> to vector<16x128xf32>
    %54 = vector.extract_strided_slice %43 {offsets = [0, 5, 0], sizes = [16, 1, 128], strides = [1, 1, 1]} : vector<16x7x128xf32> to vector<16x1x128xf32>
    %55 = vector.shape_cast %54 : vector<16x1x128xf32> to vector<16x128xf32>
    %56 = vector.extract_strided_slice %43 {offsets = [0, 6, 0], sizes = [16, 1, 128], strides = [1, 1, 1]} : vector<16x7x128xf32> to vector<16x1x128xf32>
    %57 = vector.shape_cast %56 : vector<16x1x128xf32> to vector<16x128xf32>
    %58 = tpu.concatenate %45, %47, %49, %51, %53, %55, %57 in 1 : vector<16x128xf32>, vector<16x128xf32>, vector<16x128xf32>, vector<16x128xf32>, vector<16x128xf32>, vector<16x128xf32>, vector<16x128xf32> -> vector<16x896xf32>
    %c0_19 = arith.constant 0 : index
    %c0_20 = arith.constant 0 : index
    %59 = vector.load %arg7[%c0_19, %c0_20] : memref<896x128xf32, #tpu.memory_space<vmem>>, vector<896x128xf32>
    %cst_21 = arith.constant dense<0.000000e+00> : vector<16x128xf32>
    %60 = tpu.matmul %58, %59, %cst_21 {dimension_numbers = #tpu.dot_dimension_numbers<[1], [0], [0], [1], [0, 0, 1, 1], [], []>} : vector<16x896xf32>, vector<896x128xf32>, vector<16x128xf32> -> vector<16x128xf32>
    %c0_22 = arith.constant 0 : index
    %c0_23 = arith.constant 0 : index
    %61 = vector.load %arg8[%c0_22, %c0_23] : memref<1x128xf32, #tpu.memory_space<vmem>>, vector<1x128xf32>
    %62 = vector.broadcast %61 : vector<1x128xf32> to vector<16x128xf32>
    %63 = arith.addf %60, %62 : vector<16x128xf32>
    %64 = vector.shape_cast %63 : vector<16x128xf32> to vector<8x2x128xf32>
    %65 = tpu.iota {dimensions = array<i32: 1>} : vector<1x128xi32>
    %c64_i32 = arith.constant 64 : i32
    %66 = vector.broadcast %c64_i32 : i32 to vector<1x128xi32>
    %67 = arith.cmpi sge, %65, %66 : vector<1x128xi32>
    %c96_i32 = arith.constant 96 : i32
    %68 = vector.broadcast %c96_i32 : i32 to vector<1x128xi32>
    %69 = arith.cmpi slt, %65, %68 : vector<1x128xi32>
    %70 = arith.andi %67, %69 : vector<1x128xi1>
    %cst_24 = arith.constant 1.000000e+00 : f32
    %cst_25 = arith.constant 5.000000e-01 : f32
    %71 = vector.broadcast %cst_24 : f32 to vector<1x128xf32>
    %72 = vector.broadcast %cst_25 : f32 to vector<1x128xf32>
    %73 = arith.select %70, %71, %72 : vector<1x128xi1>, vector<1x128xf32>
    %cst_26 = arith.constant 0.000000e+00 : f32
    %cst_27 = arith.constant 5.000000e-01 : f32
    %74 = vector.broadcast %cst_26 : f32 to vector<1x128xf32>
    %75 = vector.broadcast %cst_27 : f32 to vector<1x128xf32>
    %76 = arith.select %70, %74, %75 : vector<1x128xi1>, vector<1x128xf32>
    %cst_28 = arith.constant 0.000000e+00 : f32
    %77 = vector.broadcast %cst_28 : f32 to vector<2x32xf32>
    %cst_29 = arith.constant 0.000000e+00 : f32
    %78 = vector.broadcast %cst_29 : f32 to vector<2x32xf32>
    %c0_30 = arith.constant 0 : index
    %c0_31 = arith.constant 0 : index
    %79 = vector.load %arg9[%c0_30, %c0_31] : memref<32x128xf32, #tpu.memory_space<vmem>>, vector<32x128xf32>
    %80 = vector.extract_strided_slice %64 {offsets = [0, 0, 0], sizes = [1, 2, 128], strides = [1, 1, 1]} : vector<8x2x128xf32> to vector<1x2x128xf32>
    %81 = vector.shape_cast %80 : vector<1x2x128xf32> to vector<2x128xf32>
    %cst_32 = arith.constant dense<0.000000e+00> : vector<2x128xf32>
    %82 = tpu.matmul %77, %79, %cst_32 {dimension_numbers = #tpu.dot_dimension_numbers<[1], [0], [0], [1], [0, 0, 1, 1], [], []>} : vector<2x32xf32>, vector<32x128xf32>, vector<2x128xf32> -> vector<2x128xf32>
    %83 = arith.addf %81, %82 : vector<2x128xf32>
    %84 = vector.broadcast %73 : vector<1x128xf32> to vector<2x128xf32>
    %85 = arith.mulf %83, %84 : vector<2x128xf32>
    %86 = math.tanh %85 : vector<2x128xf32>
    %87 = vector.broadcast %73 : vector<1x128xf32> to vector<2x128xf32>
    %88 = arith.mulf %86, %87 : vector<2x128xf32>
    %89 = vector.broadcast %76 : vector<1x128xf32> to vector<2x128xf32>
    %90 = arith.addf %88, %89 : vector<2x128xf32>
    %91 = vector.extract_strided_slice %90 {offsets = [0, 0], sizes = [2, 32], strides = [1, 1]} : vector<2x128xf32> to vector<2x32xf32>
    %92 = vector.extract_strided_slice %90 {offsets = [0, 32], sizes = [2, 32], strides = [1, 1]} : vector<2x128xf32> to vector<2x32xf32>
    %93 = vector.extract_strided_slice %90 {offsets = [0, 64], sizes = [2, 32], strides = [1, 1]} : vector<2x128xf32> to vector<2x32xf32>
    %94 = vector.extract_strided_slice %90 {offsets = [0, 96], sizes = [2, 32], strides = [1, 1]} : vector<2x128xf32> to vector<2x32xf32>
    %95 = arith.mulf %92, %78 : vector<2x32xf32>
    %96 = arith.mulf %91, %93 : vector<2x32xf32>
    %97 = arith.addf %95, %96 : vector<2x32xf32>
    %98 = math.tanh %97 : vector<2x32xf32>
    %99 = arith.mulf %94, %98 : vector<2x32xf32>
    %100 = vector.extract_strided_slice %64 {offsets = [1, 0, 0], sizes = [1, 2, 128], strides = [1, 1, 1]} : vector<8x2x128xf32> to vector<1x2x128xf32>
    %101 = vector.shape_cast %100 : vector<1x2x128xf32> to vector<2x128xf32>
    %cst_33 = arith.constant dense<0.000000e+00> : vector<2x128xf32>
    %102 = tpu.matmul %99, %79, %cst_33 {dimension_numbers = #tpu.dot_dimension_numbers<[1], [0], [0], [1], [0, 0, 1, 1], [], []>} : vector<2x32xf32>, vector<32x128xf32>, vector<2x128xf32> -> vector<2x128xf32>
    %103 = arith.addf %101, %102 : vector<2x128xf32>
    %104 = vector.broadcast %73 : vector<1x128xf32> to vector<2x128xf32>
    %105 = arith.mulf %103, %104 : vector<2x128xf32>
    %106 = math.tanh %105 : vector<2x128xf32>
    %107 = vector.broadcast %73 : vector<1x128xf32> to vector<2x128xf32>
    %108 = arith.mulf %106, %107 : vector<2x128xf32>
    %109 = vector.broadcast %76 : vector<1x128xf32> to vector<2x128xf32>
    %110 = arith.addf %108, %109 : vector<2x128xf32>
    %111 = vector.extract_strided_slice %110 {offsets = [0, 0], sizes = [2, 32], strides = [1, 1]} : vector<2x128xf32> to vector<2x32xf32>
    %112 = vector.extract_strided_slice %110 {offsets = [0, 32], sizes = [2, 32], strides = [1, 1]} : vector<2x128xf32> to vector<2x32xf32>
    %113 = vector.extract_strided_slice %110 {offsets = [0, 64], sizes = [2, 32], strides = [1, 1]} : vector<2x128xf32> to vector<2x32xf32>
    %114 = vector.extract_strided_slice %110 {offsets = [0, 96], sizes = [2, 32], strides = [1, 1]} : vector<2x128xf32> to vector<2x32xf32>
    %115 = arith.mulf %112, %97 : vector<2x32xf32>
    %116 = arith.mulf %111, %113 : vector<2x32xf32>
    %117 = arith.addf %115, %116 : vector<2x32xf32>
    %118 = math.tanh %117 : vector<2x32xf32>
    %119 = arith.mulf %114, %118 : vector<2x32xf32>
    %120 = vector.extract_strided_slice %64 {offsets = [2, 0, 0], sizes = [1, 2, 128], strides = [1, 1, 1]} : vector<8x2x128xf32> to vector<1x2x128xf32>
    %121 = vector.shape_cast %120 : vector<1x2x128xf32> to vector<2x128xf32>
    %cst_34 = arith.constant dense<0.000000e+00> : vector<2x128xf32>
    %122 = tpu.matmul %119, %79, %cst_34 {dimension_numbers = #tpu.dot_dimension_numbers<[1], [0], [0], [1], [0, 0, 1, 1], [], []>} : vector<2x32xf32>, vector<32x128xf32>, vector<2x128xf32> -> vector<2x128xf32>
    %123 = arith.addf %121, %122 : vector<2x128xf32>
    %124 = vector.broadcast %73 : vector<1x128xf32> to vector<2x128xf32>
    %125 = arith.mulf %123, %124 : vector<2x128xf32>
    %126 = math.tanh %125 : vector<2x128xf32>
    %127 = vector.broadcast %73 : vector<1x128xf32> to vector<2x128xf32>
    %128 = arith.mulf %126, %127 : vector<2x128xf32>
    %129 = vector.broadcast %76 : vector<1x128xf32> to vector<2x128xf32>
    %130 = arith.addf %128, %129 : vector<2x128xf32>
    %131 = vector.extract_strided_slice %130 {offsets = [0, 0], sizes = [2, 32], strides = [1, 1]} : vector<2x128xf32> to vector<2x32xf32>
    %132 = vector.extract_strided_slice %130 {offsets = [0, 32], sizes = [2, 32], strides = [1, 1]} : vector<2x128xf32> to vector<2x32xf32>
    %133 = vector.extract_strided_slice %130 {offsets = [0, 64], sizes = [2, 32], strides = [1, 1]} : vector<2x128xf32> to vector<2x32xf32>
    %134 = vector.extract_strided_slice %130 {offsets = [0, 96], sizes = [2, 32], strides = [1, 1]} : vector<2x128xf32> to vector<2x32xf32>
    %135 = arith.mulf %132, %117 : vector<2x32xf32>
    %136 = arith.mulf %131, %133 : vector<2x32xf32>
    %137 = arith.addf %135, %136 : vector<2x32xf32>
    %138 = math.tanh %137 : vector<2x32xf32>
    %139 = arith.mulf %134, %138 : vector<2x32xf32>
    %140 = vector.extract_strided_slice %64 {offsets = [3, 0, 0], sizes = [1, 2, 128], strides = [1, 1, 1]} : vector<8x2x128xf32> to vector<1x2x128xf32>
    %141 = vector.shape_cast %140 : vector<1x2x128xf32> to vector<2x128xf32>
    %cst_35 = arith.constant dense<0.000000e+00> : vector<2x128xf32>
    %142 = tpu.matmul %139, %79, %cst_35 {dimension_numbers = #tpu.dot_dimension_numbers<[1], [0], [0], [1], [0, 0, 1, 1], [], []>} : vector<2x32xf32>, vector<32x128xf32>, vector<2x128xf32> -> vector<2x128xf32>
    %143 = arith.addf %141, %142 : vector<2x128xf32>
    %144 = vector.broadcast %73 : vector<1x128xf32> to vector<2x128xf32>
    %145 = arith.mulf %143, %144 : vector<2x128xf32>
    %146 = math.tanh %145 : vector<2x128xf32>
    %147 = vector.broadcast %73 : vector<1x128xf32> to vector<2x128xf32>
    %148 = arith.mulf %146, %147 : vector<2x128xf32>
    %149 = vector.broadcast %76 : vector<1x128xf32> to vector<2x128xf32>
    %150 = arith.addf %148, %149 : vector<2x128xf32>
    %151 = vector.extract_strided_slice %150 {offsets = [0, 0], sizes = [2, 32], strides = [1, 1]} : vector<2x128xf32> to vector<2x32xf32>
    %152 = vector.extract_strided_slice %150 {offsets = [0, 32], sizes = [2, 32], strides = [1, 1]} : vector<2x128xf32> to vector<2x32xf32>
    %153 = vector.extract_strided_slice %150 {offsets = [0, 64], sizes = [2, 32], strides = [1, 1]} : vector<2x128xf32> to vector<2x32xf32>
    %154 = vector.extract_strided_slice %150 {offsets = [0, 96], sizes = [2, 32], strides = [1, 1]} : vector<2x128xf32> to vector<2x32xf32>
    %155 = arith.mulf %152, %137 : vector<2x32xf32>
    %156 = arith.mulf %151, %153 : vector<2x32xf32>
    %157 = arith.addf %155, %156 : vector<2x32xf32>
    %158 = math.tanh %157 : vector<2x32xf32>
    %159 = arith.mulf %154, %158 : vector<2x32xf32>
    %160 = vector.extract_strided_slice %64 {offsets = [4, 0, 0], sizes = [1, 2, 128], strides = [1, 1, 1]} : vector<8x2x128xf32> to vector<1x2x128xf32>
    %161 = vector.shape_cast %160 : vector<1x2x128xf32> to vector<2x128xf32>
    %cst_36 = arith.constant dense<0.000000e+00> : vector<2x128xf32>
    %162 = tpu.matmul %159, %79, %cst_36 {dimension_numbers = #tpu.dot_dimension_numbers<[1], [0], [0], [1], [0, 0, 1, 1], [], []>} : vector<2x32xf32>, vector<32x128xf32>, vector<2x128xf32> -> vector<2x128xf32>
    %163 = arith.addf %161, %162 : vector<2x128xf32>
    %164 = vector.broadcast %73 : vector<1x128xf32> to vector<2x128xf32>
    %165 = arith.mulf %163, %164 : vector<2x128xf32>
    %166 = math.tanh %165 : vector<2x128xf32>
    %167 = vector.broadcast %73 : vector<1x128xf32> to vector<2x128xf32>
    %168 = arith.mulf %166, %167 : vector<2x128xf32>
    %169 = vector.broadcast %76 : vector<1x128xf32> to vector<2x128xf32>
    %170 = arith.addf %168, %169 : vector<2x128xf32>
    %171 = vector.extract_strided_slice %170 {offsets = [0, 0], sizes = [2, 32], strides = [1, 1]} : vector<2x128xf32> to vector<2x32xf32>
    %172 = vector.extract_strided_slice %170 {offsets = [0, 32], sizes = [2, 32], strides = [1, 1]} : vector<2x128xf32> to vector<2x32xf32>
    %173 = vector.extract_strided_slice %170 {offsets = [0, 64], sizes = [2, 32], strides = [1, 1]} : vector<2x128xf32> to vector<2x32xf32>
    %174 = vector.extract_strided_slice %170 {offsets = [0, 96], sizes = [2, 32], strides = [1, 1]} : vector<2x128xf32> to vector<2x32xf32>
    %175 = arith.mulf %172, %157 : vector<2x32xf32>
    %176 = arith.mulf %171, %173 : vector<2x32xf32>
    %177 = arith.addf %175, %176 : vector<2x32xf32>
    %178 = math.tanh %177 : vector<2x32xf32>
    %179 = arith.mulf %174, %178 : vector<2x32xf32>
    %180 = vector.extract_strided_slice %64 {offsets = [5, 0, 0], sizes = [1, 2, 128], strides = [1, 1, 1]} : vector<8x2x128xf32> to vector<1x2x128xf32>
    %181 = vector.shape_cast %180 : vector<1x2x128xf32> to vector<2x128xf32>
    %cst_37 = arith.constant dense<0.000000e+00> : vector<2x128xf32>
    %182 = tpu.matmul %179, %79, %cst_37 {dimension_numbers = #tpu.dot_dimension_numbers<[1], [0], [0], [1], [0, 0, 1, 1], [], []>} : vector<2x32xf32>, vector<32x128xf32>, vector<2x128xf32> -> vector<2x128xf32>
    %183 = arith.addf %181, %182 : vector<2x128xf32>
    %184 = vector.broadcast %73 : vector<1x128xf32> to vector<2x128xf32>
    %185 = arith.mulf %183, %184 : vector<2x128xf32>
    %186 = math.tanh %185 : vector<2x128xf32>
    %187 = vector.broadcast %73 : vector<1x128xf32> to vector<2x128xf32>
    %188 = arith.mulf %186, %187 : vector<2x128xf32>
    %189 = vector.broadcast %76 : vector<1x128xf32> to vector<2x128xf32>
    %190 = arith.addf %188, %189 : vector<2x128xf32>
    %191 = vector.extract_strided_slice %190 {offsets = [0, 0], sizes = [2, 32], strides = [1, 1]} : vector<2x128xf32> to vector<2x32xf32>
    %192 = vector.extract_strided_slice %190 {offsets = [0, 32], sizes = [2, 32], strides = [1, 1]} : vector<2x128xf32> to vector<2x32xf32>
    %193 = vector.extract_strided_slice %190 {offsets = [0, 64], sizes = [2, 32], strides = [1, 1]} : vector<2x128xf32> to vector<2x32xf32>
    %194 = vector.extract_strided_slice %190 {offsets = [0, 96], sizes = [2, 32], strides = [1, 1]} : vector<2x128xf32> to vector<2x32xf32>
    %195 = arith.mulf %192, %177 : vector<2x32xf32>
    %196 = arith.mulf %191, %193 : vector<2x32xf32>
    %197 = arith.addf %195, %196 : vector<2x32xf32>
    %198 = math.tanh %197 : vector<2x32xf32>
    %199 = arith.mulf %194, %198 : vector<2x32xf32>
    %200 = vector.extract_strided_slice %64 {offsets = [6, 0, 0], sizes = [1, 2, 128], strides = [1, 1, 1]} : vector<8x2x128xf32> to vector<1x2x128xf32>
    %201 = vector.shape_cast %200 : vector<1x2x128xf32> to vector<2x128xf32>
    %cst_38 = arith.constant dense<0.000000e+00> : vector<2x128xf32>
    %202 = tpu.matmul %199, %79, %cst_38 {dimension_numbers = #tpu.dot_dimension_numbers<[1], [0], [0], [1], [0, 0, 1, 1], [], []>} : vector<2x32xf32>, vector<32x128xf32>, vector<2x128xf32> -> vector<2x128xf32>
    %203 = arith.addf %201, %202 : vector<2x128xf32>
    %204 = vector.broadcast %73 : vector<1x128xf32> to vector<2x128xf32>
    %205 = arith.mulf %203, %204 : vector<2x128xf32>
    %206 = math.tanh %205 : vector<2x128xf32>
    %207 = vector.broadcast %73 : vector<1x128xf32> to vector<2x128xf32>
    %208 = arith.mulf %206, %207 : vector<2x128xf32>
    %209 = vector.broadcast %76 : vector<1x128xf32> to vector<2x128xf32>
    %210 = arith.addf %208, %209 : vector<2x128xf32>
    %211 = vector.extract_strided_slice %210 {offsets = [0, 0], sizes = [2, 32], strides = [1, 1]} : vector<2x128xf32> to vector<2x32xf32>
    %212 = vector.extract_strided_slice %210 {offsets = [0, 32], sizes = [2, 32], strides = [1, 1]} : vector<2x128xf32> to vector<2x32xf32>
    %213 = vector.extract_strided_slice %210 {offsets = [0, 64], sizes = [2, 32], strides = [1, 1]} : vector<2x128xf32> to vector<2x32xf32>
    %214 = vector.extract_strided_slice %210 {offsets = [0, 96], sizes = [2, 32], strides = [1, 1]} : vector<2x128xf32> to vector<2x32xf32>
    %215 = arith.mulf %212, %197 : vector<2x32xf32>
    %216 = arith.mulf %211, %213 : vector<2x32xf32>
    %217 = arith.addf %215, %216 : vector<2x32xf32>
    %218 = math.tanh %217 : vector<2x32xf32>
    %219 = arith.mulf %214, %218 : vector<2x32xf32>
    %220 = vector.extract_strided_slice %64 {offsets = [7, 0, 0], sizes = [1, 2, 128], strides = [1, 1, 1]} : vector<8x2x128xf32> to vector<1x2x128xf32>
    %221 = vector.shape_cast %220 : vector<1x2x128xf32> to vector<2x128xf32>
    %cst_39 = arith.constant dense<0.000000e+00> : vector<2x128xf32>
    %222 = tpu.matmul %219, %79, %cst_39 {dimension_numbers = #tpu.dot_dimension_numbers<[1], [0], [0], [1], [0, 0, 1, 1], [], []>} : vector<2x32xf32>, vector<32x128xf32>, vector<2x128xf32> -> vector<2x128xf32>
    %223 = arith.addf %221, %222 : vector<2x128xf32>
    %224 = vector.broadcast %73 : vector<1x128xf32> to vector<2x128xf32>
    %225 = arith.mulf %223, %224 : vector<2x128xf32>
    %226 = math.tanh %225 : vector<2x128xf32>
    %227 = vector.broadcast %73 : vector<1x128xf32> to vector<2x128xf32>
    %228 = arith.mulf %226, %227 : vector<2x128xf32>
    %229 = vector.broadcast %76 : vector<1x128xf32> to vector<2x128xf32>
    %230 = arith.addf %228, %229 : vector<2x128xf32>
    %231 = vector.extract_strided_slice %230 {offsets = [0, 0], sizes = [2, 32], strides = [1, 1]} : vector<2x128xf32> to vector<2x32xf32>
    %232 = vector.extract_strided_slice %230 {offsets = [0, 32], sizes = [2, 32], strides = [1, 1]} : vector<2x128xf32> to vector<2x32xf32>
    %233 = vector.extract_strided_slice %230 {offsets = [0, 64], sizes = [2, 32], strides = [1, 1]} : vector<2x128xf32> to vector<2x32xf32>
    %234 = vector.extract_strided_slice %230 {offsets = [0, 96], sizes = [2, 32], strides = [1, 1]} : vector<2x128xf32> to vector<2x32xf32>
    %235 = arith.mulf %232, %217 : vector<2x32xf32>
    %236 = arith.mulf %231, %233 : vector<2x32xf32>
    %237 = arith.addf %235, %236 : vector<2x32xf32>
    %238 = math.tanh %237 : vector<2x32xf32>
    %239 = arith.mulf %234, %238 : vector<2x32xf32>
    %c0_40 = arith.constant 0 : index
    %c0_41 = arith.constant 0 : index
    %240 = vector.load %arg1[%c0_40, %c0_41] : memref<16x1xi32, #tpu.memory_space<vmem>>, vector<16x1xi32>
    %241 = tpu.iota {dimensions = array<i32: 1>} : vector<16x8xi32>
    %242 = vector.broadcast %240 : vector<16x1xi32> to vector<16x8xi32>
    %243 = arith.cmpi eq, %241, %242 : vector<16x8xi32>
    %244 = arith.extui %243 : vector<16x8xi1> to vector<16x8xi32>
    %245 = arith.sitofp %244 : vector<16x8xi32> to vector<16x8xf32>
    %c0_42 = arith.constant 0 : index
    %c0_43 = arith.constant 0 : index
    %246 = vector.load %arg10[%c0_42, %c0_43] : memref<8x128xf32, #tpu.memory_space<vmem>>, vector<8x128xf32>
    %cst_44 = arith.constant dense<0.000000e+00> : vector<16x128xf32>
    %247 = tpu.matmul %245, %246, %cst_44 {dimension_numbers = #tpu.dot_dimension_numbers<[1], [0], [0], [1], [0, 0, 1, 1], [], []>} : vector<16x8xf32>, vector<8x128xf32>, vector<16x128xf32> -> vector<16x128xf32>
    %c0_45 = arith.constant 0 : index
    %c0_46 = arith.constant 0 : index
    %248 = vector.load %arg11[%c0_45, %c0_46] : memref<1x128xf32, #tpu.memory_space<vmem>>, vector<1x128xf32>
    %249 = vector.broadcast %248 : vector<1x128xf32> to vector<16x128xf32>
    %250 = arith.addf %247, %249 : vector<16x128xf32>
    %251 = vector.shape_cast %250 : vector<16x128xf32> to vector<8x2x128xf32>
    %c0_47 = arith.constant 0 : index
    %c0_48 = arith.constant 0 : index
    %252 = vector.load %arg12[%c0_47, %c0_48] : memref<32x128xf32, #tpu.memory_space<vmem>>, vector<32x128xf32>
    %253 = vector.extract_strided_slice %251 {offsets = [0, 0, 0], sizes = [1, 2, 128], strides = [1, 1, 1]} : vector<8x2x128xf32> to vector<1x2x128xf32>
    %254 = vector.shape_cast %253 : vector<1x2x128xf32> to vector<2x128xf32>
    %cst_49 = arith.constant dense<0.000000e+00> : vector<2x128xf32>
    %255 = tpu.matmul %239, %252, %cst_49 {dimension_numbers = #tpu.dot_dimension_numbers<[1], [0], [0], [1], [0, 0, 1, 1], [], []>} : vector<2x32xf32>, vector<32x128xf32>, vector<2x128xf32> -> vector<2x128xf32>
    %256 = arith.addf %254, %255 : vector<2x128xf32>
    %257 = vector.broadcast %73 : vector<1x128xf32> to vector<2x128xf32>
    %258 = arith.mulf %256, %257 : vector<2x128xf32>
    %259 = math.tanh %258 : vector<2x128xf32>
    %260 = vector.broadcast %73 : vector<1x128xf32> to vector<2x128xf32>
    %261 = arith.mulf %259, %260 : vector<2x128xf32>
    %262 = vector.broadcast %76 : vector<1x128xf32> to vector<2x128xf32>
    %263 = arith.addf %261, %262 : vector<2x128xf32>
    %264 = vector.extract_strided_slice %263 {offsets = [0, 0], sizes = [2, 32], strides = [1, 1]} : vector<2x128xf32> to vector<2x32xf32>
    %265 = vector.extract_strided_slice %263 {offsets = [0, 32], sizes = [2, 32], strides = [1, 1]} : vector<2x128xf32> to vector<2x32xf32>
    %266 = vector.extract_strided_slice %263 {offsets = [0, 64], sizes = [2, 32], strides = [1, 1]} : vector<2x128xf32> to vector<2x32xf32>
    %267 = vector.extract_strided_slice %263 {offsets = [0, 96], sizes = [2, 32], strides = [1, 1]} : vector<2x128xf32> to vector<2x32xf32>
    %268 = arith.mulf %265, %237 : vector<2x32xf32>
    %269 = arith.mulf %264, %266 : vector<2x32xf32>
    %270 = arith.addf %268, %269 : vector<2x32xf32>
    %271 = math.tanh %270 : vector<2x32xf32>
    %272 = arith.mulf %267, %271 : vector<2x32xf32>
    %273 = vector.extract_strided_slice %251 {offsets = [1, 0, 0], sizes = [1, 2, 128], strides = [1, 1, 1]} : vector<8x2x128xf32> to vector<1x2x128xf32>
    %274 = vector.shape_cast %273 : vector<1x2x128xf32> to vector<2x128xf32>
    %cst_50 = arith.constant dense<0.000000e+00> : vector<2x128xf32>
    %275 = tpu.matmul %272, %252, %cst_50 {dimension_numbers = #tpu.dot_dimension_numbers<[1], [0], [0], [1], [0, 0, 1, 1], [], []>} : vector<2x32xf32>, vector<32x128xf32>, vector<2x128xf32> -> vector<2x128xf32>
    %276 = arith.addf %274, %275 : vector<2x128xf32>
    %277 = vector.broadcast %73 : vector<1x128xf32> to vector<2x128xf32>
    %278 = arith.mulf %276, %277 : vector<2x128xf32>
    %279 = math.tanh %278 : vector<2x128xf32>
    %280 = vector.broadcast %73 : vector<1x128xf32> to vector<2x128xf32>
    %281 = arith.mulf %279, %280 : vector<2x128xf32>
    %282 = vector.broadcast %76 : vector<1x128xf32> to vector<2x128xf32>
    %283 = arith.addf %281, %282 : vector<2x128xf32>
    %284 = vector.extract_strided_slice %283 {offsets = [0, 0], sizes = [2, 32], strides = [1, 1]} : vector<2x128xf32> to vector<2x32xf32>
    %285 = vector.extract_strided_slice %283 {offsets = [0, 32], sizes = [2, 32], strides = [1, 1]} : vector<2x128xf32> to vector<2x32xf32>
    %286 = vector.extract_strided_slice %283 {offsets = [0, 64], sizes = [2, 32], strides = [1, 1]} : vector<2x128xf32> to vector<2x32xf32>
    %287 = vector.extract_strided_slice %283 {offsets = [0, 96], sizes = [2, 32], strides = [1, 1]} : vector<2x128xf32> to vector<2x32xf32>
    %288 = arith.mulf %285, %270 : vector<2x32xf32>
    %289 = arith.mulf %284, %286 : vector<2x32xf32>
    %290 = arith.addf %288, %289 : vector<2x32xf32>
    %291 = math.tanh %290 : vector<2x32xf32>
    %292 = arith.mulf %287, %291 : vector<2x32xf32>
    %293 = vector.extract_strided_slice %251 {offsets = [2, 0, 0], sizes = [1, 2, 128], strides = [1, 1, 1]} : vector<8x2x128xf32> to vector<1x2x128xf32>
    %294 = vector.shape_cast %293 : vector<1x2x128xf32> to vector<2x128xf32>
    %cst_51 = arith.constant dense<0.000000e+00> : vector<2x128xf32>
    %295 = tpu.matmul %292, %252, %cst_51 {dimension_numbers = #tpu.dot_dimension_numbers<[1], [0], [0], [1], [0, 0, 1, 1], [], []>} : vector<2x32xf32>, vector<32x128xf32>, vector<2x128xf32> -> vector<2x128xf32>
    %296 = arith.addf %294, %295 : vector<2x128xf32>
    %297 = vector.broadcast %73 : vector<1x128xf32> to vector<2x128xf32>
    %298 = arith.mulf %296, %297 : vector<2x128xf32>
    %299 = math.tanh %298 : vector<2x128xf32>
    %300 = vector.broadcast %73 : vector<1x128xf32> to vector<2x128xf32>
    %301 = arith.mulf %299, %300 : vector<2x128xf32>
    %302 = vector.broadcast %76 : vector<1x128xf32> to vector<2x128xf32>
    %303 = arith.addf %301, %302 : vector<2x128xf32>
    %304 = vector.extract_strided_slice %303 {offsets = [0, 0], sizes = [2, 32], strides = [1, 1]} : vector<2x128xf32> to vector<2x32xf32>
    %305 = vector.extract_strided_slice %303 {offsets = [0, 32], sizes = [2, 32], strides = [1, 1]} : vector<2x128xf32> to vector<2x32xf32>
    %306 = vector.extract_strided_slice %303 {offsets = [0, 64], sizes = [2, 32], strides = [1, 1]} : vector<2x128xf32> to vector<2x32xf32>
    %307 = vector.extract_strided_slice %303 {offsets = [0, 96], sizes = [2, 32], strides = [1, 1]} : vector<2x128xf32> to vector<2x32xf32>
    %308 = arith.mulf %305, %290 : vector<2x32xf32>
    %309 = arith.mulf %304, %306 : vector<2x32xf32>
    %310 = arith.addf %308, %309 : vector<2x32xf32>
    %311 = math.tanh %310 : vector<2x32xf32>
    %312 = arith.mulf %307, %311 : vector<2x32xf32>
    %313 = vector.extract_strided_slice %251 {offsets = [3, 0, 0], sizes = [1, 2, 128], strides = [1, 1, 1]} : vector<8x2x128xf32> to vector<1x2x128xf32>
    %314 = vector.shape_cast %313 : vector<1x2x128xf32> to vector<2x128xf32>
    %cst_52 = arith.constant dense<0.000000e+00> : vector<2x128xf32>
    %315 = tpu.matmul %312, %252, %cst_52 {dimension_numbers = #tpu.dot_dimension_numbers<[1], [0], [0], [1], [0, 0, 1, 1], [], []>} : vector<2x32xf32>, vector<32x128xf32>, vector<2x128xf32> -> vector<2x128xf32>
    %316 = arith.addf %314, %315 : vector<2x128xf32>
    %317 = vector.broadcast %73 : vector<1x128xf32> to vector<2x128xf32>
    %318 = arith.mulf %316, %317 : vector<2x128xf32>
    %319 = math.tanh %318 : vector<2x128xf32>
    %320 = vector.broadcast %73 : vector<1x128xf32> to vector<2x128xf32>
    %321 = arith.mulf %319, %320 : vector<2x128xf32>
    %322 = vector.broadcast %76 : vector<1x128xf32> to vector<2x128xf32>
    %323 = arith.addf %321, %322 : vector<2x128xf32>
    %324 = vector.extract_strided_slice %323 {offsets = [0, 0], sizes = [2, 32], strides = [1, 1]} : vector<2x128xf32> to vector<2x32xf32>
    %325 = vector.extract_strided_slice %323 {offsets = [0, 32], sizes = [2, 32], strides = [1, 1]} : vector<2x128xf32> to vector<2x32xf32>
    %326 = vector.extract_strided_slice %323 {offsets = [0, 64], sizes = [2, 32], strides = [1, 1]} : vector<2x128xf32> to vector<2x32xf32>
    %327 = vector.extract_strided_slice %323 {offsets = [0, 96], sizes = [2, 32], strides = [1, 1]} : vector<2x128xf32> to vector<2x32xf32>
    %328 = arith.mulf %325, %310 : vector<2x32xf32>
    %329 = arith.mulf %324, %326 : vector<2x32xf32>
    %330 = arith.addf %328, %329 : vector<2x32xf32>
    %331 = math.tanh %330 : vector<2x32xf32>
    %332 = arith.mulf %327, %331 : vector<2x32xf32>
    %333 = vector.extract_strided_slice %251 {offsets = [4, 0, 0], sizes = [1, 2, 128], strides = [1, 1, 1]} : vector<8x2x128xf32> to vector<1x2x128xf32>
    %334 = vector.shape_cast %333 : vector<1x2x128xf32> to vector<2x128xf32>
    %cst_53 = arith.constant dense<0.000000e+00> : vector<2x128xf32>
    %335 = tpu.matmul %332, %252, %cst_53 {dimension_numbers = #tpu.dot_dimension_numbers<[1], [0], [0], [1], [0, 0, 1, 1], [], []>} : vector<2x32xf32>, vector<32x128xf32>, vector<2x128xf32> -> vector<2x128xf32>
    %336 = arith.addf %334, %335 : vector<2x128xf32>
    %337 = vector.broadcast %73 : vector<1x128xf32> to vector<2x128xf32>
    %338 = arith.mulf %336, %337 : vector<2x128xf32>
    %339 = math.tanh %338 : vector<2x128xf32>
    %340 = vector.broadcast %73 : vector<1x128xf32> to vector<2x128xf32>
    %341 = arith.mulf %339, %340 : vector<2x128xf32>
    %342 = vector.broadcast %76 : vector<1x128xf32> to vector<2x128xf32>
    %343 = arith.addf %341, %342 : vector<2x128xf32>
    %344 = vector.extract_strided_slice %343 {offsets = [0, 0], sizes = [2, 32], strides = [1, 1]} : vector<2x128xf32> to vector<2x32xf32>
    %345 = vector.extract_strided_slice %343 {offsets = [0, 32], sizes = [2, 32], strides = [1, 1]} : vector<2x128xf32> to vector<2x32xf32>
    %346 = vector.extract_strided_slice %343 {offsets = [0, 64], sizes = [2, 32], strides = [1, 1]} : vector<2x128xf32> to vector<2x32xf32>
    %347 = vector.extract_strided_slice %343 {offsets = [0, 96], sizes = [2, 32], strides = [1, 1]} : vector<2x128xf32> to vector<2x32xf32>
    %348 = arith.mulf %345, %330 : vector<2x32xf32>
    %349 = arith.mulf %344, %346 : vector<2x32xf32>
    %350 = arith.addf %348, %349 : vector<2x32xf32>
    %351 = math.tanh %350 : vector<2x32xf32>
    %352 = arith.mulf %347, %351 : vector<2x32xf32>
    %353 = vector.extract_strided_slice %251 {offsets = [5, 0, 0], sizes = [1, 2, 128], strides = [1, 1, 1]} : vector<8x2x128xf32> to vector<1x2x128xf32>
    %354 = vector.shape_cast %353 : vector<1x2x128xf32> to vector<2x128xf32>
    %cst_54 = arith.constant dense<0.000000e+00> : vector<2x128xf32>
    %355 = tpu.matmul %352, %252, %cst_54 {dimension_numbers = #tpu.dot_dimension_numbers<[1], [0], [0], [1], [0, 0, 1, 1], [], []>} : vector<2x32xf32>, vector<32x128xf32>, vector<2x128xf32> -> vector<2x128xf32>
    %356 = arith.addf %354, %355 : vector<2x128xf32>
    %357 = vector.broadcast %73 : vector<1x128xf32> to vector<2x128xf32>
    %358 = arith.mulf %356, %357 : vector<2x128xf32>
    %359 = math.tanh %358 : vector<2x128xf32>
    %360 = vector.broadcast %73 : vector<1x128xf32> to vector<2x128xf32>
    %361 = arith.mulf %359, %360 : vector<2x128xf32>
    %362 = vector.broadcast %76 : vector<1x128xf32> to vector<2x128xf32>
    %363 = arith.addf %361, %362 : vector<2x128xf32>
    %364 = vector.extract_strided_slice %363 {offsets = [0, 0], sizes = [2, 32], strides = [1, 1]} : vector<2x128xf32> to vector<2x32xf32>
    %365 = vector.extract_strided_slice %363 {offsets = [0, 32], sizes = [2, 32], strides = [1, 1]} : vector<2x128xf32> to vector<2x32xf32>
    %366 = vector.extract_strided_slice %363 {offsets = [0, 64], sizes = [2, 32], strides = [1, 1]} : vector<2x128xf32> to vector<2x32xf32>
    %367 = vector.extract_strided_slice %363 {offsets = [0, 96], sizes = [2, 32], strides = [1, 1]} : vector<2x128xf32> to vector<2x32xf32>
    %368 = arith.mulf %365, %350 : vector<2x32xf32>
    %369 = arith.mulf %364, %366 : vector<2x32xf32>
    %370 = arith.addf %368, %369 : vector<2x32xf32>
    %371 = math.tanh %370 : vector<2x32xf32>
    %372 = arith.mulf %367, %371 : vector<2x32xf32>
    %373 = vector.extract_strided_slice %251 {offsets = [6, 0, 0], sizes = [1, 2, 128], strides = [1, 1, 1]} : vector<8x2x128xf32> to vector<1x2x128xf32>
    %374 = vector.shape_cast %373 : vector<1x2x128xf32> to vector<2x128xf32>
    %cst_55 = arith.constant dense<0.000000e+00> : vector<2x128xf32>
    %375 = tpu.matmul %372, %252, %cst_55 {dimension_numbers = #tpu.dot_dimension_numbers<[1], [0], [0], [1], [0, 0, 1, 1], [], []>} : vector<2x32xf32>, vector<32x128xf32>, vector<2x128xf32> -> vector<2x128xf32>
    %376 = arith.addf %374, %375 : vector<2x128xf32>
    %377 = vector.broadcast %73 : vector<1x128xf32> to vector<2x128xf32>
    %378 = arith.mulf %376, %377 : vector<2x128xf32>
    %379 = math.tanh %378 : vector<2x128xf32>
    %380 = vector.broadcast %73 : vector<1x128xf32> to vector<2x128xf32>
    %381 = arith.mulf %379, %380 : vector<2x128xf32>
    %382 = vector.broadcast %76 : vector<1x128xf32> to vector<2x128xf32>
    %383 = arith.addf %381, %382 : vector<2x128xf32>
    %384 = vector.extract_strided_slice %383 {offsets = [0, 0], sizes = [2, 32], strides = [1, 1]} : vector<2x128xf32> to vector<2x32xf32>
    %385 = vector.extract_strided_slice %383 {offsets = [0, 32], sizes = [2, 32], strides = [1, 1]} : vector<2x128xf32> to vector<2x32xf32>
    %386 = vector.extract_strided_slice %383 {offsets = [0, 64], sizes = [2, 32], strides = [1, 1]} : vector<2x128xf32> to vector<2x32xf32>
    %387 = vector.extract_strided_slice %383 {offsets = [0, 96], sizes = [2, 32], strides = [1, 1]} : vector<2x128xf32> to vector<2x32xf32>
    %388 = arith.mulf %385, %370 : vector<2x32xf32>
    %389 = arith.mulf %384, %386 : vector<2x32xf32>
    %390 = arith.addf %388, %389 : vector<2x32xf32>
    %391 = math.tanh %390 : vector<2x32xf32>
    %392 = arith.mulf %387, %391 : vector<2x32xf32>
    %393 = vector.extract_strided_slice %251 {offsets = [7, 0, 0], sizes = [1, 2, 128], strides = [1, 1, 1]} : vector<8x2x128xf32> to vector<1x2x128xf32>
    %394 = vector.shape_cast %393 : vector<1x2x128xf32> to vector<2x128xf32>
    %cst_56 = arith.constant dense<0.000000e+00> : vector<2x128xf32>
    %395 = tpu.matmul %392, %252, %cst_56 {dimension_numbers = #tpu.dot_dimension_numbers<[1], [0], [0], [1], [0, 0, 1, 1], [], []>} : vector<2x32xf32>, vector<32x128xf32>, vector<2x128xf32> -> vector<2x128xf32>
    %396 = arith.addf %394, %395 : vector<2x128xf32>
    %397 = vector.broadcast %73 : vector<1x128xf32> to vector<2x128xf32>
    %398 = arith.mulf %396, %397 : vector<2x128xf32>
    %399 = math.tanh %398 : vector<2x128xf32>
    %400 = vector.broadcast %73 : vector<1x128xf32> to vector<2x128xf32>
    %401 = arith.mulf %399, %400 : vector<2x128xf32>
    %402 = vector.broadcast %76 : vector<1x128xf32> to vector<2x128xf32>
    %403 = arith.addf %401, %402 : vector<2x128xf32>
    %404 = vector.extract_strided_slice %403 {offsets = [0, 0], sizes = [2, 32], strides = [1, 1]} : vector<2x128xf32> to vector<2x32xf32>
    %405 = vector.extract_strided_slice %403 {offsets = [0, 32], sizes = [2, 32], strides = [1, 1]} : vector<2x128xf32> to vector<2x32xf32>
    %406 = vector.extract_strided_slice %403 {offsets = [0, 64], sizes = [2, 32], strides = [1, 1]} : vector<2x128xf32> to vector<2x32xf32>
    %407 = vector.extract_strided_slice %403 {offsets = [0, 96], sizes = [2, 32], strides = [1, 1]} : vector<2x128xf32> to vector<2x32xf32>
    %408 = arith.mulf %405, %390 : vector<2x32xf32>
    %409 = arith.mulf %404, %406 : vector<2x32xf32>
    %410 = arith.addf %408, %409 : vector<2x32xf32>
    %411 = math.tanh %410 : vector<2x32xf32>
    %412 = arith.mulf %407, %411 : vector<2x32xf32>
    %413 = tpu.concatenate %272, %292, %312, %332, %352, %372, %392, %412 in 0 : vector<2x32xf32>, vector<2x32xf32>, vector<2x32xf32>, vector<2x32xf32>, vector<2x32xf32>, vector<2x32xf32>, vector<2x32xf32>, vector<2x32xf32> -> vector<16x32xf32>
    %c0_57 = arith.constant 0 : index
    %c0_58 = arith.constant 0 : index
    %414 = vector.load %arg13[%c0_57, %c0_58] : memref<32x8xf32, #tpu.memory_space<vmem>>, vector<32x8xf32>
    %cst_59 = arith.constant dense<0.000000e+00> : vector<16x8xf32>
    %415 = tpu.matmul %413, %414, %cst_59 {dimension_numbers = #tpu.dot_dimension_numbers<[1], [0], [0], [1], [0, 0, 1, 1], [], []>} : vector<16x32xf32>, vector<32x8xf32>, vector<16x8xf32> -> vector<16x8xf32>
    %c0_60 = arith.constant 0 : index
    %c0_61 = arith.constant 0 : index
    %416 = vector.load %arg14[%c0_60, %c0_61] : memref<1x8xf32, #tpu.memory_space<vmem>>, vector<1x8xf32>
    %417 = vector.broadcast %416 : vector<1x8xf32> to vector<16x8xf32>
    %418 = arith.addf %415, %417 : vector<16x8xf32>
    %c0_62 = arith.constant 0 : index
    %c0_63 = arith.constant 0 : index
    %419 = vector.load %arg15[%c0_62, %c0_63] : memref<16x8xf32, #tpu.memory_space<vmem>>, vector<16x8xf32>
    tpu.vector_store %arg15[%c0_62, %c0_63], %418 {strides = array<i32>} : memref<16x8xf32, #tpu.memory_space<vmem>>, vector<16x8xf32>,
    return
  }
}

</mosaic_0001>

<llo_original>
// kernel: forward.1
$region0: #{forward.1}
  #allocation0 [shape = 'u32[]', space=smem, size = 0x4, offset = 0x4, fixed_abs, tag = 'smem constant byte address 0x4 - core index']
  #allocation1 [shape = 'u32[144,128]{1,0:T(1,128)}', space=vmem, size = 0x12000, scoped, tag = 'internal scratch']
  %s0 = inlined_call_operand.vmem [shape: f32[512,9], index: 0, kind: input, shape index: {}]
  %s1 = inlined_call_operand.vmem [shape: s32[16,1], index: 1, kind: input, shape index: {}]
  %s2 = inlined_call_operand.vmem [shape: f32[9,32], index: 2, kind: input, shape index: {}]
  %s3 = inlined_call_operand.vmem [shape: f32[64,64], index: 3, kind: input, shape index: {}]
  %s4 = inlined_call_operand.vmem [shape: f32[1,64], index: 4, kind: input, shape index: {}]
  %s5 = inlined_call_operand.vmem [shape: f32[128,128], index: 5, kind: input, shape index: {}]
  %s6 = inlined_call_operand.vmem [shape: f32[1,128], index: 6, kind: input, shape index: {}]
  %s7 = inlined_call_operand.vmem [shape: f32[896,128], index: 7, kind: input, shape index: {}]
  %s8 = inlined_call_operand.vmem [shape: f32[1,128], index: 8, kind: input, shape index: {}]
  %s9 = inlined_call_operand.vmem [shape: f32[32,128], index: 9, kind: input, shape index: {}]
  %s10 = inlined_call_operand.vmem [shape: f32[8,128], index: 10, kind: input, shape index: {}]
  %s11 = inlined_call_operand.vmem [shape: f32[1,128], index: 11, kind: input, shape index: {}]
  %s12 = inlined_call_operand.vmem [shape: f32[32,128], index: 12, kind: input, shape index: {}]
  %s13 = inlined_call_operand.vmem [shape: f32[32,8], index: 13, kind: input, shape index: {}]
  %s14 = inlined_call_operand.vmem [shape: f32[1,8], index: 14, kind: input, shape index: {}]
  %s15 = inlined_call_operand.vmem [shape: f32[16,8], index: 15, kind: output, shape index: {}]
  %s16 = sld [smem:[#allocation0]]
  $region70: #{forward.1} parent=0
    _
  %s18 = ssub.s32 1, %s16
  %s19 = scalar_select 0, %s18, %s16
  // Predicated region
  $region2: #{forward.1} parent=0 // pred_check
    _
  $region3: #{forward.1} parent=0 // pred_check_branch
    %21 = sbr.rel (0) target = $region5
  $region4: #{forward.1} parent=0 // pred_region
    _
  $region5: #{forward.1} parent=0 // pred_fallthru
    _
  // Predicated region
  $region6: #{forward.1} parent=0 // pred_check
    _
  $region7: #{forward.1} parent=0 // pred_check_branch
    %23 = sbr.rel (0) target = $region9
  $region8: #{forward.1} parent=0 // pred_region
    _
  $region9: #{forward.1} parent=0 // pred_fallthru
    _
  // Predicated region
  $region10: #{forward.1} parent=0 // pred_check
    _
  $region11: #{forward.1} parent=0 // pred_check_branch
    %25 = sbr.rel (0) target = $region13
  $region12: #{forward.1} parent=0 // pred_region
    _
  $region13: #{forward.1} parent=0 // pred_fallthru
    _
  // Predicated region
  $region14: #{forward.1} parent=0 // pred_check
    _
  $region15: #{forward.1} parent=0 // pred_check_branch
    %27 = sbr.rel (0) target = $region17
  $region16: #{forward.1} parent=0 // pred_region
    _
  $region17: #{forward.1} parent=0 // pred_fallthru
    _
  // Predicated region
  $region18: #{forward.1} parent=0 // pred_check
    _
  $region19: #{forward.1} parent=0 // pred_check_branch
    %29 = sbr.rel (0) target = $region21
  $region20: #{forward.1} parent=0 // pred_region
    _
  $region21: #{forward.1} parent=0 // pred_fallthru
    _
  // Predicated region
  $region22: #{forward.1} parent=0 // pred_check
    _
  $region23: #{forward.1} parent=0 // pred_check_branch
    %31 = sbr.rel (0) target = $region25
  $region24: #{forward.1} parent=0 // pred_region
    _
  $region25: #{forward.1} parent=0 // pred_fallthru
    _
  // Predicated region
  $region26: #{forward.1} parent=0 // pred_check
    _
  $region27: #{forward.1} parent=0 // pred_check_branch
    %33 = sbr.rel (0) target = $region29
  $region28: #{forward.1} parent=0 // pred_region
    _
  $region29: #{forward.1} parent=0 // pred_fallthru
    _
  // Predicated region
  $region30: #{forward.1} parent=0 // pred_check
    _
  $region31: #{forward.1} parent=0 // pred_check_branch
    %35 = sbr.rel (0) target = $region33
  $region32: #{forward.1} parent=0 // pred_region
    _
  $region33: #{forward.1} parent=0 // pred_fallthru
    _
  // Predicated region
  $region34: #{forward.1} parent=0 // pred_check
    _
  $region35: #{forward.1} parent=0 // pred_check_branch
    %37 = sbr.rel (0) target = $region37
  $region36: #{forward.1} parent=0 // pred_region
    _
  $region37: #{forward.1} parent=0 // pred_fallthru
    _
  // Predicated region
  $region38: #{forward.1} parent=0 // pred_check
    _
  $region39: #{forward.1} parent=0 // pred_check_branch
    %39 = sbr.rel (0) target = $region41
  $region40: #{forward.1} parent=0 // pred_region
    _
  $region41: #{forward.1} parent=0 // pred_fallthru
    _
  // Predicated region
  $region42: #{forward.1} parent=0 // pred_check
    _
  $region43: #{forward.1} parent=0 // pred_check_branch
    %41 = sbr.rel (0) target = $region45
  $region44: #{forward.1} parent=0 // pred_region
    _
  $region45: #{forward.1} parent=0 // pred_fallthru
    _
  // Predicated region
  $region46: #{forward.1} parent=0 // pred_check
    _
  $region47: #{forward.1} parent=0 // pred_check_branch
    %43 = sbr.rel (0) target = $region49
  $region48: #{forward.1} parent=0 // pred_region
    _
  $region49: #{forward.1} parent=0 // pred_fallthru
    _
  // Predicated region
  $region50: #{forward.1} parent=0 // pred_check
    _
  $region51: #{forward.1} parent=0 // pred_check_branch
    %45 = sbr.rel (0) target = $region53
  $region52: #{forward.1} parent=0 // pred_region
    _
  $region53: #{forward.1} parent=0 // pred_fallthru
    _
  // Predicated region
  $region54: #{forward.1} parent=0 // pred_check
    _
  $region55: #{forward.1} parent=0 // pred_check_branch
    %47 = sbr.rel (0) target = $region57
  $region56: #{forward.1} parent=0 // pred_region
    _
  $region57: #{forward.1} parent=0 // pred_fallthru
    _
  // Predicated region
  $region58: #{forward.1} parent=0 // pred_check
    _
  $region59: #{forward.1} parent=0 // pred_check_branch
    %49 = sbr.rel (0) target = $region61
  $region60: #{forward.1} parent=0 // pred_region
    _
  $region61: #{forward.1} parent=0 // pred_fallthru
    _
  %v50 = vld [vmem:[%s0] sm:$0xff]
  %v51 = vld [vmem:[%s0 + $0x8] sm:$0xff]
  %v52 = vld [vmem:[%s0 + $0x10] sm:$0xff]
  %v53 = vld [vmem:[%s0 + $0x18] sm:$0xff]
  %v54 = vld [vmem:[%s0 + $0x20] sm:$0xff]
  %v55 = vld [vmem:[%s0 + $0x28] sm:$0xff]
  %v56 = vld [vmem:[%s0 + $0x30] sm:$0xff]
  %v57 = vld [vmem:[%s0 + $0x38] sm:$0xff]
  %v58 = vld [vmem:[%s0 + $0x40] sm:$0xff]
  %v59 = vld [vmem:[%s0 + $0x48] sm:$0xff]
  %v60 = vld [vmem:[%s0 + $0x50] sm:$0xff]
  %v61 = vld [vmem:[%s0 + $0x58] sm:$0xff]
  %v62 = vld [vmem:[%s0 + $0x60] sm:$0xff]
  %v63 = vld [vmem:[%s0 + $0x68] sm:$0xff]
  %v64 = vld [vmem:[%s0 + $0x70] sm:$0xff]
  %v65 = vld [vmem:[%s0 + $0x78] sm:$0xff]
  %v66 = vld [vmem:[%s0 + $0x80] sm:$0xff]
  %v67 = vld [vmem:[%s0 + $0x88] sm:$0xff]
  %v68 = vld [vmem:[%s0 + $0x90] sm:$0xff]
  %v69 = vld [vmem:[%s0 + $0x98] sm:$0xff]
  %v70 = vld [vmem:[%s0 + $0xa0] sm:$0xff]
  %v71 = vld [vmem:[%s0 + $0xa8] sm:$0xff]
  %v72 = vld [vmem:[%s0 + $0xb0] sm:$0xff]
  %v73 = vld [vmem:[%s0 + $0xb8] sm:$0xff]
  %v74 = vld [vmem:[%s0 + $0xc0] sm:$0xff]
  %v75 = vld [vmem:[%s0 + $0xc8] sm:$0xff]
  %v76 = vld [vmem:[%s0 + $0xd0] sm:$0xff]
  %v77 = vld [vmem:[%s0 + $0xd8] sm:$0xff]
  %v78 = vld [vmem:[%s0 + $0xe0] sm:$0xff]
  %v79 = vld [vmem:[%s0 + $0xe8] sm:$0xff]
  %v80 = vld [vmem:[%s0 + $0xf0] sm:$0xff]
  %v81 = vld [vmem:[%s0 + $0xf8] sm:$0xff]
  %v82 = vld [vmem:[%s0 + $0x100] sm:$0xff]
  %v83 = vld [vmem:[%s0 + $0x108] sm:$0xff]
  %v84 = vld [vmem:[%s0 + $0x110] sm:$0xff]
  %v85 = vld [vmem:[%s0 + $0x118] sm:$0xff]
  %v86 = vld [vmem:[%s0 + $0x120] sm:$0xff]
  %v87 = vld [vmem:[%s0 + $0x128] sm:$0xff]
  %v88 = vld [vmem:[%s0 + $0x130] sm:$0xff]
  %v89 = vld [vmem:[%s0 + $0x138] sm:$0xff]
  %v90 = vld [vmem:[%s0 + $0x140] sm:$0xff]
  %v91 = vld [vmem:[%s0 + $0x148] sm:$0xff]
  %v92 = vld [vmem:[%s0 + $0x150] sm:$0xff]
  %v93 = vld [vmem:[%s0 + $0x158] sm:$0xff]
  %v94 = vld [vmem:[%s0 + $0x160] sm:$0xff]
  %v95 = vld [vmem:[%s0 + $0x168] sm:$0xff]
  %v96 = vld [vmem:[%s0 + $0x170] sm:$0xff]
  %v97 = vld [vmem:[%s0 + $0x178] sm:$0xff]
  %v98 = vld [vmem:[%s0 + $0x180] sm:$0xff]
  %v99 = vld [vmem:[%s0 + $0x188] sm:$0xff]
  %v100 = vld [vmem:[%s0 + $0x190] sm:$0xff]
  %v101 = vld [vmem:[%s0 + $0x198] sm:$0xff]
  %v102 = vld [vmem:[%s0 + $0x1a0] sm:$0xff]
  %v103 = vld [vmem:[%s0 + $0x1a8] sm:$0xff]
  %v104 = vld [vmem:[%s0 + $0x1b0] sm:$0xff]
  %v105 = vld [vmem:[%s0 + $0x1b8] sm:$0xff]
  %v106 = vld [vmem:[%s0 + $0x1c0] sm:$0xff]
  %v107 = vld [vmem:[%s0 + $0x1c8] sm:$0xff]
  %v108 = vld [vmem:[%s0 + $0x1d0] sm:$0xff]
  %v109 = vld [vmem:[%s0 + $0x1d8] sm:$0xff]
  %v110 = vld [vmem:[%s0 + $0x1e0] sm:$0xff]
  %v111 = vld [vmem:[%s0 + $0x1e8] sm:$0xff]
  %v112 = vld [vmem:[%s0 + $0x1f0] sm:$0xff]
  %v113 = vld [vmem:[%s0 + $0x1f8] sm:$0xff]
  %v114 = vld [vmem:[%s2] sm:$0xff]
  %v115 = vld [vmem:[%s2 + $0x8] sm:$0x1]
  %vm116 = vcmask 72704
  %v118 = vsel %vm116, %v50, 0
  %v121 = vsel %vm116, %v51, 0
  %v124 = vsel %vm116, %v52, 0
  %v127 = vsel %vm116, %v53, 0
  %v130 = vsel %vm116, %v54, 0
  %v133 = vsel %vm116, %v55, 0
  %v136 = vsel %vm116, %v56, 0
  %v139 = vsel %vm116, %v57, 0
  %v142 = vsel %vm116, %v58, 0
  %v145 = vsel %vm116, %v59, 0
  %v148 = vsel %vm116, %v60, 0
  %v151 = vsel %vm116, %v61, 0
  %v154 = vsel %vm116, %v62, 0
  %v157 = vsel %vm116, %v63, 0
  %v160 = vsel %vm116, %v64, 0
  %v163 = vsel %vm116, %v65, 0
  %v166 = vsel %vm116, %v66, 0
  %v169 = vsel %vm116, %v67, 0
  %v172 = vsel %vm116, %v68, 0
  %v175 = vsel %vm116, %v69, 0
  %v178 = vsel %vm116, %v70, 0
  %v181 = vsel %vm116, %v71, 0
  %v184 = vsel %vm116, %v72, 0
  %v187 = vsel %vm116, %v73, 0
  %v190 = vsel %vm116, %v74, 0
  %v193 = vsel %vm116, %v75, 0
  %v196 = vsel %vm116, %v76, 0
  %v199 = vsel %vm116, %v77, 0
  %v202 = vsel %vm116, %v78, 0
  %v205 = vsel %vm116, %v79, 0
  %v208 = vsel %vm116, %v80, 0
  %v211 = vsel %vm116, %v81, 0
  %v214 = vsel %vm116, %v82, 0
  %v217 = vsel %vm116, %v83, 0
  %v220 = vsel %vm116, %v84, 0
  %v223 = vsel %vm116, %v85, 0
  %v226 = vsel %vm116, %v86, 0
  %v229 = vsel %vm116, %v87, 0
  %v232 = vsel %vm116, %v88, 0
  %v235 = vsel %vm116, %v89, 0
  %v238 = vsel %vm116, %v90, 0
  %v241 = vsel %vm116, %v91, 0
  %v244 = vsel %vm116, %v92, 0
  %v247 = vsel %vm116, %v93, 0
  %v250 = vsel %vm116, %v94, 0
  %v253 = vsel %vm116, %v95, 0
  %v256 = vsel %vm116, %v96, 0
  %v259 = vsel %vm116, %v97, 0
  %v262 = vsel %vm116, %v98, 0
  %v265 = vsel %vm116, %v99, 0
  %v268 = vsel %vm116, %v100, 0
  %v271 = vsel %vm116, %v101, 0
  %v274 = vsel %vm116, %v102, 0
  %v277 = vsel %vm116, %v103, 0
  %v280 = vsel %vm116, %v104, 0
  %v283 = vsel %vm116, %v105, 0
  %v286 = vsel %vm116, %v106, 0
  %v289 = vsel %vm116, %v107, 0
  %v292 = vsel %vm116, %v108, 0
  %v295 = vsel %vm116, %v109, 0
  %v298 = vsel %vm116, %v110, 0
  %v301 = vsel %vm116, %v111, 0
  %v304 = vsel %vm116, %v112, 0
  %v307 = vsel %vm116, %v113, 0
  %vm309 = vcmask 1040384
  %v311 = vsel %vm309, %v115, 0
  %313 = vmatprep.subr.mxu0 0.0
  %314 = vmatpush1.msra.mxu0 %v114
  %315 = vmatprep.subr.mxu0 0.0
  %316 = vmatpush1.msra.mxu0 %v311
  %317 = vmatprep.subr.mxu0 0.0
  %318 = vmatpush1.msra.mxu0 0.0
  %319 = vmatprep.subr.mxu0 0.0
  %320 = vmatpush1.msra.mxu0 0.0
  %321 = vmatprep.subr.mxu0 0.0
  %322 = vmatpush1.msra.mxu0 0.0
  %323 = vmatprep.subr.mxu0 0.0
  %324 = vmatpush1.msra.mxu0 0.0
  %325 = vmatprep.subr.mxu0 0.0
  %326 = vmatpush1.msra.mxu0 0.0
  %327 = vmatprep.subr.mxu0 0.0
  %328 = vmatpush1.msra.mxu0 0.0
  %329 = vmatprep.subr.mxu0 0.0
  %330 = vmatpush1.msra.mxu0 0.0
  %331 = vmatprep.subr.mxu0 0.0
  %332 = vmatpush1.msra.mxu0 0.0
  %333 = vmatprep.subr.mxu0 0.0
  %334 = vmatpush1.msra.mxu0 0.0
  %335 = vmatprep.subr.mxu0 0.0
  %336 = vmatpush1.msra.mxu0 0.0
  %337 = vmatprep.subr.mxu0 0.0
  %338 = vmatpush1.msra.mxu0 0.0
  %339 = vmatprep.subr.mxu0 0.0
  %340 = vmatpush1.msra.mxu0 0.0
  %341 = vmatprep.subr.mxu0 0.0
  %342 = vmatpush1.msra.mxu0 0.0
  %343 = vmatprep.subr.mxu0 0.0
  %344 = vmatpush1.msra.mxu0 0.0
  %345 = vmatprep.subr.mxu0 0.0
  %346 = vmatpush1.msra.mxu0 0.0
  %347 = vmatprep.subr.mxu0 0.0
  %348 = vmatpush1.msra.mxu0 0.0
  %349 = vmatprep.subr.mxu0 0.0
  %350 = vmatpush1.msra.mxu0 0.0
  %351 = vmatprep.subr.mxu0 0.0
  %352 = vmatpush1.msra.mxu0 0.0
  %353 = vmatprep.subr.mxu0 0.0
  %354 = vmatpush1.msra.mxu0 0.0
  %355 = vmatprep.subr.mxu0 0.0
  %356 = vmatpush1.msra.mxu0 0.0
  %357 = vmatprep.subr.mxu0 0.0
  %358 = vmatpush1.msra.mxu0 0.0
  %359 = vmatprep.subr.mxu0 0.0
  %360 = vmatpush1.msra.mxu0 0.0
  %361 = vmatprep.subr.mxu0 0.0
  %362 = vmatpush1.msra.mxu0 0.0
  %363 = vmatprep.subr.mxu0 0.0
  %364 = vmatpush1.msra.mxu0 0.0
  %365 = vmatprep.subr.mxu0 0.0
  %366 = vmatpush1.msra.mxu0 0.0
  %367 = vmatprep.subr.mxu0 0.0
  %368 = vmatpush1.msra.mxu0 0.0
  %369 = vmatprep.subr.mxu0 0.0
  %370 = vmatpush1.msra.mxu0 0.0
  %371 = vmatprep.subr.mxu0 0.0
  %372 = vmatpush1.msra.mxu0 0.0
  %373 = vmatprep.subr.mxu0 0.0
  %374 = vmatpush1.msra.mxu0 0.0
  %375 = vmatprep.subr.mxu0 0.0
  %376 = vmatpush1.msra.mxu0 0.0
  %377 = vmatprep.mubr.f32.mxu0 0.0
  %378 = vmatmul.mubr.f32.gmra.mrb[0].mxu0 %v118
  %v379 = vpop.f32.mrb[0].mxu0
  %v380 = vadd.f32 0.0, %v379
  %v381 = vpop.f32.mrb[0].mxu0
  %382 = vmatprep.mubr.f32.mxu0 0.0
  %383 = vmatmul.mubr.f32.gmra.mrb[0].mxu0 %v121
  %v384 = vpop.f32.mrb[0].mxu0
  %v385 = vadd.f32 0.0, %v384
  %v386 = vpop.f32.mrb[0].mxu0
  %387 = vmatprep.mubr.f32.mxu0 0.0
  %388 = vmatmul.mubr.f32.gmra.mrb[0].mxu0 %v124
  %v389 = vpop.f32.mrb[0].mxu0
  %v390 = vadd.f32 0.0, %v389
  %v391 = vpop.f32.mrb[0].mxu0
  %392 = vmatprep.mubr.f32.mxu0 0.0
  %393 = vmatmul.mubr.f32.gmra.mrb[0].mxu0 %v127
  %v394 = vpop.f32.mrb[0].mxu0
  %v395 = vadd.f32 0.0, %v394
  %v396 = vpop.f32.mrb[0].mxu0
  %397 = vmatprep.mubr.f32.mxu0 0.0
  %398 = vmatmul.mubr.f32.gmra.mrb[0].mxu0 %v130
  %v399 = vpop.f32.mrb[0].mxu0
  %v400 = vadd.f32 0.0, %v399
  %v401 = vpop.f32.mrb[0].mxu0
  %402 = vmatprep.mubr.f32.mxu0 0.0
  %403 = vmatmul.mubr.f32.gmra.mrb[0].mxu0 %v133
  %v404 = vpop.f32.mrb[0].mxu0
  %v405 = vadd.f32 0.0, %v404
  %v406 = vpop.f32.mrb[0].mxu0
  %407 = vmatprep.mubr.f32.mxu0 0.0
  %408 = vmatmul.mubr.f32.gmra.mrb[0].mxu0 %v136
  %v409 = vpop.f32.mrb[0].mxu0
  %v410 = vadd.f32 0.0, %v409
  %v411 = vpop.f32.mrb[0].mxu0
  %412 = vmatprep.mubr.f32.mxu0 0.0
  %413 = vmatmul.mubr.f32.gmra.mrb[0].mxu0 %v139
  %v414 = vpop.f32.mrb[0].mxu0
  %v415 = vadd.f32 0.0, %v414
  %v416 = vpop.f32.mrb[0].mxu0
  %417 = vmatprep.mubr.f32.mxu0 0.0
  %418 = vmatmul.mubr.f32.gmra.mrb[0].mxu0 %v142
  %v419 = vpop.f32.mrb[0].mxu0
  %v420 = vadd.f32 0.0, %v419
  %v421 = vpop.f32.mrb[0].mxu0
  %422 = vmatprep.mubr.f32.mxu0 0.0
  %423 = vmatmul.mubr.f32.gmra.mrb[0].mxu0 %v145
  %v424 = vpop.f32.mrb[0].mxu0
  %v425 = vadd.f32 0.0, %v424
  %v426 = vpop.f32.mrb[0].mxu0
  %427 = vmatprep.mubr.f32.mxu0 0.0
  %428 = vmatmul.mubr.f32.gmra.mrb[0].mxu0 %v148
  %v429 = vpop.f32.mrb[0].mxu0
  %v430 = vadd.f32 0.0, %v429
  %v431 = vpop.f32.mrb[0].mxu0
  %432 = vmatprep.mubr.f32.mxu0 0.0
  %433 = vmatmul.mubr.f32.gmra.mrb[0].mxu0 %v151
  %v434 = vpop.f32.mrb[0].mxu0
  %v435 = vadd.f32 0.0, %v434
  %v436 = vpop.f32.mrb[0].mxu0
  %437 = vmatprep.mubr.f32.mxu0 0.0
  %438 = vmatmul.mubr.f32.gmra.mrb[0].mxu0 %v154
  %v439 = vpop.f32.mrb[0].mxu0
  %v440 = vadd.f32 0.0, %v439
  %v441 = vpop.f32.mrb[0].mxu0
  %442 = vmatprep.mubr.f32.mxu0 0.0
  %443 = vmatmul.mubr.f32.gmra.mrb[0].mxu0 %v157
  %v444 = vpop.f32.mrb[0].mxu0
  %v445 = vadd.f32 0.0, %v444
  %v446 = vpop.f32.mrb[0].mxu0
  %447 = vmatprep.mubr.f32.mxu0 0.0
  %448 = vmatmul.mubr.f32.gmra.mrb[0].mxu0 %v160
  %v449 = vpop.f32.mrb[0].mxu0
  %v450 = vadd.f32 0.0, %v449
  %v451 = vpop.f32.mrb[0].mxu0
  %452 = vmatprep.mubr.f32.mxu0 0.0
  %453 = vmatmul.mubr.f32.gmra.mrb[0].mxu0 %v163
  %v454 = vpop.f32.mrb[0].mxu0
  %v455 = vadd.f32 0.0, %v454
  %v456 = vpop.f32.mrb[0].mxu0
  %457 = vmatprep.mubr.f32.mxu0 0.0
  %458 = vmatmul.mubr.f32.gmra.mrb[0].mxu0 %v166
  %v459 = vpop.f32.mrb[0].mxu0
  %v460 = vadd.f32 0.0, %v459
  %v461 = vpop.f32.mrb[0].mxu0
  %462 = vmatprep.mubr.f32.mxu0 0.0
  %463 = vmatmul.mubr.f32.gmra.mrb[0].mxu0 %v169
  %v464 = vpop.f32.mrb[0].mxu0
  %v465 = vadd.f32 0.0, %v464
  %v466 = vpop.f32.mrb[0].mxu0
  %467 = vmatprep.mubr.f32.mxu0 0.0
  %468 = vmatmul.mubr.f32.gmra.mrb[0].mxu0 %v172
  %v469 = vpop.f32.mrb[0].mxu0
  %v470 = vadd.f32 0.0, %v469
  %v471 = vpop.f32.mrb[0].mxu0
  %472 = vmatprep.mubr.f32.mxu0 0.0
  %473 = vmatmul.mubr.f32.gmra.mrb[0].mxu0 %v175
  %v474 = vpop.f32.mrb[0].mxu0
  %v475 = vadd.f32 0.0, %v474
  %v476 = vpop.f32.mrb[0].mxu0
  %477 = vmatprep.mubr.f32.mxu0 0.0
  %478 = vmatmul.mubr.f32.gmra.mrb[0].mxu0 %v178
  %v479 = vpop.f32.mrb[0].mxu0
  %v480 = vadd.f32 0.0, %v479
  %v481 = vpop.f32.mrb[0].mxu0
  %482 = vmatprep.mubr.f32.mxu0 0.0
  %483 = vmatmul.mubr.f32.gmra.mrb[0].mxu0 %v181
  %v484 = vpop.f32.mrb[0].mxu0
  %v485 = vadd.f32 0.0, %v484
  %v486 = vpop.f32.mrb[0].mxu0
  %487 = vmatprep.mubr.f32.mxu0 0.0
  %488 = vmatmul.mubr.f32.gmra.mrb[0].mxu0 %v184
  %v489 = vpop.f32.mrb[0].mxu0
  %v490 = vadd.f32 0.0, %v489
  %v491 = vpop.f32.mrb[0].mxu0
  %492 = vmatprep.mubr.f32.mxu0 0.0
  %493 = vmatmul.mubr.f32.gmra.mrb[0].mxu0 %v187
  %v494 = vpop.f32.mrb[0].mxu0
  %v495 = vadd.f32 0.0, %v494
  %v496 = vpop.f32.mrb[0].mxu0
  %497 = vmatprep.mubr.f32.mxu0 0.0
  %498 = vmatmul.mubr.f32.gmra.mrb[0].mxu0 %v190
  %v499 = vpop.f32.mrb[0].mxu0
  %v500 = vadd.f32 0.0, %v499
  %v501 = vpop.f32.mrb[0].mxu0
  %502 = vmatprep.mubr.f32.mxu0 0.0
  %503 = vmatmul.mubr.f32.gmra.mrb[0].mxu0 %v193
  %v504 = vpop.f32.mrb[0].mxu0
  %v505 = vadd.f32 0.0, %v504
  %v506 = vpop.f32.mrb[0].mxu0
  %507 = vmatprep.mubr.f32.mxu0 0.0
  %508 = vmatmul.mubr.f32.gmra.mrb[0].mxu0 %v196
  %v509 = vpop.f32.mrb[0].mxu0
  %v510 = vadd.f32 0.0, %v509
  %v511 = vpop.f32.mrb[0].mxu0
  %512 = vmatprep.mubr.f32.mxu0 0.0
  %513 = vmatmul.mubr.f32.gmra.mrb[0].mxu0 %v199
  %v514 = vpop.f32.mrb[0].mxu0
  %v515 = vadd.f32 0.0, %v514
  %v516 = vpop.f32.mrb[0].mxu0
  %517 = vmatprep.mubr.f32.mxu0 0.0
  %518 = vmatmul.mubr.f32.gmra.mrb[0].mxu0 %v202
  %v519 = vpop.f32.mrb[0].mxu0
  %v520 = vadd.f32 0.0, %v519
  %v521 = vpop.f32.mrb[0].mxu0
  %522 = vmatprep.mubr.f32.mxu0 0.0
  %523 = vmatmul.mubr.f32.gmra.mrb[0].mxu0 %v205
  %v524 = vpop.f32.mrb[0].mxu0
  %v525 = vadd.f32 0.0, %v524
  %v526 = vpop.f32.mrb[0].mxu0
  %527 = vmatprep.mubr.f32.mxu0 0.0
  %528 = vmatmul.mubr.f32.gmra.mrb[0].mxu0 %v208
  %v529 = vpop.f32.mrb[0].mxu0
  %v530 = vadd.f32 0.0, %v529
  %v531 = vpop.f32.mrb[0].mxu0
  %532 = vmatprep.mubr.f32.mxu0 0.0
  %533 = vmatmul.mubr.f32.gmra.mrb[0].mxu0 %v211
  %v534 = vpop.f32.mrb[0].mxu0
  %v535 = vadd.f32 0.0, %v534
  %v536 = vpop.f32.mrb[0].mxu0
  %537 = vmatprep.mubr.f32.mxu0 0.0
  %538 = vmatmul.mubr.f32.gmra.mrb[0].mxu0 %v214
  %v539 = vpop.f32.mrb[0].mxu0
  %v540 = vadd.f32 0.0, %v539
  %v541 = vpop.f32.mrb[0].mxu0
  %542 = vmatprep.mubr.f32.mxu0 0.0
  %543 = vmatmul.mubr.f32.gmra.mrb[0].mxu0 %v217
  %v544 = vpop.f32.mrb[0].mxu0
  %v545 = vadd.f32 0.0, %v544
  %v546 = vpop.f32.mrb[0].mxu0
  %547 = vmatprep.mubr.f32.mxu0 0.0
  %548 = vmatmul.mubr.f32.gmra.mrb[0].mxu0 %v220
  %v549 = vpop.f32.mrb[0].mxu0
  %v550 = vadd.f32 0.0, %v549
  %v551 = vpop.f32.mrb[0].mxu0
  %552 = vmatprep.mubr.f32.mxu0 0.0
  %553 = vmatmul.mubr.f32.gmra.mrb[0].mxu0 %v223
  %v554 = vpop.f32.mrb[0].mxu0
  %v555 = vadd.f32 0.0, %v554
  %v556 = vpop.f32.mrb[0].mxu0
  %557 = vmatprep.mubr.f32.mxu0 0.0
  %558 = vmatmul.mubr.f32.gmra.mrb[0].mxu0 %v226
  %v559 = vpop.f32.mrb[0].mxu0
  %v560 = vadd.f32 0.0, %v559
  %v561 = vpop.f32.mrb[0].mxu0
  %562 = vmatprep.mubr.f32.mxu0 0.0
  %563 = vmatmul.mubr.f32.gmra.mrb[0].mxu0 %v229
  %v564 = vpop.f32.mrb[0].mxu0
  %v565 = vadd.f32 0.0, %v564
  %v566 = vpop.f32.mrb[0].mxu0
  %567 = vmatprep.mubr.f32.mxu0 0.0
  %568 = vmatmul.mubr.f32.gmra.mrb[0].mxu0 %v232
  %v569 = vpop.f32.mrb[0].mxu0
  %v570 = vadd.f32 0.0, %v569
  %v571 = vpop.f32.mrb[0].mxu0
  %572 = vmatprep.mubr.f32.mxu0 0.0
  %573 = vmatmul.mubr.f32.gmra.mrb[0].mxu0 %v235
  %v574 = vpop.f32.mrb[0].mxu0
  %v575 = vadd.f32 0.0, %v574
  %v576 = vpop.f32.mrb[0].mxu0
  %577 = vmatprep.mubr.f32.mxu0 0.0
  %578 = vmatmul.mubr.f32.gmra.mrb[0].mxu0 %v238
  %v579 = vpop.f32.mrb[0].mxu0
  %v580 = vadd.f32 0.0, %v579
  %v581 = vpop.f32.mrb[0].mxu0
  %582 = vmatprep.mubr.f32.mxu0 0.0
  %583 = vmatmul.mubr.f32.gmra.mrb[0].mxu0 %v241
  %v584 = vpop.f32.mrb[0].mxu0
  %v585 = vadd.f32 0.0, %v584
  %v586 = vpop.f32.mrb[0].mxu0
  %587 = vmatprep.mubr.f32.mxu0 0.0
  %588 = vmatmul.mubr.f32.gmra.mrb[0].mxu0 %v244
  %v589 = vpop.f32.mrb[0].mxu0
  %v590 = vadd.f32 0.0, %v589
  %v591 = vpop.f32.mrb[0].mxu0
  %592 = vmatprep.mubr.f32.mxu0 0.0
  %593 = vmatmul.mubr.f32.gmra.mrb[0].mxu0 %v247
  %v594 = vpop.f32.mrb[0].mxu0
  %v595 = vadd.f32 0.0, %v594
  %v596 = vpop.f32.mrb[0].mxu0
  %597 = vmatprep.mubr.f32.mxu0 0.0
  %598 = vmatmul.mubr.f32.gmra.mrb[0].mxu0 %v250
  %v599 = vpop.f32.mrb[0].mxu0
  %v600 = vadd.f32 0.0, %v599
  %v601 = vpop.f32.mrb[0].mxu0
  %602 = vmatprep.mubr.f32.mxu0 0.0
  %603 = vmatmul.mubr.f32.gmra.mrb[0].mxu0 %v253
  %v604 = vpop.f32.mrb[0].mxu0
  %v605 = vadd.f32 0.0, %v604
  %v606 = vpop.f32.mrb[0].mxu0
  %607 = vmatprep.mubr.f32.mxu0 0.0
  %608 = vmatmul.mubr.f32.gmra.mrb[0].mxu0 %v256
  %v609 = vpop.f32.mrb[0].mxu0
  %v610 = vadd.f32 0.0, %v609
  %v611 = vpop.f32.mrb[0].mxu0
  %612 = vmatprep.mubr.f32.mxu0 0.0
  %613 = vmatmul.mubr.f32.gmra.mrb[0].mxu0 %v259
  %v614 = vpop.f32.mrb[0].mxu0
  %v615 = vadd.f32 0.0, %v614
  %v616 = vpop.f32.mrb[0].mxu0
  %617 = vmatprep.mubr.f32.mxu0 0.0
  %618 = vmatmul.mubr.f32.gmra.mrb[0].mxu0 %v262
  %v619 = vpop.f32.mrb[0].mxu0
  %v620 = vadd.f32 0.0, %v619
  %v621 = vpop.f32.mrb[0].mxu0
  %622 = vmatprep.mubr.f32.mxu0 0.0
  %623 = vmatmul.mubr.f32.gmra.mrb[0].mxu0 %v265
  %v624 = vpop.f32.mrb[0].mxu0
  %v625 = vadd.f32 0.0, %v624
  %v626 = vpop.f32.mrb[0].mxu0
  %627 = vmatprep.mubr.f32.mxu0 0.0
  %628 = vmatmul.mubr.f32.gmra.mrb[0].mxu0 %v268
  %v629 = vpop.f32.mrb[0].mxu0
  %v630 = vadd.f32 0.0, %v629
  %v631 = vpop.f32.mrb[0].mxu0
  %632 = vmatprep.mubr.f32.mxu0 0.0
  %633 = vmatmul.mubr.f32.gmra.mrb[0].mxu0 %v271
  %v634 = vpop.f32.mrb[0].mxu0
  %v635 = vadd.f32 0.0, %v634
  %v636 = vpop.f32.mrb[0].mxu0
  %637 = vmatprep.mubr.f32.mxu0 0.0
  %638 = vmatmul.mubr.f32.gmra.mrb[0].mxu0 %v274
  %v639 = vpop.f32.mrb[0].mxu0
  %v640 = vadd.f32 0.0, %v639
  %v641 = vpop.f32.mrb[0].mxu0
  %642 = vmatprep.mubr.f32.mxu0 0.0
  %643 = vmatmul.mubr.f32.gmra.mrb[0].mxu0 %v277
  %v644 = vpop.f32.mrb[0].mxu0
  %v645 = vadd.f32 0.0, %v644
  %v646 = vpop.f32.mrb[0].mxu0
  %647 = vmatprep.mubr.f32.mxu0 0.0
  %648 = vmatmul.mubr.f32.gmra.mrb[0].mxu0 %v280
  %v649 = vpop.f32.mrb[0].mxu0
  %v650 = vadd.f32 0.0, %v649
  %v651 = vpop.f32.mrb[0].mxu0
  %652 = vmatprep.mubr.f32.mxu0 0.0
  %653 = vmatmul.mubr.f32.gmra.mrb[0].mxu0 %v283
  %v654 = vpop.f32.mrb[0].mxu0
  %v655 = vadd.f32 0.0, %v654
  %v656 = vpop.f32.mrb[0].mxu0
  %657 = vmatprep.mubr.f32.mxu0 0.0
  %658 = vmatmul.mubr.f32.gmra.mrb[0].mxu0 %v286
  %v659 = vpop.f32.mrb[0].mxu0
  %v660 = vadd.f32 0.0, %v659
  %v661 = vpop.f32.mrb[0].mxu0
  %662 = vmatprep.mubr.f32.mxu0 0.0
  %663 = vmatmul.mubr.f32.gmra.mrb[0].mxu0 %v289
  %v664 = vpop.f32.mrb[0].mxu0
  %v665 = vadd.f32 0.0, %v664
  %v666 = vpop.f32.mrb[0].mxu0
  %667 = vmatprep.mubr.f32.mxu0 0.0
  %668 = vmatmul.mubr.f32.gmra.mrb[0].mxu0 %v292
  %v669 = vpop.f32.mrb[0].mxu0
  %v670 = vadd.f32 0.0, %v669
  %v671 = vpop.f32.mrb[0].mxu0
  %672 = vmatprep.mubr.f32.mxu0 0.0
  %673 = vmatmul.mubr.f32.gmra.mrb[0].mxu0 %v295
  %v674 = vpop.f32.mrb[0].mxu0
  %v675 = vadd.f32 0.0, %v674
  %v676 = vpop.f32.mrb[0].mxu0
  %677 = vmatprep.mubr.f32.mxu0 0.0
  %678 = vmatmul.mubr.f32.gmra.mrb[0].mxu0 %v298
  %v679 = vpop.f32.mrb[0].mxu0
  %v680 = vadd.f32 0.0, %v679
  %v681 = vpop.f32.mrb[0].mxu0
  %682 = vmatprep.mubr.f32.mxu0 0.0
  %683 = vmatmul.mubr.f32.gmra.mrb[0].mxu0 %v301
  %v684 = vpop.f32.mrb[0].mxu0
  %v685 = vadd.f32 0.0, %v684
  %v686 = vpop.f32.mrb[0].mxu0
  %687 = vmatprep.mubr.f32.mxu0 0.0
  %688 = vmatmul.mubr.f32.gmra.mrb[0].mxu0 %v304
  %v689 = vpop.f32.mrb[0].mxu0
  %v690 = vadd.f32 0.0, %v689
  %v691 = vpop.f32.mrb[0].mxu0
  %692 = vmatprep.mubr.f32.mxu0 0.0
  %693 = vmatmul.mubr.f32.gmra.mrb[0].mxu0 %v307
  %v694 = vpop.f32.mrb[0].mxu0
  %v695 = vadd.f32 0.0, %v694
  %v696 = vpop.f32.mrb[0].mxu0
  %697 = vdwg.mxu0
  %v698 = vmax.f32 %v380, 0.0
  %v699 = vmax.f32 %v385, 0.0
  %v700 = vmax.f32 %v390, 0.0
  %v701 = vmax.f32 %v395, 0.0
  %v702 = vmax.f32 %v400, 0.0
  %v703 = vmax.f32 %v405, 0.0
  %v704 = vmax.f32 %v410, 0.0
  %v705 = vmax.f32 %v415, 0.0
  %v706 = vmax.f32 %v420, 0.0
  %v707 = vmax.f32 %v425, 0.0
  %v708 = vmax.f32 %v430, 0.0
  %v709 = vmax.f32 %v435, 0.0
  %v710 = vmax.f32 %v440, 0.0
  %v711 = vmax.f32 %v445, 0.0
  %v712 = vmax.f32 %v450, 0.0
  %v713 = vmax.f32 %v455, 0.0
  %v714 = vmax.f32 %v460, 0.0
  %v715 = vmax.f32 %v465, 0.0
  %v716 = vmax.f32 %v470, 0.0
  %v717 = vmax.f32 %v475, 0.0
  %v718 = vmax.f32 %v480, 0.0
  %v719 = vmax.f32 %v485, 0.0
  %v720 = vmax.f32 %v490, 0.0
  %v721 = vmax.f32 %v495, 0.0
  %v722 = vmax.f32 %v500, 0.0
  %v723 = vmax.f32 %v505, 0.0
  %v724 = vmax.f32 %v510, 0.0
  %v725 = vmax.f32 %v515, 0.0
  %v726 = vmax.f32 %v520, 0.0
  %v727 = vmax.f32 %v525, 0.0
  %v728 = vmax.f32 %v530, 0.0
  %v729 = vmax.f32 %v535, 0.0
  %v730 = vmax.f32 %v540, 0.0
  %v731 = vmax.f32 %v545, 0.0
  %v732 = vmax.f32 %v550, 0.0
  %v733 = vmax.f32 %v555, 0.0
  %v734 = vmax.f32 %v560, 0.0
  %v735 = vmax.f32 %v565, 0.0
  %v736 = vmax.f32 %v570, 0.0
  %v737 = vmax.f32 %v575, 0.0
  %v738 = vmax.f32 %v580, 0.0
  %v739 = vmax.f32 %v585, 0.0
  %v740 = vmax.f32 %v590, 0.0
  %v741 = vmax.f32 %v595, 0.0
  %v742 = vmax.f32 %v600, 0.0
  %v743 = vmax.f32 %v605, 0.0
  %v744 = vmax.f32 %v610, 0.0
  %v745 = vmax.f32 %v615, 0.0
  %v746 = vmax.f32 %v620, 0.0
  %v747 = vmax.f32 %v625, 0.0
  %v748 = vmax.f32 %v630, 0.0
  %v749 = vmax.f32 %v635, 0.0
  %v750 = vmax.f32 %v640, 0.0
  %v751 = vmax.f32 %v645, 0.0
  %v752 = vmax.f32 %v650, 0.0
  %v753 = vmax.f32 %v655, 0.0
  %v754 = vmax.f32 %v660, 0.0
  %v755 = vmax.f32 %v665, 0.0
  %v756 = vmax.f32 %v670, 0.0
  %v757 = vmax.f32 %v675, 0.0
  %v758 = vmax.f32 %v680, 0.0
  %v759 = vmax.f32 %v685, 0.0
  %v760 = vmax.f32 %v690, 0.0
  %v761 = vmax.f32 %v695, 0.0
  %v762 = vmax.f32 %v698, %v730
  %v763 = vmax.f32 %v699, %v731
  %v764 = vmax.f32 %v700, %v732
  %v765 = vmax.f32 %v701, %v733
  %v766 = vmax.f32 %v702, %v734
  %v767 = vmax.f32 %v703, %v735
  %v768 = vmax.f32 %v704, %v736
  %v769 = vmax.f32 %v705, %v737
  %v770 = vmax.f32 %v706, %v738
  %v771 = vmax.f32 %v707, %v739
  %v772 = vmax.f32 %v708, %v740
  %v773 = vmax.f32 %v709, %v741
  %v774 = vmax.f32 %v710, %v742
  %v775 = vmax.f32 %v711, %v743
  %v776 = vmax.f32 %v712, %v744
  %v777 = vmax.f32 %v713, %v745
  %v778 = vmax.f32 %v714, %v746
  %v779 = vmax.f32 %v715, %v747
  %v780 = vmax.f32 %v716, %v748
  %v781 = vmax.f32 %v717, %v749
  %v782 = vmax.f32 %v718, %v750
  %v783 = vmax.f32 %v719, %v751
  %v784 = vmax.f32 %v720, %v752
  %v785 = vmax.f32 %v721, %v753
  %v786 = vmax.f32 %v722, %v754
  %v787 = vmax.f32 %v723, %v755
  %v788 = vmax.f32 %v724, %v756
  %v789 = vmax.f32 %v725, %v757
  %v790 = vmax.f32 %v726, %v758
  %v791 = vmax.f32 %v727, %v759
  %v792 = vmax.f32 %v728, %v760
  %v793 = vmax.f32 %v729, %v761
  %810 = vrot.lane.b32.xlu0 %v763, 32
  %v811 = vpop.permute.xlu0 %810
  %812 = vrot.lane.b32.xlu0 %v765, 32
  %v813 = vpop.permute.xlu0 %812
  %814 = vrot.lane.b32.xlu0 %v767, 32
  %v815 = vpop.permute.xlu0 %814
  %816 = vrot.lane.b32.xlu0 %v769, 32
  %v817 = vpop.permute.xlu0 %816
  %818 = vrot.lane.b32.xlu0 %v771, 32
  %v819 = vpop.permute.xlu0 %818
  %820 = vrot.lane.b32.xlu0 %v773, 32
  %v821 = vpop.permute.xlu0 %820
  %822 = vrot.lane.b32.xlu0 %v775, 32
  %v823 = vpop.permute.xlu0 %822
  %824 = vrot.lane.b32.xlu0 %v777, 32
  %v825 = vpop.permute.xlu0 %824
  %826 = vrot.lane.b32.xlu0 %v779, 32
  %v827 = vpop.permute.xlu0 %826
  %828 = vrot.lane.b32.xlu0 %v781, 32
  %v829 = vpop.permute.xlu0 %828
  %830 = vrot.lane.b32.xlu0 %v783, 32
  %v831 = vpop.permute.xlu0 %830
  %832 = vrot.lane.b32.xlu0 %v785, 32
  %v833 = vpop.permute.xlu0 %832
  %834 = vrot.lane.b32.xlu0 %v787, 32
  %v835 = vpop.permute.xlu0 %834
  %836 = vrot.lane.b32.xlu0 %v789, 32
  %v837 = vpop.permute.xlu0 %836
  %838 = vrot.lane.b32.xlu0 %v791, 32
  %v839 = vpop.permute.xlu0 %838
  %840 = vrot.lane.b32.xlu0 %v793, 32
  %v841 = vpop.permute.xlu0 %840
  %vm858 = vcmask 261120
  %v859 = vsel %vm858, %v762, %v811
  %v860 = vsel %vm858, %v764, %v813
  %v861 = vsel %vm858, %v766, %v815
  %v862 = vsel %vm858, %v768, %v817
  %v863 = vsel %vm858, %v770, %v819
  %v864 = vsel %vm858, %v772, %v821
  %v865 = vsel %vm858, %v774, %v823
  %v866 = vsel %vm858, %v776, %v825
  %v867 = vsel %vm858, %v778, %v827
  %v868 = vsel %vm858, %v780, %v829
  %v869 = vsel %vm858, %v782, %v831
  %v870 = vsel %vm858, %v784, %v833
  %v871 = vsel %vm858, %v786, %v835
  %v872 = vsel %vm858, %v788, %v837
  %v873 = vsel %vm858, %v790, %v839
  %v874 = vsel %vm858, %v792, %v841
  %v891 = vcombine.high %v859, %v859
  %v893 = vunpack.c.l.s4 1983009808
  %v894 = vunpack.c.0.s8 %v893
  %v895 = vlaneseq
  %v896 = vshrl.u32 %v895, 7
  %v897 = vsub.s32 %v894, %v896
  %v898 = vrot.slane %v859, %v897
  %v900 = vunpack.c.l.s4 1983009808
  %v901 = vunpack.c.0.s8 %v900
  %v902 = vlaneseq
  %v903 = vshrl.u32 %v902, 7
  %v904 = vsub.s32 %v901, %v903
  %v905 = vrot.slane %v891, %v904
  %v906 = vcombine.high %v898, %v898
  %v907 = vcombine.high %v860, %v860
  %v909 = vunpack.c.l.s4 1983009808
  %v910 = vunpack.c.0.s8 %v909
  %v911 = vlaneseq
  %v912 = vshrl.u32 %v911, 7
  %v913 = vsub.s32 %v910, %v912
  %v914 = vrot.slane %v860, %v913
  %v916 = vunpack.c.l.s4 1983009808
  %v917 = vunpack.c.0.s8 %v916
  %v918 = vlaneseq
  %v919 = vshrl.u32 %v918, 7
  %v920 = vsub.s32 %v917, %v919
  %v921 = vrot.slane %v907, %v920
  %v922 = vcombine.high %v914, %v914
  %v923 = vcombine.high %v861, %v861
  %v925 = vunpack.c.l.s4 1983009808
  %v926 = vunpack.c.0.s8 %v925
  %v927 = vlaneseq
  %v928 = vshrl.u32 %v927, 7
  %v929 = vsub.s32 %v926, %v928
  %v930 = vrot.slane %v861, %v929
  %v932 = vunpack.c.l.s4 1983009808
  %v933 = vunpack.c.0.s8 %v932
  %v934 = vlaneseq
  %v935 = vshrl.u32 %v934, 7
  %v936 = vsub.s32 %v933, %v935
  %v937 = vrot.slane %v923, %v936
  %v938 = vcombine.high %v930, %v930
  %v939 = vcombine.high %v862, %v862
  %v941 = vunpack.c.l.s4 1983009808
  %v942 = vunpack.c.0.s8 %v941
  %v943 = vlaneseq
  %v944 = vshrl.u32 %v943, 7
  %v945 = vsub.s32 %v942, %v944
  %v946 = vrot.slane %v862, %v945
  %v948 = vunpack.c.l.s4 1983009808
  %v949 = vunpack.c.0.s8 %v948
  %v950 = vlaneseq
  %v951 = vshrl.u32 %v950, 7
  %v952 = vsub.s32 %v949, %v951
  %v953 = vrot.slane %v939, %v952
  %v954 = vcombine.high %v946, %v946
  %v955 = vcombine.high %v863, %v863
  %v957 = vunpack.c.l.s4 1983009808
  %v958 = vunpack.c.0.s8 %v957
  %v959 = vlaneseq
  %v960 = vshrl.u32 %v959, 7
  %v961 = vsub.s32 %v958, %v960
  %v962 = vrot.slane %v863, %v961
  %v964 = vunpack.c.l.s4 1983009808
  %v965 = vunpack.c.0.s8 %v964
  %v966 = vlaneseq
  %v967 = vshrl.u32 %v966, 7
  %v968 = vsub.s32 %v965, %v967
  %v969 = vrot.slane %v955, %v968
  %v970 = vcombine.high %v962, %v962
  %v971 = vcombine.high %v864, %v864
  %v973 = vunpack.c.l.s4 1983009808
  %v974 = vunpack.c.0.s8 %v973
  %v975 = vlaneseq
  %v976 = vshrl.u32 %v975, 7
  %v977 = vsub.s32 %v974, %v976
  %v978 = vrot.slane %v864, %v977
  %v980 = vunpack.c.l.s4 1983009808
  %v981 = vunpack.c.0.s8 %v980
  %v982 = vlaneseq
  %v983 = vshrl.u32 %v982, 7
  %v984 = vsub.s32 %v981, %v983
  %v985 = vrot.slane %v971, %v984
  %v986 = vcombine.high %v978, %v978
  %v987 = vcombine.high %v865, %v865
  %v989 = vunpack.c.l.s4 1983009808
  %v990 = vunpack.c.0.s8 %v989
  %v991 = vlaneseq
  %v992 = vshrl.u32 %v991, 7
  %v993 = vsub.s32 %v990, %v992
  %v994 = vrot.slane %v865, %v993
  %v996 = vunpack.c.l.s4 1983009808
  %v997 = vunpack.c.0.s8 %v996
  %v998 = vlaneseq
  %v999 = vshrl.u32 %v998, 7
  %v1000 = vsub.s32 %v997, %v999
  %v1001 = vrot.slane %v987, %v1000
  %v1002 = vcombine.high %v994, %v994
  %v1003 = vcombine.high %v866, %v866
  %v1005 = vunpack.c.l.s4 1983009808
  %v1006 = vunpack.c.0.s8 %v1005
  %v1007 = vlaneseq
  %v1008 = vshrl.u32 %v1007, 7
  %v1009 = vsub.s32 %v1006, %v1008
  %v1010 = vrot.slane %v866, %v1009
  %v1012 = vunpack.c.l.s4 1983009808
  %v1013 = vunpack.c.0.s8 %v1012
  %v1014 = vlaneseq
  %v1015 = vshrl.u32 %v1014, 7
  %v1016 = vsub.s32 %v1013, %v1015
  %v1017 = vrot.slane %v1003, %v1016
  %v1018 = vcombine.high %v1010, %v1010
  %v1019 = vcombine.high %v867, %v867
  %v1021 = vunpack.c.l.s4 1983009808
  %v1022 = vunpack.c.0.s8 %v1021
  %v1023 = vlaneseq
  %v1024 = vshrl.u32 %v1023, 7
  %v1025 = vsub.s32 %v1022, %v1024
  %v1026 = vrot.slane %v867, %v1025
  %v1028 = vunpack.c.l.s4 1983009808
  %v1029 = vunpack.c.0.s8 %v1028
  %v1030 = vlaneseq
  %v1031 = vshrl.u32 %v1030, 7
  %v1032 = vsub.s32 %v1029, %v1031
  %v1033 = vrot.slane %v1019, %v1032
  %v1034 = vcombine.high %v1026, %v1026
  %v1035 = vcombine.high %v868, %v868
  %v1037 = vunpack.c.l.s4 1983009808
  %v1038 = vunpack.c.0.s8 %v1037
  %v1039 = vlaneseq
  %v1040 = vshrl.u32 %v1039, 7
  %v1041 = vsub.s32 %v1038, %v1040
  %v1042 = vrot.slane %v868, %v1041
  %v1044 = vunpack.c.l.s4 1983009808
  %v1045 = vunpack.c.0.s8 %v1044
  %v1046 = vlaneseq
  %v1047 = vshrl.u32 %v1046, 7
  %v1048 = vsub.s32 %v1045, %v1047
  %v1049 = vrot.slane %v1035, %v1048
  %v1050 = vcombine.high %v1042, %v1042
  %v1051 = vcombine.high %v869, %v869
  %v1053 = vunpack.c.l.s4 1983009808
  %v1054 = vunpack.c.0.s8 %v1053
  %v1055 = vlaneseq
  %v1056 = vshrl.u32 %v1055, 7
  %v1057 = vsub.s32 %v1054, %v1056
  %v1058 = vrot.slane %v869, %v1057
  %v1060 = vunpack.c.l.s4 1983009808
  %v1061 = vunpack.c.0.s8 %v1060
  %v1062 = vlaneseq
  %v1063 = vshrl.u32 %v1062, 7
  %v1064 = vsub.s32 %v1061, %v1063
  %v1065 = vrot.slane %v1051, %v1064
  %v1066 = vcombine.high %v1058, %v1058
  %v1067 = vcombine.high %v870, %v870
  %v1069 = vunpack.c.l.s4 1983009808
  %v1070 = vunpack.c.0.s8 %v1069
  %v1071 = vlaneseq
  %v1072 = vshrl.u32 %v1071, 7
  %v1073 = vsub.s32 %v1070, %v1072
  %v1074 = vrot.slane %v870, %v1073
  %v1076 = vunpack.c.l.s4 1983009808
  %v1077 = vunpack.c.0.s8 %v1076
  %v1078 = vlaneseq
  %v1079 = vshrl.u32 %v1078, 7
  %v1080 = vsub.s32 %v1077, %v1079
  %v1081 = vrot.slane %v1067, %v1080
  %v1082 = vcombine.high %v1074, %v1074
  %v1083 = vcombine.high %v871, %v871
  %v1085 = vunpack.c.l.s4 1983009808
  %v1086 = vunpack.c.0.s8 %v1085
  %v1087 = vlaneseq
  %v1088 = vshrl.u32 %v1087, 7
  %v1089 = vsub.s32 %v1086, %v1088
  %v1090 = vrot.slane %v871, %v1089
  %v1092 = vunpack.c.l.s4 1983009808
  %v1093 = vunpack.c.0.s8 %v1092
  %v1094 = vlaneseq
  %v1095 = vshrl.u32 %v1094, 7
  %v1096 = vsub.s32 %v1093, %v1095
  %v1097 = vrot.slane %v1083, %v1096
  %v1098 = vcombine.high %v1090, %v1090
  %v1099 = vcombine.high %v872, %v872
  %v1101 = vunpack.c.l.s4 1983009808
  %v1102 = vunpack.c.0.s8 %v1101
  %v1103 = vlaneseq
  %v1104 = vshrl.u32 %v1103, 7
  %v1105 = vsub.s32 %v1102, %v1104
  %v1106 = vrot.slane %v872, %v1105
  %v1108 = vunpack.c.l.s4 1983009808
  %v1109 = vunpack.c.0.s8 %v1108
  %v1110 = vlaneseq
  %v1111 = vshrl.u32 %v1110, 7
  %v1112 = vsub.s32 %v1109, %v1111
  %v1113 = vrot.slane %v1099, %v1112
  %v1114 = vcombine.high %v1106, %v1106
  %v1115 = vcombine.high %v873, %v873
  %v1117 = vunpack.c.l.s4 1983009808
  %v1118 = vunpack.c.0.s8 %v1117
  %v1119 = vlaneseq
  %v1120 = vshrl.u32 %v1119, 7
  %v1121 = vsub.s32 %v1118, %v1120
  %v1122 = vrot.slane %v873, %v1121
  %v1124 = vunpack.c.l.s4 1983009808
  %v1125 = vunpack.c.0.s8 %v1124
  %v1126 = vlaneseq
  %v1127 = vshrl.u32 %v1126, 7
  %v1128 = vsub.s32 %v1125, %v1127
  %v1129 = vrot.slane %v1115, %v1128
  %v1130 = vcombine.high %v1122, %v1122
  %v1131 = vcombine.high %v874, %v874
  %v1133 = vunpack.c.l.s4 1983009808
  %v1134 = vunpack.c.0.s8 %v1133
  %v1135 = vlaneseq
  %v1136 = vshrl.u32 %v1135, 7
  %v1137 = vsub.s32 %v1134, %v1136
  %v1138 = vrot.slane %v874, %v1137
  %v1140 = vunpack.c.l.s4 1983009808
  %v1141 = vunpack.c.0.s8 %v1140
  %v1142 = vlaneseq
  %v1143 = vshrl.u32 %v1142, 7
  %v1144 = vsub.s32 %v1141, %v1143
  %v1145 = vrot.slane %v1131, %v1144
  %v1146 = vcombine.high %v1138, %v1138
  %v1163 = vrot.slane %v762, 1
  %v1164 = vrot.slane %v764, 1
  %v1165 = vrot.slane %v766, 1
  %v1166 = vrot.slane %v768, 1
  %v1167 = vrot.slane %v770, 1
  %v1168 = vrot.slane %v772, 1
  %v1169 = vrot.slane %v774, 1
  %v1170 = vrot.slane %v776, 1
  %v1171 = vrot.slane %v778, 1
  %v1172 = vrot.slane %v780, 1
  %v1173 = vrot.slane %v782, 1
  %v1174 = vrot.slane %v784, 1
  %v1175 = vrot.slane %v786, 1
  %v1176 = vrot.slane %v788, 1
  %v1177 = vrot.slane %v790, 1
  %v1178 = vrot.slane %v792, 1
  %1179 = vrot.lane.b32.xlu0 %v1163, 32
  %v1180 = vpop.permute.xlu0 %1179
  %1181 = vrot.lane.b32.xlu0 %v1164, 32
  %v1182 = vpop.permute.xlu0 %1181
  %1183 = vrot.lane.b32.xlu0 %v1165, 32
  %v1184 = vpop.permute.xlu0 %1183
  %1185 = vrot.lane.b32.xlu0 %v1166, 32
  %v1186 = vpop.permute.xlu0 %1185
  %1187 = vrot.lane.b32.xlu0 %v1167, 32
  %v1188 = vpop.permute.xlu0 %1187
  %1189 = vrot.lane.b32.xlu0 %v1168, 32
  %v1190 = vpop.permute.xlu0 %1189
  %1191 = vrot.lane.b32.xlu0 %v1169, 32
  %v1192 = vpop.permute.xlu0 %1191
  %1193 = vrot.lane.b32.xlu0 %v1170, 32
  %v1194 = vpop.permute.xlu0 %1193
  %1195 = vrot.lane.b32.xlu0 %v1171, 32
  %v1196 = vpop.permute.xlu0 %1195
  %1197 = vrot.lane.b32.xlu0 %v1172, 32
  %v1198 = vpop.permute.xlu0 %1197
  %1199 = vrot.lane.b32.xlu0 %v1173, 32
  %v1200 = vpop.permute.xlu0 %1199
  %1201 = vrot.lane.b32.xlu0 %v1174, 32
  %v1202 = vpop.permute.xlu0 %1201
  %1203 = vrot.lane.b32.xlu0 %v1175, 32
  %v1204 = vpop.permute.xlu0 %1203
  %1205 = vrot.lane.b32.xlu0 %v1176, 32
  %v1206 = vpop.permute.xlu0 %1205
  %1207 = vrot.lane.b32.xlu0 %v1177, 32
  %v1208 = vpop.permute.xlu0 %1207
  %1209 = vrot.lane.b32.xlu0 %v1178, 32
  %v1210 = vpop.permute.xlu0 %1209
  %v1227 = vsel %vm858, %v763, %v1180
  %v1228 = vsel %vm858, %v765, %v1182
  %v1229 = vsel %vm858, %v767, %v1184
  %v1230 = vsel %vm858, %v769, %v1186
  %v1231 = vsel %vm858, %v771, %v1188
  %v1232 = vsel %vm858, %v773, %v1190
  %v1233 = vsel %vm858, %v775, %v1192
  %v1234 = vsel %vm858, %v777, %v1194
  %v1235 = vsel %vm858, %v779, %v1196
  %v1236 = vsel %vm858, %v781, %v1198
  %v1237 = vsel %vm858, %v783, %v1200
  %v1238 = vsel %vm858, %v785, %v1202
  %v1239 = vsel %vm858, %v787, %v1204
  %v1240 = vsel %vm858, %v789, %v1206
  %v1241 = vsel %vm858, %v791, %v1208
  %v1242 = vsel %vm858, %v793, %v1210
  %v1259 = vcombine.high %v1227, %v1227
  %v1261 = vunpack.c.l.s4 1983009808
  %v1262 = vunpack.c.0.s8 %v1261
  %v1263 = vlaneseq
  %v1264 = vshrl.u32 %v1263, 7
  %v1265 = vsub.s32 %v1262, %v1264
  %v1266 = vrot.slane %v1227, %v1265
  %v1268 = vunpack.c.l.s4 1983009808
  %v1269 = vunpack.c.0.s8 %v1268
  %v1270 = vlaneseq
  %v1271 = vshrl.u32 %v1270, 7
  %v1272 = vsub.s32 %v1269, %v1271
  %v1273 = vrot.slane %v1259, %v1272
  %v1274 = vcombine.high %v1266, %v1266
  %v1275 = vcombine.high %v1228, %v1228
  %v1277 = vunpack.c.l.s4 1983009808
  %v1278 = vunpack.c.0.s8 %v1277
  %v1279 = vlaneseq
  %v1280 = vshrl.u32 %v1279, 7
  %v1281 = vsub.s32 %v1278, %v1280
  %v1282 = vrot.slane %v1228, %v1281
  %v1284 = vunpack.c.l.s4 1983009808
  %v1285 = vunpack.c.0.s8 %v1284
  %v1286 = vlaneseq
  %v1287 = vshrl.u32 %v1286, 7
  %v1288 = vsub.s32 %v1285, %v1287
  %v1289 = vrot.slane %v1275, %v1288
  %v1290 = vcombine.high %v1282, %v1282
  %v1291 = vcombine.high %v1229, %v1229
  %v1293 = vunpack.c.l.s4 1983009808
  %v1294 = vunpack.c.0.s8 %v1293
  %v1295 = vlaneseq
  %v1296 = vshrl.u32 %v1295, 7
  %v1297 = vsub.s32 %v1294, %v1296
  %v1298 = vrot.slane %v1229, %v1297
  %v1300 = vunpack.c.l.s4 1983009808
  %v1301 = vunpack.c.0.s8 %v1300
  %v1302 = vlaneseq
  %v1303 = vshrl.u32 %v1302, 7
  %v1304 = vsub.s32 %v1301, %v1303
  %v1305 = vrot.slane %v1291, %v1304
  %v1306 = vcombine.high %v1298, %v1298
  %v1307 = vcombine.high %v1230, %v1230
  %v1309 = vunpack.c.l.s4 1983009808
  %v1310 = vunpack.c.0.s8 %v1309
  %v1311 = vlaneseq
  %v1312 = vshrl.u32 %v1311, 7
  %v1313 = vsub.s32 %v1310, %v1312
  %v1314 = vrot.slane %v1230, %v1313
  %v1316 = vunpack.c.l.s4 1983009808
  %v1317 = vunpack.c.0.s8 %v1316
  %v1318 = vlaneseq
  %v1319 = vshrl.u32 %v1318, 7
  %v1320 = vsub.s32 %v1317, %v1319
  %v1321 = vrot.slane %v1307, %v1320
  %v1322 = vcombine.high %v1314, %v1314
  %v1323 = vcombine.high %v1231, %v1231
  %v1325 = vunpack.c.l.s4 1983009808
  %v1326 = vunpack.c.0.s8 %v1325
  %v1327 = vlaneseq
  %v1328 = vshrl.u32 %v1327, 7
  %v1329 = vsub.s32 %v1326, %v1328
  %v1330 = vrot.slane %v1231, %v1329
  %v1332 = vunpack.c.l.s4 1983009808
  %v1333 = vunpack.c.0.s8 %v1332
  %v1334 = vlaneseq
  %v1335 = vshrl.u32 %v1334, 7
  %v1336 = vsub.s32 %v1333, %v1335
  %v1337 = vrot.slane %v1323, %v1336
  %v1338 = vcombine.high %v1330, %v1330
  %v1339 = vcombine.high %v1232, %v1232
  %v1341 = vunpack.c.l.s4 1983009808
  %v1342 = vunpack.c.0.s8 %v1341
  %v1343 = vlaneseq
  %v1344 = vshrl.u32 %v1343, 7
  %v1345 = vsub.s32 %v1342, %v1344
  %v1346 = vrot.slane %v1232, %v1345
  %v1348 = vunpack.c.l.s4 1983009808
  %v1349 = vunpack.c.0.s8 %v1348
  %v1350 = vlaneseq
  %v1351 = vshrl.u32 %v1350, 7
  %v1352 = vsub.s32 %v1349, %v1351
  %v1353 = vrot.slane %v1339, %v1352
  %v1354 = vcombine.high %v1346, %v1346
  %v1355 = vcombine.high %v1233, %v1233
  %v1357 = vunpack.c.l.s4 1983009808
  %v1358 = vunpack.c.0.s8 %v1357
  %v1359 = vlaneseq
  %v1360 = vshrl.u32 %v1359, 7
  %v1361 = vsub.s32 %v1358, %v1360
  %v1362 = vrot.slane %v1233, %v1361
  %v1364 = vunpack.c.l.s4 1983009808
  %v1365 = vunpack.c.0.s8 %v1364
  %v1366 = vlaneseq
  %v1367 = vshrl.u32 %v1366, 7
  %v1368 = vsub.s32 %v1365, %v1367
  %v1369 = vrot.slane %v1355, %v1368
  %v1370 = vcombine.high %v1362, %v1362
  %v1371 = vcombine.high %v1234, %v1234
  %v1373 = vunpack.c.l.s4 1983009808
  %v1374 = vunpack.c.0.s8 %v1373
  %v1375 = vlaneseq
  %v1376 = vshrl.u32 %v1375, 7
  %v1377 = vsub.s32 %v1374, %v1376
  %v1378 = vrot.slane %v1234, %v1377
  %v1380 = vunpack.c.l.s4 1983009808
  %v1381 = vunpack.c.0.s8 %v1380
  %v1382 = vlaneseq
  %v1383 = vshrl.u32 %v1382, 7
  %v1384 = vsub.s32 %v1381, %v1383
  %v1385 = vrot.slane %v1371, %v1384
  %v1386 = vcombine.high %v1378, %v1378
  %v1387 = vcombine.high %v1235, %v1235
  %v1389 = vunpack.c.l.s4 1983009808
  %v1390 = vunpack.c.0.s8 %v1389
  %v1391 = vlaneseq
  %v1392 = vshrl.u32 %v1391, 7
  %v1393 = vsub.s32 %v1390, %v1392
  %v1394 = vrot.slane %v1235, %v1393
  %v1396 = vunpack.c.l.s4 1983009808
  %v1397 = vunpack.c.0.s8 %v1396
  %v1398 = vlaneseq
  %v1399 = vshrl.u32 %v1398, 7
  %v1400 = vsub.s32 %v1397, %v1399
  %v1401 = vrot.slane %v1387, %v1400
  %v1402 = vcombine.high %v1394, %v1394
  %v1403 = vcombine.high %v1236, %v1236
  %v1405 = vunpack.c.l.s4 1983009808
  %v1406 = vunpack.c.0.s8 %v1405
  %v1407 = vlaneseq
  %v1408 = vshrl.u32 %v1407, 7
  %v1409 = vsub.s32 %v1406, %v1408
  %v1410 = vrot.slane %v1236, %v1409
  %v1412 = vunpack.c.l.s4 1983009808
  %v1413 = vunpack.c.0.s8 %v1412
  %v1414 = vlaneseq
  %v1415 = vshrl.u32 %v1414, 7
  %v1416 = vsub.s32 %v1413, %v1415
  %v1417 = vrot.slane %v1403, %v1416
  %v1418 = vcombine.high %v1410, %v1410
  %v1419 = vcombine.high %v1237, %v1237
  %v1421 = vunpack.c.l.s4 1983009808
  %v1422 = vunpack.c.0.s8 %v1421
  %v1423 = vlaneseq
  %v1424 = vshrl.u32 %v1423, 7
  %v1425 = vsub.s32 %v1422, %v1424
  %v1426 = vrot.slane %v1237, %v1425
  %v1428 = vunpack.c.l.s4 1983009808
  %v1429 = vunpack.c.0.s8 %v1428
  %v1430 = vlaneseq
  %v1431 = vshrl.u32 %v1430, 7
  %v1432 = vsub.s32 %v1429, %v1431
  %v1433 = vrot.slane %v1419, %v1432
  %v1434 = vcombine.high %v1426, %v1426
  %v1435 = vcombine.high %v1238, %v1238
  %v1437 = vunpack.c.l.s4 1983009808
  %v1438 = vunpack.c.0.s8 %v1437
  %v1439 = vlaneseq
  %v1440 = vshrl.u32 %v1439, 7
  %v1441 = vsub.s32 %v1438, %v1440
  %v1442 = vrot.slane %v1238, %v1441
  %v1444 = vunpack.c.l.s4 1983009808
  %v1445 = vunpack.c.0.s8 %v1444
  %v1446 = vlaneseq
  %v1447 = vshrl.u32 %v1446, 7
  %v1448 = vsub.s32 %v1445, %v1447
  %v1449 = vrot.slane %v1435, %v1448
  %v1450 = vcombine.high %v1442, %v1442
  %v1451 = vcombine.high %v1239, %v1239
  %v1453 = vunpack.c.l.s4 1983009808
  %v1454 = vunpack.c.0.s8 %v1453
  %v1455 = vlaneseq
  %v1456 = vshrl.u32 %v1455, 7
  %v1457 = vsub.s32 %v1454, %v1456
  %v1458 = vrot.slane %v1239, %v1457
  %v1460 = vunpack.c.l.s4 1983009808
  %v1461 = vunpack.c.0.s8 %v1460
  %v1462 = vlaneseq
  %v1463 = vshrl.u32 %v1462, 7
  %v1464 = vsub.s32 %v1461, %v1463
  %v1465 = vrot.slane %v1451, %v1464
  %v1466 = vcombine.high %v1458, %v1458
  %v1467 = vcombine.high %v1240, %v1240
  %v1469 = vunpack.c.l.s4 1983009808
  %v1470 = vunpack.c.0.s8 %v1469
  %v1471 = vlaneseq
  %v1472 = vshrl.u32 %v1471, 7
  %v1473 = vsub.s32 %v1470, %v1472
  %v1474 = vrot.slane %v1240, %v1473
  %v1476 = vunpack.c.l.s4 1983009808
  %v1477 = vunpack.c.0.s8 %v1476
  %v1478 = vlaneseq
  %v1479 = vshrl.u32 %v1478, 7
  %v1480 = vsub.s32 %v1477, %v1479
  %v1481 = vrot.slane %v1467, %v1480
  %v1482 = vcombine.high %v1474, %v1474
  %v1483 = vcombine.high %v1241, %v1241
  %v1485 = vunpack.c.l.s4 1983009808
  %v1486 = vunpack.c.0.s8 %v1485
  %v1487 = vlaneseq
  %v1488 = vshrl.u32 %v1487, 7
  %v1489 = vsub.s32 %v1486, %v1488
  %v1490 = vrot.slane %v1241, %v1489
  %v1492 = vunpack.c.l.s4 1983009808
  %v1493 = vunpack.c.0.s8 %v1492
  %v1494 = vlaneseq
  %v1495 = vshrl.u32 %v1494, 7
  %v1496 = vsub.s32 %v1493, %v1495
  %v1497 = vrot.slane %v1483, %v1496
  %v1498 = vcombine.high %v1490, %v1490
  %v1499 = vcombine.high %v1242, %v1242
  %v1501 = vunpack.c.l.s4 1983009808
  %v1502 = vunpack.c.0.s8 %v1501
  %v1503 = vlaneseq
  %v1504 = vshrl.u32 %v1503, 7
  %v1505 = vsub.s32 %v1502, %v1504
  %v1506 = vrot.slane %v1242, %v1505
  %v1508 = vunpack.c.l.s4 1983009808
  %v1509 = vunpack.c.0.s8 %v1508
  %v1510 = vlaneseq
  %v1511 = vshrl.u32 %v1510, 7
  %v1512 = vsub.s32 %v1509, %v1511
  %v1513 = vrot.slane %v1499, %v1512
  %v1514 = vcombine.high %v1506, %v1506
  %v1515 = vld [vmem:[%s3] sm:$0xff]
  %v1516 = vld [vmem:[%s3 + $0x8] sm:$0xff]
  %v1517 = vld [vmem:[%s3 + $0x10] sm:$0xff]
  %v1518 = vld [vmem:[%s3 + $0x18] sm:$0xff]
  %v1519 = vld [vmem:[%s3 + $0x20] sm:$0xff]
  %v1520 = vld [vmem:[%s3 + $0x28] sm:$0xff]
  %v1521 = vld [vmem:[%s3 + $0x30] sm:$0xff]
  %v1522 = vld [vmem:[%s3 + $0x38] sm:$0xff]
  %v1523 = vld [vmem:[%s4] sm:$0x1]
  %v1525 = vlaneseq
  %v1526 = vshrl.u32 %v1525, 7
  %v1527 = vsub.s32 0, %v1526
  %v1528 = vrot.slane %v1523, %v1527
  %v1530 = vcombine.low %v898, %v906
  %v1531 = vcombine.low %v905, %v914
  %v1533 = vunpack.c.l.s4 1983009808
  %v1534 = vunpack.c.0.s8 %v1533
  %v1535 = vlaneseq
  %v1536 = vshrl.u32 %v1535, 7
  %v1537 = vsub.s32 %v1534, %v1536
  %v1538 = vrot.slane %v1530, %v1537
  %v1540 = vunpack.c.l.s4 1983009808
  %v1541 = vunpack.c.0.s8 %v1540
  %v1542 = vlaneseq
  %v1543 = vshrl.u32 %v1542, 7
  %v1544 = vsub.s32 %v1541, %v1543
  %v1545 = vrot.slane %v1531, %v1544
  %v1546 = vcombine.low %v1538, %v1545
  %v1547 = vcombine.low %v922, %v921
  %v1548 = vcombine.low %v930, %v938
  %v1550 = vunpack.c.l.s4 1983009808
  %v1551 = vunpack.c.0.s8 %v1550
  %v1552 = vlaneseq
  %v1553 = vshrl.u32 %v1552, 7
  %v1554 = vsub.s32 %v1551, %v1553
  %v1555 = vrot.slane %v1547, %v1554
  %v1557 = vunpack.c.l.s4 1983009808
  %v1558 = vunpack.c.0.s8 %v1557
  %v1559 = vlaneseq
  %v1560 = vshrl.u32 %v1559, 7
  %v1561 = vsub.s32 %v1558, %v1560
  %v1562 = vrot.slane %v1548, %v1561
  %v1563 = vcombine.low %v1555, %v1562
  %v1564 = vcombine.low %v937, %v946
  %v1565 = vcombine.low %v954, %v953
  %v1567 = vunpack.c.l.s4 1983009808
  %v1568 = vunpack.c.0.s8 %v1567
  %v1569 = vlaneseq
  %v1570 = vshrl.u32 %v1569, 7
  %v1571 = vsub.s32 %v1568, %v1570
  %v1572 = vrot.slane %v1564, %v1571
  %v1574 = vunpack.c.l.s4 1983009808
  %v1575 = vunpack.c.0.s8 %v1574
  %v1576 = vlaneseq
  %v1577 = vshrl.u32 %v1576, 7
  %v1578 = vsub.s32 %v1575, %v1577
  %v1579 = vrot.slane %v1565, %v1578
  %v1580 = vcombine.low %v1572, %v1579
  %v1581 = vcombine.low %v962, %v970
  %v1582 = vcombine.low %v969, %v978
  %v1584 = vunpack.c.l.s4 1983009808
  %v1585 = vunpack.c.0.s8 %v1584
  %v1586 = vlaneseq
  %v1587 = vshrl.u32 %v1586, 7
  %v1588 = vsub.s32 %v1585, %v1587
  %v1589 = vrot.slane %v1581, %v1588
  %v1591 = vunpack.c.l.s4 1983009808
  %v1592 = vunpack.c.0.s8 %v1591
  %v1593 = vlaneseq
  %v1594 = vshrl.u32 %v1593, 7
  %v1595 = vsub.s32 %v1592, %v1594
  %v1596 = vrot.slane %v1582, %v1595
  %v1597 = vcombine.low %v1589, %v1596
  %v1598 = vcombine.low %v986, %v985
  %v1599 = vcombine.low %v994, %v1002
  %v1601 = vunpack.c.l.s4 1983009808
  %v1602 = vunpack.c.0.s8 %v1601
  %v1603 = vlaneseq
  %v1604 = vshrl.u32 %v1603, 7
  %v1605 = vsub.s32 %v1602, %v1604
  %v1606 = vrot.slane %v1598, %v1605
  %v1608 = vunpack.c.l.s4 1983009808
  %v1609 = vunpack.c.0.s8 %v1608
  %v1610 = vlaneseq
  %v1611 = vshrl.u32 %v1610, 7
  %v1612 = vsub.s32 %v1609, %v1611
  %v1613 = vrot.slane %v1599, %v1612
  %v1614 = vcombine.low %v1606, %v1613
  %v1615 = vcombine.low %v1001, %v1010
  %v1616 = vcombine.low %v1018, %v1017
  %v1618 = vunpack.c.l.s4 1983009808
  %v1619 = vunpack.c.0.s8 %v1618
  %v1620 = vlaneseq
  %v1621 = vshrl.u32 %v1620, 7
  %v1622 = vsub.s32 %v1619, %v1621
  %v1623 = vrot.slane %v1615, %v1622
  %v1625 = vunpack.c.l.s4 1983009808
  %v1626 = vunpack.c.0.s8 %v1625
  %v1627 = vlaneseq
  %v1628 = vshrl.u32 %v1627, 7
  %v1629 = vsub.s32 %v1626, %v1628
  %v1630 = vrot.slane %v1616, %v1629
  %v1631 = vcombine.low %v1623, %v1630
  %v1632 = vcombine.low %v1026, %v1034
  %v1633 = vcombine.low %v1033, %v1042
  %v1635 = vunpack.c.l.s4 1983009808
  %v1636 = vunpack.c.0.s8 %v1635
  %v1637 = vlaneseq
  %v1638 = vshrl.u32 %v1637, 7
  %v1639 = vsub.s32 %v1636, %v1638
  %v1640 = vrot.slane %v1632, %v1639
  %v1642 = vunpack.c.l.s4 1983009808
  %v1643 = vunpack.c.0.s8 %v1642
  %v1644 = vlaneseq
  %v1645 = vshrl.u32 %v1644, 7
  %v1646 = vsub.s32 %v1643, %v1645
  %v1647 = vrot.slane %v1633, %v1646
  %v1648 = vcombine.low %v1640, %v1647
  %v1649 = vcombine.low %v1050, %v1049
  %v1650 = vcombine.low %v1058, %v1066
  %v1652 = vunpack.c.l.s4 1983009808
  %v1653 = vunpack.c.0.s8 %v1652
  %v1654 = vlaneseq
  %v1655 = vshrl.u32 %v1654, 7
  %v1656 = vsub.s32 %v1653, %v1655
  %v1657 = vrot.slane %v1649, %v1656
  %v1659 = vunpack.c.l.s4 1983009808
  %v1660 = vunpack.c.0.s8 %v1659
  %v1661 = vlaneseq
  %v1662 = vshrl.u32 %v1661, 7
  %v1663 = vsub.s32 %v1660, %v1662
  %v1664 = vrot.slane %v1650, %v1663
  %v1665 = vcombine.low %v1657, %v1664
  %v1666 = vcombine.low %v1065, %v1074
  %v1667 = vcombine.low %v1082, %v1081
  %v1669 = vunpack.c.l.s4 1983009808
  %v1670 = vunpack.c.0.s8 %v1669
  %v1671 = vlaneseq
  %v1672 = vshrl.u32 %v1671, 7
  %v1673 = vsub.s32 %v1670, %v1672
  %v1674 = vrot.slane %v1666, %v1673
  %v1676 = vunpack.c.l.s4 1983009808
  %v1677 = vunpack.c.0.s8 %v1676
  %v1678 = vlaneseq
  %v1679 = vshrl.u32 %v1678, 7
  %v1680 = vsub.s32 %v1677, %v1679
  %v1681 = vrot.slane %v1667, %v1680
  %v1682 = vcombine.low %v1674, %v1681
  %v1683 = vcombine.low %v1090, %v1098
  %v1684 = vcombine.low %v1097, %v1106
  %v1686 = vunpack.c.l.s4 1983009808
  %v1687 = vunpack.c.0.s8 %v1686
  %v1688 = vlaneseq
  %v1689 = vshrl.u32 %v1688, 7
  %v1690 = vsub.s32 %v1687, %v1689
  %v1691 = vrot.slane %v1683, %v1690
  %v1693 = vunpack.c.l.s4 1983009808
  %v1694 = vunpack.c.0.s8 %v1693
  %v1695 = vlaneseq
  %v1696 = vshrl.u32 %v1695, 7
  %v1697 = vsub.s32 %v1694, %v1696
  %v1698 = vrot.slane %v1684, %v1697
  %v1699 = vcombine.low %v1691, %v1698
  %v1700 = vcombine.low %v1114, %v1113
  %v1701 = vcombine.low %v1122, %v1130
  %v1703 = vunpack.c.l.s4 1983009808
  %v1704 = vunpack.c.0.s8 %v1703
  %v1705 = vlaneseq
  %v1706 = vshrl.u32 %v1705, 7
  %v1707 = vsub.s32 %v1704, %v1706
  %v1708 = vrot.slane %v1700, %v1707
  %v1710 = vunpack.c.l.s4 1983009808
  %v1711 = vunpack.c.0.s8 %v1710
  %v1712 = vlaneseq
  %v1713 = vshrl.u32 %v1712, 7
  %v1714 = vsub.s32 %v1711, %v1713
  %v1715 = vrot.slane %v1701, %v1714
  %v1716 = vcombine.low %v1708, %v1715
  %v1717 = vcombine.low %v1129, %v1138
  %v1718 = vcombine.low %v1146, %v1145
  %v1720 = vunpack.c.l.s4 1983009808
  %v1721 = vunpack.c.0.s8 %v1720
  %v1722 = vlaneseq
  %v1723 = vshrl.u32 %v1722, 7
  %v1724 = vsub.s32 %v1721, %v1723
  %v1725 = vrot.slane %v1717, %v1724
  %v1727 = vunpack.c.l.s4 1983009808
  %v1728 = vunpack.c.0.s8 %v1727
  %v1729 = vlaneseq
  %v1730 = vshrl.u32 %v1729, 7
  %v1731 = vsub.s32 %v1728, %v1730
  %v1732 = vrot.slane %v1718, %v1731
  %v1733 = vcombine.low %v1725, %v1732
  %vm1734 = vcmask 523264
  %v1735 = vsel %vm1734, %v1546, 0
  %v1737 = vsel %vm1734, %v1563, 0
  %v1739 = vsel %vm1734, %v1580, 0
  %v1741 = vsel %vm1734, %v1597, 0
  %v1743 = vsel %vm1734, %v1614, 0
  %v1745 = vsel %vm1734, %v1631, 0
  %v1747 = vsel %vm1734, %v1648, 0
  %v1749 = vsel %vm1734, %v1665, 0
  %v1751 = vsel %vm1734, %v1682, 0
  %v1753 = vsel %vm1734, %v1699, 0
  %v1755 = vsel %vm1734, %v1716, 0
  %v1757 = vsel %vm1734, %v1733, 0
  %1759 = vmatprep.subr.mxu0 0.0
  %1760 = vmatpush1.msra.mxu0 %v1515
  %1761 = vmatprep.subr.mxu0 0.0
  %1762 = vmatpush1.msra.mxu0 %v1516
  %1763 = vmatprep.subr.mxu0 0.0
  %1764 = vmatpush1.msra.mxu0 %v1517
  %1765 = vmatprep.subr.mxu0 0.0
  %1766 = vmatpush1.msra.mxu0 %v1518
  %1767 = vmatprep.subr.mxu0 0.0
  %1768 = vmatpush1.msra.mxu0 %v1519
  %1769 = vmatprep.subr.mxu0 0.0
  %1770 = vmatpush1.msra.mxu0 %v1520
  %1771 = vmatprep.subr.mxu0 0.0
  %1772 = vmatpush1.msra.mxu0 %v1521
  %1773 = vmatprep.subr.mxu0 0.0
  %1774 = vmatpush1.msra.mxu0 %v1522
  %1775 = vmatprep.subr.mxu0 0.0
  %1776 = vmatpush1.msra.mxu0 0.0
  %1777 = vmatprep.subr.mxu0 0.0
  %1778 = vmatpush1.msra.mxu0 0.0
  %1779 = vmatprep.subr.mxu0 0.0
  %1780 = vmatpush1.msra.mxu0 0.0
  %1781 = vmatprep.subr.mxu0 0.0
  %1782 = vmatpush1.msra.mxu0 0.0
  %1783 = vmatprep.subr.mxu0 0.0
  %1784 = vmatpush1.msra.mxu0 0.0
  %1785 = vmatprep.subr.mxu0 0.0
  %1786 = vmatpush1.msra.mxu0 0.0
  %1787 = vmatprep.subr.mxu0 0.0
  %1788 = vmatpush1.msra.mxu0 0.0
  %1789 = vmatprep.subr.mxu0 0.0
  %1790 = vmatpush1.msra.mxu0 0.0
  %1791 = vmatprep.subr.mxu0 0.0
  %1792 = vmatpush1.msra.mxu0 0.0
  %1793 = vmatprep.subr.mxu0 0.0
  %1794 = vmatpush1.msra.mxu0 0.0
  %1795 = vmatprep.subr.mxu0 0.0
  %1796 = vmatpush1.msra.mxu0 0.0
  %1797 = vmatprep.subr.mxu0 0.0
  %1798 = vmatpush1.msra.mxu0 0.0
  %1799 = vmatprep.subr.mxu0 0.0
  %1800 = vmatpush1.msra.mxu0 0.0
  %1801 = vmatprep.subr.mxu0 0.0
  %1802 = vmatpush1.msra.mxu0 0.0
  %1803 = vmatprep.subr.mxu0 0.0
  %1804 = vmatpush1.msra.mxu0 0.0
  %1805 = vmatprep.subr.mxu0 0.0
  %1806 = vmatpush1.msra.mxu0 0.0
  %1807 = vmatprep.subr.mxu0 0.0
  %1808 = vmatpush1.msra.mxu0 0.0
  %1809 = vmatprep.subr.mxu0 0.0
  %1810 = vmatpush1.msra.mxu0 0.0
  %1811 = vmatprep.subr.mxu0 0.0
  %1812 = vmatpush1.msra.mxu0 0.0
  %1813 = vmatprep.subr.mxu0 0.0
  %1814 = vmatpush1.msra.mxu0 0.0
  %1815 = vmatprep.subr.mxu0 0.0
  %1816 = vmatpush1.msra.mxu0 0.0
  %1817 = vmatprep.subr.mxu0 0.0
  %1818 = vmatpush1.msra.mxu0 0.0
  %1819 = vmatprep.subr.mxu0 0.0
  %1820 = vmatpush1.msra.mxu0 0.0
  %1821 = vmatprep.subr.mxu0 0.0
  %1822 = vmatpush1.msra.mxu0 0.0
  %1823 = vmatprep.mubr.f32.mxu0 0.0
  %1824 = vmatmul.mubr.f32.gmra.mrb[0].mxu0 %v1735
  %v1825 = vpop.f32.mrb[0].mxu0
  %v1826 = vadd.f32 %v1528, %v1825
  %v1827 = vpop.f32.mrb[0].mxu0
  %1828 = vmatprep.mubr.f32.mxu0 0.0
  %1829 = vmatmul.mubr.f32.gmra.mrb[0].mxu0 %v1737
  %v1830 = vpop.f32.mrb[0].mxu0
  %v1831 = vadd.f32 %v1528, %v1830
  %v1832 = vpop.f32.mrb[0].mxu0
  %1833 = vmatprep.mubr.f32.mxu0 0.0
  %1834 = vmatmul.mubr.f32.gmra.mrb[0].mxu0 %v1739
  %v1835 = vpop.f32.mrb[0].mxu0
  %v1836 = vadd.f32 %v1528, %v1835
  %v1837 = vpop.f32.mrb[0].mxu0
  %1838 = vmatprep.mubr.f32.mxu0 0.0
  %1839 = vmatmul.mubr.f32.gmra.mrb[0].mxu0 %v1741
  %v1840 = vpop.f32.mrb[0].mxu0
  %v1841 = vadd.f32 %v1528, %v1840
  %v1842 = vpop.f32.mrb[0].mxu0
  %1843 = vmatprep.mubr.f32.mxu0 0.0
  %1844 = vmatmul.mubr.f32.gmra.mrb[0].mxu0 %v1743
  %v1845 = vpop.f32.mrb[0].mxu0
  %v1846 = vadd.f32 %v1528, %v1845
  %v1847 = vpop.f32.mrb[0].mxu0
  %1848 = vmatprep.mubr.f32.mxu0 0.0
  %1849 = vmatmul.mubr.f32.gmra.mrb[0].mxu0 %v1745
  %v1850 = vpop.f32.mrb[0].mxu0
  %v1851 = vadd.f32 %v1528, %v1850
  %v1852 = vpop.f32.mrb[0].mxu0
  %1853 = vmatprep.mubr.f32.mxu0 0.0
  %1854 = vmatmul.mubr.f32.gmra.mrb[0].mxu0 %v1747
  %v1855 = vpop.f32.mrb[0].mxu0
  %v1856 = vadd.f32 %v1528, %v1855
  %v1857 = vpop.f32.mrb[0].mxu0
  %1858 = vmatprep.mubr.f32.mxu0 0.0
  %1859 = vmatmul.mubr.f32.gmra.mrb[0].mxu0 %v1749
  %v1860 = vpop.f32.mrb[0].mxu0
  %v1861 = vadd.f32 %v1528, %v1860
  %v1862 = vpop.f32.mrb[0].mxu0
  %1863 = vmatprep.mubr.f32.mxu0 0.0
  %1864 = vmatmul.mubr.f32.gmra.mrb[0].mxu0 %v1751
  %v1865 = vpop.f32.mrb[0].mxu0
  %v1866 = vadd.f32 %v1528, %v1865
  %v1867 = vpop.f32.mrb[0].mxu0
  %1868 = vmatprep.mubr.f32.mxu0 0.0
  %1869 = vmatmul.mubr.f32.gmra.mrb[0].mxu0 %v1753
  %v1870 = vpop.f32.mrb[0].mxu0
  %v1871 = vadd.f32 %v1528, %v1870
  %v1872 = vpop.f32.mrb[0].mxu0
  %1873 = vmatprep.mubr.f32.mxu0 0.0
  %1874 = vmatmul.mubr.f32.gmra.mrb[0].mxu0 %v1755
  %v1875 = vpop.f32.mrb[0].mxu0
  %v1876 = vadd.f32 %v1528, %v1875
  %v1877 = vpop.f32.mrb[0].mxu0
  %1878 = vmatprep.mubr.f32.mxu0 0.0
  %1879 = vmatmul.mubr.f32.gmra.mrb[0].mxu0 %v1757
  %v1880 = vpop.f32.mrb[0].mxu0
  %v1881 = vadd.f32 %v1528, %v1880
  %v1882 = vpop.f32.mrb[0].mxu0
  %1883 = vdwg.mxu0
  %v1884 = vmax.f32 %v1826, 0.0
  %v1885 = vmax.f32 %v1831, 0.0
  %v1886 = vmax.f32 %v1836, 0.0
  %v1887 = vmax.f32 %v1841, 0.0
  %v1888 = vmax.f32 %v1846, 0.0
  %v1889 = vmax.f32 %v1851, 0.0
  %v1890 = vmax.f32 %v1856, 0.0
  %v1891 = vmax.f32 %v1861, 0.0
  %v1892 = vmax.f32 %v1866, 0.0
  %v1893 = vmax.f32 %v1871, 0.0
  %v1894 = vmax.f32 %v1876, 0.0
  %v1895 = vmax.f32 %v1881, 0.0
  %v1896 = vcombine.low %v1266, %v1274
  %v1897 = vcombine.low %v1273, %v1282
  %v1899 = vunpack.c.l.s4 1983009808
  %v1900 = vunpack.c.0.s8 %v1899
  %v1901 = vlaneseq
  %v1902 = vshrl.u32 %v1901, 7
  %v1903 = vsub.s32 %v1900, %v1902
  %v1904 = vrot.slane %v1896, %v1903
  %v1906 = vunpack.c.l.s4 1983009808
  %v1907 = vunpack.c.0.s8 %v1906
  %v1908 = vlaneseq
  %v1909 = vshrl.u32 %v1908, 7
  %v1910 = vsub.s32 %v1907, %v1909
  %v1911 = vrot.slane %v1897, %v1910
  %v1912 = vcombine.low %v1904, %v1911
  %v1913 = vcombine.low %v1290, %v1289
  %v1914 = vcombine.low %v1298, %v1306
  %v1916 = vunpack.c.l.s4 1983009808
  %v1917 = vunpack.c.0.s8 %v1916
  %v1918 = vlaneseq
  %v1919 = vshrl.u32 %v1918, 7
  %v1920 = vsub.s32 %v1917, %v1919
  %v1921 = vrot.slane %v1913, %v1920
  %v1923 = vunpack.c.l.s4 1983009808
  %v1924 = vunpack.c.0.s8 %v1923
  %v1925 = vlaneseq
  %v1926 = vshrl.u32 %v1925, 7
  %v1927 = vsub.s32 %v1924, %v1926
  %v1928 = vrot.slane %v1914, %v1927
  %v1929 = vcombine.low %v1921, %v1928
  %v1930 = vcombine.low %v1305, %v1314
  %v1931 = vcombine.low %v1322, %v1321
  %v1933 = vunpack.c.l.s4 1983009808
  %v1934 = vunpack.c.0.s8 %v1933
  %v1935 = vlaneseq
  %v1936 = vshrl.u32 %v1935, 7
  %v1937 = vsub.s32 %v1934, %v1936
  %v1938 = vrot.slane %v1930, %v1937
  %v1940 = vunpack.c.l.s4 1983009808
  %v1941 = vunpack.c.0.s8 %v1940
  %v1942 = vlaneseq
  %v1943 = vshrl.u32 %v1942, 7
  %v1944 = vsub.s32 %v1941, %v1943
  %v1945 = vrot.slane %v1931, %v1944
  %v1946 = vcombine.low %v1938, %v1945
  %v1947 = vcombine.low %v1330, %v1338
  %v1948 = vcombine.low %v1337, %v1346
  %v1950 = vunpack.c.l.s4 1983009808
  %v1951 = vunpack.c.0.s8 %v1950
  %v1952 = vlaneseq
  %v1953 = vshrl.u32 %v1952, 7
  %v1954 = vsub.s32 %v1951, %v1953
  %v1955 = vrot.slane %v1947, %v1954
  %v1957 = vunpack.c.l.s4 1983009808
  %v1958 = vunpack.c.0.s8 %v1957
  %v1959 = vlaneseq
  %v1960 = vshrl.u32 %v1959, 7
  %v1961 = vsub.s32 %v1958, %v1960
  %v1962 = vrot.slane %v1948, %v1961
  %v1963 = vcombine.low %v1955, %v1962
  %v1964 = vcombine.low %v1354, %v1353
  %v1965 = vcombine.low %v1362, %v1370
  %v1967 = vunpack.c.l.s4 1983009808
  %v1968 = vunpack.c.0.s8 %v1967
  %v1969 = vlaneseq
  %v1970 = vshrl.u32 %v1969, 7
  %v1971 = vsub.s32 %v1968, %v1970
  %v1972 = vrot.slane %v1964, %v1971
  %v1974 = vunpack.c.l.s4 1983009808
  %v1975 = vunpack.c.0.s8 %v1974
  %v1976 = vlaneseq
  %v1977 = vshrl.u32 %v1976, 7
  %v1978 = vsub.s32 %v1975, %v1977
  %v1979 = vrot.slane %v1965, %v1978
  %v1980 = vcombine.low %v1972, %v1979
  %v1981 = vcombine.low %v1369, %v1378
  %v1982 = vcombine.low %v1386, %v1385
  %v1984 = vunpack.c.l.s4 1983009808
  %v1985 = vunpack.c.0.s8 %v1984
  %v1986 = vlaneseq
  %v1987 = vshrl.u32 %v1986, 7
  %v1988 = vsub.s32 %v1985, %v1987
  %v1989 = vrot.slane %v1981, %v1988
  %v1991 = vunpack.c.l.s4 1983009808
  %v1992 = vunpack.c.0.s8 %v1991
  %v1993 = vlaneseq
  %v1994 = vshrl.u32 %v1993, 7
  %v1995 = vsub.s32 %v1992, %v1994
  %v1996 = vrot.slane %v1982, %v1995
  %v1997 = vcombine.low %v1989, %v1996
  %v1998 = vcombine.low %v1394, %v1402
  %v1999 = vcombine.low %v1401, %v1410
  %v2001 = vunpack.c.l.s4 1983009808
  %v2002 = vunpack.c.0.s8 %v2001
  %v2003 = vlaneseq
  %v2004 = vshrl.u32 %v2003, 7
  %v2005 = vsub.s32 %v2002, %v2004
  %v2006 = vrot.slane %v1998, %v2005
  %v2008 = vunpack.c.l.s4 1983009808
  %v2009 = vunpack.c.0.s8 %v2008
  %v2010 = vlaneseq
  %v2011 = vshrl.u32 %v2010, 7
  %v2012 = vsub.s32 %v2009, %v2011
  %v2013 = vrot.slane %v1999, %v2012
  %v2014 = vcombine.low %v2006, %v2013
  %v2015 = vcombine.low %v1418, %v1417
  %v2016 = vcombine.low %v1426, %v1434
  %v2018 = vunpack.c.l.s4 1983009808
  %v2019 = vunpack.c.0.s8 %v2018
  %v2020 = vlaneseq
  %v2021 = vshrl.u32 %v2020, 7
  %v2022 = vsub.s32 %v2019, %v2021
  %v2023 = vrot.slane %v2015, %v2022
  %v2025 = vunpack.c.l.s4 1983009808
  %v2026 = vunpack.c.0.s8 %v2025
  %v2027 = vlaneseq
  %v2028 = vshrl.u32 %v2027, 7
  %v2029 = vsub.s32 %v2026, %v2028
  %v2030 = vrot.slane %v2016, %v2029
  %v2031 = vcombine.low %v2023, %v2030
  %v2032 = vcombine.low %v1433, %v1442
  %v2033 = vcombine.low %v1450, %v1449
  %v2035 = vunpack.c.l.s4 1983009808
  %v2036 = vunpack.c.0.s8 %v2035
  %v2037 = vlaneseq
  %v2038 = vshrl.u32 %v2037, 7
  %v2039 = vsub.s32 %v2036, %v2038
  %v2040 = vrot.slane %v2032, %v2039
  %v2042 = vunpack.c.l.s4 1983009808
  %v2043 = vunpack.c.0.s8 %v2042
  %v2044 = vlaneseq
  %v2045 = vshrl.u32 %v2044, 7
  %v2046 = vsub.s32 %v2043, %v2045
  %v2047 = vrot.slane %v2033, %v2046
  %v2048 = vcombine.low %v2040, %v2047
  %v2049 = vcombine.low %v1458, %v1466
  %v2050 = vcombine.low %v1465, %v1474
  %v2052 = vunpack.c.l.s4 1983009808
  %v2053 = vunpack.c.0.s8 %v2052
  %v2054 = vlaneseq
  %v2055 = vshrl.u32 %v2054, 7
  %v2056 = vsub.s32 %v2053, %v2055
  %v2057 = vrot.slane %v2049, %v2056
  %v2059 = vunpack.c.l.s4 1983009808
  %v2060 = vunpack.c.0.s8 %v2059
  %v2061 = vlaneseq
  %v2062 = vshrl.u32 %v2061, 7
  %v2063 = vsub.s32 %v2060, %v2062
  %v2064 = vrot.slane %v2050, %v2063
  %v2065 = vcombine.low %v2057, %v2064
  %v2066 = vcombine.low %v1482, %v1481
  %v2067 = vcombine.low %v1490, %v1498
  %v2069 = vunpack.c.l.s4 1983009808
  %v2070 = vunpack.c.0.s8 %v2069
  %v2071 = vlaneseq
  %v2072 = vshrl.u32 %v2071, 7
  %v2073 = vsub.s32 %v2070, %v2072
  %v2074 = vrot.slane %v2066, %v2073
  %v2076 = vunpack.c.l.s4 1983009808
  %v2077 = vunpack.c.0.s8 %v2076
  %v2078 = vlaneseq
  %v2079 = vshrl.u32 %v2078, 7
  %v2080 = vsub.s32 %v2077, %v2079
  %v2081 = vrot.slane %v2067, %v2080
  %v2082 = vcombine.low %v2074, %v2081
  %v2083 = vcombine.low %v1497, %v1506
  %v2084 = vcombine.low %v1514, %v1513
  %v2086 = vunpack.c.l.s4 1983009808
  %v2087 = vunpack.c.0.s8 %v2086
  %v2088 = vlaneseq
  %v2089 = vshrl.u32 %v2088, 7
  %v2090 = vsub.s32 %v2087, %v2089
  %v2091 = vrot.slane %v2083, %v2090
  %v2093 = vunpack.c.l.s4 1983009808
  %v2094 = vunpack.c.0.s8 %v2093
  %v2095 = vlaneseq
  %v2096 = vshrl.u32 %v2095, 7
  %v2097 = vsub.s32 %v2094, %v2096
  %v2098 = vrot.slane %v2084, %v2097
  %v2099 = vcombine.low %v2091, %v2098
  %v2100 = vsel %vm1734, %v1912, 0
  %v2102 = vsel %vm1734, %v1929, 0
  %v2104 = vsel %vm1734, %v1946, 0
  %v2106 = vsel %vm1734, %v1963, 0
  %v2108 = vsel %vm1734, %v1980, 0
  %v2110 = vsel %vm1734, %v1997, 0
  %v2112 = vsel %vm1734, %v2014, 0
  %v2114 = vsel %vm1734, %v2031, 0
  %v2116 = vsel %vm1734, %v2048, 0
  %v2118 = vsel %vm1734, %v2065, 0
  %v2120 = vsel %vm1734, %v2082, 0
  %v2122 = vsel %vm1734, %v2099, 0
  %2124 = vmatprep.subr.mxu0 0.0
  %2125 = vmatpush1.msra.mxu0 %v1515
  %2126 = vmatprep.subr.mxu0 0.0
  %2127 = vmatpush1.msra.mxu0 %v1516
  %2128 = vmatprep.subr.mxu0 0.0
  %2129 = vmatpush1.msra.mxu0 %v1517
  %2130 = vmatprep.subr.mxu0 0.0
  %2131 = vmatpush1.msra.mxu0 %v1518
  %2132 = vmatprep.subr.mxu0 0.0
  %2133 = vmatpush1.msra.mxu0 %v1519
  %2134 = vmatprep.subr.mxu0 0.0
  %2135 = vmatpush1.msra.mxu0 %v1520
  %2136 = vmatprep.subr.mxu0 0.0
  %2137 = vmatpush1.msra.mxu0 %v1521
  %2138 = vmatprep.subr.mxu0 0.0
  %2139 = vmatpush1.msra.mxu0 %v1522
  %2140 = vmatprep.subr.mxu0 0.0
  %2141 = vmatpush1.msra.mxu0 0.0
  %2142 = vmatprep.subr.mxu0 0.0
  %2143 = vmatpush1.msra.mxu0 0.0
  %2144 = vmatprep.subr.mxu0 0.0
  %2145 = vmatpush1.msra.mxu0 0.0
  %2146 = vmatprep.subr.mxu0 0.0
  %2147 = vmatpush1.msra.mxu0 0.0
  %2148 = vmatprep.subr.mxu0 0.0
  %2149 = vmatpush1.msra.mxu0 0.0
  %2150 = vmatprep.subr.mxu0 0.0
  %2151 = vmatpush1.msra.mxu0 0.0
  %2152 = vmatprep.subr.mxu0 0.0
  %2153 = vmatpush1.msra.mxu0 0.0
  %2154 = vmatprep.subr.mxu0 0.0
  %2155 = vmatpush1.msra.mxu0 0.0
  %2156 = vmatprep.subr.mxu0 0.0
  %2157 = vmatpush1.msra.mxu0 0.0
  %2158 = vmatprep.subr.mxu0 0.0
  %2159 = vmatpush1.msra.mxu0 0.0
  %2160 = vmatprep.subr.mxu0 0.0
  %2161 = vmatpush1.msra.mxu0 0.0
  %2162 = vmatprep.subr.mxu0 0.0
  %2163 = vmatpush1.msra.mxu0 0.0
  %2164 = vmatprep.subr.mxu0 0.0
  %2165 = vmatpush1.msra.mxu0 0.0
  %2166 = vmatprep.subr.mxu0 0.0
  %2167 = vmatpush1.msra.mxu0 0.0
  %2168 = vmatprep.subr.mxu0 0.0
  %2169 = vmatpush1.msra.mxu0 0.0
  %2170 = vmatprep.subr.mxu0 0.0
  %2171 = vmatpush1.msra.mxu0 0.0
  %2172 = vmatprep.subr.mxu0 0.0
  %2173 = vmatpush1.msra.mxu0 0.0
  %2174 = vmatprep.subr.mxu0 0.0
  %2175 = vmatpush1.msra.mxu0 0.0
  %2176 = vmatprep.subr.mxu0 0.0
  %2177 = vmatpush1.msra.mxu0 0.0
  %2178 = vmatprep.subr.mxu0 0.0
  %2179 = vmatpush1.msra.mxu0 0.0
  %2180 = vmatprep.subr.mxu0 0.0
  %2181 = vmatpush1.msra.mxu0 0.0
  %2182 = vmatprep.subr.mxu0 0.0
  %2183 = vmatpush1.msra.mxu0 0.0
  %2184 = vmatprep.subr.mxu0 0.0
  %2185 = vmatpush1.msra.mxu0 0.0
  %2186 = vmatprep.subr.mxu0 0.0
  %2187 = vmatpush1.msra.mxu0 0.0
  %2188 = vmatprep.mubr.f32.mxu0 0.0
  %2189 = vmatmul.mubr.f32.gmra.mrb[0].mxu0 %v2100
  %v2190 = vpop.f32.mrb[0].mxu0
  %v2191 = vadd.f32 %v1528, %v2190
  %v2192 = vpop.f32.mrb[0].mxu0
  %2193 = vmatprep.mubr.f32.mxu0 0.0
  %2194 = vmatmul.mubr.f32.gmra.mrb[0].mxu0 %v2102
  %v2195 = vpop.f32.mrb[0].mxu0
  %v2196 = vadd.f32 %v1528, %v2195
  %v2197 = vpop.f32.mrb[0].mxu0
  %2198 = vmatprep.mubr.f32.mxu0 0.0
  %2199 = vmatmul.mubr.f32.gmra.mrb[0].mxu0 %v2104
  %v2200 = vpop.f32.mrb[0].mxu0
  %v2201 = vadd.f32 %v1528, %v2200
  %v2202 = vpop.f32.mrb[0].mxu0
  %2203 = vmatprep.mubr.f32.mxu0 0.0
  %2204 = vmatmul.mubr.f32.gmra.mrb[0].mxu0 %v2106
  %v2205 = vpop.f32.mrb[0].mxu0
  %v2206 = vadd.f32 %v1528, %v2205
  %v2207 = vpop.f32.mrb[0].mxu0
  %2208 = vmatprep.mubr.f32.mxu0 0.0
  %2209 = vmatmul.mubr.f32.gmra.mrb[0].mxu0 %v2108
  %v2210 = vpop.f32.mrb[0].mxu0
  %v2211 = vadd.f32 %v1528, %v2210
  %v2212 = vpop.f32.mrb[0].mxu0
  %2213 = vmatprep.mubr.f32.mxu0 0.0
  %2214 = vmatmul.mubr.f32.gmra.mrb[0].mxu0 %v2110
  %v2215 = vpop.f32.mrb[0].mxu0
  %v2216 = vadd.f32 %v1528, %v2215
  %v2217 = vpop.f32.mrb[0].mxu0
  %2218 = vmatprep.mubr.f32.mxu0 0.0
  %2219 = vmatmul.mubr.f32.gmra.mrb[0].mxu0 %v2112
  %v2220 = vpop.f32.mrb[0].mxu0
  %v2221 = vadd.f32 %v1528, %v2220
  %v2222 = vpop.f32.mrb[0].mxu0
  %2223 = vmatprep.mubr.f32.mxu0 0.0
  %2224 = vmatmul.mubr.f32.gmra.mrb[0].mxu0 %v2114
  %v2225 = vpop.f32.mrb[0].mxu0
  %v2226 = vadd.f32 %v1528, %v2225
  %v2227 = vpop.f32.mrb[0].mxu0
  %2228 = vmatprep.mubr.f32.mxu0 0.0
  %2229 = vmatmul.mubr.f32.gmra.mrb[0].mxu0 %v2116
  %v2230 = vpop.f32.mrb[0].mxu0
  %v2231 = vadd.f32 %v1528, %v2230
  %v2232 = vpop.f32.mrb[0].mxu0
  %2233 = vmatprep.mubr.f32.mxu0 0.0
  %2234 = vmatmul.mubr.f32.gmra.mrb[0].mxu0 %v2118
  %v2235 = vpop.f32.mrb[0].mxu0
  %v2236 = vadd.f32 %v1528, %v2235
  %v2237 = vpop.f32.mrb[0].mxu0
  %2238 = vmatprep.mubr.f32.mxu0 0.0
  %2239 = vmatmul.mubr.f32.gmra.mrb[0].mxu0 %v2120
  %v2240 = vpop.f32.mrb[0].mxu0
  %v2241 = vadd.f32 %v1528, %v2240
  %v2242 = vpop.f32.mrb[0].mxu0
  %2243 = vmatprep.mubr.f32.mxu0 0.0
  %2244 = vmatmul.mubr.f32.gmra.mrb[0].mxu0 %v2122
  %v2245 = vpop.f32.mrb[0].mxu0
  %v2246 = vadd.f32 %v1528, %v2245
  %v2247 = vpop.f32.mrb[0].mxu0
  %2248 = vdwg.mxu0
  %v2249 = vmax.f32 %v2191, 0.0
  %v2250 = vmax.f32 %v2196, 0.0
  %v2251 = vmax.f32 %v2201, 0.0
  %v2252 = vmax.f32 %v2206, 0.0
  %v2253 = vmax.f32 %v2211, 0.0
  %v2254 = vmax.f32 %v2216, 0.0
  %v2255 = vmax.f32 %v2221, 0.0
  %v2256 = vmax.f32 %v2226, 0.0
  %v2257 = vmax.f32 %v2231, 0.0
  %v2258 = vmax.f32 %v2236, 0.0
  %v2259 = vmax.f32 %v2241, 0.0
  %v2260 = vmax.f32 %v2246, 0.0
  %v2261 = vmax.f32 %v1884, %v2249
  %v2262 = vmax.f32 %v1885, %v2250
  %v2263 = vmax.f32 %v1886, %v2251
  %v2264 = vmax.f32 %v1887, %v2252
  %v2265 = vmax.f32 %v1888, %v2253
  %v2266 = vmax.f32 %v1889, %v2254
  %v2267 = vmax.f32 %v1890, %v2255
  %v2268 = vmax.f32 %v1891, %v2256
  %v2269 = vmax.f32 %v1892, %v2257
  %v2270 = vmax.f32 %v1893, %v2258
  %v2271 = vmax.f32 %v1894, %v2259
  %v2272 = vmax.f32 %v1895, %v2260
  %v2285 = vcombine.high %v2261, %v2261
  %v2287 = vunpack.c.l.s4 1983009808
  %v2288 = vunpack.c.0.s8 %v2287
  %v2289 = vlaneseq
  %v2290 = vshrl.u32 %v2289, 7
  %v2291 = vsub.s32 %v2288, %v2290
  %v2292 = vrot.slane %v2261, %v2291
  %v2294 = vunpack.c.l.s4 1983009808
  %v2295 = vunpack.c.0.s8 %v2294
  %v2296 = vlaneseq
  %v2297 = vshrl.u32 %v2296, 7
  %v2298 = vsub.s32 %v2295, %v2297
  %v2299 = vrot.slane %v2285, %v2298
  %v2300 = vcombine.high %v2292, %v2292
  %v2301 = vcombine.high %v2299, %v2299
  %v2302 = vcombine.high %v2262, %v2262
  %v2304 = vunpack.c.l.s4 1983009808
  %v2305 = vunpack.c.0.s8 %v2304
  %v2306 = vlaneseq
  %v2307 = vshrl.u32 %v2306, 7
  %v2308 = vsub.s32 %v2305, %v2307
  %v2309 = vrot.slane %v2262, %v2308
  %v2311 = vunpack.c.l.s4 1983009808
  %v2312 = vunpack.c.0.s8 %v2311
  %v2313 = vlaneseq
  %v2314 = vshrl.u32 %v2313, 7
  %v2315 = vsub.s32 %v2312, %v2314
  %v2316 = vrot.slane %v2302, %v2315
  %v2317 = vcombine.high %v2309, %v2309
  %v2318 = vcombine.high %v2316, %v2316
  %v2319 = vcombine.high %v2263, %v2263
  %v2321 = vunpack.c.l.s4 1983009808
  %v2322 = vunpack.c.0.s8 %v2321
  %v2323 = vlaneseq
  %v2324 = vshrl.u32 %v2323, 7
  %v2325 = vsub.s32 %v2322, %v2324
  %v2326 = vrot.slane %v2263, %v2325
  %v2328 = vunpack.c.l.s4 1983009808
  %v2329 = vunpack.c.0.s8 %v2328
  %v2330 = vlaneseq
  %v2331 = vshrl.u32 %v2330, 7
  %v2332 = vsub.s32 %v2329, %v2331
  %v2333 = vrot.slane %v2319, %v2332
  %v2334 = vcombine.high %v2326, %v2326
  %v2335 = vcombine.high %v2333, %v2333
  %v2336 = vcombine.high %v2264, %v2264
  %v2338 = vunpack.c.l.s4 1983009808
  %v2339 = vunpack.c.0.s8 %v2338
  %v2340 = vlaneseq
  %v2341 = vshrl.u32 %v2340, 7
  %v2342 = vsub.s32 %v2339, %v2341
  %v2343 = vrot.slane %v2264, %v2342
  %v2345 = vunpack.c.l.s4 1983009808
  %v2346 = vunpack.c.0.s8 %v2345
  %v2347 = vlaneseq
  %v2348 = vshrl.u32 %v2347, 7
  %v2349 = vsub.s32 %v2346, %v2348
  %v2350 = vrot.slane %v2336, %v2349
  %v2351 = vcombine.high %v2343, %v2343
  %v2352 = vcombine.high %v2350, %v2350
  %v2353 = vcombine.high %v2265, %v2265
  %v2355 = vunpack.c.l.s4 1983009808
  %v2356 = vunpack.c.0.s8 %v2355
  %v2357 = vlaneseq
  %v2358 = vshrl.u32 %v2357, 7
  %v2359 = vsub.s32 %v2356, %v2358
  %v2360 = vrot.slane %v2265, %v2359
  %v2362 = vunpack.c.l.s4 1983009808
  %v2363 = vunpack.c.0.s8 %v2362
  %v2364 = vlaneseq
  %v2365 = vshrl.u32 %v2364, 7
  %v2366 = vsub.s32 %v2363, %v2365
  %v2367 = vrot.slane %v2353, %v2366
  %v2368 = vcombine.high %v2360, %v2360
  %v2369 = vcombine.high %v2367, %v2367
  %v2370 = vcombine.high %v2266, %v2266
  %v2372 = vunpack.c.l.s4 1983009808
  %v2373 = vunpack.c.0.s8 %v2372
  %v2374 = vlaneseq
  %v2375 = vshrl.u32 %v2374, 7
  %v2376 = vsub.s32 %v2373, %v2375
  %v2377 = vrot.slane %v2266, %v2376
  %v2379 = vunpack.c.l.s4 1983009808
  %v2380 = vunpack.c.0.s8 %v2379
  %v2381 = vlaneseq
  %v2382 = vshrl.u32 %v2381, 7
  %v2383 = vsub.s32 %v2380, %v2382
  %v2384 = vrot.slane %v2370, %v2383
  %v2385 = vcombine.high %v2377, %v2377
  %v2386 = vcombine.high %v2384, %v2384
  %v2387 = vcombine.high %v2267, %v2267
  %v2389 = vunpack.c.l.s4 1983009808
  %v2390 = vunpack.c.0.s8 %v2389
  %v2391 = vlaneseq
  %v2392 = vshrl.u32 %v2391, 7
  %v2393 = vsub.s32 %v2390, %v2392
  %v2394 = vrot.slane %v2267, %v2393
  %v2396 = vunpack.c.l.s4 1983009808
  %v2397 = vunpack.c.0.s8 %v2396
  %v2398 = vlaneseq
  %v2399 = vshrl.u32 %v2398, 7
  %v2400 = vsub.s32 %v2397, %v2399
  %v2401 = vrot.slane %v2387, %v2400
  %v2402 = vcombine.high %v2394, %v2394
  %v2403 = vcombine.high %v2401, %v2401
  %v2404 = vcombine.high %v2268, %v2268
  %v2406 = vunpack.c.l.s4 1983009808
  %v2407 = vunpack.c.0.s8 %v2406
  %v2408 = vlaneseq
  %v2409 = vshrl.u32 %v2408, 7
  %v2410 = vsub.s32 %v2407, %v2409
  %v2411 = vrot.slane %v2268, %v2410
  %v2413 = vunpack.c.l.s4 1983009808
  %v2414 = vunpack.c.0.s8 %v2413
  %v2415 = vlaneseq
  %v2416 = vshrl.u32 %v2415, 7
  %v2417 = vsub.s32 %v2414, %v2416
  %v2418 = vrot.slane %v2404, %v2417
  %v2419 = vcombine.high %v2411, %v2411
  %v2420 = vcombine.high %v2418, %v2418
  %v2421 = vcombine.high %v2269, %v2269
  %v2423 = vunpack.c.l.s4 1983009808
  %v2424 = vunpack.c.0.s8 %v2423
  %v2425 = vlaneseq
  %v2426 = vshrl.u32 %v2425, 7
  %v2427 = vsub.s32 %v2424, %v2426
  %v2428 = vrot.slane %v2269, %v2427
  %v2430 = vunpack.c.l.s4 1983009808
  %v2431 = vunpack.c.0.s8 %v2430
  %v2432 = vlaneseq
  %v2433 = vshrl.u32 %v2432, 7
  %v2434 = vsub.s32 %v2431, %v2433
  %v2435 = vrot.slane %v2421, %v2434
  %v2436 = vcombine.high %v2428, %v2428
  %v2437 = vcombine.high %v2435, %v2435
  %v2438 = vcombine.high %v2270, %v2270
  %v2440 = vunpack.c.l.s4 1983009808
  %v2441 = vunpack.c.0.s8 %v2440
  %v2442 = vlaneseq
  %v2443 = vshrl.u32 %v2442, 7
  %v2444 = vsub.s32 %v2441, %v2443
  %v2445 = vrot.slane %v2270, %v2444
  %v2447 = vunpack.c.l.s4 1983009808
  %v2448 = vunpack.c.0.s8 %v2447
  %v2449 = vlaneseq
  %v2450 = vshrl.u32 %v2449, 7
  %v2451 = vsub.s32 %v2448, %v2450
  %v2452 = vrot.slane %v2438, %v2451
  %v2453 = vcombine.high %v2445, %v2445
  %v2454 = vcombine.high %v2452, %v2452
  %v2455 = vcombine.high %v2271, %v2271
  %v2457 = vunpack.c.l.s4 1983009808
  %v2458 = vunpack.c.0.s8 %v2457
  %v2459 = vlaneseq
  %v2460 = vshrl.u32 %v2459, 7
  %v2461 = vsub.s32 %v2458, %v2460
  %v2462 = vrot.slane %v2271, %v2461
  %v2464 = vunpack.c.l.s4 1983009808
  %v2465 = vunpack.c.0.s8 %v2464
  %v2466 = vlaneseq
  %v2467 = vshrl.u32 %v2466, 7
  %v2468 = vsub.s32 %v2465, %v2467
  %v2469 = vrot.slane %v2455, %v2468
  %v2470 = vcombine.high %v2462, %v2462
  %v2471 = vcombine.high %v2469, %v2469
  %v2472 = vcombine.high %v2272, %v2272
  %v2474 = vunpack.c.l.s4 1983009808
  %v2475 = vunpack.c.0.s8 %v2474
  %v2476 = vlaneseq
  %v2477 = vshrl.u32 %v2476, 7
  %v2478 = vsub.s32 %v2475, %v2477
  %v2479 = vrot.slane %v2272, %v2478
  %v2481 = vunpack.c.l.s4 1983009808
  %v2482 = vunpack.c.0.s8 %v2481
  %v2483 = vlaneseq
  %v2484 = vshrl.u32 %v2483, 7
  %v2485 = vsub.s32 %v2482, %v2484
  %v2486 = vrot.slane %v2472, %v2485
  %v2487 = vcombine.high %v2479, %v2479
  %v2488 = vcombine.high %v2486, %v2486
  %v2489 = vcombine.low %v2292, %v2300
  %v2491 = vunpack.c.l.s4 1983009808
  %v2492 = vunpack.c.0.s8 %v2491
  %v2493 = vlaneseq
  %v2494 = vshrl.u32 %v2493, 7
  %v2495 = vsub.s32 %v2492, %v2494
  %v2496 = vrot.slane %v2489, %v2495
  %v2498 = vunpack.c.l.s4 1983009808
  %v2499 = vunpack.c.0.s8 %v2498
  %v2500 = vlaneseq
  %v2501 = vshrl.u32 %v2500, 7
  %v2502 = vsub.s32 %v2499, %v2501
  %v2503 = vrot.slane %v2299, %v2502
  %v2504 = vcombine.low %v2496, %v2503
  %v2505 = vcombine.low %v2301, %v2309
  %v2507 = vunpack.c.l.s4 1983009808
  %v2508 = vunpack.c.0.s8 %v2507
  %v2509 = vlaneseq
  %v2510 = vshrl.u32 %v2509, 7
  %v2511 = vsub.s32 %v2508, %v2510
  %v2512 = vrot.slane %v2505, %v2511
  %v2514 = vunpack.c.l.s4 1983009808
  %v2515 = vunpack.c.0.s8 %v2514
  %v2516 = vlaneseq
  %v2517 = vshrl.u32 %v2516, 7
  %v2518 = vsub.s32 %v2515, %v2517
  %v2519 = vrot.slane %v2317, %v2518
  %v2520 = vcombine.low %v2512, %v2519
  %v2521 = vcombine.low %v2316, %v2318
  %v2523 = vunpack.c.l.s4 1983009808
  %v2524 = vunpack.c.0.s8 %v2523
  %v2525 = vlaneseq
  %v2526 = vshrl.u32 %v2525, 7
  %v2527 = vsub.s32 %v2524, %v2526
  %v2528 = vrot.slane %v2521, %v2527
  %v2530 = vunpack.c.l.s4 1983009808
  %v2531 = vunpack.c.0.s8 %v2530
  %v2532 = vlaneseq
  %v2533 = vshrl.u32 %v2532, 7
  %v2534 = vsub.s32 %v2531, %v2533
  %v2535 = vrot.slane %v2326, %v2534
  %v2536 = vcombine.low %v2528, %v2535
  %v2537 = vcombine.low %v2334, %v2333
  %v2539 = vunpack.c.l.s4 1983009808
  %v2540 = vunpack.c.0.s8 %v2539
  %v2541 = vlaneseq
  %v2542 = vshrl.u32 %v2541, 7
  %v2543 = vsub.s32 %v2540, %v2542
  %v2544 = vrot.slane %v2537, %v2543
  %v2546 = vunpack.c.l.s4 1983009808
  %v2547 = vunpack.c.0.s8 %v2546
  %v2548 = vlaneseq
  %v2549 = vshrl.u32 %v2548, 7
  %v2550 = vsub.s32 %v2547, %v2549
  %v2551 = vrot.slane %v2335, %v2550
  %v2552 = vcombine.low %v2544, %v2551
  %v2553 = vcombine.low %v2343, %v2351
  %v2555 = vunpack.c.l.s4 1983009808
  %v2556 = vunpack.c.0.s8 %v2555
  %v2557 = vlaneseq
  %v2558 = vshrl.u32 %v2557, 7
  %v2559 = vsub.s32 %v2556, %v2558
  %v2560 = vrot.slane %v2553, %v2559
  %v2562 = vunpack.c.l.s4 1983009808
  %v2563 = vunpack.c.0.s8 %v2562
  %v2564 = vlaneseq
  %v2565 = vshrl.u32 %v2564, 7
  %v2566 = vsub.s32 %v2563, %v2565
  %v2567 = vrot.slane %v2350, %v2566
  %v2568 = vcombine.low %v2560, %v2567
  %v2569 = vcombine.low %v2352, %v2360
  %v2571 = vunpack.c.l.s4 1983009808
  %v2572 = vunpack.c.0.s8 %v2571
  %v2573 = vlaneseq
  %v2574 = vshrl.u32 %v2573, 7
  %v2575 = vsub.s32 %v2572, %v2574
  %v2576 = vrot.slane %v2569, %v2575
  %v2578 = vunpack.c.l.s4 1983009808
  %v2579 = vunpack.c.0.s8 %v2578
  %v2580 = vlaneseq
  %v2581 = vshrl.u32 %v2580, 7
  %v2582 = vsub.s32 %v2579, %v2581
  %v2583 = vrot.slane %v2368, %v2582
  %v2584 = vcombine.low %v2576, %v2583
  %v2585 = vcombine.low %v2367, %v2369
  %v2587 = vunpack.c.l.s4 1983009808
  %v2588 = vunpack.c.0.s8 %v2587
  %v2589 = vlaneseq
  %v2590 = vshrl.u32 %v2589, 7
  %v2591 = vsub.s32 %v2588, %v2590
  %v2592 = vrot.slane %v2585, %v2591
  %v2594 = vunpack.c.l.s4 1983009808
  %v2595 = vunpack.c.0.s8 %v2594
  %v2596 = vlaneseq
  %v2597 = vshrl.u32 %v2596, 7
  %v2598 = vsub.s32 %v2595, %v2597
  %v2599 = vrot.slane %v2377, %v2598
  %v2600 = vcombine.low %v2592, %v2599
  %v2601 = vcombine.low %v2385, %v2384
  %v2603 = vunpack.c.l.s4 1983009808
  %v2604 = vunpack.c.0.s8 %v2603
  %v2605 = vlaneseq
  %v2606 = vshrl.u32 %v2605, 7
  %v2607 = vsub.s32 %v2604, %v2606
  %v2608 = vrot.slane %v2601, %v2607
  %v2610 = vunpack.c.l.s4 1983009808
  %v2611 = vunpack.c.0.s8 %v2610
  %v2612 = vlaneseq
  %v2613 = vshrl.u32 %v2612, 7
  %v2614 = vsub.s32 %v2611, %v2613
  %v2615 = vrot.slane %v2386, %v2614
  %v2616 = vcombine.low %v2608, %v2615
  %v2617 = vcombine.low %v2394, %v2402
  %v2619 = vunpack.c.l.s4 1983009808
  %v2620 = vunpack.c.0.s8 %v2619
  %v2621 = vlaneseq
  %v2622 = vshrl.u32 %v2621, 7
  %v2623 = vsub.s32 %v2620, %v2622
  %v2624 = vrot.slane %v2617, %v2623
  %v2626 = vunpack.c.l.s4 1983009808
  %v2627 = vunpack.c.0.s8 %v2626
  %v2628 = vlaneseq
  %v2629 = vshrl.u32 %v2628, 7
  %v2630 = vsub.s32 %v2627, %v2629
  %v2631 = vrot.slane %v2401, %v2630
  %v2632 = vcombine.low %v2624, %v2631
  %v2633 = vcombine.low %v2403, %v2411
  %v2635 = vunpack.c.l.s4 1983009808
  %v2636 = vunpack.c.0.s8 %v2635
  %v2637 = vlaneseq
  %v2638 = vshrl.u32 %v2637, 7
  %v2639 = vsub.s32 %v2636, %v2638
  %v2640 = vrot.slane %v2633, %v2639
  %v2642 = vunpack.c.l.s4 1983009808
  %v2643 = vunpack.c.0.s8 %v2642
  %v2644 = vlaneseq
  %v2645 = vshrl.u32 %v2644, 7
  %v2646 = vsub.s32 %v2643, %v2645
  %v2647 = vrot.slane %v2419, %v2646
  %v2648 = vcombine.low %v2640, %v2647
  %v2649 = vcombine.low %v2418, %v2420
  %v2651 = vunpack.c.l.s4 1983009808
  %v2652 = vunpack.c.0.s8 %v2651
  %v2653 = vlaneseq
  %v2654 = vshrl.u32 %v2653, 7
  %v2655 = vsub.s32 %v2652, %v2654
  %v2656 = vrot.slane %v2649, %v2655
  %v2658 = vunpack.c.l.s4 1983009808
  %v2659 = vunpack.c.0.s8 %v2658
  %v2660 = vlaneseq
  %v2661 = vshrl.u32 %v2660, 7
  %v2662 = vsub.s32 %v2659, %v2661
  %v2663 = vrot.slane %v2428, %v2662
  %v2664 = vcombine.low %v2656, %v2663
  %v2665 = vcombine.low %v2436, %v2435
  %v2667 = vunpack.c.l.s4 1983009808
  %v2668 = vunpack.c.0.s8 %v2667
  %v2669 = vlaneseq
  %v2670 = vshrl.u32 %v2669, 7
  %v2671 = vsub.s32 %v2668, %v2670
  %v2672 = vrot.slane %v2665, %v2671
  %v2674 = vunpack.c.l.s4 1983009808
  %v2675 = vunpack.c.0.s8 %v2674
  %v2676 = vlaneseq
  %v2677 = vshrl.u32 %v2676, 7
  %v2678 = vsub.s32 %v2675, %v2677
  %v2679 = vrot.slane %v2437, %v2678
  %v2680 = vcombine.low %v2672, %v2679
  %v2681 = vcombine.low %v2445, %v2453
  %v2683 = vunpack.c.l.s4 1983009808
  %v2684 = vunpack.c.0.s8 %v2683
  %v2685 = vlaneseq
  %v2686 = vshrl.u32 %v2685, 7
  %v2687 = vsub.s32 %v2684, %v2686
  %v2688 = vrot.slane %v2681, %v2687
  %v2690 = vunpack.c.l.s4 1983009808
  %v2691 = vunpack.c.0.s8 %v2690
  %v2692 = vlaneseq
  %v2693 = vshrl.u32 %v2692, 7
  %v2694 = vsub.s32 %v2691, %v2693
  %v2695 = vrot.slane %v2452, %v2694
  %v2696 = vcombine.low %v2688, %v2695
  %v2697 = vcombine.low %v2454, %v2462
  %v2699 = vunpack.c.l.s4 1983009808
  %v2700 = vunpack.c.0.s8 %v2699
  %v2701 = vlaneseq
  %v2702 = vshrl.u32 %v2701, 7
  %v2703 = vsub.s32 %v2700, %v2702
  %v2704 = vrot.slane %v2697, %v2703
  %v2706 = vunpack.c.l.s4 1983009808
  %v2707 = vunpack.c.0.s8 %v2706
  %v2708 = vlaneseq
  %v2709 = vshrl.u32 %v2708, 7
  %v2710 = vsub.s32 %v2707, %v2709
  %v2711 = vrot.slane %v2470, %v2710
  %v2712 = vcombine.low %v2704, %v2711
  %v2713 = vcombine.low %v2469, %v2471
  %v2715 = vunpack.c.l.s4 1983009808
  %v2716 = vunpack.c.0.s8 %v2715
  %v2717 = vlaneseq
  %v2718 = vshrl.u32 %v2717, 7
  %v2719 = vsub.s32 %v2716, %v2718
  %v2720 = vrot.slane %v2713, %v2719
  %v2722 = vunpack.c.l.s4 1983009808
  %v2723 = vunpack.c.0.s8 %v2722
  %v2724 = vlaneseq
  %v2725 = vshrl.u32 %v2724, 7
  %v2726 = vsub.s32 %v2723, %v2725
  %v2727 = vrot.slane %v2479, %v2726
  %v2728 = vcombine.low %v2720, %v2727
  %v2729 = vcombine.low %v2487, %v2486
  %v2731 = vunpack.c.l.s4 1983009808
  %v2732 = vunpack.c.0.s8 %v2731
  %v2733 = vlaneseq
  %v2734 = vshrl.u32 %v2733, 7
  %v2735 = vsub.s32 %v2732, %v2734
  %v2736 = vrot.slane %v2729, %v2735
  %v2738 = vunpack.c.l.s4 1983009808
  %v2739 = vunpack.c.0.s8 %v2738
  %v2740 = vlaneseq
  %v2741 = vshrl.u32 %v2740, 7
  %v2742 = vsub.s32 %v2739, %v2741
  %v2743 = vrot.slane %v2488, %v2742
  %v2744 = vcombine.low %v2736, %v2743
  %v2745 = vrot.slane %v2504, 7
  %v2746 = vrot.slane %v2520, 7
  %v2747 = vrot.slane %v2536, 7
  %v2748 = vrot.slane %v2552, 7
  %v2749 = vrot.slane %v2568, 7
  %v2750 = vrot.slane %v2584, 7
  %v2751 = vrot.slane %v2600, 7
  %v2752 = vrot.slane %v2616, 7
  %v2753 = vrot.slane %v2632, 7
  %v2754 = vrot.slane %v2648, 7
  %v2755 = vrot.slane %v2664, 7
  %v2756 = vrot.slane %v2680, 7
  %v2757 = vrot.slane %v2696, 7
  %v2758 = vrot.slane %v2712, 7
  %v2759 = vrot.slane %v2728, 7
  %v2760 = vrot.slane %v2744, 7
  %v2777 = vsel %vm309, 0.0, %v2745
  %v2778 = vsel %vm309, 0.0, %v2746
  %v2779 = vsel %vm309, 0.0, %v2747
  %v2780 = vsel %vm309, 0.0, %v2748
  %v2781 = vsel %vm309, 0.0, %v2749
  %v2782 = vsel %vm309, 0.0, %v2750
  %v2783 = vsel %vm309, 0.0, %v2751
  %v2784 = vsel %vm309, 0.0, %v2752
  %v2785 = vsel %vm309, 0.0, %v2753
  %v2786 = vsel %vm309, 0.0, %v2754
  %v2787 = vsel %vm309, 0.0, %v2755
  %v2788 = vsel %vm309, 0.0, %v2756
  %v2789 = vsel %vm309, 0.0, %v2757
  %v2790 = vsel %vm309, 0.0, %v2758
  %v2791 = vsel %vm309, 0.0, %v2759
  %v2792 = vsel %vm309, 0.0, %v2760
  %vm2809 = vcmask 1045504
  %v2810 = vsel %vm2809, %v2504, 0.0
  %v2811 = vsel %vm2809, %v2520, 0.0
  %v2812 = vsel %vm2809, %v2536, 0.0
  %v2813 = vsel %vm2809, %v2552, 0.0
  %v2814 = vsel %vm2809, %v2568, 0.0
  %v2815 = vsel %vm2809, %v2584, 0.0
  %v2816 = vsel %vm2809, %v2600, 0.0
  %v2817 = vsel %vm2809, %v2616, 0.0
  %v2818 = vsel %vm2809, %v2632, 0.0
  %v2819 = vsel %vm2809, %v2648, 0.0
  %v2820 = vsel %vm2809, %v2664, 0.0
  %v2821 = vsel %vm2809, %v2680, 0.0
  %v2822 = vsel %vm2809, %v2696, 0.0
  %v2823 = vsel %vm2809, %v2712, 0.0
  %v2824 = vsel %vm2809, %v2728, 0.0
  %v2825 = vsel %vm2809, %v2744, 0.0
  %2842 = vrot.lane.b32.xlu0 %v2810, 64
  %v2843 = vpop.permute.xlu0 %2842
  %2844 = vrot.lane.b32.xlu0 %v2811, 64
  %v2845 = vpop.permute.xlu0 %2844
  %2846 = vrot.lane.b32.xlu0 %v2812, 64
  %v2847 = vpop.permute.xlu0 %2846
  %2848 = vrot.lane.b32.xlu0 %v2813, 64
  %v2849 = vpop.permute.xlu0 %2848
  %2850 = vrot.lane.b32.xlu0 %v2814, 64
  %v2851 = vpop.permute.xlu0 %2850
  %2852 = vrot.lane.b32.xlu0 %v2815, 64
  %v2853 = vpop.permute.xlu0 %2852
  %2854 = vrot.lane.b32.xlu0 %v2816, 64
  %v2855 = vpop.permute.xlu0 %2854
  %2856 = vrot.lane.b32.xlu0 %v2817, 64
  %v2857 = vpop.permute.xlu0 %2856
  %2858 = vrot.lane.b32.xlu0 %v2818, 64
  %v2859 = vpop.permute.xlu0 %2858
  %2860 = vrot.lane.b32.xlu0 %v2819, 64
  %v2861 = vpop.permute.xlu0 %2860
  %2862 = vrot.lane.b32.xlu0 %v2820, 64
  %v2863 = vpop.permute.xlu0 %2862
  %2864 = vrot.lane.b32.xlu0 %v2821, 64
  %v2865 = vpop.permute.xlu0 %2864
  %2866 = vrot.lane.b32.xlu0 %v2822, 64
  %v2867 = vpop.permute.xlu0 %2866
  %2868 = vrot.lane.b32.xlu0 %v2823, 64
  %v2869 = vpop.permute.xlu0 %2868
  %2870 = vrot.lane.b32.xlu0 %v2824, 64
  %v2871 = vpop.permute.xlu0 %2870
  %2872 = vrot.lane.b32.xlu0 %v2825, 64
  %v2873 = vpop.permute.xlu0 %2872
  %v2890 = vsel %vm1734, %v2777, %v2843
  %v2891 = vsel %vm1734, %v2778, %v2845
  %v2892 = vsel %vm1734, %v2779, %v2847
  %v2893 = vsel %vm1734, %v2780, %v2849
  %v2894 = vsel %vm1734, %v2781, %v2851
  %v2895 = vsel %vm1734, %v2782, %v2853
  %v2896 = vsel %vm1734, %v2783, %v2855
  %v2897 = vsel %vm1734, %v2784, %v2857
  %v2898 = vsel %vm1734, %v2785, %v2859
  %v2899 = vsel %vm1734, %v2786, %v2861
  %v2900 = vsel %vm1734, %v2787, %v2863
  %v2901 = vsel %vm1734, %v2788, %v2865
  %v2902 = vsel %vm1734, %v2789, %v2867
  %v2903 = vsel %vm1734, %v2790, %v2869
  %v2904 = vsel %vm1734, %v2791, %v2871
  %v2905 = vsel %vm1734, %v2792, %v2873
  %v2922 = vcombine.high %v2890, %v2890
  %v2924 = vunpack.c.l.s4 1966171168
  %v2925 = vunpack.c.0.s8 %v2924
  %v2926 = vlaneseq
  %v2927 = vshrl.u32 %v2926, 7
  %v2928 = vsub.s32 %v2925, %v2927
  %v2929 = vrot.slane %v2890, %v2928
  %v2931 = vunpack.c.l.s4 1966171168
  %v2932 = vunpack.c.0.s8 %v2931
  %v2933 = vlaneseq
  %v2934 = vshrl.u32 %v2933, 7
  %v2935 = vsub.s32 %v2932, %v2934
  %v2936 = vrot.slane %v2922, %v2935
  %v2937 = vcombine.high %v2929, %v2929
  %v2938 = vcombine.high %v2936, %v2936
  %v2940 = vunpack.c.l.s4 1966171168
  %v2941 = vunpack.c.0.s8 %v2940
  %v2942 = vlaneseq
  %v2943 = vshrl.u32 %v2942, 7
  %v2944 = vsub.s32 %v2941, %v2943
  %v2945 = vrot.slane %v2929, %v2944
  %v2947 = vunpack.c.l.s4 1966171168
  %v2948 = vunpack.c.0.s8 %v2947
  %v2949 = vlaneseq
  %v2950 = vshrl.u32 %v2949, 7
  %v2951 = vsub.s32 %v2948, %v2950
  %v2952 = vrot.slane %v2936, %v2951
  %v2954 = vunpack.c.l.s4 1966171168
  %v2955 = vunpack.c.0.s8 %v2954
  %v2956 = vlaneseq
  %v2957 = vshrl.u32 %v2956, 7
  %v2958 = vsub.s32 %v2955, %v2957
  %v2959 = vrot.slane %v2937, %v2958
  %v2961 = vunpack.c.l.s4 1966171168
  %v2962 = vunpack.c.0.s8 %v2961
  %v2963 = vlaneseq
  %v2964 = vshrl.u32 %v2963, 7
  %v2965 = vsub.s32 %v2962, %v2964
  %v2966 = vrot.slane %v2938, %v2965
  %v2967 = vcombine.high %v2945, %v2945
  %v2968 = vcombine.high %v2952, %v2952
  %v2969 = vcombine.high %v2959, %v2959
  %v2970 = vcombine.high %v2891, %v2891
  %v2972 = vunpack.c.l.s4 1966171168
  %v2973 = vunpack.c.0.s8 %v2972
  %v2974 = vlaneseq
  %v2975 = vshrl.u32 %v2974, 7
  %v2976 = vsub.s32 %v2973, %v2975
  %v2977 = vrot.slane %v2891, %v2976
  %v2979 = vunpack.c.l.s4 1966171168
  %v2980 = vunpack.c.0.s8 %v2979
  %v2981 = vlaneseq
  %v2982 = vshrl.u32 %v2981, 7
  %v2983 = vsub.s32 %v2980, %v2982
  %v2984 = vrot.slane %v2970, %v2983
  %v2985 = vcombine.high %v2977, %v2977
  %v2986 = vcombine.high %v2984, %v2984
  %v2988 = vunpack.c.l.s4 1966171168
  %v2989 = vunpack.c.0.s8 %v2988
  %v2990 = vlaneseq
  %v2991 = vshrl.u32 %v2990, 7
  %v2992 = vsub.s32 %v2989, %v2991
  %v2993 = vrot.slane %v2977, %v2992
  %v2995 = vunpack.c.l.s4 1966171168
  %v2996 = vunpack.c.0.s8 %v2995
  %v2997 = vlaneseq
  %v2998 = vshrl.u32 %v2997, 7
  %v2999 = vsub.s32 %v2996, %v2998
  %v3000 = vrot.slane %v2984, %v2999
  %v3002 = vunpack.c.l.s4 1966171168
  %v3003 = vunpack.c.0.s8 %v3002
  %v3004 = vlaneseq
  %v3005 = vshrl.u32 %v3004, 7
  %v3006 = vsub.s32 %v3003, %v3005
  %v3007 = vrot.slane %v2985, %v3006
  %v3009 = vunpack.c.l.s4 1966171168
  %v3010 = vunpack.c.0.s8 %v3009
  %v3011 = vlaneseq
  %v3012 = vshrl.u32 %v3011, 7
  %v3013 = vsub.s32 %v3010, %v3012
  %v3014 = vrot.slane %v2986, %v3013
  %v3015 = vcombine.high %v2993, %v2993
  %v3016 = vcombine.high %v3000, %v3000
  %v3017 = vcombine.high %v3007, %v3007
  %v3018 = vcombine.high %v2892, %v2892
  %v3020 = vunpack.c.l.s4 1966171168
  %v3021 = vunpack.c.0.s8 %v3020
  %v3022 = vlaneseq
  %v3023 = vshrl.u32 %v3022, 7
  %v3024 = vsub.s32 %v3021, %v3023
  %v3025 = vrot.slane %v2892, %v3024
  %v3027 = vunpack.c.l.s4 1966171168
  %v3028 = vunpack.c.0.s8 %v3027
  %v3029 = vlaneseq
  %v3030 = vshrl.u32 %v3029, 7
  %v3031 = vsub.s32 %v3028, %v3030
  %v3032 = vrot.slane %v3018, %v3031
  %v3033 = vcombine.high %v3025, %v3025
  %v3034 = vcombine.high %v3032, %v3032
  %v3036 = vunpack.c.l.s4 1966171168
  %v3037 = vunpack.c.0.s8 %v3036
  %v3038 = vlaneseq
  %v3039 = vshrl.u32 %v3038, 7
  %v3040 = vsub.s32 %v3037, %v3039
  %v3041 = vrot.slane %v3025, %v3040
  %v3043 = vunpack.c.l.s4 1966171168
  %v3044 = vunpack.c.0.s8 %v3043
  %v3045 = vlaneseq
  %v3046 = vshrl.u32 %v3045, 7
  %v3047 = vsub.s32 %v3044, %v3046
  %v3048 = vrot.slane %v3032, %v3047
  %v3050 = vunpack.c.l.s4 1966171168
  %v3051 = vunpack.c.0.s8 %v3050
  %v3052 = vlaneseq
  %v3053 = vshrl.u32 %v3052, 7
  %v3054 = vsub.s32 %v3051, %v3053
  %v3055 = vrot.slane %v3033, %v3054
  %v3057 = vunpack.c.l.s4 1966171168
  %v3058 = vunpack.c.0.s8 %v3057
  %v3059 = vlaneseq
  %v3060 = vshrl.u32 %v3059, 7
  %v3061 = vsub.s32 %v3058, %v3060
  %v3062 = vrot.slane %v3034, %v3061
  %v3063 = vcombine.high %v3041, %v3041
  %v3064 = vcombine.high %v3048, %v3048
  %v3065 = vcombine.high %v3055, %v3055
  %v3066 = vcombine.high %v2893, %v2893
  %v3068 = vunpack.c.l.s4 1966171168
  %v3069 = vunpack.c.0.s8 %v3068
  %v3070 = vlaneseq
  %v3071 = vshrl.u32 %v3070, 7
  %v3072 = vsub.s32 %v3069, %v3071
  %v3073 = vrot.slane %v2893, %v3072
  %v3075 = vunpack.c.l.s4 1966171168
  %v3076 = vunpack.c.0.s8 %v3075
  %v3077 = vlaneseq
  %v3078 = vshrl.u32 %v3077, 7
  %v3079 = vsub.s32 %v3076, %v3078
  %v3080 = vrot.slane %v3066, %v3079
  %v3081 = vcombine.high %v3073, %v3073
  %v3082 = vcombine.high %v3080, %v3080
  %v3084 = vunpack.c.l.s4 1966171168
  %v3085 = vunpack.c.0.s8 %v3084
  %v3086 = vlaneseq
  %v3087 = vshrl.u32 %v3086, 7
  %v3088 = vsub.s32 %v3085, %v3087
  %v3089 = vrot.slane %v3073, %v3088
  %v3091 = vunpack.c.l.s4 1966171168
  %v3092 = vunpack.c.0.s8 %v3091
  %v3093 = vlaneseq
  %v3094 = vshrl.u32 %v3093, 7
  %v3095 = vsub.s32 %v3092, %v3094
  %v3096 = vrot.slane %v3080, %v3095
  %v3098 = vunpack.c.l.s4 1966171168
  %v3099 = vunpack.c.0.s8 %v3098
  %v3100 = vlaneseq
  %v3101 = vshrl.u32 %v3100, 7
  %v3102 = vsub.s32 %v3099, %v3101
  %v3103 = vrot.slane %v3081, %v3102
  %v3105 = vunpack.c.l.s4 1966171168
  %v3106 = vunpack.c.0.s8 %v3105
  %v3107 = vlaneseq
  %v3108 = vshrl.u32 %v3107, 7
  %v3109 = vsub.s32 %v3106, %v3108
  %v3110 = vrot.slane %v3082, %v3109
  %v3111 = vcombine.high %v3089, %v3089
  %v3112 = vcombine.high %v3096, %v3096
  %v3113 = vcombine.high %v3103, %v3103
  %v3114 = vcombine.high %v2894, %v2894
  %v3116 = vunpack.c.l.s4 1966171168
  %v3117 = vunpack.c.0.s8 %v3116
  %v3118 = vlaneseq
  %v3119 = vshrl.u32 %v3118, 7
  %v3120 = vsub.s32 %v3117, %v3119
  %v3121 = vrot.slane %v2894, %v3120
  %v3123 = vunpack.c.l.s4 1966171168
  %v3124 = vunpack.c.0.s8 %v3123
  %v3125 = vlaneseq
  %v3126 = vshrl.u32 %v3125, 7
  %v3127 = vsub.s32 %v3124, %v3126
  %v3128 = vrot.slane %v3114, %v3127
  %v3129 = vcombine.high %v3121, %v3121
  %v3130 = vcombine.high %v3128, %v3128
  %v3132 = vunpack.c.l.s4 1966171168
  %v3133 = vunpack.c.0.s8 %v3132
  %v3134 = vlaneseq
  %v3135 = vshrl.u32 %v3134, 7
  %v3136 = vsub.s32 %v3133, %v3135
  %v3137 = vrot.slane %v3121, %v3136
  %v3139 = vunpack.c.l.s4 1966171168
  %v3140 = vunpack.c.0.s8 %v3139
  %v3141 = vlaneseq
  %v3142 = vshrl.u32 %v3141, 7
  %v3143 = vsub.s32 %v3140, %v3142
  %v3144 = vrot.slane %v3128, %v3143
  %v3146 = vunpack.c.l.s4 1966171168
  %v3147 = vunpack.c.0.s8 %v3146
  %v3148 = vlaneseq
  %v3149 = vshrl.u32 %v3148, 7
  %v3150 = vsub.s32 %v3147, %v3149
  %v3151 = vrot.slane %v3129, %v3150
  %v3153 = vunpack.c.l.s4 1966171168
  %v3154 = vunpack.c.0.s8 %v3153
  %v3155 = vlaneseq
  %v3156 = vshrl.u32 %v3155, 7
  %v3157 = vsub.s32 %v3154, %v3156
  %v3158 = vrot.slane %v3130, %v3157
  %v3159 = vcombine.high %v3137, %v3137
  %v3160 = vcombine.high %v3144, %v3144
  %v3161 = vcombine.high %v3151, %v3151
  %v3162 = vcombine.high %v2895, %v2895
  %v3164 = vunpack.c.l.s4 1966171168
  %v3165 = vunpack.c.0.s8 %v3164
  %v3166 = vlaneseq
  %v3167 = vshrl.u32 %v3166, 7
  %v3168 = vsub.s32 %v3165, %v3167
  %v3169 = vrot.slane %v2895, %v3168
  %v3171 = vunpack.c.l.s4 1966171168
  %v3172 = vunpack.c.0.s8 %v3171
  %v3173 = vlaneseq
  %v3174 = vshrl.u32 %v3173, 7
  %v3175 = vsub.s32 %v3172, %v3174
  %v3176 = vrot.slane %v3162, %v3175
  %v3177 = vcombine.high %v3169, %v3169
  %v3178 = vcombine.high %v3176, %v3176
  %v3180 = vunpack.c.l.s4 1966171168
  %v3181 = vunpack.c.0.s8 %v3180
  %v3182 = vlaneseq
  %v3183 = vshrl.u32 %v3182, 7
  %v3184 = vsub.s32 %v3181, %v3183
  %v3185 = vrot.slane %v3169, %v3184
  %v3187 = vunpack.c.l.s4 1966171168
  %v3188 = vunpack.c.0.s8 %v3187
  %v3189 = vlaneseq
  %v3190 = vshrl.u32 %v3189, 7
  %v3191 = vsub.s32 %v3188, %v3190
  %v3192 = vrot.slane %v3176, %v3191
  %v3194 = vunpack.c.l.s4 1966171168
  %v3195 = vunpack.c.0.s8 %v3194
  %v3196 = vlaneseq
  %v3197 = vshrl.u32 %v3196, 7
  %v3198 = vsub.s32 %v3195, %v3197
  %v3199 = vrot.slane %v3177, %v3198
  %v3201 = vunpack.c.l.s4 1966171168
  %v3202 = vunpack.c.0.s8 %v3201
  %v3203 = vlaneseq
  %v3204 = vshrl.u32 %v3203, 7
  %v3205 = vsub.s32 %v3202, %v3204
  %v3206 = vrot.slane %v3178, %v3205
  %v3207 = vcombine.high %v3185, %v3185
  %v3208 = vcombine.high %v3192, %v3192
  %v3209 = vcombine.high %v3199, %v3199
  %v3210 = vcombine.high %v2896, %v2896
  %v3212 = vunpack.c.l.s4 1966171168
  %v3213 = vunpack.c.0.s8 %v3212
  %v3214 = vlaneseq
  %v3215 = vshrl.u32 %v3214, 7
  %v3216 = vsub.s32 %v3213, %v3215
  %v3217 = vrot.slane %v2896, %v3216
  %v3219 = vunpack.c.l.s4 1966171168
  %v3220 = vunpack.c.0.s8 %v3219
  %v3221 = vlaneseq
  %v3222 = vshrl.u32 %v3221, 7
  %v3223 = vsub.s32 %v3220, %v3222
  %v3224 = vrot.slane %v3210, %v3223
  %v3225 = vcombine.high %v3217, %v3217
  %v3226 = vcombine.high %v3224, %v3224
  %v3228 = vunpack.c.l.s4 1966171168
  %v3229 = vunpack.c.0.s8 %v3228
  %v3230 = vlaneseq
  %v3231 = vshrl.u32 %v3230, 7
  %v3232 = vsub.s32 %v3229, %v3231
  %v3233 = vrot.slane %v3217, %v3232
  %v3235 = vunpack.c.l.s4 1966171168
  %v3236 = vunpack.c.0.s8 %v3235
  %v3237 = vlaneseq
  %v3238 = vshrl.u32 %v3237, 7
  %v3239 = vsub.s32 %v3236, %v3238
  %v3240 = vrot.slane %v3224, %v3239
  %v3242 = vunpack.c.l.s4 1966171168
  %v3243 = vunpack.c.0.s8 %v3242
  %v3244 = vlaneseq
  %v3245 = vshrl.u32 %v3244, 7
  %v3246 = vsub.s32 %v3243, %v3245
  %v3247 = vrot.slane %v3225, %v3246
  %v3249 = vunpack.c.l.s4 1966171168
  %v3250 = vunpack.c.0.s8 %v3249
  %v3251 = vlaneseq
  %v3252 = vshrl.u32 %v3251, 7
  %v3253 = vsub.s32 %v3250, %v3252
  %v3254 = vrot.slane %v3226, %v3253
  %v3255 = vcombine.high %v3233, %v3233
  %v3256 = vcombine.high %v3240, %v3240
  %v3257 = vcombine.high %v3247, %v3247
  %v3258 = vcombine.high %v2897, %v2897
  %v3260 = vunpack.c.l.s4 1966171168
  %v3261 = vunpack.c.0.s8 %v3260
  %v3262 = vlaneseq
  %v3263 = vshrl.u32 %v3262, 7
  %v3264 = vsub.s32 %v3261, %v3263
  %v3265 = vrot.slane %v2897, %v3264
  %v3267 = vunpack.c.l.s4 1966171168
  %v3268 = vunpack.c.0.s8 %v3267
  %v3269 = vlaneseq
  %v3270 = vshrl.u32 %v3269, 7
  %v3271 = vsub.s32 %v3268, %v3270
  %v3272 = vrot.slane %v3258, %v3271
  %v3273 = vcombine.high %v3265, %v3265
  %v3274 = vcombine.high %v3272, %v3272
  %v3276 = vunpack.c.l.s4 1966171168
  %v3277 = vunpack.c.0.s8 %v3276
  %v3278 = vlaneseq
  %v3279 = vshrl.u32 %v3278, 7
  %v3280 = vsub.s32 %v3277, %v3279
  %v3281 = vrot.slane %v3265, %v3280
  %v3283 = vunpack.c.l.s4 1966171168
  %v3284 = vunpack.c.0.s8 %v3283
  %v3285 = vlaneseq
  %v3286 = vshrl.u32 %v3285, 7
  %v3287 = vsub.s32 %v3284, %v3286
  %v3288 = vrot.slane %v3272, %v3287
  %v3290 = vunpack.c.l.s4 1966171168
  %v3291 = vunpack.c.0.s8 %v3290
  %v3292 = vlaneseq
  %v3293 = vshrl.u32 %v3292, 7
  %v3294 = vsub.s32 %v3291, %v3293
  %v3295 = vrot.slane %v3273, %v3294
  %v3297 = vunpack.c.l.s4 1966171168
  %v3298 = vunpack.c.0.s8 %v3297
  %v3299 = vlaneseq
  %v3300 = vshrl.u32 %v3299, 7
  %v3301 = vsub.s32 %v3298, %v3300
  %v3302 = vrot.slane %v3274, %v3301
  %v3303 = vcombine.high %v3281, %v3281
  %v3304 = vcombine.high %v3288, %v3288
  %v3305 = vcombine.high %v3295, %v3295
  %v3306 = vcombine.high %v2898, %v2898
  %v3308 = vunpack.c.l.s4 1966171168
  %v3309 = vunpack.c.0.s8 %v3308
  %v3310 = vlaneseq
  %v3311 = vshrl.u32 %v3310, 7
  %v3312 = vsub.s32 %v3309, %v3311
  %v3313 = vrot.slane %v2898, %v3312
  %v3315 = vunpack.c.l.s4 1966171168
  %v3316 = vunpack.c.0.s8 %v3315
  %v3317 = vlaneseq
  %v3318 = vshrl.u32 %v3317, 7
  %v3319 = vsub.s32 %v3316, %v3318
  %v3320 = vrot.slane %v3306, %v3319
  %v3321 = vcombine.high %v3313, %v3313
  %v3322 = vcombine.high %v3320, %v3320
  %v3324 = vunpack.c.l.s4 1966171168
  %v3325 = vunpack.c.0.s8 %v3324
  %v3326 = vlaneseq
  %v3327 = vshrl.u32 %v3326, 7
  %v3328 = vsub.s32 %v3325, %v3327
  %v3329 = vrot.slane %v3313, %v3328
  %v3331 = vunpack.c.l.s4 1966171168
  %v3332 = vunpack.c.0.s8 %v3331
  %v3333 = vlaneseq
  %v3334 = vshrl.u32 %v3333, 7
  %v3335 = vsub.s32 %v3332, %v3334
  %v3336 = vrot.slane %v3320, %v3335
  %v3338 = vunpack.c.l.s4 1966171168
  %v3339 = vunpack.c.0.s8 %v3338
  %v3340 = vlaneseq
  %v3341 = vshrl.u32 %v3340, 7
  %v3342 = vsub.s32 %v3339, %v3341
  %v3343 = vrot.slane %v3321, %v3342
  %v3345 = vunpack.c.l.s4 1966171168
  %v3346 = vunpack.c.0.s8 %v3345
  %v3347 = vlaneseq
  %v3348 = vshrl.u32 %v3347, 7
  %v3349 = vsub.s32 %v3346, %v3348
  %v3350 = vrot.slane %v3322, %v3349
  %v3351 = vcombine.high %v3329, %v3329
  %v3352 = vcombine.high %v3336, %v3336
  %v3353 = vcombine.high %v3343, %v3343
  %v3354 = vcombine.high %v2899, %v2899
  %v3356 = vunpack.c.l.s4 1966171168
  %v3357 = vunpack.c.0.s8 %v3356
  %v3358 = vlaneseq
  %v3359 = vshrl.u32 %v3358, 7
  %v3360 = vsub.s32 %v3357, %v3359
  %v3361 = vrot.slane %v2899, %v3360
  %v3363 = vunpack.c.l.s4 1966171168
  %v3364 = vunpack.c.0.s8 %v3363
  %v3365 = vlaneseq
  %v3366 = vshrl.u32 %v3365, 7
  %v3367 = vsub.s32 %v3364, %v3366
  %v3368 = vrot.slane %v3354, %v3367
  %v3369 = vcombine.high %v3361, %v3361
  %v3370 = vcombine.high %v3368, %v3368
  %v3372 = vunpack.c.l.s4 1966171168
  %v3373 = vunpack.c.0.s8 %v3372
  %v3374 = vlaneseq
  %v3375 = vshrl.u32 %v3374, 7
  %v3376 = vsub.s32 %v3373, %v3375
  %v3377 = vrot.slane %v3361, %v3376
  %v3379 = vunpack.c.l.s4 1966171168
  %v3380 = vunpack.c.0.s8 %v3379
  %v3381 = vlaneseq
  %v3382 = vshrl.u32 %v3381, 7
  %v3383 = vsub.s32 %v3380, %v3382
  %v3384 = vrot.slane %v3368, %v3383
  %v3386 = vunpack.c.l.s4 1966171168
  %v3387 = vunpack.c.0.s8 %v3386
  %v3388 = vlaneseq
  %v3389 = vshrl.u32 %v3388, 7
  %v3390 = vsub.s32 %v3387, %v3389
  %v3391 = vrot.slane %v3369, %v3390
  %v3393 = vunpack.c.l.s4 1966171168
  %v3394 = vunpack.c.0.s8 %v3393
  %v3395 = vlaneseq
  %v3396 = vshrl.u32 %v3395, 7
  %v3397 = vsub.s32 %v3394, %v3396
  %v3398 = vrot.slane %v3370, %v3397
  %v3399 = vcombine.high %v3377, %v3377
  %v3400 = vcombine.high %v3384, %v3384
  %v3401 = vcombine.high %v3391, %v3391
  %v3402 = vcombine.high %v2900, %v2900
  %v3404 = vunpack.c.l.s4 1966171168
  %v3405 = vunpack.c.0.s8 %v3404
  %v3406 = vlaneseq
  %v3407 = vshrl.u32 %v3406, 7
  %v3408 = vsub.s32 %v3405, %v3407
  %v3409 = vrot.slane %v2900, %v3408
  %v3411 = vunpack.c.l.s4 1966171168
  %v3412 = vunpack.c.0.s8 %v3411
  %v3413 = vlaneseq
  %v3414 = vshrl.u32 %v3413, 7
  %v3415 = vsub.s32 %v3412, %v3414
  %v3416 = vrot.slane %v3402, %v3415
  %v3417 = vcombine.high %v3409, %v3409
  %v3418 = vcombine.high %v3416, %v3416
  %v3420 = vunpack.c.l.s4 1966171168
  %v3421 = vunpack.c.0.s8 %v3420
  %v3422 = vlaneseq
  %v3423 = vshrl.u32 %v3422, 7
  %v3424 = vsub.s32 %v3421, %v3423
  %v3425 = vrot.slane %v3409, %v3424
  %v3427 = vunpack.c.l.s4 1966171168
  %v3428 = vunpack.c.0.s8 %v3427
  %v3429 = vlaneseq
  %v3430 = vshrl.u32 %v3429, 7
  %v3431 = vsub.s32 %v3428, %v3430
  %v3432 = vrot.slane %v3416, %v3431
  %v3434 = vunpack.c.l.s4 1966171168
  %v3435 = vunpack.c.0.s8 %v3434
  %v3436 = vlaneseq
  %v3437 = vshrl.u32 %v3436, 7
  %v3438 = vsub.s32 %v3435, %v3437
  %v3439 = vrot.slane %v3417, %v3438
  %v3441 = vunpack.c.l.s4 1966171168
  %v3442 = vunpack.c.0.s8 %v3441
  %v3443 = vlaneseq
  %v3444 = vshrl.u32 %v3443, 7
  %v3445 = vsub.s32 %v3442, %v3444
  %v3446 = vrot.slane %v3418, %v3445
  %v3447 = vcombine.high %v3425, %v3425
  %v3448 = vcombine.high %v3432, %v3432
  %v3449 = vcombine.high %v3439, %v3439
  %v3450 = vcombine.high %v2901, %v2901
  %v3452 = vunpack.c.l.s4 1966171168
  %v3453 = vunpack.c.0.s8 %v3452
  %v3454 = vlaneseq
  %v3455 = vshrl.u32 %v3454, 7
  %v3456 = vsub.s32 %v3453, %v3455
  %v3457 = vrot.slane %v2901, %v3456
  %v3459 = vunpack.c.l.s4 1966171168
  %v3460 = vunpack.c.0.s8 %v3459
  %v3461 = vlaneseq
  %v3462 = vshrl.u32 %v3461, 7
  %v3463 = vsub.s32 %v3460, %v3462
  %v3464 = vrot.slane %v3450, %v3463
  %v3465 = vcombine.high %v3457, %v3457
  %v3466 = vcombine.high %v3464, %v3464
  %v3468 = vunpack.c.l.s4 1966171168
  %v3469 = vunpack.c.0.s8 %v3468
  %v3470 = vlaneseq
  %v3471 = vshrl.u32 %v3470, 7
  %v3472 = vsub.s32 %v3469, %v3471
  %v3473 = vrot.slane %v3457, %v3472
  %v3475 = vunpack.c.l.s4 1966171168
  %v3476 = vunpack.c.0.s8 %v3475
  %v3477 = vlaneseq
  %v3478 = vshrl.u32 %v3477, 7
  %v3479 = vsub.s32 %v3476, %v3478
  %v3480 = vrot.slane %v3464, %v3479
  %v3482 = vunpack.c.l.s4 1966171168
  %v3483 = vunpack.c.0.s8 %v3482
  %v3484 = vlaneseq
  %v3485 = vshrl.u32 %v3484, 7
  %v3486 = vsub.s32 %v3483, %v3485
  %v3487 = vrot.slane %v3465, %v3486
  %v3489 = vunpack.c.l.s4 1966171168
  %v3490 = vunpack.c.0.s8 %v3489
  %v3491 = vlaneseq
  %v3492 = vshrl.u32 %v3491, 7
  %v3493 = vsub.s32 %v3490, %v3492
  %v3494 = vrot.slane %v3466, %v3493
  %v3495 = vcombine.high %v3473, %v3473
  %v3496 = vcombine.high %v3480, %v3480
  %v3497 = vcombine.high %v3487, %v3487
  %v3498 = vcombine.high %v2902, %v2902
  %v3500 = vunpack.c.l.s4 1966171168
  %v3501 = vunpack.c.0.s8 %v3500
  %v3502 = vlaneseq
  %v3503 = vshrl.u32 %v3502, 7
  %v3504 = vsub.s32 %v3501, %v3503
  %v3505 = vrot.slane %v2902, %v3504
  %v3507 = vunpack.c.l.s4 1966171168
  %v3508 = vunpack.c.0.s8 %v3507
  %v3509 = vlaneseq
  %v3510 = vshrl.u32 %v3509, 7
  %v3511 = vsub.s32 %v3508, %v3510
  %v3512 = vrot.slane %v3498, %v3511
  %v3513 = vcombine.high %v3505, %v3505
  %v3514 = vcombine.high %v3512, %v3512
  %v3516 = vunpack.c.l.s4 1966171168
  %v3517 = vunpack.c.0.s8 %v3516
  %v3518 = vlaneseq
  %v3519 = vshrl.u32 %v3518, 7
  %v3520 = vsub.s32 %v3517, %v3519
  %v3521 = vrot.slane %v3505, %v3520
  %v3523 = vunpack.c.l.s4 1966171168
  %v3524 = vunpack.c.0.s8 %v3523
  %v3525 = vlaneseq
  %v3526 = vshrl.u32 %v3525, 7
  %v3527 = vsub.s32 %v3524, %v3526
  %v3528 = vrot.slane %v3512, %v3527
  %v3530 = vunpack.c.l.s4 1966171168
  %v3531 = vunpack.c.0.s8 %v3530
  %v3532 = vlaneseq
  %v3533 = vshrl.u32 %v3532, 7
  %v3534 = vsub.s32 %v3531, %v3533
  %v3535 = vrot.slane %v3513, %v3534
  %v3537 = vunpack.c.l.s4 1966171168
  %v3538 = vunpack.c.0.s8 %v3537
  %v3539 = vlaneseq
  %v3540 = vshrl.u32 %v3539, 7
  %v3541 = vsub.s32 %v3538, %v3540
  %v3542 = vrot.slane %v3514, %v3541
  %v3543 = vcombine.high %v3521, %v3521
  %v3544 = vcombine.high %v3528, %v3528
  %v3545 = vcombine.high %v3535, %v3535
  %v3546 = vcombine.high %v2903, %v2903
  %v3548 = vunpack.c.l.s4 1966171168
  %v3549 = vunpack.c.0.s8 %v3548
  %v3550 = vlaneseq
  %v3551 = vshrl.u32 %v3550, 7
  %v3552 = vsub.s32 %v3549, %v3551
  %v3553 = vrot.slane %v2903, %v3552
  %v3555 = vunpack.c.l.s4 1966171168
  %v3556 = vunpack.c.0.s8 %v3555
  %v3557 = vlaneseq
  %v3558 = vshrl.u32 %v3557, 7
  %v3559 = vsub.s32 %v3556, %v3558
  %v3560 = vrot.slane %v3546, %v3559
  %v3561 = vcombine.high %v3553, %v3553
  %v3562 = vcombine.high %v3560, %v3560
  %v3564 = vunpack.c.l.s4 1966171168
  %v3565 = vunpack.c.0.s8 %v3564
  %v3566 = vlaneseq
  %v3567 = vshrl.u32 %v3566, 7
  %v3568 = vsub.s32 %v3565, %v3567
  %v3569 = vrot.slane %v3553, %v3568
  %v3571 = vunpack.c.l.s4 1966171168
  %v3572 = vunpack.c.0.s8 %v3571
  %v3573 = vlaneseq
  %v3574 = vshrl.u32 %v3573, 7
  %v3575 = vsub.s32 %v3572, %v3574
  %v3576 = vrot.slane %v3560, %v3575
  %v3578 = vunpack.c.l.s4 1966171168
  %v3579 = vunpack.c.0.s8 %v3578
  %v3580 = vlaneseq
  %v3581 = vshrl.u32 %v3580, 7
  %v3582 = vsub.s32 %v3579, %v3581
  %v3583 = vrot.slane %v3561, %v3582
  %v3585 = vunpack.c.l.s4 1966171168
  %v3586 = vunpack.c.0.s8 %v3585
  %v3587 = vlaneseq
  %v3588 = vshrl.u32 %v3587, 7
  %v3589 = vsub.s32 %v3586, %v3588
  %v3590 = vrot.slane %v3562, %v3589
  %v3591 = vcombine.high %v3569, %v3569
  %v3592 = vcombine.high %v3576, %v3576
  %v3593 = vcombine.high %v3583, %v3583
  %v3594 = vcombine.high %v2904, %v2904
  %v3596 = vunpack.c.l.s4 1966171168
  %v3597 = vunpack.c.0.s8 %v3596
  %v3598 = vlaneseq
  %v3599 = vshrl.u32 %v3598, 7
  %v3600 = vsub.s32 %v3597, %v3599
  %v3601 = vrot.slane %v2904, %v3600
  %v3603 = vunpack.c.l.s4 1966171168
  %v3604 = vunpack.c.0.s8 %v3603
  %v3605 = vlaneseq
  %v3606 = vshrl.u32 %v3605, 7
  %v3607 = vsub.s32 %v3604, %v3606
  %v3608 = vrot.slane %v3594, %v3607
  %v3609 = vcombine.high %v3601, %v3601
  %v3610 = vcombine.high %v3608, %v3608
  %v3612 = vunpack.c.l.s4 1966171168
  %v3613 = vunpack.c.0.s8 %v3612
  %v3614 = vlaneseq
  %v3615 = vshrl.u32 %v3614, 7
  %v3616 = vsub.s32 %v3613, %v3615
  %v3617 = vrot.slane %v3601, %v3616
  %v3619 = vunpack.c.l.s4 1966171168
  %v3620 = vunpack.c.0.s8 %v3619
  %v3621 = vlaneseq
  %v3622 = vshrl.u32 %v3621, 7
  %v3623 = vsub.s32 %v3620, %v3622
  %v3624 = vrot.slane %v3608, %v3623
  %v3626 = vunpack.c.l.s4 1966171168
  %v3627 = vunpack.c.0.s8 %v3626
  %v3628 = vlaneseq
  %v3629 = vshrl.u32 %v3628, 7
  %v3630 = vsub.s32 %v3627, %v3629
  %v3631 = vrot.slane %v3609, %v3630
  %v3633 = vunpack.c.l.s4 1966171168
  %v3634 = vunpack.c.0.s8 %v3633
  %v3635 = vlaneseq
  %v3636 = vshrl.u32 %v3635, 7
  %v3637 = vsub.s32 %v3634, %v3636
  %v3638 = vrot.slane %v3610, %v3637
  %v3639 = vcombine.high %v3617, %v3617
  %v3640 = vcombine.high %v3624, %v3624
  %v3641 = vcombine.high %v3631, %v3631
  %v3642 = vcombine.high %v2905, %v2905
  %v3644 = vunpack.c.l.s4 1966171168
  %v3645 = vunpack.c.0.s8 %v3644
  %v3646 = vlaneseq
  %v3647 = vshrl.u32 %v3646, 7
  %v3648 = vsub.s32 %v3645, %v3647
  %v3649 = vrot.slane %v2905, %v3648
  %v3651 = vunpack.c.l.s4 1966171168
  %v3652 = vunpack.c.0.s8 %v3651
  %v3653 = vlaneseq
  %v3654 = vshrl.u32 %v3653, 7
  %v3655 = vsub.s32 %v3652, %v3654
  %v3656 = vrot.slane %v3642, %v3655
  %v3657 = vcombine.high %v3649, %v3649
  %v3658 = vcombine.high %v3656, %v3656
  %v3660 = vunpack.c.l.s4 1966171168
  %v3661 = vunpack.c.0.s8 %v3660
  %v3662 = vlaneseq
  %v3663 = vshrl.u32 %v3662, 7
  %v3664 = vsub.s32 %v3661, %v3663
  %v3665 = vrot.slane %v3649, %v3664
  %v3667 = vunpack.c.l.s4 1966171168
  %v3668 = vunpack.c.0.s8 %v3667
  %v3669 = vlaneseq
  %v3670 = vshrl.u32 %v3669, 7
  %v3671 = vsub.s32 %v3668, %v3670
  %v3672 = vrot.slane %v3656, %v3671
  %v3674 = vunpack.c.l.s4 1966171168
  %v3675 = vunpack.c.0.s8 %v3674
  %v3676 = vlaneseq
  %v3677 = vshrl.u32 %v3676, 7
  %v3678 = vsub.s32 %v3675, %v3677
  %v3679 = vrot.slane %v3657, %v3678
  %v3681 = vunpack.c.l.s4 1966171168
  %v3682 = vunpack.c.0.s8 %v3681
  %v3683 = vlaneseq
  %v3684 = vshrl.u32 %v3683, 7
  %v3685 = vsub.s32 %v3682, %v3684
  %v3686 = vrot.slane %v3658, %v3685
  %v3687 = vcombine.high %v3665, %v3665
  %v3688 = vcombine.high %v3672, %v3672
  %v3689 = vcombine.high %v3679, %v3679
  %v3690 = vld [vmem:[%s5] sm:$0xff]
  %v3691 = vld [vmem:[%s5 + $0x8] sm:$0xff]
  %v3692 = vld [vmem:[%s5 + $0x10] sm:$0xff]
  %v3693 = vld [vmem:[%s5 + $0x18] sm:$0xff]
  %v3694 = vld [vmem:[%s5 + $0x20] sm:$0xff]
  %v3695 = vld [vmem:[%s5 + $0x28] sm:$0xff]
  %v3696 = vld [vmem:[%s5 + $0x30] sm:$0xff]
  %v3697 = vld [vmem:[%s5 + $0x38] sm:$0xff]
  %v3698 = vld [vmem:[%s5 + $0x40] sm:$0xff]
  %v3699 = vld [vmem:[%s5 + $0x48] sm:$0xff]
  %v3700 = vld [vmem:[%s5 + $0x50] sm:$0xff]
  %v3701 = vld [vmem:[%s5 + $0x58] sm:$0xff]
  %v3702 = vld [vmem:[%s5 + $0x60] sm:$0xff]
  %v3703 = vld [vmem:[%s5 + $0x68] sm:$0xff]
  %v3704 = vld [vmem:[%s5 + $0x70] sm:$0xff]
  %v3705 = vld [vmem:[%s5 + $0x78] sm:$0xff]
  %v3706 = vld [vmem:[%s6] sm:$0x1]
  %v3708 = vlaneseq
  %v3709 = vshrl.u32 %v3708, 7
  %v3710 = vsub.s32 0, %v3709
  %v3711 = vrot.slane %v3706, %v3710
  %v3713 = vcombine.low %v2945, %v2959
  %v3714 = vcombine.low %v2967, %v2969
  %v3715 = vcombine.low %v2952, %v2966
  %v3716 = vcombine.low %v2968, %v2993
  %v3718 = vunpack.c.l.s4 1966171168
  %v3719 = vunpack.c.0.s8 %v3718
  %v3720 = vlaneseq
  %v3721 = vshrl.u32 %v3720, 7
  %v3722 = vsub.s32 %v3719, %v3721
  %v3723 = vrot.slane %v3713, %v3722
  %v3725 = vunpack.c.l.s4 1966171168
  %v3726 = vunpack.c.0.s8 %v3725
  %v3727 = vlaneseq
  %v3728 = vshrl.u32 %v3727, 7
  %v3729 = vsub.s32 %v3726, %v3728
  %v3730 = vrot.slane %v3714, %v3729
  %v3732 = vunpack.c.l.s4 1966171168
  %v3733 = vunpack.c.0.s8 %v3732
  %v3734 = vlaneseq
  %v3735 = vshrl.u32 %v3734, 7
  %v3736 = vsub.s32 %v3733, %v3735
  %v3737 = vrot.slane %v3715, %v3736
  %v3739 = vunpack.c.l.s4 1966171168
  %v3740 = vunpack.c.0.s8 %v3739
  %v3741 = vlaneseq
  %v3742 = vshrl.u32 %v3741, 7
  %v3743 = vsub.s32 %v3740, %v3742
  %v3744 = vrot.slane %v3716, %v3743
  %v3745 = vcombine.low %v3723, %v3730
  %v3746 = vcombine.low %v3737, %v3744
  %v3748 = vunpack.c.l.s4 1966171168
  %v3749 = vunpack.c.0.s8 %v3748
  %v3750 = vlaneseq
  %v3751 = vshrl.u32 %v3750, 7
  %v3752 = vsub.s32 %v3749, %v3751
  %v3753 = vrot.slane %v3745, %v3752
  %v3755 = vunpack.c.l.s4 1966171168
  %v3756 = vunpack.c.0.s8 %v3755
  %v3757 = vlaneseq
  %v3758 = vshrl.u32 %v3757, 7
  %v3759 = vsub.s32 %v3756, %v3758
  %v3760 = vrot.slane %v3746, %v3759
  %v3761 = vcombine.low %v3753, %v3760
  %v3762 = vcombine.low %v3007, %v3015
  %v3763 = vcombine.low %v3017, %v3000
  %v3764 = vcombine.low %v3014, %v3016
  %v3765 = vcombine.low %v3041, %v3055
  %v3767 = vunpack.c.l.s4 1966171168
  %v3768 = vunpack.c.0.s8 %v3767
  %v3769 = vlaneseq
  %v3770 = vshrl.u32 %v3769, 7
  %v3771 = vsub.s32 %v3768, %v3770
  %v3772 = vrot.slane %v3762, %v3771
  %v3774 = vunpack.c.l.s4 1966171168
  %v3775 = vunpack.c.0.s8 %v3774
  %v3776 = vlaneseq
  %v3777 = vshrl.u32 %v3776, 7
  %v3778 = vsub.s32 %v3775, %v3777
  %v3779 = vrot.slane %v3763, %v3778
  %v3781 = vunpack.c.l.s4 1966171168
  %v3782 = vunpack.c.0.s8 %v3781
  %v3783 = vlaneseq
  %v3784 = vshrl.u32 %v3783, 7
  %v3785 = vsub.s32 %v3782, %v3784
  %v3786 = vrot.slane %v3764, %v3785
  %v3788 = vunpack.c.l.s4 1966171168
  %v3789 = vunpack.c.0.s8 %v3788
  %v3790 = vlaneseq
  %v3791 = vshrl.u32 %v3790, 7
  %v3792 = vsub.s32 %v3789, %v3791
  %v3793 = vrot.slane %v3765, %v3792
  %v3794 = vcombine.low %v3772, %v3779
  %v3795 = vcombine.low %v3786, %v3793
  %v3797 = vunpack.c.l.s4 1966171168
  %v3798 = vunpack.c.0.s8 %v3797
  %v3799 = vlaneseq
  %v3800 = vshrl.u32 %v3799, 7
  %v3801 = vsub.s32 %v3798, %v3800
  %v3802 = vrot.slane %v3794, %v3801
  %v3804 = vunpack.c.l.s4 1966171168
  %v3805 = vunpack.c.0.s8 %v3804
  %v3806 = vlaneseq
  %v3807 = vshrl.u32 %v3806, 7
  %v3808 = vsub.s32 %v3805, %v3807
  %v3809 = vrot.slane %v3795, %v3808
  %v3810 = vcombine.low %v3802, %v3809
  %v3811 = vcombine.low %v3063, %v3065
  %v3812 = vcombine.low %v3048, %v3062
  %v3813 = vcombine.low %v3064, %v3089
  %v3814 = vcombine.low %v3103, %v3111
  %v3816 = vunpack.c.l.s4 1966171168
  %v3817 = vunpack.c.0.s8 %v3816
  %v3818 = vlaneseq
  %v3819 = vshrl.u32 %v3818, 7
  %v3820 = vsub.s32 %v3817, %v3819
  %v3821 = vrot.slane %v3811, %v3820
  %v3823 = vunpack.c.l.s4 1966171168
  %v3824 = vunpack.c.0.s8 %v3823
  %v3825 = vlaneseq
  %v3826 = vshrl.u32 %v3825, 7
  %v3827 = vsub.s32 %v3824, %v3826
  %v3828 = vrot.slane %v3812, %v3827
  %v3830 = vunpack.c.l.s4 1966171168
  %v3831 = vunpack.c.0.s8 %v3830
  %v3832 = vlaneseq
  %v3833 = vshrl.u32 %v3832, 7
  %v3834 = vsub.s32 %v3831, %v3833
  %v3835 = vrot.slane %v3813, %v3834
  %v3837 = vunpack.c.l.s4 1966171168
  %v3838 = vunpack.c.0.s8 %v3837
  %v3839 = vlaneseq
  %v3840 = vshrl.u32 %v3839, 7
  %v3841 = vsub.s32 %v3838, %v3840
  %v3842 = vrot.slane %v3814, %v3841
  %v3843 = vcombine.low %v3821, %v3828
  %v3844 = vcombine.low %v3835, %v3842
  %v3846 = vunpack.c.l.s4 1966171168
  %v3847 = vunpack.c.0.s8 %v3846
  %v3848 = vlaneseq
  %v3849 = vshrl.u32 %v3848, 7
  %v3850 = vsub.s32 %v3847, %v3849
  %v3851 = vrot.slane %v3843, %v3850
  %v3853 = vunpack.c.l.s4 1966171168
  %v3854 = vunpack.c.0.s8 %v3853
  %v3855 = vlaneseq
  %v3856 = vshrl.u32 %v3855, 7
  %v3857 = vsub.s32 %v3854, %v3856
  %v3858 = vrot.slane %v3844, %v3857
  %v3859 = vcombine.low %v3851, %v3858
  %v3860 = vcombine.low %v3113, %v3096
  %v3861 = vcombine.low %v3110, %v3112
  %v3862 = vcombine.low %v3137, %v3151
  %v3863 = vcombine.low %v3159, %v3161
  %v3865 = vunpack.c.l.s4 1966171168
  %v3866 = vunpack.c.0.s8 %v3865
  %v3867 = vlaneseq
  %v3868 = vshrl.u32 %v3867, 7
  %v3869 = vsub.s32 %v3866, %v3868
  %v3870 = vrot.slane %v3860, %v3869
  %v3872 = vunpack.c.l.s4 1966171168
  %v3873 = vunpack.c.0.s8 %v3872
  %v3874 = vlaneseq
  %v3875 = vshrl.u32 %v3874, 7
  %v3876 = vsub.s32 %v3873, %v3875
  %v3877 = vrot.slane %v3861, %v3876
  %v3879 = vunpack.c.l.s4 1966171168
  %v3880 = vunpack.c.0.s8 %v3879
  %v3881 = vlaneseq
  %v3882 = vshrl.u32 %v3881, 7
  %v3883 = vsub.s32 %v3880, %v3882
  %v3884 = vrot.slane %v3862, %v3883
  %v3886 = vunpack.c.l.s4 1966171168
  %v3887 = vunpack.c.0.s8 %v3886
  %v3888 = vlaneseq
  %v3889 = vshrl.u32 %v3888, 7
  %v3890 = vsub.s32 %v3887, %v3889
  %v3891 = vrot.slane %v3863, %v3890
  %v3892 = vcombine.low %v3870, %v3877
  %v3893 = vcombine.low %v3884, %v3891
  %v3895 = vunpack.c.l.s4 1966171168
  %v3896 = vunpack.c.0.s8 %v3895
  %v3897 = vlaneseq
  %v3898 = vshrl.u32 %v3897, 7
  %v3899 = vsub.s32 %v3896, %v3898
  %v3900 = vrot.slane %v3892, %v3899
  %v3902 = vunpack.c.l.s4 1966171168
  %v3903 = vunpack.c.0.s8 %v3902
  %v3904 = vlaneseq
  %v3905 = vshrl.u32 %v3904, 7
  %v3906 = vsub.s32 %v3903, %v3905
  %v3907 = vrot.slane %v3893, %v3906
  %v3908 = vcombine.low %v3900, %v3907
  %v3909 = vcombine.low %v3144, %v3158
  %v3910 = vcombine.low %v3160, %v3185
  %v3911 = vcombine.low %v3199, %v3207
  %v3912 = vcombine.low %v3209, %v3192
  %v3914 = vunpack.c.l.s4 1966171168
  %v3915 = vunpack.c.0.s8 %v3914
  %v3916 = vlaneseq
  %v3917 = vshrl.u32 %v3916, 7
  %v3918 = vsub.s32 %v3915, %v3917
  %v3919 = vrot.slane %v3909, %v3918
  %v3921 = vunpack.c.l.s4 1966171168
  %v3922 = vunpack.c.0.s8 %v3921
  %v3923 = vlaneseq
  %v3924 = vshrl.u32 %v3923, 7
  %v3925 = vsub.s32 %v3922, %v3924
  %v3926 = vrot.slane %v3910, %v3925
  %v3928 = vunpack.c.l.s4 1966171168
  %v3929 = vunpack.c.0.s8 %v3928
  %v3930 = vlaneseq
  %v3931 = vshrl.u32 %v3930, 7
  %v3932 = vsub.s32 %v3929, %v3931
  %v3933 = vrot.slane %v3911, %v3932
  %v3935 = vunpack.c.l.s4 1966171168
  %v3936 = vunpack.c.0.s8 %v3935
  %v3937 = vlaneseq
  %v3938 = vshrl.u32 %v3937, 7
  %v3939 = vsub.s32 %v3936, %v3938
  %v3940 = vrot.slane %v3912, %v3939
  %v3941 = vcombine.low %v3919, %v3926
  %v3942 = vcombine.low %v3933, %v3940
  %v3944 = vunpack.c.l.s4 1966171168
  %v3945 = vunpack.c.0.s8 %v3944
  %v3946 = vlaneseq
  %v3947 = vshrl.u32 %v3946, 7
  %v3948 = vsub.s32 %v3945, %v3947
  %v3949 = vrot.slane %v3941, %v3948
  %v3951 = vunpack.c.l.s4 1966171168
  %v3952 = vunpack.c.0.s8 %v3951
  %v3953 = vlaneseq
  %v3954 = vshrl.u32 %v3953, 7
  %v3955 = vsub.s32 %v3952, %v3954
  %v3956 = vrot.slane %v3942, %v3955
  %v3957 = vcombine.low %v3949, %v3956
  %v3958 = vcombine.low %v3206, %v3208
  %v3959 = vcombine.low %v3233, %v3247
  %v3960 = vcombine.low %v3255, %v3257
  %v3961 = vcombine.low %v3240, %v3254
  %v3963 = vunpack.c.l.s4 1966171168
  %v3964 = vunpack.c.0.s8 %v3963
  %v3965 = vlaneseq
  %v3966 = vshrl.u32 %v3965, 7
  %v3967 = vsub.s32 %v3964, %v3966
  %v3968 = vrot.slane %v3958, %v3967
  %v3970 = vunpack.c.l.s4 1966171168
  %v3971 = vunpack.c.0.s8 %v3970
  %v3972 = vlaneseq
  %v3973 = vshrl.u32 %v3972, 7
  %v3974 = vsub.s32 %v3971, %v3973
  %v3975 = vrot.slane %v3959, %v3974
  %v3977 = vunpack.c.l.s4 1966171168
  %v3978 = vunpack.c.0.s8 %v3977
  %v3979 = vlaneseq
  %v3980 = vshrl.u32 %v3979, 7
  %v3981 = vsub.s32 %v3978, %v3980
  %v3982 = vrot.slane %v3960, %v3981
  %v3984 = vunpack.c.l.s4 1966171168
  %v3985 = vunpack.c.0.s8 %v3984
  %v3986 = vlaneseq
  %v3987 = vshrl.u32 %v3986, 7
  %v3988 = vsub.s32 %v3985, %v3987
  %v3989 = vrot.slane %v3961, %v3988
  %v3990 = vcombine.low %v3968, %v3975
  %v3991 = vcombine.low %v3982, %v3989
  %v3993 = vunpack.c.l.s4 1966171168
  %v3994 = vunpack.c.0.s8 %v3993
  %v3995 = vlaneseq
  %v3996 = vshrl.u32 %v3995, 7
  %v3997 = vsub.s32 %v3994, %v3996
  %v3998 = vrot.slane %v3990, %v3997
  %v4000 = vunpack.c.l.s4 1966171168
  %v4001 = vunpack.c.0.s8 %v4000
  %v4002 = vlaneseq
  %v4003 = vshrl.u32 %v4002, 7
  %v4004 = vsub.s32 %v4001, %v4003
  %v4005 = vrot.slane %v3991, %v4004
  %v4006 = vcombine.low %v3998, %v4005
  %v4007 = vcombine.low %v3256, %v3281
  %v4008 = vcombine.low %v3295, %v3303
  %v4009 = vcombine.low %v3305, %v3288
  %v4010 = vcombine.low %v3302, %v3304
  %v4012 = vunpack.c.l.s4 1966171168
  %v4013 = vunpack.c.0.s8 %v4012
  %v4014 = vlaneseq
  %v4015 = vshrl.u32 %v4014, 7
  %v4016 = vsub.s32 %v4013, %v4015
  %v4017 = vrot.slane %v4007, %v4016
  %v4019 = vunpack.c.l.s4 1966171168
  %v4020 = vunpack.c.0.s8 %v4019
  %v4021 = vlaneseq
  %v4022 = vshrl.u32 %v4021, 7
  %v4023 = vsub.s32 %v4020, %v4022
  %v4024 = vrot.slane %v4008, %v4023
  %v4026 = vunpack.c.l.s4 1966171168
  %v4027 = vunpack.c.0.s8 %v4026
  %v4028 = vlaneseq
  %v4029 = vshrl.u32 %v4028, 7
  %v4030 = vsub.s32 %v4027, %v4029
  %v4031 = vrot.slane %v4009, %v4030
  %v4033 = vunpack.c.l.s4 1966171168
  %v4034 = vunpack.c.0.s8 %v4033
  %v4035 = vlaneseq
  %v4036 = vshrl.u32 %v4035, 7
  %v4037 = vsub.s32 %v4034, %v4036
  %v4038 = vrot.slane %v4010, %v4037
  %v4039 = vcombine.low %v4017, %v4024
  %v4040 = vcombine.low %v4031, %v4038
  %v4042 = vunpack.c.l.s4 1966171168
  %v4043 = vunpack.c.0.s8 %v4042
  %v4044 = vlaneseq
  %v4045 = vshrl.u32 %v4044, 7
  %v4046 = vsub.s32 %v4043, %v4045
  %v4047 = vrot.slane %v4039, %v4046
  %v4049 = vunpack.c.l.s4 1966171168
  %v4050 = vunpack.c.0.s8 %v4049
  %v4051 = vlaneseq
  %v4052 = vshrl.u32 %v4051, 7
  %v4053 = vsub.s32 %v4050, %v4052
  %v4054 = vrot.slane %v4040, %v4053
  %v4055 = vcombine.low %v4047, %v4054
  %v4056 = vcombine.low %v3329, %v3343
  %v4057 = vcombine.low %v3351, %v3353
  %v4058 = vcombine.low %v3336, %v3350
  %v4059 = vcombine.low %v3352, %v3377
  %v4061 = vunpack.c.l.s4 1966171168
  %v4062 = vunpack.c.0.s8 %v4061
  %v4063 = vlaneseq
  %v4064 = vshrl.u32 %v4063, 7
  %v4065 = vsub.s32 %v4062, %v4064
  %v4066 = vrot.slane %v4056, %v4065
  %v4068 = vunpack.c.l.s4 1966171168
  %v4069 = vunpack.c.0.s8 %v4068
  %v4070 = vlaneseq
  %v4071 = vshrl.u32 %v4070, 7
  %v4072 = vsub.s32 %v4069, %v4071
  %v4073 = vrot.slane %v4057, %v4072
  %v4075 = vunpack.c.l.s4 1966171168
  %v4076 = vunpack.c.0.s8 %v4075
  %v4077 = vlaneseq
  %v4078 = vshrl.u32 %v4077, 7
  %v4079 = vsub.s32 %v4076, %v4078
  %v4080 = vrot.slane %v4058, %v4079
  %v4082 = vunpack.c.l.s4 1966171168
  %v4083 = vunpack.c.0.s8 %v4082
  %v4084 = vlaneseq
  %v4085 = vshrl.u32 %v4084, 7
  %v4086 = vsub.s32 %v4083, %v4085
  %v4087 = vrot.slane %v4059, %v4086
  %v4088 = vcombine.low %v4066, %v4073
  %v4089 = vcombine.low %v4080, %v4087
  %v4091 = vunpack.c.l.s4 1966171168
  %v4092 = vunpack.c.0.s8 %v4091
  %v4093 = vlaneseq
  %v4094 = vshrl.u32 %v4093, 7
  %v4095 = vsub.s32 %v4092, %v4094
  %v4096 = vrot.slane %v4088, %v4095
  %v4098 = vunpack.c.l.s4 1966171168
  %v4099 = vunpack.c.0.s8 %v4098
  %v4100 = vlaneseq
  %v4101 = vshrl.u32 %v4100, 7
  %v4102 = vsub.s32 %v4099, %v4101
  %v4103 = vrot.slane %v4089, %v4102
  %v4104 = vcombine.low %v4096, %v4103
  %v4105 = vcombine.low %v3391, %v3399
  %v4106 = vcombine.low %v3401, %v3384
  %v4107 = vcombine.low %v3398, %v3400
  %v4108 = vcombine.low %v3425, %v3439
  %v4110 = vunpack.c.l.s4 1966171168
  %v4111 = vunpack.c.0.s8 %v4110
  %v4112 = vlaneseq
  %v4113 = vshrl.u32 %v4112, 7
  %v4114 = vsub.s32 %v4111, %v4113
  %v4115 = vrot.slane %v4105, %v4114
  %v4117 = vunpack.c.l.s4 1966171168
  %v4118 = vunpack.c.0.s8 %v4117
  %v4119 = vlaneseq
  %v4120 = vshrl.u32 %v4119, 7
  %v4121 = vsub.s32 %v4118, %v4120
  %v4122 = vrot.slane %v4106, %v4121
  %v4124 = vunpack.c.l.s4 1966171168
  %v4125 = vunpack.c.0.s8 %v4124
  %v4126 = vlaneseq
  %v4127 = vshrl.u32 %v4126, 7
  %v4128 = vsub.s32 %v4125, %v4127
  %v4129 = vrot.slane %v4107, %v4128
  %v4131 = vunpack.c.l.s4 1966171168
  %v4132 = vunpack.c.0.s8 %v4131
  %v4133 = vlaneseq
  %v4134 = vshrl.u32 %v4133, 7
  %v4135 = vsub.s32 %v4132, %v4134
  %v4136 = vrot.slane %v4108, %v4135
  %v4137 = vcombine.low %v4115, %v4122
  %v4138 = vcombine.low %v4129, %v4136
  %v4140 = vunpack.c.l.s4 1966171168
  %v4141 = vunpack.c.0.s8 %v4140
  %v4142 = vlaneseq
  %v4143 = vshrl.u32 %v4142, 7
  %v4144 = vsub.s32 %v4141, %v4143
  %v4145 = vrot.slane %v4137, %v4144
  %v4147 = vunpack.c.l.s4 1966171168
  %v4148 = vunpack.c.0.s8 %v4147
  %v4149 = vlaneseq
  %v4150 = vshrl.u32 %v4149, 7
  %v4151 = vsub.s32 %v4148, %v4150
  %v4152 = vrot.slane %v4138, %v4151
  %v4153 = vcombine.low %v4145, %v4152
  %v4154 = vcombine.low %v3447, %v3449
  %v4155 = vcombine.low %v3432, %v3446
  %v4156 = vcombine.low %v3448, %v3473
  %v4157 = vcombine.low %v3487, %v3495
  %v4159 = vunpack.c.l.s4 1966171168
  %v4160 = vunpack.c.0.s8 %v4159
  %v4161 = vlaneseq
  %v4162 = vshrl.u32 %v4161, 7
  %v4163 = vsub.s32 %v4160, %v4162
  %v4164 = vrot.slane %v4154, %v4163
  %v4166 = vunpack.c.l.s4 1966171168
  %v4167 = vunpack.c.0.s8 %v4166
  %v4168 = vlaneseq
  %v4169 = vshrl.u32 %v4168, 7
  %v4170 = vsub.s32 %v4167, %v4169
  %v4171 = vrot.slane %v4155, %v4170
  %v4173 = vunpack.c.l.s4 1966171168
  %v4174 = vunpack.c.0.s8 %v4173
  %v4175 = vlaneseq
  %v4176 = vshrl.u32 %v4175, 7
  %v4177 = vsub.s32 %v4174, %v4176
  %v4178 = vrot.slane %v4156, %v4177
  %v4180 = vunpack.c.l.s4 1966171168
  %v4181 = vunpack.c.0.s8 %v4180
  %v4182 = vlaneseq
  %v4183 = vshrl.u32 %v4182, 7
  %v4184 = vsub.s32 %v4181, %v4183
  %v4185 = vrot.slane %v4157, %v4184
  %v4186 = vcombine.low %v4164, %v4171
  %v4187 = vcombine.low %v4178, %v4185
  %v4189 = vunpack.c.l.s4 1966171168
  %v4190 = vunpack.c.0.s8 %v4189
  %v4191 = vlaneseq
  %v4192 = vshrl.u32 %v4191, 7
  %v4193 = vsub.s32 %v4190, %v4192
  %v4194 = vrot.slane %v4186, %v4193
  %v4196 = vunpack.c.l.s4 1966171168
  %v4197 = vunpack.c.0.s8 %v4196
  %v4198 = vlaneseq
  %v4199 = vshrl.u32 %v4198, 7
  %v4200 = vsub.s32 %v4197, %v4199
  %v4201 = vrot.slane %v4187, %v4200
  %v4202 = vcombine.low %v4194, %v4201
  %v4203 = vcombine.low %v3497, %v3480
  %v4204 = vcombine.low %v3494, %v3496
  %v4205 = vcombine.low %v3521, %v3535
  %v4206 = vcombine.low %v3543, %v3545
  %v4208 = vunpack.c.l.s4 1966171168
  %v4209 = vunpack.c.0.s8 %v4208
  %v4210 = vlaneseq
  %v4211 = vshrl.u32 %v4210, 7
  %v4212 = vsub.s32 %v4209, %v4211
  %v4213 = vrot.slane %v4203, %v4212
  %v4215 = vunpack.c.l.s4 1966171168
  %v4216 = vunpack.c.0.s8 %v4215
  %v4217 = vlaneseq
  %v4218 = vshrl.u32 %v4217, 7
  %v4219 = vsub.s32 %v4216, %v4218
  %v4220 = vrot.slane %v4204, %v4219
  %v4222 = vunpack.c.l.s4 1966171168
  %v4223 = vunpack.c.0.s8 %v4222
  %v4224 = vlaneseq
  %v4225 = vshrl.u32 %v4224, 7
  %v4226 = vsub.s32 %v4223, %v4225
  %v4227 = vrot.slane %v4205, %v4226
  %v4229 = vunpack.c.l.s4 1966171168
  %v4230 = vunpack.c.0.s8 %v4229
  %v4231 = vlaneseq
  %v4232 = vshrl.u32 %v4231, 7
  %v4233 = vsub.s32 %v4230, %v4232
  %v4234 = vrot.slane %v4206, %v4233
  %v4235 = vcombine.low %v4213, %v4220
  %v4236 = vcombine.low %v4227, %v4234
  %v4238 = vunpack.c.l.s4 1966171168
  %v4239 = vunpack.c.0.s8 %v4238
  %v4240 = vlaneseq
  %v4241 = vshrl.u32 %v4240, 7
  %v4242 = vsub.s32 %v4239, %v4241
  %v4243 = vrot.slane %v4235, %v4242
  %v4245 = vunpack.c.l.s4 1966171168
  %v4246 = vunpack.c.0.s8 %v4245
  %v4247 = vlaneseq
  %v4248 = vshrl.u32 %v4247, 7
  %v4249 = vsub.s32 %v4246, %v4248
  %v4250 = vrot.slane %v4236, %v4249
  %v4251 = vcombine.low %v4243, %v4250
  %v4252 = vcombine.low %v3528, %v3542
  %v4253 = vcombine.low %v3544, %v3569
  %v4254 = vcombine.low %v3583, %v3591
  %v4255 = vcombine.low %v3593, %v3576
  %v4257 = vunpack.c.l.s4 1966171168
  %v4258 = vunpack.c.0.s8 %v4257
  %v4259 = vlaneseq
  %v4260 = vshrl.u32 %v4259, 7
  %v4261 = vsub.s32 %v4258, %v4260
  %v4262 = vrot.slane %v4252, %v4261
  %v4264 = vunpack.c.l.s4 1966171168
  %v4265 = vunpack.c.0.s8 %v4264
  %v4266 = vlaneseq
  %v4267 = vshrl.u32 %v4266, 7
  %v4268 = vsub.s32 %v4265, %v4267
  %v4269 = vrot.slane %v4253, %v4268
  %v4271 = vunpack.c.l.s4 1966171168
  %v4272 = vunpack.c.0.s8 %v4271
  %v4273 = vlaneseq
  %v4274 = vshrl.u32 %v4273, 7
  %v4275 = vsub.s32 %v4272, %v4274
  %v4276 = vrot.slane %v4254, %v4275
  %v4278 = vunpack.c.l.s4 1966171168
  %v4279 = vunpack.c.0.s8 %v4278
  %v4280 = vlaneseq
  %v4281 = vshrl.u32 %v4280, 7
  %v4282 = vsub.s32 %v4279, %v4281
  %v4283 = vrot.slane %v4255, %v4282
  %v4284 = vcombine.low %v4262, %v4269
  %v4285 = vcombine.low %v4276, %v4283
  %v4287 = vunpack.c.l.s4 1966171168
  %v4288 = vunpack.c.0.s8 %v4287
  %v4289 = vlaneseq
  %v4290 = vshrl.u32 %v4289, 7
  %v4291 = vsub.s32 %v4288, %v4290
  %v4292 = vrot.slane %v4284, %v4291
  %v4294 = vunpack.c.l.s4 1966171168
  %v4295 = vunpack.c.0.s8 %v4294
  %v4296 = vlaneseq
  %v4297 = vshrl.u32 %v4296, 7
  %v4298 = vsub.s32 %v4295, %v4297
  %v4299 = vrot.slane %v4285, %v4298
  %v4300 = vcombine.low %v4292, %v4299
  %v4301 = vcombine.low %v3590, %v3592
  %v4302 = vcombine.low %v3617, %v3631
  %v4303 = vcombine.low %v3639, %v3641
  %v4304 = vcombine.low %v3624, %v3638
  %v4306 = vunpack.c.l.s4 1966171168
  %v4307 = vunpack.c.0.s8 %v4306
  %v4308 = vlaneseq
  %v4309 = vshrl.u32 %v4308, 7
  %v4310 = vsub.s32 %v4307, %v4309
  %v4311 = vrot.slane %v4301, %v4310
  %v4313 = vunpack.c.l.s4 1966171168
  %v4314 = vunpack.c.0.s8 %v4313
  %v4315 = vlaneseq
  %v4316 = vshrl.u32 %v4315, 7
  %v4317 = vsub.s32 %v4314, %v4316
  %v4318 = vrot.slane %v4302, %v4317
  %v4320 = vunpack.c.l.s4 1966171168
  %v4321 = vunpack.c.0.s8 %v4320
  %v4322 = vlaneseq
  %v4323 = vshrl.u32 %v4322, 7
  %v4324 = vsub.s32 %v4321, %v4323
  %v4325 = vrot.slane %v4303, %v4324
  %v4327 = vunpack.c.l.s4 1966171168
  %v4328 = vunpack.c.0.s8 %v4327
  %v4329 = vlaneseq
  %v4330 = vshrl.u32 %v4329, 7
  %v4331 = vsub.s32 %v4328, %v4330
  %v4332 = vrot.slane %v4304, %v4331
  %v4333 = vcombine.low %v4311, %v4318
  %v4334 = vcombine.low %v4325, %v4332
  %v4336 = vunpack.c.l.s4 1966171168
  %v4337 = vunpack.c.0.s8 %v4336
  %v4338 = vlaneseq
  %v4339 = vshrl.u32 %v4338, 7
  %v4340 = vsub.s32 %v4337, %v4339
  %v4341 = vrot.slane %v4333, %v4340
  %v4343 = vunpack.c.l.s4 1966171168
  %v4344 = vunpack.c.0.s8 %v4343
  %v4345 = vlaneseq
  %v4346 = vshrl.u32 %v4345, 7
  %v4347 = vsub.s32 %v4344, %v4346
  %v4348 = vrot.slane %v4334, %v4347
  %v4349 = vcombine.low %v4341, %v4348
  %v4350 = vcombine.low %v3640, %v3665
  %v4351 = vcombine.low %v3679, %v3687
  %v4352 = vcombine.low %v3689, %v3672
  %v4353 = vcombine.low %v3686, %v3688
  %v4355 = vunpack.c.l.s4 1966171168
  %v4356 = vunpack.c.0.s8 %v4355
  %v4357 = vlaneseq
  %v4358 = vshrl.u32 %v4357, 7
  %v4359 = vsub.s32 %v4356, %v4358
  %v4360 = vrot.slane %v4350, %v4359
  %v4362 = vunpack.c.l.s4 1966171168
  %v4363 = vunpack.c.0.s8 %v4362
  %v4364 = vlaneseq
  %v4365 = vshrl.u32 %v4364, 7
  %v4366 = vsub.s32 %v4363, %v4365
  %v4367 = vrot.slane %v4351, %v4366
  %v4369 = vunpack.c.l.s4 1966171168
  %v4370 = vunpack.c.0.s8 %v4369
  %v4371 = vlaneseq
  %v4372 = vshrl.u32 %v4371, 7
  %v4373 = vsub.s32 %v4370, %v4372
  %v4374 = vrot.slane %v4352, %v4373
  %v4376 = vunpack.c.l.s4 1966171168
  %v4377 = vunpack.c.0.s8 %v4376
  %v4378 = vlaneseq
  %v4379 = vshrl.u32 %v4378, 7
  %v4380 = vsub.s32 %v4377, %v4379
  %v4381 = vrot.slane %v4353, %v4380
  %v4382 = vcombine.low %v4360, %v4367
  %v4383 = vcombine.low %v4374, %v4381
  %v4385 = vunpack.c.l.s4 1966171168
  %v4386 = vunpack.c.0.s8 %v4385
  %v4387 = vlaneseq
  %v4388 = vshrl.u32 %v4387, 7
  %v4389 = vsub.s32 %v4386, %v4388
  %v4390 = vrot.slane %v4382, %v4389
  %v4392 = vunpack.c.l.s4 1966171168
  %v4393 = vunpack.c.0.s8 %v4392
  %v4394 = vlaneseq
  %v4395 = vshrl.u32 %v4394, 7
  %v4396 = vsub.s32 %v4393, %v4395
  %v4397 = vrot.slane %v4383, %v4396
  %v4398 = vcombine.low %v4390, %v4397
  %4413 = vmatprep.subr.mxu0 0.0
  %4414 = vmatpush1.msra.mxu0 %v3690
  %4415 = vmatprep.subr.mxu0 0.0
  %4416 = vmatpush1.msra.mxu0 %v3691
  %4417 = vmatprep.subr.mxu0 0.0
  %4418 = vmatpush1.msra.mxu0 %v3692
  %4419 = vmatprep.subr.mxu0 0.0
  %4420 = vmatpush1.msra.mxu0 %v3693
  %4421 = vmatprep.subr.mxu0 0.0
  %4422 = vmatpush1.msra.mxu0 %v3694
  %4423 = vmatprep.subr.mxu0 0.0
  %4424 = vmatpush1.msra.mxu0 %v3695
  %4425 = vmatprep.subr.mxu0 0.0
  %4426 = vmatpush1.msra.mxu0 %v3696
  %4427 = vmatprep.subr.mxu0 0.0
  %4428 = vmatpush1.msra.mxu0 %v3697
  %4429 = vmatprep.subr.mxu0 0.0
  %4430 = vmatpush1.msra.mxu0 %v3698
  %4431 = vmatprep.subr.mxu0 0.0
  %4432 = vmatpush1.msra.mxu0 %v3699
  %4433 = vmatprep.subr.mxu0 0.0
  %4434 = vmatpush1.msra.mxu0 %v3700
  %4435 = vmatprep.subr.mxu0 0.0
  %4436 = vmatpush1.msra.mxu0 %v3701
  %4437 = vmatprep.subr.mxu0 0.0
  %4438 = vmatpush1.msra.mxu0 %v3702
  %4439 = vmatprep.subr.mxu0 0.0
  %4440 = vmatpush1.msra.mxu0 %v3703
  %4441 = vmatprep.subr.mxu0 0.0
  %4442 = vmatpush1.msra.mxu0 %v3704
  %4443 = vmatprep.subr.mxu0 0.0
  %4444 = vmatpush1.msra.mxu0 %v3705
  %4445 = vmatprep.subr.mxu0 0.0
  %4446 = vmatpush1.msra.mxu0 0.0
  %4447 = vmatprep.subr.mxu0 0.0
  %4448 = vmatpush1.msra.mxu0 0.0
  %4449 = vmatprep.subr.mxu0 0.0
  %4450 = vmatpush1.msra.mxu0 0.0
  %4451 = vmatprep.subr.mxu0 0.0
  %4452 = vmatpush1.msra.mxu0 0.0
  %4453 = vmatprep.subr.mxu0 0.0
  %4454 = vmatpush1.msra.mxu0 0.0
  %4455 = vmatprep.subr.mxu0 0.0
  %4456 = vmatpush1.msra.mxu0 0.0
  %4457 = vmatprep.subr.mxu0 0.0
  %4458 = vmatpush1.msra.mxu0 0.0
  %4459 = vmatprep.subr.mxu0 0.0
  %4460 = vmatpush1.msra.mxu0 0.0
  %4461 = vmatprep.subr.mxu0 0.0
  %4462 = vmatpush1.msra.mxu0 0.0
  %4463 = vmatprep.subr.mxu0 0.0
  %4464 = vmatpush1.msra.mxu0 0.0
  %4465 = vmatprep.subr.mxu0 0.0
  %4466 = vmatpush1.msra.mxu0 0.0
  %4467 = vmatprep.subr.mxu0 0.0
  %4468 = vmatpush1.msra.mxu0 0.0
  %4469 = vmatprep.subr.mxu0 0.0
  %4470 = vmatpush1.msra.mxu0 0.0
  %4471 = vmatprep.subr.mxu0 0.0
  %4472 = vmatpush1.msra.mxu0 0.0
  %4473 = vmatprep.subr.mxu0 0.0
  %4474 = vmatpush1.msra.mxu0 0.0
  %4475 = vmatprep.subr.mxu0 0.0
  %4476 = vmatpush1.msra.mxu0 0.0
  %4477 = vmatprep.mubr.f32.mxu0 0.0
  %4478 = vmatmul.mubr.f32.gmra.mrb[0].mxu0 %v3761
  %v4479 = vpop.f32.mrb[0].mxu0
  %v4480 = vadd.f32 %v3711, %v4479
  %v4481 = vpop.f32.mrb[0].mxu0
  %4482 = vmatprep.mubr.f32.mxu0 0.0
  %4483 = vmatmul.mubr.f32.gmra.mrb[0].mxu0 %v3810
  %v4484 = vpop.f32.mrb[0].mxu0
  %v4485 = vadd.f32 %v3711, %v4484
  %v4486 = vpop.f32.mrb[0].mxu0
  %4487 = vmatprep.mubr.f32.mxu0 0.0
  %4488 = vmatmul.mubr.f32.gmra.mrb[0].mxu0 %v3859
  %v4489 = vpop.f32.mrb[0].mxu0
  %v4490 = vadd.f32 %v3711, %v4489
  %v4491 = vpop.f32.mrb[0].mxu0
  %4492 = vmatprep.mubr.f32.mxu0 0.0
  %4493 = vmatmul.mubr.f32.gmra.mrb[0].mxu0 %v3908
  %v4494 = vpop.f32.mrb[0].mxu0
  %v4495 = vadd.f32 %v3711, %v4494
  %v4496 = vpop.f32.mrb[0].mxu0
  %4497 = vmatprep.mubr.f32.mxu0 0.0
  %4498 = vmatmul.mubr.f32.gmra.mrb[0].mxu0 %v3957
  %v4499 = vpop.f32.mrb[0].mxu0
  %v4500 = vadd.f32 %v3711, %v4499
  %v4501 = vpop.f32.mrb[0].mxu0
  %4502 = vmatprep.mubr.f32.mxu0 0.0
  %4503 = vmatmul.mubr.f32.gmra.mrb[0].mxu0 %v4006
  %v4504 = vpop.f32.mrb[0].mxu0
  %v4505 = vadd.f32 %v3711, %v4504
  %v4506 = vpop.f32.mrb[0].mxu0
  %4507 = vmatprep.mubr.f32.mxu0 0.0
  %4508 = vmatmul.mubr.f32.gmra.mrb[0].mxu0 %v4055
  %v4509 = vpop.f32.mrb[0].mxu0
  %v4510 = vadd.f32 %v3711, %v4509
  %v4511 = vpop.f32.mrb[0].mxu0
  %4512 = vmatprep.mubr.f32.mxu0 0.0
  %4513 = vmatmul.mubr.f32.gmra.mrb[0].mxu0 %v4104
  %v4514 = vpop.f32.mrb[0].mxu0
  %v4515 = vadd.f32 %v3711, %v4514
  %v4516 = vpop.f32.mrb[0].mxu0
  %4517 = vmatprep.mubr.f32.mxu0 0.0
  %4518 = vmatmul.mubr.f32.gmra.mrb[0].mxu0 %v4153
  %v4519 = vpop.f32.mrb[0].mxu0
  %v4520 = vadd.f32 %v3711, %v4519
  %v4521 = vpop.f32.mrb[0].mxu0
  %4522 = vmatprep.mubr.f32.mxu0 0.0
  %4523 = vmatmul.mubr.f32.gmra.mrb[0].mxu0 %v4202
  %v4524 = vpop.f32.mrb[0].mxu0
  %v4525 = vadd.f32 %v3711, %v4524
  %v4526 = vpop.f32.mrb[0].mxu0
  %4527 = vmatprep.mubr.f32.mxu0 0.0
  %4528 = vmatmul.mubr.f32.gmra.mrb[0].mxu0 %v4251
  %v4529 = vpop.f32.mrb[0].mxu0
  %v4530 = vadd.f32 %v3711, %v4529
  %v4531 = vpop.f32.mrb[0].mxu0
  %4532 = vmatprep.mubr.f32.mxu0 0.0
  %4533 = vmatmul.mubr.f32.gmra.mrb[0].mxu0 %v4300
  %v4534 = vpop.f32.mrb[0].mxu0
  %v4535 = vadd.f32 %v3711, %v4534
  %v4536 = vpop.f32.mrb[0].mxu0
  %4537 = vmatprep.mubr.f32.mxu0 0.0
  %4538 = vmatmul.mubr.f32.gmra.mrb[0].mxu0 %v4349
  %v4539 = vpop.f32.mrb[0].mxu0
  %v4540 = vadd.f32 %v3711, %v4539
  %v4541 = vpop.f32.mrb[0].mxu0
  %4542 = vmatprep.mubr.f32.mxu0 0.0
  %4543 = vmatmul.mubr.f32.gmra.mrb[0].mxu0 %v4398
  %v4544 = vpop.f32.mrb[0].mxu0
  %v4545 = vadd.f32 %v3711, %v4544
  %v4546 = vpop.f32.mrb[0].mxu0
  %4547 = vdwg.mxu0
  %v4548 = vmax.f32 %v4480, 0.0
  %v4549 = vmax.f32 %v4485, 0.0
  %v4550 = vmax.f32 %v4490, 0.0
  %v4551 = vmax.f32 %v4495, 0.0
  %v4552 = vmax.f32 %v4500, 0.0
  %v4553 = vmax.f32 %v4505, 0.0
  %v4554 = vmax.f32 %v4510, 0.0
  %v4555 = vmax.f32 %v4515, 0.0
  %v4556 = vmax.f32 %v4520, 0.0
  %v4557 = vmax.f32 %v4525, 0.0
  %v4558 = vmax.f32 %v4530, 0.0
  %v4559 = vmax.f32 %v4535, 0.0
  %v4560 = vmax.f32 %v4540, 0.0
  %v4561 = vmax.f32 %v4545, 0.0
  %v4576 = vcombine.high %v4548, %v4548
  %v4578 = vunpack.c.l.s4 1966171168
  %v4579 = vunpack.c.0.s8 %v4578
  %v4580 = vlaneseq
  %v4581 = vshrl.u32 %v4580, 7
  %v4582 = vsub.s32 %v4579, %v4581
  %v4583 = vrot.slane %v4548, %v4582
  %v4585 = vunpack.c.l.s4 1966171168
  %v4586 = vunpack.c.0.s8 %v4585
  %v4587 = vlaneseq
  %v4588 = vshrl.u32 %v4587, 7
  %v4589 = vsub.s32 %v4586, %v4588
  %v4590 = vrot.slane %v4576, %v4589
  %v4591 = vcombine.high %v4583, %v4583
  %v4592 = vcombine.high %v4590, %v4590
  %v4594 = vunpack.c.l.s4 1966171168
  %v4595 = vunpack.c.0.s8 %v4594
  %v4596 = vlaneseq
  %v4597 = vshrl.u32 %v4596, 7
  %v4598 = vsub.s32 %v4595, %v4597
  %v4599 = vrot.slane %v4583, %v4598
  %v4601 = vunpack.c.l.s4 1966171168
  %v4602 = vunpack.c.0.s8 %v4601
  %v4603 = vlaneseq
  %v4604 = vshrl.u32 %v4603, 7
  %v4605 = vsub.s32 %v4602, %v4604
  %v4606 = vrot.slane %v4590, %v4605
  %v4608 = vunpack.c.l.s4 1966171168
  %v4609 = vunpack.c.0.s8 %v4608
  %v4610 = vlaneseq
  %v4611 = vshrl.u32 %v4610, 7
  %v4612 = vsub.s32 %v4609, %v4611
  %v4613 = vrot.slane %v4591, %v4612
  %v4615 = vunpack.c.l.s4 1966171168
  %v4616 = vunpack.c.0.s8 %v4615
  %v4617 = vlaneseq
  %v4618 = vshrl.u32 %v4617, 7
  %v4619 = vsub.s32 %v4616, %v4618
  %v4620 = vrot.slane %v4592, %v4619
  %v4621 = vcombine.high %v4599, %v4599
  %v4622 = vcombine.high %v4606, %v4606
  %v4623 = vcombine.high %v4613, %v4613
  %v4624 = vcombine.high %v4620, %v4620
  %v4625 = vcombine.high %v4549, %v4549
  %v4627 = vunpack.c.l.s4 1966171168
  %v4628 = vunpack.c.0.s8 %v4627
  %v4629 = vlaneseq
  %v4630 = vshrl.u32 %v4629, 7
  %v4631 = vsub.s32 %v4628, %v4630
  %v4632 = vrot.slane %v4549, %v4631
  %v4634 = vunpack.c.l.s4 1966171168
  %v4635 = vunpack.c.0.s8 %v4634
  %v4636 = vlaneseq
  %v4637 = vshrl.u32 %v4636, 7
  %v4638 = vsub.s32 %v4635, %v4637
  %v4639 = vrot.slane %v4625, %v4638
  %v4640 = vcombine.high %v4632, %v4632
  %v4641 = vcombine.high %v4639, %v4639
  %v4643 = vunpack.c.l.s4 1966171168
  %v4644 = vunpack.c.0.s8 %v4643
  %v4645 = vlaneseq
  %v4646 = vshrl.u32 %v4645, 7
  %v4647 = vsub.s32 %v4644, %v4646
  %v4648 = vrot.slane %v4632, %v4647
  %v4650 = vunpack.c.l.s4 1966171168
  %v4651 = vunpack.c.0.s8 %v4650
  %v4652 = vlaneseq
  %v4653 = vshrl.u32 %v4652, 7
  %v4654 = vsub.s32 %v4651, %v4653
  %v4655 = vrot.slane %v4639, %v4654
  %v4657 = vunpack.c.l.s4 1966171168
  %v4658 = vunpack.c.0.s8 %v4657
  %v4659 = vlaneseq
  %v4660 = vshrl.u32 %v4659, 7
  %v4661 = vsub.s32 %v4658, %v4660
  %v4662 = vrot.slane %v4640, %v4661
  %v4664 = vunpack.c.l.s4 1966171168
  %v4665 = vunpack.c.0.s8 %v4664
  %v4666 = vlaneseq
  %v4667 = vshrl.u32 %v4666, 7
  %v4668 = vsub.s32 %v4665, %v4667
  %v4669 = vrot.slane %v4641, %v4668
  %v4670 = vcombine.high %v4648, %v4648
  %v4671 = vcombine.high %v4655, %v4655
  %v4672 = vcombine.high %v4662, %v4662
  %v4673 = vcombine.high %v4669, %v4669
  %v4674 = vcombine.high %v4550, %v4550
  %v4676 = vunpack.c.l.s4 1966171168
  %v4677 = vunpack.c.0.s8 %v4676
  %v4678 = vlaneseq
  %v4679 = vshrl.u32 %v4678, 7
  %v4680 = vsub.s32 %v4677, %v4679
  %v4681 = vrot.slane %v4550, %v4680
  %v4683 = vunpack.c.l.s4 1966171168
  %v4684 = vunpack.c.0.s8 %v4683
  %v4685 = vlaneseq
  %v4686 = vshrl.u32 %v4685, 7
  %v4687 = vsub.s32 %v4684, %v4686
  %v4688 = vrot.slane %v4674, %v4687
  %v4689 = vcombine.high %v4681, %v4681
  %v4690 = vcombine.high %v4688, %v4688
  %v4692 = vunpack.c.l.s4 1966171168
  %v4693 = vunpack.c.0.s8 %v4692
  %v4694 = vlaneseq
  %v4695 = vshrl.u32 %v4694, 7
  %v4696 = vsub.s32 %v4693, %v4695
  %v4697 = vrot.slane %v4681, %v4696
  %v4699 = vunpack.c.l.s4 1966171168
  %v4700 = vunpack.c.0.s8 %v4699
  %v4701 = vlaneseq
  %v4702 = vshrl.u32 %v4701, 7
  %v4703 = vsub.s32 %v4700, %v4702
  %v4704 = vrot.slane %v4688, %v4703
  %v4706 = vunpack.c.l.s4 1966171168
  %v4707 = vunpack.c.0.s8 %v4706
  %v4708 = vlaneseq
  %v4709 = vshrl.u32 %v4708, 7
  %v4710 = vsub.s32 %v4707, %v4709
  %v4711 = vrot.slane %v4689, %v4710
  %v4713 = vunpack.c.l.s4 1966171168
  %v4714 = vunpack.c.0.s8 %v4713
  %v4715 = vlaneseq
  %v4716 = vshrl.u32 %v4715, 7
  %v4717 = vsub.s32 %v4714, %v4716
  %v4718 = vrot.slane %v4690, %v4717
  %v4719 = vcombine.high %v4697, %v4697
  %v4720 = vcombine.high %v4704, %v4704
  %v4721 = vcombine.high %v4711, %v4711
  %v4722 = vcombine.high %v4718, %v4718
  %v4723 = vcombine.high %v4551, %v4551
  %v4725 = vunpack.c.l.s4 1966171168
  %v4726 = vunpack.c.0.s8 %v4725
  %v4727 = vlaneseq
  %v4728 = vshrl.u32 %v4727, 7
  %v4729 = vsub.s32 %v4726, %v4728
  %v4730 = vrot.slane %v4551, %v4729
  %v4732 = vunpack.c.l.s4 1966171168
  %v4733 = vunpack.c.0.s8 %v4732
  %v4734 = vlaneseq
  %v4735 = vshrl.u32 %v4734, 7
  %v4736 = vsub.s32 %v4733, %v4735
  %v4737 = vrot.slane %v4723, %v4736
  %v4738 = vcombine.high %v4730, %v4730
  %v4739 = vcombine.high %v4737, %v4737
  %v4741 = vunpack.c.l.s4 1966171168
  %v4742 = vunpack.c.0.s8 %v4741
  %v4743 = vlaneseq
  %v4744 = vshrl.u32 %v4743, 7
  %v4745 = vsub.s32 %v4742, %v4744
  %v4746 = vrot.slane %v4730, %v4745
  %v4748 = vunpack.c.l.s4 1966171168
  %v4749 = vunpack.c.0.s8 %v4748
  %v4750 = vlaneseq
  %v4751 = vshrl.u32 %v4750, 7
  %v4752 = vsub.s32 %v4749, %v4751
  %v4753 = vrot.slane %v4737, %v4752
  %v4755 = vunpack.c.l.s4 1966171168
  %v4756 = vunpack.c.0.s8 %v4755
  %v4757 = vlaneseq
  %v4758 = vshrl.u32 %v4757, 7
  %v4759 = vsub.s32 %v4756, %v4758
  %v4760 = vrot.slane %v4738, %v4759
  %v4762 = vunpack.c.l.s4 1966171168
  %v4763 = vunpack.c.0.s8 %v4762
  %v4764 = vlaneseq
  %v4765 = vshrl.u32 %v4764, 7
  %v4766 = vsub.s32 %v4763, %v4765
  %v4767 = vrot.slane %v4739, %v4766
  %v4768 = vcombine.high %v4746, %v4746
  %v4769 = vcombine.high %v4753, %v4753
  %v4770 = vcombine.high %v4760, %v4760
  %v4771 = vcombine.high %v4767, %v4767
  %v4772 = vcombine.high %v4552, %v4552
  %v4774 = vunpack.c.l.s4 1966171168
  %v4775 = vunpack.c.0.s8 %v4774
  %v4776 = vlaneseq
  %v4777 = vshrl.u32 %v4776, 7
  %v4778 = vsub.s32 %v4775, %v4777
  %v4779 = vrot.slane %v4552, %v4778
  %v4781 = vunpack.c.l.s4 1966171168
  %v4782 = vunpack.c.0.s8 %v4781
  %v4783 = vlaneseq
  %v4784 = vshrl.u32 %v4783, 7
  %v4785 = vsub.s32 %v4782, %v4784
  %v4786 = vrot.slane %v4772, %v4785
  %v4787 = vcombine.high %v4779, %v4779
  %v4788 = vcombine.high %v4786, %v4786
  %v4790 = vunpack.c.l.s4 1966171168
  %v4791 = vunpack.c.0.s8 %v4790
  %v4792 = vlaneseq
  %v4793 = vshrl.u32 %v4792, 7
  %v4794 = vsub.s32 %v4791, %v4793
  %v4795 = vrot.slane %v4779, %v4794
  %v4797 = vunpack.c.l.s4 1966171168
  %v4798 = vunpack.c.0.s8 %v4797
  %v4799 = vlaneseq
  %v4800 = vshrl.u32 %v4799, 7
  %v4801 = vsub.s32 %v4798, %v4800
  %v4802 = vrot.slane %v4786, %v4801
  %v4804 = vunpack.c.l.s4 1966171168
  %v4805 = vunpack.c.0.s8 %v4804
  %v4806 = vlaneseq
  %v4807 = vshrl.u32 %v4806, 7
  %v4808 = vsub.s32 %v4805, %v4807
  %v4809 = vrot.slane %v4787, %v4808
  %v4811 = vunpack.c.l.s4 1966171168
  %v4812 = vunpack.c.0.s8 %v4811
  %v4813 = vlaneseq
  %v4814 = vshrl.u32 %v4813, 7
  %v4815 = vsub.s32 %v4812, %v4814
  %v4816 = vrot.slane %v4788, %v4815
  %v4817 = vcombine.high %v4795, %v4795
  %v4818 = vcombine.high %v4802, %v4802
  %v4819 = vcombine.high %v4809, %v4809
  %v4820 = vcombine.high %v4816, %v4816
  %v4821 = vcombine.high %v4553, %v4553
  %v4823 = vunpack.c.l.s4 1966171168
  %v4824 = vunpack.c.0.s8 %v4823
  %v4825 = vlaneseq
  %v4826 = vshrl.u32 %v4825, 7
  %v4827 = vsub.s32 %v4824, %v4826
  %v4828 = vrot.slane %v4553, %v4827
  %v4830 = vunpack.c.l.s4 1966171168
  %v4831 = vunpack.c.0.s8 %v4830
  %v4832 = vlaneseq
  %v4833 = vshrl.u32 %v4832, 7
  %v4834 = vsub.s32 %v4831, %v4833
  %v4835 = vrot.slane %v4821, %v4834
  %v4836 = vcombine.high %v4828, %v4828
  %v4837 = vcombine.high %v4835, %v4835
  %v4839 = vunpack.c.l.s4 1966171168
  %v4840 = vunpack.c.0.s8 %v4839
  %v4841 = vlaneseq
  %v4842 = vshrl.u32 %v4841, 7
  %v4843 = vsub.s32 %v4840, %v4842
  %v4844 = vrot.slane %v4828, %v4843
  %v4846 = vunpack.c.l.s4 1966171168
  %v4847 = vunpack.c.0.s8 %v4846
  %v4848 = vlaneseq
  %v4849 = vshrl.u32 %v4848, 7
  %v4850 = vsub.s32 %v4847, %v4849
  %v4851 = vrot.slane %v4835, %v4850
  %v4853 = vunpack.c.l.s4 1966171168
  %v4854 = vunpack.c.0.s8 %v4853
  %v4855 = vlaneseq
  %v4856 = vshrl.u32 %v4855, 7
  %v4857 = vsub.s32 %v4854, %v4856
  %v4858 = vrot.slane %v4836, %v4857
  %v4860 = vunpack.c.l.s4 1966171168
  %v4861 = vunpack.c.0.s8 %v4860
  %v4862 = vlaneseq
  %v4863 = vshrl.u32 %v4862, 7
  %v4864 = vsub.s32 %v4861, %v4863
  %v4865 = vrot.slane %v4837, %v4864
  %v4866 = vcombine.high %v4844, %v4844
  %v4867 = vcombine.high %v4851, %v4851
  %v4868 = vcombine.high %v4858, %v4858
  %v4869 = vcombine.high %v4865, %v4865
  %v4870 = vcombine.high %v4554, %v4554
  %v4872 = vunpack.c.l.s4 1966171168
  %v4873 = vunpack.c.0.s8 %v4872
  %v4874 = vlaneseq
  %v4875 = vshrl.u32 %v4874, 7
  %v4876 = vsub.s32 %v4873, %v4875
  %v4877 = vrot.slane %v4554, %v4876
  %v4879 = vunpack.c.l.s4 1966171168
  %v4880 = vunpack.c.0.s8 %v4879
  %v4881 = vlaneseq
  %v4882 = vshrl.u32 %v4881, 7
  %v4883 = vsub.s32 %v4880, %v4882
  %v4884 = vrot.slane %v4870, %v4883
  %v4885 = vcombine.high %v4877, %v4877
  %v4886 = vcombine.high %v4884, %v4884
  %v4888 = vunpack.c.l.s4 1966171168
  %v4889 = vunpack.c.0.s8 %v4888
  %v4890 = vlaneseq
  %v4891 = vshrl.u32 %v4890, 7
  %v4892 = vsub.s32 %v4889, %v4891
  %v4893 = vrot.slane %v4877, %v4892
  %v4895 = vunpack.c.l.s4 1966171168
  %v4896 = vunpack.c.0.s8 %v4895
  %v4897 = vlaneseq
  %v4898 = vshrl.u32 %v4897, 7
  %v4899 = vsub.s32 %v4896, %v4898
  %v4900 = vrot.slane %v4884, %v4899
  %v4902 = vunpack.c.l.s4 1966171168
  %v4903 = vunpack.c.0.s8 %v4902
  %v4904 = vlaneseq
  %v4905 = vshrl.u32 %v4904, 7
  %v4906 = vsub.s32 %v4903, %v4905
  %v4907 = vrot.slane %v4885, %v4906
  %v4909 = vunpack.c.l.s4 1966171168
  %v4910 = vunpack.c.0.s8 %v4909
  %v4911 = vlaneseq
  %v4912 = vshrl.u32 %v4911, 7
  %v4913 = vsub.s32 %v4910, %v4912
  %v4914 = vrot.slane %v4886, %v4913
  %v4915 = vcombine.high %v4893, %v4893
  %v4916 = vcombine.high %v4900, %v4900
  %v4917 = vcombine.high %v4907, %v4907
  %v4918 = vcombine.high %v4914, %v4914
  %v4919 = vcombine.high %v4555, %v4555
  %v4921 = vunpack.c.l.s4 1966171168
  %v4922 = vunpack.c.0.s8 %v4921
  %v4923 = vlaneseq
  %v4924 = vshrl.u32 %v4923, 7
  %v4925 = vsub.s32 %v4922, %v4924
  %v4926 = vrot.slane %v4555, %v4925
  %v4928 = vunpack.c.l.s4 1966171168
  %v4929 = vunpack.c.0.s8 %v4928
  %v4930 = vlaneseq
  %v4931 = vshrl.u32 %v4930, 7
  %v4932 = vsub.s32 %v4929, %v4931
  %v4933 = vrot.slane %v4919, %v4932
  %v4934 = vcombine.high %v4926, %v4926
  %v4935 = vcombine.high %v4933, %v4933
  %v4937 = vunpack.c.l.s4 1966171168
  %v4938 = vunpack.c.0.s8 %v4937
  %v4939 = vlaneseq
  %v4940 = vshrl.u32 %v4939, 7
  %v4941 = vsub.s32 %v4938, %v4940
  %v4942 = vrot.slane %v4926, %v4941
  %v4944 = vunpack.c.l.s4 1966171168
  %v4945 = vunpack.c.0.s8 %v4944
  %v4946 = vlaneseq
  %v4947 = vshrl.u32 %v4946, 7
  %v4948 = vsub.s32 %v4945, %v4947
  %v4949 = vrot.slane %v4933, %v4948
  %v4951 = vunpack.c.l.s4 1966171168
  %v4952 = vunpack.c.0.s8 %v4951
  %v4953 = vlaneseq
  %v4954 = vshrl.u32 %v4953, 7
  %v4955 = vsub.s32 %v4952, %v4954
  %v4956 = vrot.slane %v4934, %v4955
  %v4958 = vunpack.c.l.s4 1966171168
  %v4959 = vunpack.c.0.s8 %v4958
  %v4960 = vlaneseq
  %v4961 = vshrl.u32 %v4960, 7
  %v4962 = vsub.s32 %v4959, %v4961
  %v4963 = vrot.slane %v4935, %v4962
  %v4964 = vcombine.high %v4942, %v4942
  %v4965 = vcombine.high %v4949, %v4949
  %v4966 = vcombine.high %v4956, %v4956
  %v4967 = vcombine.high %v4963, %v4963
  %v4968 = vcombine.high %v4556, %v4556
  %v4970 = vunpack.c.l.s4 1966171168
  %v4971 = vunpack.c.0.s8 %v4970
  %v4972 = vlaneseq
  %v4973 = vshrl.u32 %v4972, 7
  %v4974 = vsub.s32 %v4971, %v4973
  %v4975 = vrot.slane %v4556, %v4974
  %v4977 = vunpack.c.l.s4 1966171168
  %v4978 = vunpack.c.0.s8 %v4977
  %v4979 = vlaneseq
  %v4980 = vshrl.u32 %v4979, 7
  %v4981 = vsub.s32 %v4978, %v4980
  %v4982 = vrot.slane %v4968, %v4981
  %v4983 = vcombine.high %v4975, %v4975
  %v4984 = vcombine.high %v4982, %v4982
  %v4986 = vunpack.c.l.s4 1966171168
  %v4987 = vunpack.c.0.s8 %v4986
  %v4988 = vlaneseq
  %v4989 = vshrl.u32 %v4988, 7
  %v4990 = vsub.s32 %v4987, %v4989
  %v4991 = vrot.slane %v4975, %v4990
  %v4993 = vunpack.c.l.s4 1966171168
  %v4994 = vunpack.c.0.s8 %v4993
  %v4995 = vlaneseq
  %v4996 = vshrl.u32 %v4995, 7
  %v4997 = vsub.s32 %v4994, %v4996
  %v4998 = vrot.slane %v4982, %v4997
  %v5000 = vunpack.c.l.s4 1966171168
  %v5001 = vunpack.c.0.s8 %v5000
  %v5002 = vlaneseq
  %v5003 = vshrl.u32 %v5002, 7
  %v5004 = vsub.s32 %v5001, %v5003
  %v5005 = vrot.slane %v4983, %v5004
  %v5007 = vunpack.c.l.s4 1966171168
  %v5008 = vunpack.c.0.s8 %v5007
  %v5009 = vlaneseq
  %v5010 = vshrl.u32 %v5009, 7
  %v5011 = vsub.s32 %v5008, %v5010
  %v5012 = vrot.slane %v4984, %v5011
  %v5013 = vcombine.high %v4991, %v4991
  %v5014 = vcombine.high %v4998, %v4998
  %v5015 = vcombine.high %v5005, %v5005
  %v5016 = vcombine.high %v5012, %v5012
  %v5017 = vcombine.high %v4557, %v4557
  %v5019 = vunpack.c.l.s4 1966171168
  %v5020 = vunpack.c.0.s8 %v5019
  %v5021 = vlaneseq
  %v5022 = vshrl.u32 %v5021, 7
  %v5023 = vsub.s32 %v5020, %v5022
  %v5024 = vrot.slane %v4557, %v5023
  %v5026 = vunpack.c.l.s4 1966171168
  %v5027 = vunpack.c.0.s8 %v5026
  %v5028 = vlaneseq
  %v5029 = vshrl.u32 %v5028, 7
  %v5030 = vsub.s32 %v5027, %v5029
  %v5031 = vrot.slane %v5017, %v5030
  %v5032 = vcombine.high %v5024, %v5024
  %v5033 = vcombine.high %v5031, %v5031
  %v5035 = vunpack.c.l.s4 1966171168
  %v5036 = vunpack.c.0.s8 %v5035
  %v5037 = vlaneseq
  %v5038 = vshrl.u32 %v5037, 7
  %v5039 = vsub.s32 %v5036, %v5038
  %v5040 = vrot.slane %v5024, %v5039
  %v5042 = vunpack.c.l.s4 1966171168
  %v5043 = vunpack.c.0.s8 %v5042
  %v5044 = vlaneseq
  %v5045 = vshrl.u32 %v5044, 7
  %v5046 = vsub.s32 %v5043, %v5045
  %v5047 = vrot.slane %v5031, %v5046
  %v5049 = vunpack.c.l.s4 1966171168
  %v5050 = vunpack.c.0.s8 %v5049
  %v5051 = vlaneseq
  %v5052 = vshrl.u32 %v5051, 7
  %v5053 = vsub.s32 %v5050, %v5052
  %v5054 = vrot.slane %v5032, %v5053
  %v5056 = vunpack.c.l.s4 1966171168
  %v5057 = vunpack.c.0.s8 %v5056
  %v5058 = vlaneseq
  %v5059 = vshrl.u32 %v5058, 7
  %v5060 = vsub.s32 %v5057, %v5059
  %v5061 = vrot.slane %v5033, %v5060
  %v5062 = vcombine.high %v5040, %v5040
  %v5063 = vcombine.high %v5047, %v5047
  %v5064 = vcombine.high %v5054, %v5054
  %v5065 = vcombine.high %v5061, %v5061
  %v5066 = vcombine.high %v4558, %v4558
  %v5068 = vunpack.c.l.s4 1966171168
  %v5069 = vunpack.c.0.s8 %v5068
  %v5070 = vlaneseq
  %v5071 = vshrl.u32 %v5070, 7
  %v5072 = vsub.s32 %v5069, %v5071
  %v5073 = vrot.slane %v4558, %v5072
  %v5075 = vunpack.c.l.s4 1966171168
  %v5076 = vunpack.c.0.s8 %v5075
  %v5077 = vlaneseq
  %v5078 = vshrl.u32 %v5077, 7
  %v5079 = vsub.s32 %v5076, %v5078
  %v5080 = vrot.slane %v5066, %v5079
  %v5081 = vcombine.high %v5073, %v5073
  %v5082 = vcombine.high %v5080, %v5080
  %v5084 = vunpack.c.l.s4 1966171168
  %v5085 = vunpack.c.0.s8 %v5084
  %v5086 = vlaneseq
  %v5087 = vshrl.u32 %v5086, 7
  %v5088 = vsub.s32 %v5085, %v5087
  %v5089 = vrot.slane %v5073, %v5088
  %v5091 = vunpack.c.l.s4 1966171168
  %v5092 = vunpack.c.0.s8 %v5091
  %v5093 = vlaneseq
  %v5094 = vshrl.u32 %v5093, 7
  %v5095 = vsub.s32 %v5092, %v5094
  %v5096 = vrot.slane %v5080, %v5095
  %v5098 = vunpack.c.l.s4 1966171168
  %v5099 = vunpack.c.0.s8 %v5098
  %v5100 = vlaneseq
  %v5101 = vshrl.u32 %v5100, 7
  %v5102 = vsub.s32 %v5099, %v5101
  %v5103 = vrot.slane %v5081, %v5102
  %v5105 = vunpack.c.l.s4 1966171168
  %v5106 = vunpack.c.0.s8 %v5105
  %v5107 = vlaneseq
  %v5108 = vshrl.u32 %v5107, 7
  %v5109 = vsub.s32 %v5106, %v5108
  %v5110 = vrot.slane %v5082, %v5109
  %v5111 = vcombine.high %v5089, %v5089
  %v5112 = vcombine.high %v5096, %v5096
  %v5113 = vcombine.high %v5103, %v5103
  %v5114 = vcombine.high %v5110, %v5110
  %v5115 = vcombine.high %v4559, %v4559
  %v5117 = vunpack.c.l.s4 1966171168
  %v5118 = vunpack.c.0.s8 %v5117
  %v5119 = vlaneseq
  %v5120 = vshrl.u32 %v5119, 7
  %v5121 = vsub.s32 %v5118, %v5120
  %v5122 = vrot.slane %v4559, %v5121
  %v5124 = vunpack.c.l.s4 1966171168
  %v5125 = vunpack.c.0.s8 %v5124
  %v5126 = vlaneseq
  %v5127 = vshrl.u32 %v5126, 7
  %v5128 = vsub.s32 %v5125, %v5127
  %v5129 = vrot.slane %v5115, %v5128
  %v5130 = vcombine.high %v5122, %v5122
  %v5131 = vcombine.high %v5129, %v5129
  %v5133 = vunpack.c.l.s4 1966171168
  %v5134 = vunpack.c.0.s8 %v5133
  %v5135 = vlaneseq
  %v5136 = vshrl.u32 %v5135, 7
  %v5137 = vsub.s32 %v5134, %v5136
  %v5138 = vrot.slane %v5122, %v5137
  %v5140 = vunpack.c.l.s4 1966171168
  %v5141 = vunpack.c.0.s8 %v5140
  %v5142 = vlaneseq
  %v5143 = vshrl.u32 %v5142, 7
  %v5144 = vsub.s32 %v5141, %v5143
  %v5145 = vrot.slane %v5129, %v5144
  %v5147 = vunpack.c.l.s4 1966171168
  %v5148 = vunpack.c.0.s8 %v5147
  %v5149 = vlaneseq
  %v5150 = vshrl.u32 %v5149, 7
  %v5151 = vsub.s32 %v5148, %v5150
  %v5152 = vrot.slane %v5130, %v5151
  %v5154 = vunpack.c.l.s4 1966171168
  %v5155 = vunpack.c.0.s8 %v5154
  %v5156 = vlaneseq
  %v5157 = vshrl.u32 %v5156, 7
  %v5158 = vsub.s32 %v5155, %v5157
  %v5159 = vrot.slane %v5131, %v5158
  %v5160 = vcombine.high %v5138, %v5138
  %v5161 = vcombine.high %v5145, %v5145
  %v5162 = vcombine.high %v5152, %v5152
  %v5163 = vcombine.high %v5159, %v5159
  %v5164 = vcombine.high %v4560, %v4560
  %v5166 = vunpack.c.l.s4 1966171168
  %v5167 = vunpack.c.0.s8 %v5166
  %v5168 = vlaneseq
  %v5169 = vshrl.u32 %v5168, 7
  %v5170 = vsub.s32 %v5167, %v5169
  %v5171 = vrot.slane %v4560, %v5170
  %v5173 = vunpack.c.l.s4 1966171168
  %v5174 = vunpack.c.0.s8 %v5173
  %v5175 = vlaneseq
  %v5176 = vshrl.u32 %v5175, 7
  %v5177 = vsub.s32 %v5174, %v5176
  %v5178 = vrot.slane %v5164, %v5177
  %v5179 = vcombine.high %v5171, %v5171
  %v5180 = vcombine.high %v5178, %v5178
  %v5182 = vunpack.c.l.s4 1966171168
  %v5183 = vunpack.c.0.s8 %v5182
  %v5184 = vlaneseq
  %v5185 = vshrl.u32 %v5184, 7
  %v5186 = vsub.s32 %v5183, %v5185
  %v5187 = vrot.slane %v5171, %v5186
  %v5189 = vunpack.c.l.s4 1966171168
  %v5190 = vunpack.c.0.s8 %v5189
  %v5191 = vlaneseq
  %v5192 = vshrl.u32 %v5191, 7
  %v5193 = vsub.s32 %v5190, %v5192
  %v5194 = vrot.slane %v5178, %v5193
  %v5196 = vunpack.c.l.s4 1966171168
  %v5197 = vunpack.c.0.s8 %v5196
  %v5198 = vlaneseq
  %v5199 = vshrl.u32 %v5198, 7
  %v5200 = vsub.s32 %v5197, %v5199
  %v5201 = vrot.slane %v5179, %v5200
  %v5203 = vunpack.c.l.s4 1966171168
  %v5204 = vunpack.c.0.s8 %v5203
  %v5205 = vlaneseq
  %v5206 = vshrl.u32 %v5205, 7
  %v5207 = vsub.s32 %v5204, %v5206
  %v5208 = vrot.slane %v5180, %v5207
  %v5209 = vcombine.high %v5187, %v5187
  %v5210 = vcombine.high %v5194, %v5194
  %v5211 = vcombine.high %v5201, %v5201
  %v5212 = vcombine.high %v5208, %v5208
  %v5213 = vcombine.high %v4561, %v4561
  %v5215 = vunpack.c.l.s4 1966171168
  %v5216 = vunpack.c.0.s8 %v5215
  %v5217 = vlaneseq
  %v5218 = vshrl.u32 %v5217, 7
  %v5219 = vsub.s32 %v5216, %v5218
  %v5220 = vrot.slane %v4561, %v5219
  %v5222 = vunpack.c.l.s4 1966171168
  %v5223 = vunpack.c.0.s8 %v5222
  %v5224 = vlaneseq
  %v5225 = vshrl.u32 %v5224, 7
  %v5226 = vsub.s32 %v5223, %v5225
  %v5227 = vrot.slane %v5213, %v5226
  %v5228 = vcombine.high %v5220, %v5220
  %v5229 = vcombine.high %v5227, %v5227
  %v5231 = vunpack.c.l.s4 1966171168
  %v5232 = vunpack.c.0.s8 %v5231
  %v5233 = vlaneseq
  %v5234 = vshrl.u32 %v5233, 7
  %v5235 = vsub.s32 %v5232, %v5234
  %v5236 = vrot.slane %v5220, %v5235
  %v5238 = vunpack.c.l.s4 1966171168
  %v5239 = vunpack.c.0.s8 %v5238
  %v5240 = vlaneseq
  %v5241 = vshrl.u32 %v5240, 7
  %v5242 = vsub.s32 %v5239, %v5241
  %v5243 = vrot.slane %v5227, %v5242
  %v5245 = vunpack.c.l.s4 1966171168
  %v5246 = vunpack.c.0.s8 %v5245
  %v5247 = vlaneseq
  %v5248 = vshrl.u32 %v5247, 7
  %v5249 = vsub.s32 %v5246, %v5248
  %v5250 = vrot.slane %v5228, %v5249
  %v5252 = vunpack.c.l.s4 1966171168
  %v5253 = vunpack.c.0.s8 %v5252
  %v5254 = vlaneseq
  %v5255 = vshrl.u32 %v5254, 7
  %v5256 = vsub.s32 %v5253, %v5255
  %v5257 = vrot.slane %v5229, %v5256
  %v5258 = vcombine.high %v5236, %v5236
  %v5259 = vcombine.high %v5243, %v5243
  %v5260 = vcombine.high %v5250, %v5250
  %v5261 = vcombine.high %v5257, %v5257
  %v5262 = vcombine.low %v4599, %v4624
  %v5263 = vcombine.low %v4671, %v4718
  %v5264 = vcombine.low %v4753, %v4819
  %v5265 = vcombine.low %v4866, %v4907
  %v5267 = vunpack.c.l.s4 1966171168
  %v5268 = vunpack.c.0.s8 %v5267
  %v5269 = vlaneseq
  %v5270 = vshrl.u32 %v5269, 7
  %v5271 = vsub.s32 %v5268, %v5270
  %v5272 = vrot.slane %v5262, %v5271
  %v5274 = vunpack.c.l.s4 1966171168
  %v5275 = vunpack.c.0.s8 %v5274
  %v5276 = vlaneseq
  %v5277 = vshrl.u32 %v5276, 7
  %v5278 = vsub.s32 %v5275, %v5277
  %v5279 = vrot.slane %v5263, %v5278
  %v5281 = vunpack.c.l.s4 1966171168
  %v5282 = vunpack.c.0.s8 %v5281
  %v5283 = vlaneseq
  %v5284 = vshrl.u32 %v5283, 7
  %v5285 = vsub.s32 %v5282, %v5284
  %v5286 = vrot.slane %v5264, %v5285
  %v5288 = vunpack.c.l.s4 1966171168
  %v5289 = vunpack.c.0.s8 %v5288
  %v5290 = vlaneseq
  %v5291 = vshrl.u32 %v5290, 7
  %v5292 = vsub.s32 %v5289, %v5291
  %v5293 = vrot.slane %v5265, %v5292
  %v5294 = vcombine.low %v5272, %v5279
  %v5295 = vcombine.low %v5286, %v5293
  %v5297 = vunpack.c.l.s4 1966171168
  %v5298 = vunpack.c.0.s8 %v5297
  %v5299 = vlaneseq
  %v5300 = vshrl.u32 %v5299, 7
  %v5301 = vsub.s32 %v5298, %v5300
  %v5302 = vrot.slane %v5294, %v5301
  %v5304 = vunpack.c.l.s4 1966171168
  %v5305 = vunpack.c.0.s8 %v5304
  %v5306 = vlaneseq
  %v5307 = vshrl.u32 %v5306, 7
  %v5308 = vsub.s32 %v5305, %v5307
  %v5309 = vrot.slane %v5295, %v5308
  %v5310 = vcombine.low %v5302, %v5309
  %v5311 = vcombine.low %v4942, %v4967
  %v5312 = vcombine.low %v5014, %v5061
  %v5313 = vcombine.low %v5096, %v5162
  %v5314 = vcombine.low %v5209, %v5250
  %v5316 = vunpack.c.l.s4 1966171168
  %v5317 = vunpack.c.0.s8 %v5316
  %v5318 = vlaneseq
  %v5319 = vshrl.u32 %v5318, 7
  %v5320 = vsub.s32 %v5317, %v5319
  %v5321 = vrot.slane %v5311, %v5320
  %v5323 = vunpack.c.l.s4 1966171168
  %v5324 = vunpack.c.0.s8 %v5323
  %v5325 = vlaneseq
  %v5326 = vshrl.u32 %v5325, 7
  %v5327 = vsub.s32 %v5324, %v5326
  %v5328 = vrot.slane %v5312, %v5327
  %v5330 = vunpack.c.l.s4 1966171168
  %v5331 = vunpack.c.0.s8 %v5330
  %v5332 = vlaneseq
  %v5333 = vshrl.u32 %v5332, 7
  %v5334 = vsub.s32 %v5331, %v5333
  %v5335 = vrot.slane %v5313, %v5334
  %v5337 = vunpack.c.l.s4 1966171168
  %v5338 = vunpack.c.0.s8 %v5337
  %v5339 = vlaneseq
  %v5340 = vshrl.u32 %v5339, 7
  %v5341 = vsub.s32 %v5338, %v5340
  %v5342 = vrot.slane %v5314, %v5341
  %v5343 = vcombine.low %v5321, %v5328
  %v5344 = vcombine.low %v5335, %v5342
  %v5346 = vunpack.c.l.s4 1966171168
  %v5347 = vunpack.c.0.s8 %v5346
  %v5348 = vlaneseq
  %v5349 = vshrl.u32 %v5348, 7
  %v5350 = vsub.s32 %v5347, %v5349
  %v5351 = vrot.slane %v5343, %v5350
  %v5353 = vunpack.c.l.s4 1966171168
  %v5354 = vunpack.c.0.s8 %v5353
  %v5355 = vlaneseq
  %v5356 = vshrl.u32 %v5355, 7
  %v5357 = vsub.s32 %v5354, %v5356
  %v5358 = vrot.slane %v5344, %v5357
  %v5359 = vcombine.low %v5351, %v5358
  %v5362 = vcombine.low %v4613, %v4648
  %v5363 = vcombine.low %v4673, %v4720
  %v5364 = vcombine.low %v4767, %v4802
  %v5365 = vcombine.low %v4868, %v4915
  %v5367 = vunpack.c.l.s4 1966171168
  %v5368 = vunpack.c.0.s8 %v5367
  %v5369 = vlaneseq
  %v5370 = vshrl.u32 %v5369, 7
  %v5371 = vsub.s32 %v5368, %v5370
  %v5372 = vrot.slane %v5362, %v5371
  %v5374 = vunpack.c.l.s4 1966171168
  %v5375 = vunpack.c.0.s8 %v5374
  %v5376 = vlaneseq
  %v5377 = vshrl.u32 %v5376, 7
  %v5378 = vsub.s32 %v5375, %v5377
  %v5379 = vrot.slane %v5363, %v5378
  %v5381 = vunpack.c.l.s4 1966171168
  %v5382 = vunpack.c.0.s8 %v5381
  %v5383 = vlaneseq
  %v5384 = vshrl.u32 %v5383, 7
  %v5385 = vsub.s32 %v5382, %v5384
  %v5386 = vrot.slane %v5364, %v5385
  %v5388 = vunpack.c.l.s4 1966171168
  %v5389 = vunpack.c.0.s8 %v5388
  %v5390 = vlaneseq
  %v5391 = vshrl.u32 %v5390, 7
  %v5392 = vsub.s32 %v5389, %v5391
  %v5393 = vrot.slane %v5365, %v5392
  %v5394 = vcombine.low %v5372, %v5379
  %v5395 = vcombine.low %v5386, %v5393
  %v5397 = vunpack.c.l.s4 1966171168
  %v5398 = vunpack.c.0.s8 %v5397
  %v5399 = vlaneseq
  %v5400 = vshrl.u32 %v5399, 7
  %v5401 = vsub.s32 %v5398, %v5400
  %v5402 = vrot.slane %v5394, %v5401
  %v5404 = vunpack.c.l.s4 1966171168
  %v5405 = vunpack.c.0.s8 %v5404
  %v5406 = vlaneseq
  %v5407 = vshrl.u32 %v5406, 7
  %v5408 = vsub.s32 %v5405, %v5407
  %v5409 = vrot.slane %v5395, %v5408
  %v5410 = vcombine.low %v5402, %v5409
  %v5411 = vcombine.low %v4956, %v4991
  %v5412 = vcombine.low %v5016, %v5063
  %v5413 = vcombine.low %v5110, %v5145
  %v5414 = vcombine.low %v5211, %v5258
  %v5416 = vunpack.c.l.s4 1966171168
  %v5417 = vunpack.c.0.s8 %v5416
  %v5418 = vlaneseq
  %v5419 = vshrl.u32 %v5418, 7
  %v5420 = vsub.s32 %v5417, %v5419
  %v5421 = vrot.slane %v5411, %v5420
  %v5423 = vunpack.c.l.s4 1966171168
  %v5424 = vunpack.c.0.s8 %v5423
  %v5425 = vlaneseq
  %v5426 = vshrl.u32 %v5425, 7
  %v5427 = vsub.s32 %v5424, %v5426
  %v5428 = vrot.slane %v5412, %v5427
  %v5430 = vunpack.c.l.s4 1966171168
  %v5431 = vunpack.c.0.s8 %v5430
  %v5432 = vlaneseq
  %v5433 = vshrl.u32 %v5432, 7
  %v5434 = vsub.s32 %v5431, %v5433
  %v5435 = vrot.slane %v5413, %v5434
  %v5437 = vunpack.c.l.s4 1966171168
  %v5438 = vunpack.c.0.s8 %v5437
  %v5439 = vlaneseq
  %v5440 = vshrl.u32 %v5439, 7
  %v5441 = vsub.s32 %v5438, %v5440
  %v5442 = vrot.slane %v5414, %v5441
  %v5443 = vcombine.low %v5421, %v5428
  %v5444 = vcombine.low %v5435, %v5442
  %v5446 = vunpack.c.l.s4 1966171168
  %v5447 = vunpack.c.0.s8 %v5446
  %v5448 = vlaneseq
  %v5449 = vshrl.u32 %v5448, 7
  %v5450 = vsub.s32 %v5447, %v5449
  %v5451 = vrot.slane %v5443, %v5450
  %v5453 = vunpack.c.l.s4 1966171168
  %v5454 = vunpack.c.0.s8 %v5453
  %v5455 = vlaneseq
  %v5456 = vshrl.u32 %v5455, 7
  %v5457 = vsub.s32 %v5454, %v5456
  %v5458 = vrot.slane %v5444, %v5457
  %v5459 = vcombine.low %v5451, %v5458
  %v5462 = vcombine.low %v4621, %v4662
  %v5463 = vcombine.low %v4697, %v4722
  %v5464 = vcombine.low %v4769, %v4816
  %v5465 = vcombine.low %v4851, %v4917
  %v5467 = vunpack.c.l.s4 1966171168
  %v5468 = vunpack.c.0.s8 %v5467
  %v5469 = vlaneseq
  %v5470 = vshrl.u32 %v5469, 7
  %v5471 = vsub.s32 %v5468, %v5470
  %v5472 = vrot.slane %v5462, %v5471
  %v5474 = vunpack.c.l.s4 1966171168
  %v5475 = vunpack.c.0.s8 %v5474
  %v5476 = vlaneseq
  %v5477 = vshrl.u32 %v5476, 7
  %v5478 = vsub.s32 %v5475, %v5477
  %v5479 = vrot.slane %v5463, %v5478
  %v5481 = vunpack.c.l.s4 1966171168
  %v5482 = vunpack.c.0.s8 %v5481
  %v5483 = vlaneseq
  %v5484 = vshrl.u32 %v5483, 7
  %v5485 = vsub.s32 %v5482, %v5484
  %v5486 = vrot.slane %v5464, %v5485
  %v5488 = vunpack.c.l.s4 1966171168
  %v5489 = vunpack.c.0.s8 %v5488
  %v5490 = vlaneseq
  %v5491 = vshrl.u32 %v5490, 7
  %v5492 = vsub.s32 %v5489, %v5491
  %v5493 = vrot.slane %v5465, %v5492
  %v5494 = vcombine.low %v5472, %v5479
  %v5495 = vcombine.low %v5486, %v5493
  %v5497 = vunpack.c.l.s4 1966171168
  %v5498 = vunpack.c.0.s8 %v5497
  %v5499 = vlaneseq
  %v5500 = vshrl.u32 %v5499, 7
  %v5501 = vsub.s32 %v5498, %v5500
  %v5502 = vrot.slane %v5494, %v5501
  %v5504 = vunpack.c.l.s4 1966171168
  %v5505 = vunpack.c.0.s8 %v5504
  %v5506 = vlaneseq
  %v5507 = vshrl.u32 %v5506, 7
  %v5508 = vsub.s32 %v5505, %v5507
  %v5509 = vrot.slane %v5495, %v5508
  %v5510 = vcombine.low %v5502, %v5509
  %v5511 = vcombine.low %v4964, %v5005
  %v5512 = vcombine.low %v5040, %v5065
  %v5513 = vcombine.low %v5112, %v5159
  %v5514 = vcombine.low %v5194, %v5260
  %v5516 = vunpack.c.l.s4 1966171168
  %v5517 = vunpack.c.0.s8 %v5516
  %v5518 = vlaneseq
  %v5519 = vshrl.u32 %v5518, 7
  %v5520 = vsub.s32 %v5517, %v5519
  %v5521 = vrot.slane %v5511, %v5520
  %v5523 = vunpack.c.l.s4 1966171168
  %v5524 = vunpack.c.0.s8 %v5523
  %v5525 = vlaneseq
  %v5526 = vshrl.u32 %v5525, 7
  %v5527 = vsub.s32 %v5524, %v5526
  %v5528 = vrot.slane %v5512, %v5527
  %v5530 = vunpack.c.l.s4 1966171168
  %v5531 = vunpack.c.0.s8 %v5530
  %v5532 = vlaneseq
  %v5533 = vshrl.u32 %v5532, 7
  %v5534 = vsub.s32 %v5531, %v5533
  %v5535 = vrot.slane %v5513, %v5534
  %v5537 = vunpack.c.l.s4 1966171168
  %v5538 = vunpack.c.0.s8 %v5537
  %v5539 = vlaneseq
  %v5540 = vshrl.u32 %v5539, 7
  %v5541 = vsub.s32 %v5538, %v5540
  %v5542 = vrot.slane %v5514, %v5541
  %v5543 = vcombine.low %v5521, %v5528
  %v5544 = vcombine.low %v5535, %v5542
  %v5546 = vunpack.c.l.s4 1966171168
  %v5547 = vunpack.c.0.s8 %v5546
  %v5548 = vlaneseq
  %v5549 = vshrl.u32 %v5548, 7
  %v5550 = vsub.s32 %v5547, %v5549
  %v5551 = vrot.slane %v5543, %v5550
  %v5553 = vunpack.c.l.s4 1966171168
  %v5554 = vunpack.c.0.s8 %v5553
  %v5555 = vlaneseq
  %v5556 = vshrl.u32 %v5555, 7
  %v5557 = vsub.s32 %v5554, %v5556
  %v5558 = vrot.slane %v5544, %v5557
  %v5559 = vcombine.low %v5551, %v5558
  %v5562 = vcombine.low %v4623, %v4670
  %v5563 = vcombine.low %v4711, %v4746
  %v5564 = vcombine.low %v4771, %v4818
  %v5565 = vcombine.low %v4865, %v4900
  %v5567 = vunpack.c.l.s4 1966171168
  %v5568 = vunpack.c.0.s8 %v5567
  %v5569 = vlaneseq
  %v5570 = vshrl.u32 %v5569, 7
  %v5571 = vsub.s32 %v5568, %v5570
  %v5572 = vrot.slane %v5562, %v5571
  %v5574 = vunpack.c.l.s4 1966171168
  %v5575 = vunpack.c.0.s8 %v5574
  %v5576 = vlaneseq
  %v5577 = vshrl.u32 %v5576, 7
  %v5578 = vsub.s32 %v5575, %v5577
  %v5579 = vrot.slane %v5563, %v5578
  %v5581 = vunpack.c.l.s4 1966171168
  %v5582 = vunpack.c.0.s8 %v5581
  %v5583 = vlaneseq
  %v5584 = vshrl.u32 %v5583, 7
  %v5585 = vsub.s32 %v5582, %v5584
  %v5586 = vrot.slane %v5564, %v5585
  %v5588 = vunpack.c.l.s4 1966171168
  %v5589 = vunpack.c.0.s8 %v5588
  %v5590 = vlaneseq
  %v5591 = vshrl.u32 %v5590, 7
  %v5592 = vsub.s32 %v5589, %v5591
  %v5593 = vrot.slane %v5565, %v5592
  %v5594 = vcombine.low %v5572, %v5579
  %v5595 = vcombine.low %v5586, %v5593
  %v5597 = vunpack.c.l.s4 1966171168
  %v5598 = vunpack.c.0.s8 %v5597
  %v5599 = vlaneseq
  %v5600 = vshrl.u32 %v5599, 7
  %v5601 = vsub.s32 %v5598, %v5600
  %v5602 = vrot.slane %v5594, %v5601
  %v5604 = vunpack.c.l.s4 1966171168
  %v5605 = vunpack.c.0.s8 %v5604
  %v5606 = vlaneseq
  %v5607 = vshrl.u32 %v5606, 7
  %v5608 = vsub.s32 %v5605, %v5607
  %v5609 = vrot.slane %v5595, %v5608
  %v5610 = vcombine.low %v5602, %v5609
  %v5611 = vcombine.low %v4966, %v5013
  %v5612 = vcombine.low %v5054, %v5089
  %v5613 = vcombine.low %v5114, %v5161
  %v5614 = vcombine.low %v5208, %v5243
  %v5616 = vunpack.c.l.s4 1966171168
  %v5617 = vunpack.c.0.s8 %v5616
  %v5618 = vlaneseq
  %v5619 = vshrl.u32 %v5618, 7
  %v5620 = vsub.s32 %v5617, %v5619
  %v5621 = vrot.slane %v5611, %v5620
  %v5623 = vunpack.c.l.s4 1966171168
  %v5624 = vunpack.c.0.s8 %v5623
  %v5625 = vlaneseq
  %v5626 = vshrl.u32 %v5625, 7
  %v5627 = vsub.s32 %v5624, %v5626
  %v5628 = vrot.slane %v5612, %v5627
  %v5630 = vunpack.c.l.s4 1966171168
  %v5631 = vunpack.c.0.s8 %v5630
  %v5632 = vlaneseq
  %v5633 = vshrl.u32 %v5632, 7
  %v5634 = vsub.s32 %v5631, %v5633
  %v5635 = vrot.slane %v5613, %v5634
  %v5637 = vunpack.c.l.s4 1966171168
  %v5638 = vunpack.c.0.s8 %v5637
  %v5639 = vlaneseq
  %v5640 = vshrl.u32 %v5639, 7
  %v5641 = vsub.s32 %v5638, %v5640
  %v5642 = vrot.slane %v5614, %v5641
  %v5643 = vcombine.low %v5621, %v5628
  %v5644 = vcombine.low %v5635, %v5642
  %v5646 = vunpack.c.l.s4 1966171168
  %v5647 = vunpack.c.0.s8 %v5646
  %v5648 = vlaneseq
  %v5649 = vshrl.u32 %v5648, 7
  %v5650 = vsub.s32 %v5647, %v5649
  %v5651 = vrot.slane %v5643, %v5650
  %v5653 = vunpack.c.l.s4 1966171168
  %v5654 = vunpack.c.0.s8 %v5653
  %v5655 = vlaneseq
  %v5656 = vshrl.u32 %v5655, 7
  %v5657 = vsub.s32 %v5654, %v5656
  %v5658 = vrot.slane %v5644, %v5657
  %v5659 = vcombine.low %v5651, %v5658
  %v5662 = vcombine.low %v4606, %v4672
  %v5663 = vcombine.low %v4719, %v4760
  %v5664 = vcombine.low %v4795, %v4820
  %v5665 = vcombine.low %v4867, %v4914
  %v5667 = vunpack.c.l.s4 1966171168
  %v5668 = vunpack.c.0.s8 %v5667
  %v5669 = vlaneseq
  %v5670 = vshrl.u32 %v5669, 7
  %v5671 = vsub.s32 %v5668, %v5670
  %v5672 = vrot.slane %v5662, %v5671
  %v5674 = vunpack.c.l.s4 1966171168
  %v5675 = vunpack.c.0.s8 %v5674
  %v5676 = vlaneseq
  %v5677 = vshrl.u32 %v5676, 7
  %v5678 = vsub.s32 %v5675, %v5677
  %v5679 = vrot.slane %v5663, %v5678
  %v5681 = vunpack.c.l.s4 1966171168
  %v5682 = vunpack.c.0.s8 %v5681
  %v5683 = vlaneseq
  %v5684 = vshrl.u32 %v5683, 7
  %v5685 = vsub.s32 %v5682, %v5684
  %v5686 = vrot.slane %v5664, %v5685
  %v5688 = vunpack.c.l.s4 1966171168
  %v5689 = vunpack.c.0.s8 %v5688
  %v5690 = vlaneseq
  %v5691 = vshrl.u32 %v5690, 7
  %v5692 = vsub.s32 %v5689, %v5691
  %v5693 = vrot.slane %v5665, %v5692
  %v5694 = vcombine.low %v5672, %v5679
  %v5695 = vcombine.low %v5686, %v5693
  %v5697 = vunpack.c.l.s4 1966171168
  %v5698 = vunpack.c.0.s8 %v5697
  %v5699 = vlaneseq
  %v5700 = vshrl.u32 %v5699, 7
  %v5701 = vsub.s32 %v5698, %v5700
  %v5702 = vrot.slane %v5694, %v5701
  %v5704 = vunpack.c.l.s4 1966171168
  %v5705 = vunpack.c.0.s8 %v5704
  %v5706 = vlaneseq
  %v5707 = vshrl.u32 %v5706, 7
  %v5708 = vsub.s32 %v5705, %v5707
  %v5709 = vrot.slane %v5695, %v5708
  %v5710 = vcombine.low %v5702, %v5709
  %v5711 = vcombine.low %v4949, %v5015
  %v5712 = vcombine.low %v5062, %v5103
  %v5713 = vcombine.low %v5138, %v5163
  %v5714 = vcombine.low %v5210, %v5257
  %v5716 = vunpack.c.l.s4 1966171168
  %v5717 = vunpack.c.0.s8 %v5716
  %v5718 = vlaneseq
  %v5719 = vshrl.u32 %v5718, 7
  %v5720 = vsub.s32 %v5717, %v5719
  %v5721 = vrot.slane %v5711, %v5720
  %v5723 = vunpack.c.l.s4 1966171168
  %v5724 = vunpack.c.0.s8 %v5723
  %v5725 = vlaneseq
  %v5726 = vshrl.u32 %v5725, 7
  %v5727 = vsub.s32 %v5724, %v5726
  %v5728 = vrot.slane %v5712, %v5727
  %v5730 = vunpack.c.l.s4 1966171168
  %v5731 = vunpack.c.0.s8 %v5730
  %v5732 = vlaneseq
  %v5733 = vshrl.u32 %v5732, 7
  %v5734 = vsub.s32 %v5731, %v5733
  %v5735 = vrot.slane %v5713, %v5734
  %v5737 = vunpack.c.l.s4 1966171168
  %v5738 = vunpack.c.0.s8 %v5737
  %v5739 = vlaneseq
  %v5740 = vshrl.u32 %v5739, 7
  %v5741 = vsub.s32 %v5738, %v5740
  %v5742 = vrot.slane %v5714, %v5741
  %v5743 = vcombine.low %v5721, %v5728
  %v5744 = vcombine.low %v5735, %v5742
  %v5746 = vunpack.c.l.s4 1966171168
  %v5747 = vunpack.c.0.s8 %v5746
  %v5748 = vlaneseq
  %v5749 = vshrl.u32 %v5748, 7
  %v5750 = vsub.s32 %v5747, %v5749
  %v5751 = vrot.slane %v5743, %v5750
  %v5753 = vunpack.c.l.s4 1966171168
  %v5754 = vunpack.c.0.s8 %v5753
  %v5755 = vlaneseq
  %v5756 = vshrl.u32 %v5755, 7
  %v5757 = vsub.s32 %v5754, %v5756
  %v5758 = vrot.slane %v5744, %v5757
  %v5759 = vcombine.low %v5751, %v5758
  %v5762 = vcombine.low %v4620, %v4655
  %v5763 = vcombine.low %v4721, %v4768
  %v5764 = vcombine.low %v4809, %v4844
  %v5765 = vcombine.low %v4869, %v4916
  %v5767 = vunpack.c.l.s4 1966171168
  %v5768 = vunpack.c.0.s8 %v5767
  %v5769 = vlaneseq
  %v5770 = vshrl.u32 %v5769, 7
  %v5771 = vsub.s32 %v5768, %v5770
  %v5772 = vrot.slane %v5762, %v5771
  %v5774 = vunpack.c.l.s4 1966171168
  %v5775 = vunpack.c.0.s8 %v5774
  %v5776 = vlaneseq
  %v5777 = vshrl.u32 %v5776, 7
  %v5778 = vsub.s32 %v5775, %v5777
  %v5779 = vrot.slane %v5763, %v5778
  %v5781 = vunpack.c.l.s4 1966171168
  %v5782 = vunpack.c.0.s8 %v5781
  %v5783 = vlaneseq
  %v5784 = vshrl.u32 %v5783, 7
  %v5785 = vsub.s32 %v5782, %v5784
  %v5786 = vrot.slane %v5764, %v5785
  %v5788 = vunpack.c.l.s4 1966171168
  %v5789 = vunpack.c.0.s8 %v5788
  %v5790 = vlaneseq
  %v5791 = vshrl.u32 %v5790, 7
  %v5792 = vsub.s32 %v5789, %v5791
  %v5793 = vrot.slane %v5765, %v5792
  %v5794 = vcombine.low %v5772, %v5779
  %v5795 = vcombine.low %v5786, %v5793
  %v5797 = vunpack.c.l.s4 1966171168
  %v5798 = vunpack.c.0.s8 %v5797
  %v5799 = vlaneseq
  %v5800 = vshrl.u32 %v5799, 7
  %v5801 = vsub.s32 %v5798, %v5800
  %v5802 = vrot.slane %v5794, %v5801
  %v5804 = vunpack.c.l.s4 1966171168
  %v5805 = vunpack.c.0.s8 %v5804
  %v5806 = vlaneseq
  %v5807 = vshrl.u32 %v5806, 7
  %v5808 = vsub.s32 %v5805, %v5807
  %v5809 = vrot.slane %v5795, %v5808
  %v5810 = vcombine.low %v5802, %v5809
  %v5811 = vcombine.low %v4963, %v4998
  %v5812 = vcombine.low %v5064, %v5111
  %v5813 = vcombine.low %v5152, %v5187
  %v5814 = vcombine.low %v5212, %v5259
  %v5816 = vunpack.c.l.s4 1966171168
  %v5817 = vunpack.c.0.s8 %v5816
  %v5818 = vlaneseq
  %v5819 = vshrl.u32 %v5818, 7
  %v5820 = vsub.s32 %v5817, %v5819
  %v5821 = vrot.slane %v5811, %v5820
  %v5823 = vunpack.c.l.s4 1966171168
  %v5824 = vunpack.c.0.s8 %v5823
  %v5825 = vlaneseq
  %v5826 = vshrl.u32 %v5825, 7
  %v5827 = vsub.s32 %v5824, %v5826
  %v5828 = vrot.slane %v5812, %v5827
  %v5830 = vunpack.c.l.s4 1966171168
  %v5831 = vunpack.c.0.s8 %v5830
  %v5832 = vlaneseq
  %v5833 = vshrl.u32 %v5832, 7
  %v5834 = vsub.s32 %v5831, %v5833
  %v5835 = vrot.slane %v5813, %v5834
  %v5837 = vunpack.c.l.s4 1966171168
  %v5838 = vunpack.c.0.s8 %v5837
  %v5839 = vlaneseq
  %v5840 = vshrl.u32 %v5839, 7
  %v5841 = vsub.s32 %v5838, %v5840
  %v5842 = vrot.slane %v5814, %v5841
  %v5843 = vcombine.low %v5821, %v5828
  %v5844 = vcombine.low %v5835, %v5842
  %v5846 = vunpack.c.l.s4 1966171168
  %v5847 = vunpack.c.0.s8 %v5846
  %v5848 = vlaneseq
  %v5849 = vshrl.u32 %v5848, 7
  %v5850 = vsub.s32 %v5847, %v5849
  %v5851 = vrot.slane %v5843, %v5850
  %v5853 = vunpack.c.l.s4 1966171168
  %v5854 = vunpack.c.0.s8 %v5853
  %v5855 = vlaneseq
  %v5856 = vshrl.u32 %v5855, 7
  %v5857 = vsub.s32 %v5854, %v5856
  %v5858 = vrot.slane %v5844, %v5857
  %v5859 = vcombine.low %v5851, %v5858
  %v5862 = vcombine.low %v4622, %v4669
  %v5863 = vcombine.low %v4704, %v4770
  %v5864 = vcombine.low %v4817, %v4858
  %v5865 = vcombine.low %v4893, %v4918
  %v5867 = vunpack.c.l.s4 1966171168
  %v5868 = vunpack.c.0.s8 %v5867
  %v5869 = vlaneseq
  %v5870 = vshrl.u32 %v5869, 7
  %v5871 = vsub.s32 %v5868, %v5870
  %v5872 = vrot.slane %v5862, %v5871
  %v5874 = vunpack.c.l.s4 1966171168
  %v5875 = vunpack.c.0.s8 %v5874
  %v5876 = vlaneseq
  %v5877 = vshrl.u32 %v5876, 7
  %v5878 = vsub.s32 %v5875, %v5877
  %v5879 = vrot.slane %v5863, %v5878
  %v5881 = vunpack.c.l.s4 1966171168
  %v5882 = vunpack.c.0.s8 %v5881
  %v5883 = vlaneseq
  %v5884 = vshrl.u32 %v5883, 7
  %v5885 = vsub.s32 %v5882, %v5884
  %v5886 = vrot.slane %v5864, %v5885
  %v5888 = vunpack.c.l.s4 1966171168
  %v5889 = vunpack.c.0.s8 %v5888
  %v5890 = vlaneseq
  %v5891 = vshrl.u32 %v5890, 7
  %v5892 = vsub.s32 %v5889, %v5891
  %v5893 = vrot.slane %v5865, %v5892
  %v5894 = vcombine.low %v5872, %v5879
  %v5895 = vcombine.low %v5886, %v5893
  %v5897 = vunpack.c.l.s4 1966171168
  %v5898 = vunpack.c.0.s8 %v5897
  %v5899 = vlaneseq
  %v5900 = vshrl.u32 %v5899, 7
  %v5901 = vsub.s32 %v5898, %v5900
  %v5902 = vrot.slane %v5894, %v5901
  %v5904 = vunpack.c.l.s4 1966171168
  %v5905 = vunpack.c.0.s8 %v5904
  %v5906 = vlaneseq
  %v5907 = vshrl.u32 %v5906, 7
  %v5908 = vsub.s32 %v5905, %v5907
  %v5909 = vrot.slane %v5895, %v5908
  %v5910 = vcombine.low %v5902, %v5909
  %v5911 = vcombine.low %v4965, %v5012
  %v5912 = vcombine.low %v5047, %v5113
  %v5913 = vcombine.low %v5160, %v5201
  %v5914 = vcombine.low %v5236, %v5261
  %v5916 = vunpack.c.l.s4 1966171168
  %v5917 = vunpack.c.0.s8 %v5916
  %v5918 = vlaneseq
  %v5919 = vshrl.u32 %v5918, 7
  %v5920 = vsub.s32 %v5917, %v5919
  %v5921 = vrot.slane %v5911, %v5920
  %v5923 = vunpack.c.l.s4 1966171168
  %v5924 = vunpack.c.0.s8 %v5923
  %v5925 = vlaneseq
  %v5926 = vshrl.u32 %v5925, 7
  %v5927 = vsub.s32 %v5924, %v5926
  %v5928 = vrot.slane %v5912, %v5927
  %v5930 = vunpack.c.l.s4 1966171168
  %v5931 = vunpack.c.0.s8 %v5930
  %v5932 = vlaneseq
  %v5933 = vshrl.u32 %v5932, 7
  %v5934 = vsub.s32 %v5931, %v5933
  %v5935 = vrot.slane %v5913, %v5934
  %v5937 = vunpack.c.l.s4 1966171168
  %v5938 = vunpack.c.0.s8 %v5937
  %v5939 = vlaneseq
  %v5940 = vshrl.u32 %v5939, 7
  %v5941 = vsub.s32 %v5938, %v5940
  %v5942 = vrot.slane %v5914, %v5941
  %v5943 = vcombine.low %v5921, %v5928
  %v5944 = vcombine.low %v5935, %v5942
  %v5946 = vunpack.c.l.s4 1966171168
  %v5947 = vunpack.c.0.s8 %v5946
  %v5948 = vlaneseq
  %v5949 = vshrl.u32 %v5948, 7
  %v5950 = vsub.s32 %v5947, %v5949
  %v5951 = vrot.slane %v5943, %v5950
  %v5953 = vunpack.c.l.s4 1966171168
  %v5954 = vunpack.c.0.s8 %v5953
  %v5955 = vlaneseq
  %v5956 = vshrl.u32 %v5955, 7
  %v5957 = vsub.s32 %v5954, %v5956
  %v5958 = vrot.slane %v5944, %v5957
  %v5959 = vcombine.low %v5951, %v5958
  %v5962 = vld [vmem:[%s7] sm:$0xff]
  %v5963 = vld [vmem:[%s7 + $0x8] sm:$0xff]
  %v5964 = vld [vmem:[%s7 + $0x10] sm:$0xff]
  %v5965 = vld [vmem:[%s7 + $0x18] sm:$0xff]
  %v5966 = vld [vmem:[%s7 + $0x20] sm:$0xff]
  %v5967 = vld [vmem:[%s7 + $0x28] sm:$0xff]
  %v5968 = vld [vmem:[%s7 + $0x30] sm:$0xff]
  %v5969 = vld [vmem:[%s7 + $0x38] sm:$0xff]
  %v5970 = vld [vmem:[%s7 + $0x40] sm:$0xff]
  %v5971 = vld [vmem:[%s7 + $0x48] sm:$0xff]
  %v5972 = vld [vmem:[%s7 + $0x50] sm:$0xff]
  %v5973 = vld [vmem:[%s7 + $0x58] sm:$0xff]
  %v5974 = vld [vmem:[%s7 + $0x60] sm:$0xff]
  %v5975 = vld [vmem:[%s7 + $0x68] sm:$0xff]
  %v5976 = vld [vmem:[%s7 + $0x70] sm:$0xff]
  %v5977 = vld [vmem:[%s7 + $0x78] sm:$0xff]
  %v5978 = vld [vmem:[%s7 + $0x80] sm:$0xff]
  %v5979 = vld [vmem:[%s7 + $0x88] sm:$0xff]
  %v5980 = vld [vmem:[%s7 + $0x90] sm:$0xff]
  %v5981 = vld [vmem:[%s7 + $0x98] sm:$0xff]
  %v5982 = vld [vmem:[%s7 + $0xa0] sm:$0xff]
  %v5983 = vld [vmem:[%s7 + $0xa8] sm:$0xff]
  %v5984 = vld [vmem:[%s7 + $0xb0] sm:$0xff]
  %v5985 = vld [vmem:[%s7 + $0xb8] sm:$0xff]
  %v5986 = vld [vmem:[%s7 + $0xc0] sm:$0xff]
  %v5987 = vld [vmem:[%s7 + $0xc8] sm:$0xff]
  %v5988 = vld [vmem:[%s7 + $0xd0] sm:$0xff]
  %v5989 = vld [vmem:[%s7 + $0xd8] sm:$0xff]
  %v5990 = vld [vmem:[%s7 + $0xe0] sm:$0xff]
  %v5991 = vld [vmem:[%s7 + $0xe8] sm:$0xff]
  %v5992 = vld [vmem:[%s7 + $0xf0] sm:$0xff]
  %v5993 = vld [vmem:[%s7 + $0xf8] sm:$0xff]
  %v5994 = vld [vmem:[%s7 + $0x100] sm:$0xff]
  %v5995 = vld [vmem:[%s7 + $0x108] sm:$0xff]
  %v5996 = vld [vmem:[%s7 + $0x110] sm:$0xff]
  %v5997 = vld [vmem:[%s7 + $0x118] sm:$0xff]
  %v5998 = vld [vmem:[%s7 + $0x120] sm:$0xff]
  %v5999 = vld [vmem:[%s7 + $0x128] sm:$0xff]
  %v6000 = vld [vmem:[%s7 + $0x130] sm:$0xff]
  %v6001 = vld [vmem:[%s7 + $0x138] sm:$0xff]
  %v6002 = vld [vmem:[%s7 + $0x140] sm:$0xff]
  %v6003 = vld [vmem:[%s7 + $0x148] sm:$0xff]
  %v6004 = vld [vmem:[%s7 + $0x150] sm:$0xff]
  %v6005 = vld [vmem:[%s7 + $0x158] sm:$0xff]
  %v6006 = vld [vmem:[%s7 + $0x160] sm:$0xff]
  %v6007 = vld [vmem:[%s7 + $0x168] sm:$0xff]
  %v6008 = vld [vmem:[%s7 + $0x170] sm:$0xff]
  %v6009 = vld [vmem:[%s7 + $0x178] sm:$0xff]
  %v6010 = vld [vmem:[%s7 + $0x180] sm:$0xff]
  %v6011 = vld [vmem:[%s7 + $0x188] sm:$0xff]
  %v6012 = vld [vmem:[%s7 + $0x190] sm:$0xff]
  %v6013 = vld [vmem:[%s7 + $0x198] sm:$0xff]
  %v6014 = vld [vmem:[%s7 + $0x1a0] sm:$0xff]
  %v6015 = vld [vmem:[%s7 + $0x1a8] sm:$0xff]
  %v6016 = vld [vmem:[%s7 + $0x1b0] sm:$0xff]
  %v6017 = vld [vmem:[%s7 + $0x1b8] sm:$0xff]
  %v6018 = vld [vmem:[%s7 + $0x1c0] sm:$0xff]
  %v6019 = vld [vmem:[%s7 + $0x1c8] sm:$0xff]
  %v6020 = vld [vmem:[%s7 + $0x1d0] sm:$0xff]
  %v6021 = vld [vmem:[%s7 + $0x1d8] sm:$0xff]
  %v6022 = vld [vmem:[%s7 + $0x1e0] sm:$0xff]
  %v6023 = vld [vmem:[%s7 + $0x1e8] sm:$0xff]
  %v6024 = vld [vmem:[%s7 + $0x1f0] sm:$0xff]
  %v6025 = vld [vmem:[%s7 + $0x1f8] sm:$0xff]
  %v6026 = vld [vmem:[%s7 + $0x200] sm:$0xff]
  %v6027 = vld [vmem:[%s7 + $0x208] sm:$0xff]
  %v6028 = vld [vmem:[%s7 + $0x210] sm:$0xff]
  %v6029 = vld [vmem:[%s7 + $0x218] sm:$0xff]
  %v6030 = vld [vmem:[%s7 + $0x220] sm:$0xff]
  %v6031 = vld [vmem:[%s7 + $0x228] sm:$0xff]
  %v6032 = vld [vmem:[%s7 + $0x230] sm:$0xff]
  %v6033 = vld [vmem:[%s7 + $0x238] sm:$0xff]
  %v6034 = vld [vmem:[%s7 + $0x240] sm:$0xff]
  %v6035 = vld [vmem:[%s7 + $0x248] sm:$0xff]
  %v6036 = vld [vmem:[%s7 + $0x250] sm:$0xff]
  %v6037 = vld [vmem:[%s7 + $0x258] sm:$0xff]
  %v6038 = vld [vmem:[%s7 + $0x260] sm:$0xff]
  %v6039 = vld [vmem:[%s7 + $0x268] sm:$0xff]
  %v6040 = vld [vmem:[%s7 + $0x270] sm:$0xff]
  %v6041 = vld [vmem:[%s7 + $0x278] sm:$0xff]
  %v6042 = vld [vmem:[%s7 + $0x280] sm:$0xff]
  %v6043 = vld [vmem:[%s7 + $0x288] sm:$0xff]
  %v6044 = vld [vmem:[%s7 + $0x290] sm:$0xff]
  %v6045 = vld [vmem:[%s7 + $0x298] sm:$0xff]
  %v6046 = vld [vmem:[%s7 + $0x2a0] sm:$0xff]
  %v6047 = vld [vmem:[%s7 + $0x2a8] sm:$0xff]
  %v6048 = vld [vmem:[%s7 + $0x2b0] sm:$0xff]
  %v6049 = vld [vmem:[%s7 + $0x2b8] sm:$0xff]
  %v6050 = vld [vmem:[%s7 + $0x2c0] sm:$0xff]
  %v6051 = vld [vmem:[%s7 + $0x2c8] sm:$0xff]
  %v6052 = vld [vmem:[%s7 + $0x2d0] sm:$0xff]
  %v6053 = vld [vmem:[%s7 + $0x2d8] sm:$0xff]
  %v6054 = vld [vmem:[%s7 + $0x2e0] sm:$0xff]
  %v6055 = vld [vmem:[%s7 + $0x2e8] sm:$0xff]
  %v6056 = vld [vmem:[%s7 + $0x2f0] sm:$0xff]
  %v6057 = vld [vmem:[%s7 + $0x2f8] sm:$0xff]
  %v6058 = vld [vmem:[%s7 + $0x300] sm:$0xff]
  %v6059 = vld [vmem:[%s7 + $0x308] sm:$0xff]
  %v6060 = vld [vmem:[%s7 + $0x310] sm:$0xff]
  %v6061 = vld [vmem:[%s7 + $0x318] sm:$0xff]
  %v6062 = vld [vmem:[%s7 + $0x320] sm:$0xff]
  %v6063 = vld [vmem:[%s7 + $0x328] sm:$0xff]
  %v6064 = vld [vmem:[%s7 + $0x330] sm:$0xff]
  %v6065 = vld [vmem:[%s7 + $0x338] sm:$0xff]
  %v6066 = vld [vmem:[%s7 + $0x340] sm:$0xff]
  %v6067 = vld [vmem:[%s7 + $0x348] sm:$0xff]
  %v6068 = vld [vmem:[%s7 + $0x350] sm:$0xff]
  %v6069 = vld [vmem:[%s7 + $0x358] sm:$0xff]
  %v6070 = vld [vmem:[%s7 + $0x360] sm:$0xff]
  %v6071 = vld [vmem:[%s7 + $0x368] sm:$0xff]
  %v6072 = vld [vmem:[%s7 + $0x370] sm:$0xff]
  %v6073 = vld [vmem:[%s7 + $0x378] sm:$0xff]
  %v6074 = vld [vmem:[%s8] sm:$0x1]
  %v6076 = vlaneseq
  %v6077 = vshrl.u32 %v6076, 7
  %v6078 = vsub.s32 0, %v6077
  %v6079 = vrot.slane %v6074, %v6078
  %6081 = vmatprep.subr.mxu0 0.0
  %6082 = vmatpush1.msra.mxu0 %v5962
  %6083 = vmatprep.subr.mxu0 0.0
  %6084 = vmatpush1.msra.mxu0 %v5963
  %6085 = vmatprep.subr.mxu0 0.0
  %6086 = vmatpush1.msra.mxu0 %v5964
  %6087 = vmatprep.subr.mxu0 0.0
  %6088 = vmatpush1.msra.mxu0 %v5965
  %6089 = vmatprep.subr.mxu0 0.0
  %6090 = vmatpush1.msra.mxu0 %v5966
  %6091 = vmatprep.subr.mxu0 0.0
  %6092 = vmatpush1.msra.mxu0 %v5967
  %6093 = vmatprep.subr.mxu0 0.0
  %6094 = vmatpush1.msra.mxu0 %v5968
  %6095 = vmatprep.subr.mxu0 0.0
  %6096 = vmatpush1.msra.mxu0 %v5969
  %6097 = vmatprep.subr.mxu0 0.0
  %6098 = vmatpush1.msra.mxu0 %v5970
  %6099 = vmatprep.subr.mxu0 0.0
  %6100 = vmatpush1.msra.mxu0 %v5971
  %6101 = vmatprep.subr.mxu0 0.0
  %6102 = vmatpush1.msra.mxu0 %v5972
  %6103 = vmatprep.subr.mxu0 0.0
  %6104 = vmatpush1.msra.mxu0 %v5973
  %6105 = vmatprep.subr.mxu0 0.0
  %6106 = vmatpush1.msra.mxu0 %v5974
  %6107 = vmatprep.subr.mxu0 0.0
  %6108 = vmatpush1.msra.mxu0 %v5975
  %6109 = vmatprep.subr.mxu0 0.0
  %6110 = vmatpush1.msra.mxu0 %v5976
  %6111 = vmatprep.subr.mxu0 0.0
  %6112 = vmatpush1.msra.mxu0 %v5977
  %6113 = vmatprep.subr.mxu0 0.0
  %6114 = vmatpush1.msra.mxu0 %v5978
  %6115 = vmatprep.subr.mxu0 0.0
  %6116 = vmatpush1.msra.mxu0 %v5979
  %6117 = vmatprep.subr.mxu0 0.0
  %6118 = vmatpush1.msra.mxu0 %v5980
  %6119 = vmatprep.subr.mxu0 0.0
  %6120 = vmatpush1.msra.mxu0 %v5981
  %6121 = vmatprep.subr.mxu0 0.0
  %6122 = vmatpush1.msra.mxu0 %v5982
  %6123 = vmatprep.subr.mxu0 0.0
  %6124 = vmatpush1.msra.mxu0 %v5983
  %6125 = vmatprep.subr.mxu0 0.0
  %6126 = vmatpush1.msra.mxu0 %v5984
  %6127 = vmatprep.subr.mxu0 0.0
  %6128 = vmatpush1.msra.mxu0 %v5985
  %6129 = vmatprep.subr.mxu0 0.0
  %6130 = vmatpush1.msra.mxu0 %v5986
  %6131 = vmatprep.subr.mxu0 0.0
  %6132 = vmatpush1.msra.mxu0 %v5987
  %6133 = vmatprep.subr.mxu0 0.0
  %6134 = vmatpush1.msra.mxu0 %v5988
  %6135 = vmatprep.subr.mxu0 0.0
  %6136 = vmatpush1.msra.mxu0 %v5989
  %6137 = vmatprep.subr.mxu0 0.0
  %6138 = vmatpush1.msra.mxu0 %v5990
  %6139 = vmatprep.subr.mxu0 0.0
  %6140 = vmatpush1.msra.mxu0 %v5991
  %6141 = vmatprep.subr.mxu0 0.0
  %6142 = vmatpush1.msra.mxu0 %v5992
  %6143 = vmatprep.subr.mxu0 0.0
  %6144 = vmatpush1.msra.mxu0 %v5993
  %6145 = vmatprep.mubr.f32.mxu0 %v5410
  %6146 = vmatmul.mubr.f32.gmra.mrb[0].mxu0 %v5310
  %v6147 = vpop.f32.mrb[0].mxu0
  %v6148 = vadd.f32 %v6079, %v6147
  %v6149 = vpop.f32.mrb[0].mxu0
  %6150 = vmatprep.mubr.f32.mxu0 %v5459
  %6151 = vmatmul.mubr.f32.gmra.mrb[0].mxu0 %v5359
  %v6152 = vpop.f32.mrb[0].mxu0
  %v6153 = vadd.f32 %v6079, %v6152
  %v6154 = vpop.f32.mrb[0].mxu0
  %6155 = vdwg.mxu0
  %6156 = vmatprep.subr.mxu0 0.0
  %6157 = vmatpush1.msra.mxu0 %v5994
  %6158 = vmatprep.subr.mxu0 0.0
  %6159 = vmatpush1.msra.mxu0 %v5995
  %6160 = vmatprep.subr.mxu0 0.0
  %6161 = vmatpush1.msra.mxu0 %v5996
  %6162 = vmatprep.subr.mxu0 0.0
  %6163 = vmatpush1.msra.mxu0 %v5997
  %6164 = vmatprep.subr.mxu0 0.0
  %6165 = vmatpush1.msra.mxu0 %v5998
  %6166 = vmatprep.subr.mxu0 0.0
  %6167 = vmatpush1.msra.mxu0 %v5999
  %6168 = vmatprep.subr.mxu0 0.0
  %6169 = vmatpush1.msra.mxu0 %v6000
  %6170 = vmatprep.subr.mxu0 0.0
  %6171 = vmatpush1.msra.mxu0 %v6001
  %6172 = vmatprep.subr.mxu0 0.0
  %6173 = vmatpush1.msra.mxu0 %v6002
  %6174 = vmatprep.subr.mxu0 0.0
  %6175 = vmatpush1.msra.mxu0 %v6003
  %6176 = vmatprep.subr.mxu0 0.0
  %6177 = vmatpush1.msra.mxu0 %v6004
  %6178 = vmatprep.subr.mxu0 0.0
  %6179 = vmatpush1.msra.mxu0 %v6005
  %6180 = vmatprep.subr.mxu0 0.0
  %6181 = vmatpush1.msra.mxu0 %v6006
  %6182 = vmatprep.subr.mxu0 0.0
  %6183 = vmatpush1.msra.mxu0 %v6007
  %6184 = vmatprep.subr.mxu0 0.0
  %6185 = vmatpush1.msra.mxu0 %v6008
  %6186 = vmatprep.subr.mxu0 0.0
  %6187 = vmatpush1.msra.mxu0 %v6009
  %6188 = vmatprep.subr.mxu0 0.0
  %6189 = vmatpush1.msra.mxu0 %v6010
  %6190 = vmatprep.subr.mxu0 0.0
  %6191 = vmatpush1.msra.mxu0 %v6011
  %6192 = vmatprep.subr.mxu0 0.0
  %6193 = vmatpush1.msra.mxu0 %v6012
  %6194 = vmatprep.subr.mxu0 0.0
  %6195 = vmatpush1.msra.mxu0 %v6013
  %6196 = vmatprep.subr.mxu0 0.0
  %6197 = vmatpush1.msra.mxu0 %v6014
  %6198 = vmatprep.subr.mxu0 0.0
  %6199 = vmatpush1.msra.mxu0 %v6015
  %6200 = vmatprep.subr.mxu0 0.0
  %6201 = vmatpush1.msra.mxu0 %v6016
  %6202 = vmatprep.subr.mxu0 0.0
  %6203 = vmatpush1.msra.mxu0 %v6017
  %6204 = vmatprep.subr.mxu0 0.0
  %6205 = vmatpush1.msra.mxu0 %v6018
  %6206 = vmatprep.subr.mxu0 0.0
  %6207 = vmatpush1.msra.mxu0 %v6019
  %6208 = vmatprep.subr.mxu0 0.0
  %6209 = vmatpush1.msra.mxu0 %v6020
  %6210 = vmatprep.subr.mxu0 0.0
  %6211 = vmatpush1.msra.mxu0 %v6021
  %6212 = vmatprep.subr.mxu0 0.0
  %6213 = vmatpush1.msra.mxu0 %v6022
  %6214 = vmatprep.subr.mxu0 0.0
  %6215 = vmatpush1.msra.mxu0 %v6023
  %6216 = vmatprep.subr.mxu0 0.0
  %6217 = vmatpush1.msra.mxu0 %v6024
  %6218 = vmatprep.subr.mxu0 0.0
  %6219 = vmatpush1.msra.mxu0 %v6025
  %6220 = vmatprep.mubr.f32.mxu0 %v5610
  %6221 = vmatmul.mubr.f32.gmra.mrb[0].mxu0 %v5510
  %v6222 = vpop.f32.mrb[0].mxu0
  %v6223 = vadd.f32 %v6148, %v6222
  %v6224 = vpop.f32.mrb[0].mxu0
  %6225 = vmatprep.mubr.f32.mxu0 %v5659
  %6226 = vmatmul.mubr.f32.gmra.mrb[0].mxu0 %v5559
  %v6227 = vpop.f32.mrb[0].mxu0
  %v6228 = vadd.f32 %v6153, %v6227
  %v6229 = vpop.f32.mrb[0].mxu0
  %6230 = vdwg.mxu0
  %6231 = vmatprep.subr.mxu0 0.0
  %6232 = vmatpush1.msra.mxu0 %v6026
  %6233 = vmatprep.subr.mxu0 0.0
  %6234 = vmatpush1.msra.mxu0 %v6027
  %6235 = vmatprep.subr.mxu0 0.0
  %6236 = vmatpush1.msra.mxu0 %v6028
  %6237 = vmatprep.subr.mxu0 0.0
  %6238 = vmatpush1.msra.mxu0 %v6029
  %6239 = vmatprep.subr.mxu0 0.0
  %6240 = vmatpush1.msra.mxu0 %v6030
  %6241 = vmatprep.subr.mxu0 0.0
  %6242 = vmatpush1.msra.mxu0 %v6031
  %6243 = vmatprep.subr.mxu0 0.0
  %6244 = vmatpush1.msra.mxu0 %v6032
  %6245 = vmatprep.subr.mxu0 0.0
  %6246 = vmatpush1.msra.mxu0 %v6033
  %6247 = vmatprep.subr.mxu0 0.0
  %6248 = vmatpush1.msra.mxu0 %v6034
  %6249 = vmatprep.subr.mxu0 0.0
  %6250 = vmatpush1.msra.mxu0 %v6035
  %6251 = vmatprep.subr.mxu0 0.0
  %6252 = vmatpush1.msra.mxu0 %v6036
  %6253 = vmatprep.subr.mxu0 0.0
  %6254 = vmatpush1.msra.mxu0 %v6037
  %6255 = vmatprep.subr.mxu0 0.0
  %6256 = vmatpush1.msra.mxu0 %v6038
  %6257 = vmatprep.subr.mxu0 0.0
  %6258 = vmatpush1.msra.mxu0 %v6039
  %6259 = vmatprep.subr.mxu0 0.0
  %6260 = vmatpush1.msra.mxu0 %v6040
  %6261 = vmatprep.subr.mxu0 0.0
  %6262 = vmatpush1.msra.mxu0 %v6041
  %6263 = vmatprep.subr.mxu0 0.0
  %6264 = vmatpush1.msra.mxu0 %v6042
  %6265 = vmatprep.subr.mxu0 0.0
  %6266 = vmatpush1.msra.mxu0 %v6043
  %6267 = vmatprep.subr.mxu0 0.0
  %6268 = vmatpush1.msra.mxu0 %v6044
  %6269 = vmatprep.subr.mxu0 0.0
  %6270 = vmatpush1.msra.mxu0 %v6045
  %6271 = vmatprep.subr.mxu0 0.0
  %6272 = vmatpush1.msra.mxu0 %v6046
  %6273 = vmatprep.subr.mxu0 0.0
  %6274 = vmatpush1.msra.mxu0 %v6047
  %6275 = vmatprep.subr.mxu0 0.0
  %6276 = vmatpush1.msra.mxu0 %v6048
  %6277 = vmatprep.subr.mxu0 0.0
  %6278 = vmatpush1.msra.mxu0 %v6049
  %6279 = vmatprep.subr.mxu0 0.0
  %6280 = vmatpush1.msra.mxu0 %v6050
  %6281 = vmatprep.subr.mxu0 0.0
  %6282 = vmatpush1.msra.mxu0 %v6051
  %6283 = vmatprep.subr.mxu0 0.0
  %6284 = vmatpush1.msra.mxu0 %v6052
  %6285 = vmatprep.subr.mxu0 0.0
  %6286 = vmatpush1.msra.mxu0 %v6053
  %6287 = vmatprep.subr.mxu0 0.0
  %6288 = vmatpush1.msra.mxu0 %v6054
  %6289 = vmatprep.subr.mxu0 0.0
  %6290 = vmatpush1.msra.mxu0 %v6055
  %6291 = vmatprep.subr.mxu0 0.0
  %6292 = vmatpush1.msra.mxu0 %v6056
  %6293 = vmatprep.subr.mxu0 0.0
  %6294 = vmatpush1.msra.mxu0 %v6057
  %6295 = vmatprep.mubr.f32.mxu0 %v5810
  %6296 = vmatmul.mubr.f32.gmra.mrb[0].mxu0 %v5710
  %v6297 = vpop.f32.mrb[0].mxu0
  %v6298 = vadd.f32 %v6223, %v6297
  %v6299 = vpop.f32.mrb[0].mxu0
  %6300 = vmatprep.mubr.f32.mxu0 %v5859
  %6301 = vmatmul.mubr.f32.gmra.mrb[0].mxu0 %v5759
  %v6302 = vpop.f32.mrb[0].mxu0
  %v6303 = vadd.f32 %v6228, %v6302
  %v6304 = vpop.f32.mrb[0].mxu0
  %6305 = vdwg.mxu0
  %6306 = vmatprep.subr.mxu0 0.0
  %6307 = vmatpush1.msra.mxu0 %v6058
  %6308 = vmatprep.subr.mxu0 0.0
  %6309 = vmatpush1.msra.mxu0 %v6059
  %6310 = vmatprep.subr.mxu0 0.0
  %6311 = vmatpush1.msra.mxu0 %v6060
  %6312 = vmatprep.subr.mxu0 0.0
  %6313 = vmatpush1.msra.mxu0 %v6061
  %6314 = vmatprep.subr.mxu0 0.0
  %6315 = vmatpush1.msra.mxu0 %v6062
  %6316 = vmatprep.subr.mxu0 0.0
  %6317 = vmatpush1.msra.mxu0 %v6063
  %6318 = vmatprep.subr.mxu0 0.0
  %6319 = vmatpush1.msra.mxu0 %v6064
  %6320 = vmatprep.subr.mxu0 0.0
  %6321 = vmatpush1.msra.mxu0 %v6065
  %6322 = vmatprep.subr.mxu0 0.0
  %6323 = vmatpush1.msra.mxu0 %v6066
  %6324 = vmatprep.subr.mxu0 0.0
  %6325 = vmatpush1.msra.mxu0 %v6067
  %6326 = vmatprep.subr.mxu0 0.0
  %6327 = vmatpush1.msra.mxu0 %v6068
  %6328 = vmatprep.subr.mxu0 0.0
  %6329 = vmatpush1.msra.mxu0 %v6069
  %6330 = vmatprep.subr.mxu0 0.0
  %6331 = vmatpush1.msra.mxu0 %v6070
  %6332 = vmatprep.subr.mxu0 0.0
  %6333 = vmatpush1.msra.mxu0 %v6071
  %6334 = vmatprep.subr.mxu0 0.0
  %6335 = vmatpush1.msra.mxu0 %v6072
  %6336 = vmatprep.subr.mxu0 0.0
  %6337 = vmatpush1.msra.mxu0 %v6073
  %6338 = vmatprep.subr.mxu0 0.0
  %6339 = vmatpush1.msra.mxu0 0.0
  %6340 = vmatprep.subr.mxu0 0.0
  %6341 = vmatpush1.msra.mxu0 0.0
  %6342 = vmatprep.subr.mxu0 0.0
  %6343 = vmatpush1.msra.mxu0 0.0
  %6344 = vmatprep.subr.mxu0 0.0
  %6345 = vmatpush1.msra.mxu0 0.0
  %6346 = vmatprep.subr.mxu0 0.0
  %6347 = vmatpush1.msra.mxu0 0.0
  %6348 = vmatprep.subr.mxu0 0.0
  %6349 = vmatpush1.msra.mxu0 0.0
  %6350 = vmatprep.subr.mxu0 0.0
  %6351 = vmatpush1.msra.mxu0 0.0
  %6352 = vmatprep.subr.mxu0 0.0
  %6353 = vmatpush1.msra.mxu0 0.0
  %6354 = vmatprep.subr.mxu0 0.0
  %6355 = vmatpush1.msra.mxu0 0.0
  %6356 = vmatprep.subr.mxu0 0.0
  %6357 = vmatpush1.msra.mxu0 0.0
  %6358 = vmatprep.subr.mxu0 0.0
  %6359 = vmatpush1.msra.mxu0 0.0
  %6360 = vmatprep.subr.mxu0 0.0
  %6361 = vmatpush1.msra.mxu0 0.0
  %6362 = vmatprep.subr.mxu0 0.0
  %6363 = vmatpush1.msra.mxu0 0.0
  %6364 = vmatprep.subr.mxu0 0.0
  %6365 = vmatpush1.msra.mxu0 0.0
  %6366 = vmatprep.subr.mxu0 0.0
  %6367 = vmatpush1.msra.mxu0 0.0
  %6368 = vmatprep.subr.mxu0 0.0
  %6369 = vmatpush1.msra.mxu0 0.0
  %6370 = vmatprep.mubr.f32.mxu0 0.0
  %6371 = vmatmul.mubr.f32.gmra.mrb[0].mxu0 %v5910
  %v6372 = vpop.f32.mrb[0].mxu0
  %v6373 = vadd.f32 %v6298, %v6372
  %v6374 = vpop.f32.mrb[0].mxu0
  %6375 = vmatprep.mubr.f32.mxu0 0.0
  %6376 = vmatmul.mubr.f32.gmra.mrb[0].mxu0 %v5959
  %v6377 = vpop.f32.mrb[0].mxu0
  %v6378 = vadd.f32 %v6303, %v6377
  %v6379 = vpop.f32.mrb[0].mxu0
  %6380 = vdwg.mxu0
  %v6383 = vcombine.high %v6373, %v6373
  %v6385 = vunpack.c.l.s4 1983009808
  %v6386 = vunpack.c.0.s8 %v6385
  %v6387 = vlaneseq
  %v6388 = vshrl.u32 %v6387, 7
  %v6389 = vsub.s32 %v6386, %v6388
  %v6390 = vrot.slane %v6373, %v6389
  %v6392 = vunpack.c.l.s4 1983009808
  %v6393 = vunpack.c.0.s8 %v6392
  %v6394 = vlaneseq
  %v6395 = vshrl.u32 %v6394, 7
  %v6396 = vsub.s32 %v6393, %v6395
  %v6397 = vrot.slane %v6383, %v6396
  %v6398 = vcombine.high %v6390, %v6390
  %v6399 = vcombine.high %v6397, %v6397
  %v6400 = vcombine.high %v6378, %v6378
  %v6402 = vunpack.c.l.s4 1983009808
  %v6403 = vunpack.c.0.s8 %v6402
  %v6404 = vlaneseq
  %v6405 = vshrl.u32 %v6404, 7
  %v6406 = vsub.s32 %v6403, %v6405
  %v6407 = vrot.slane %v6378, %v6406
  %v6409 = vunpack.c.l.s4 1983009808
  %v6410 = vunpack.c.0.s8 %v6409
  %v6411 = vlaneseq
  %v6412 = vshrl.u32 %v6411, 7
  %v6413 = vsub.s32 %v6410, %v6412
  %v6414 = vrot.slane %v6400, %v6413
  %v6415 = vcombine.high %v6407, %v6407
  %v6416 = vcombine.high %v6414, %v6414
  %v6425 = vlaneseq
  %v6426 = vand.u32 %v6425, 127
  %vm6427 = vcmp.ge.s32.totalorder %v6426, 64
  %vm6428 = vcmp.lt.s32.totalorder %v6426, 96
  %vm6429 = vmand %vm6427, %vm6428
  %v6430 = vsel %vm6429, 1.0, 0.5
  %v6431 = vsel %vm6429, 0.0, 0.5
  %v6432 = vld [vmem:[%s9] sm:$0xff]
  %v6433 = vld [vmem:[%s9 + $0x8] sm:$0xff]
  %v6434 = vld [vmem:[%s9 + $0x10] sm:$0xff]
  %v6435 = vld [vmem:[%s9 + $0x18] sm:$0xff]
  %v6437 = vsel %vm858, 0.0, 0
  %6439 = vmatprep.subr.mxu0 0.0
  %6440 = vmatpush1.msra.mxu0 %v6432
  %6441 = vmatprep.subr.mxu0 0.0
  %6442 = vmatpush1.msra.mxu0 %v6433
  %6443 = vmatprep.subr.mxu0 0.0
  %6444 = vmatpush1.msra.mxu0 %v6434
  %6445 = vmatprep.subr.mxu0 0.0
  %6446 = vmatpush1.msra.mxu0 %v6435
  %6447 = vmatprep.subr.mxu0 0.0
  %6448 = vmatpush1.msra.mxu0 0.0
  %6449 = vmatprep.subr.mxu0 0.0
  %6450 = vmatpush1.msra.mxu0 0.0
  %6451 = vmatprep.subr.mxu0 0.0
  %6452 = vmatpush1.msra.mxu0 0.0
  %6453 = vmatprep.subr.mxu0 0.0
  %6454 = vmatpush1.msra.mxu0 0.0
  %6455 = vmatprep.subr.mxu0 0.0
  %6456 = vmatpush1.msra.mxu0 0.0
  %6457 = vmatprep.subr.mxu0 0.0
  %6458 = vmatpush1.msra.mxu0 0.0
  %6459 = vmatprep.subr.mxu0 0.0
  %6460 = vmatpush1.msra.mxu0 0.0
  %6461 = vmatprep.subr.mxu0 0.0
  %6462 = vmatpush1.msra.mxu0 0.0
  %6463 = vmatprep.subr.mxu0 0.0
  %6464 = vmatpush1.msra.mxu0 0.0
  %6465 = vmatprep.subr.mxu0 0.0
  %6466 = vmatpush1.msra.mxu0 0.0
  %6467 = vmatprep.subr.mxu0 0.0
  %6468 = vmatpush1.msra.mxu0 0.0
  %6469 = vmatprep.subr.mxu0 0.0
  %6470 = vmatpush1.msra.mxu0 0.0
  %6471 = vmatprep.subr.mxu0 0.0
  %6472 = vmatpush1.msra.mxu0 0.0
  %6473 = vmatprep.subr.mxu0 0.0
  %6474 = vmatpush1.msra.mxu0 0.0
  %6475 = vmatprep.subr.mxu0 0.0
  %6476 = vmatpush1.msra.mxu0 0.0
  %6477 = vmatprep.subr.mxu0 0.0
  %6478 = vmatpush1.msra.mxu0 0.0
  %6479 = vmatprep.subr.mxu0 0.0
  %6480 = vmatpush1.msra.mxu0 0.0
  %6481 = vmatprep.subr.mxu0 0.0
  %6482 = vmatpush1.msra.mxu0 0.0
  %6483 = vmatprep.subr.mxu0 0.0
  %6484 = vmatpush1.msra.mxu0 0.0
  %6485 = vmatprep.subr.mxu0 0.0
  %6486 = vmatpush1.msra.mxu0 0.0
  %6487 = vmatprep.subr.mxu0 0.0
  %6488 = vmatpush1.msra.mxu0 0.0
  %6489 = vmatprep.subr.mxu0 0.0
  %6490 = vmatpush1.msra.mxu0 0.0
  %6491 = vmatprep.subr.mxu0 0.0
  %6492 = vmatpush1.msra.mxu0 0.0
  %6493 = vmatprep.subr.mxu0 0.0
  %6494 = vmatpush1.msra.mxu0 0.0
  %6495 = vmatprep.subr.mxu0 0.0
  %6496 = vmatpush1.msra.mxu0 0.0
  %6497 = vmatprep.subr.mxu0 0.0
  %6498 = vmatpush1.msra.mxu0 0.0
  %6499 = vmatprep.subr.mxu0 0.0
  %6500 = vmatpush1.msra.mxu0 0.0
  %6501 = vmatprep.subr.mxu0 0.0
  %6502 = vmatpush1.msra.mxu0 0.0
  %6503 = vmatprep.mubr.f32.mxu0 0.0
  %6504 = vmatmul.mubr.f32.gmra.mrb[0].mxu0 %v6437
  %v6505 = vpop.f32.mrb[0].mxu0
  %v6506 = vadd.f32 0.0, %v6505
  %v6507 = vpop.f32.mrb[0].mxu0
  %6508 = vdwg.mxu0
  %v6509 = vadd.f32 %v6390, %v6506
  %v6510 = vmul.f32 %v6509, %v6430
  %v6511 = vtanh.pop %v6510
  %v6512 = vmul.f32 %v6511, %v6430
  %v6513 = vadd.f32 %v6512, %v6431
  %v6514 = vmul.f32 %v6513, 0.0
  %6516 = vrot.lane.b32.xlu0 %v6513, 64
  %v6517 = vpop.permute.xlu0 %6516
  %v6519 = vmul.f32 %v6513, %v6517
  %6521 = vrot.lane.b32.xlu0 %v6519, 32
  %v6522 = vpop.permute.xlu0 %6521
  %v6524 = vadd.f32 %v6514, %v6522
  %v6525 = vtanh.pop %v6524
  %6527 = vrot.lane.b32.xlu0 %v6525, 64
  %v6528 = vpop.permute.xlu0 %6527
  %v6530 = vmul.f32 %v6513, %v6528
  %v6533 = vunpack.c.l.s4 1983009808
  %v6534 = vunpack.c.0.s8 %v6533
  %v6535 = vlaneseq
  %v6536 = vshrl.u32 %v6535, 7
  %v6537 = vsub.s32 %v6534, %v6536
  %v6538 = vrot.slane %v6530, %v6537
  %6539 = vrot.lane.b32.xlu0 %v6538, 32
  %v6540 = vpop.permute.xlu0 %6539
  %v6541 = vsel %vm858, %v6540, 0
  %6543 = vmatprep.subr.mxu0 0.0
  %6544 = vmatpush1.msra.mxu0 %v6432
  %6545 = vmatprep.subr.mxu0 0.0
  %6546 = vmatpush1.msra.mxu0 %v6433
  %6547 = vmatprep.subr.mxu0 0.0
  %6548 = vmatpush1.msra.mxu0 %v6434
  %6549 = vmatprep.subr.mxu0 0.0
  %6550 = vmatpush1.msra.mxu0 %v6435
  %6551 = vmatprep.subr.mxu0 0.0
  %6552 = vmatpush1.msra.mxu0 0.0
  %6553 = vmatprep.subr.mxu0 0.0
  %6554 = vmatpush1.msra.mxu0 0.0
  %6555 = vmatprep.subr.mxu0 0.0
  %6556 = vmatpush1.msra.mxu0 0.0
  %6557 = vmatprep.subr.mxu0 0.0
  %6558 = vmatpush1.msra.mxu0 0.0
  %6559 = vmatprep.subr.mxu0 0.0
  %6560 = vmatpush1.msra.mxu0 0.0
  %6561 = vmatprep.subr.mxu0 0.0
  %6562 = vmatpush1.msra.mxu0 0.0
  %6563 = vmatprep.subr.mxu0 0.0
  %6564 = vmatpush1.msra.mxu0 0.0
  %6565 = vmatprep.subr.mxu0 0.0
  %6566 = vmatpush1.msra.mxu0 0.0
  %6567 = vmatprep.subr.mxu0 0.0
  %6568 = vmatpush1.msra.mxu0 0.0
  %6569 = vmatprep.subr.mxu0 0.0
  %6570 = vmatpush1.msra.mxu0 0.0
  %6571 = vmatprep.subr.mxu0 0.0
  %6572 = vmatpush1.msra.mxu0 0.0
  %6573 = vmatprep.subr.mxu0 0.0
  %6574 = vmatpush1.msra.mxu0 0.0
  %6575 = vmatprep.subr.mxu0 0.0
  %6576 = vmatpush1.msra.mxu0 0.0
  %6577 = vmatprep.subr.mxu0 0.0
  %6578 = vmatpush1.msra.mxu0 0.0
  %6579 = vmatprep.subr.mxu0 0.0
  %6580 = vmatpush1.msra.mxu0 0.0
  %6581 = vmatprep.subr.mxu0 0.0
  %6582 = vmatpush1.msra.mxu0 0.0
  %6583 = vmatprep.subr.mxu0 0.0
  %6584 = vmatpush1.msra.mxu0 0.0
  %6585 = vmatprep.subr.mxu0 0.0
  %6586 = vmatpush1.msra.mxu0 0.0
  %6587 = vmatprep.subr.mxu0 0.0
  %6588 = vmatpush1.msra.mxu0 0.0
  %6589 = vmatprep.subr.mxu0 0.0
  %6590 = vmatpush1.msra.mxu0 0.0
  %6591 = vmatprep.subr.mxu0 0.0
  %6592 = vmatpush1.msra.mxu0 0.0
  %6593 = vmatprep.subr.mxu0 0.0
  %6594 = vmatpush1.msra.mxu0 0.0
  %6595 = vmatprep.subr.mxu0 0.0
  %6596 = vmatpush1.msra.mxu0 0.0
  %6597 = vmatprep.subr.mxu0 0.0
  %6598 = vmatpush1.msra.mxu0 0.0
  %6599 = vmatprep.subr.mxu0 0.0
  %6600 = vmatpush1.msra.mxu0 0.0
  %6601 = vmatprep.subr.mxu0 0.0
  %6602 = vmatpush1.msra.mxu0 0.0
  %6603 = vmatprep.subr.mxu0 0.0
  %6604 = vmatpush1.msra.mxu0 0.0
  %6605 = vmatprep.subr.mxu0 0.0
  %6606 = vmatpush1.msra.mxu0 0.0
  %6607 = vmatprep.mubr.f32.mxu0 0.0
  %6608 = vmatmul.mubr.f32.gmra.mrb[0].mxu0 %v6541
  %v6609 = vpop.f32.mrb[0].mxu0
  %v6610 = vadd.f32 0.0, %v6609
  %v6611 = vpop.f32.mrb[0].mxu0
  %6612 = vdwg.mxu0
  %v6613 = vadd.f32 %v6398, %v6610
  %v6614 = vmul.f32 %v6613, %v6430
  %v6615 = vtanh.pop %v6614
  %v6616 = vmul.f32 %v6615, %v6430
  %v6617 = vadd.f32 %v6616, %v6431
  %v6618 = vmul.f32 %v6617, %v6524
  %6620 = vrot.lane.b32.xlu0 %v6617, 64
  %v6621 = vpop.permute.xlu0 %6620
  %v6623 = vmul.f32 %v6617, %v6621
  %6625 = vrot.lane.b32.xlu0 %v6623, 32
  %v6626 = vpop.permute.xlu0 %6625
  %v6628 = vadd.f32 %v6618, %v6626
  %v6629 = vtanh.pop %v6628
  %6631 = vrot.lane.b32.xlu0 %v6629, 64
  %v6632 = vpop.permute.xlu0 %6631
  %v6634 = vmul.f32 %v6617, %v6632
  %v6637 = vunpack.c.l.s4 1983009808
  %v6638 = vunpack.c.0.s8 %v6637
  %v6639 = vlaneseq
  %v6640 = vshrl.u32 %v6639, 7
  %v6641 = vsub.s32 %v6638, %v6640
  %v6642 = vrot.slane %v6634, %v6641
  %6643 = vrot.lane.b32.xlu0 %v6642, 32
  %v6644 = vpop.permute.xlu0 %6643
  %v6645 = vsel %vm858, %v6644, 0
  %6647 = vmatprep.subr.mxu0 0.0
  %6648 = vmatpush1.msra.mxu0 %v6432
  %6649 = vmatprep.subr.mxu0 0.0
  %6650 = vmatpush1.msra.mxu0 %v6433
  %6651 = vmatprep.subr.mxu0 0.0
  %6652 = vmatpush1.msra.mxu0 %v6434
  %6653 = vmatprep.subr.mxu0 0.0
  %6654 = vmatpush1.msra.mxu0 %v6435
  %6655 = vmatprep.subr.mxu0 0.0
  %6656 = vmatpush1.msra.mxu0 0.0
  %6657 = vmatprep.subr.mxu0 0.0
  %6658 = vmatpush1.msra.mxu0 0.0
  %6659 = vmatprep.subr.mxu0 0.0
  %6660 = vmatpush1.msra.mxu0 0.0
  %6661 = vmatprep.subr.mxu0 0.0
  %6662 = vmatpush1.msra.mxu0 0.0
  %6663 = vmatprep.subr.mxu0 0.0
  %6664 = vmatpush1.msra.mxu0 0.0
  %6665 = vmatprep.subr.mxu0 0.0
  %6666 = vmatpush1.msra.mxu0 0.0
  %6667 = vmatprep.subr.mxu0 0.0
  %6668 = vmatpush1.msra.mxu0 0.0
  %6669 = vmatprep.subr.mxu0 0.0
  %6670 = vmatpush1.msra.mxu0 0.0
  %6671 = vmatprep.subr.mxu0 0.0
  %6672 = vmatpush1.msra.mxu0 0.0
  %6673 = vmatprep.subr.mxu0 0.0
  %6674 = vmatpush1.msra.mxu0 0.0
  %6675 = vmatprep.subr.mxu0 0.0
  %6676 = vmatpush1.msra.mxu0 0.0
  %6677 = vmatprep.subr.mxu0 0.0
  %6678 = vmatpush1.msra.mxu0 0.0
  %6679 = vmatprep.subr.mxu0 0.0
  %6680 = vmatpush1.msra.mxu0 0.0
  %6681 = vmatprep.subr.mxu0 0.0
  %6682 = vmatpush1.msra.mxu0 0.0
  %6683 = vmatprep.subr.mxu0 0.0
  %6684 = vmatpush1.msra.mxu0 0.0
  %6685 = vmatprep.subr.mxu0 0.0
  %6686 = vmatpush1.msra.mxu0 0.0
  %6687 = vmatprep.subr.mxu0 0.0
  %6688 = vmatpush1.msra.mxu0 0.0
  %6689 = vmatprep.subr.mxu0 0.0
  %6690 = vmatpush1.msra.mxu0 0.0
  %6691 = vmatprep.subr.mxu0 0.0
  %6692 = vmatpush1.msra.mxu0 0.0
  %6693 = vmatprep.subr.mxu0 0.0
  %6694 = vmatpush1.msra.mxu0 0.0
  %6695 = vmatprep.subr.mxu0 0.0
  %6696 = vmatpush1.msra.mxu0 0.0
  %6697 = vmatprep.subr.mxu0 0.0
  %6698 = vmatpush1.msra.mxu0 0.0
  %6699 = vmatprep.subr.mxu0 0.0
  %6700 = vmatpush1.msra.mxu0 0.0
  %6701 = vmatprep.subr.mxu0 0.0
  %6702 = vmatpush1.msra.mxu0 0.0
  %6703 = vmatprep.subr.mxu0 0.0
  %6704 = vmatpush1.msra.mxu0 0.0
  %6705 = vmatprep.subr.mxu0 0.0
  %6706 = vmatpush1.msra.mxu0 0.0
  %6707 = vmatprep.subr.mxu0 0.0
  %6708 = vmatpush1.msra.mxu0 0.0
  %6709 = vmatprep.subr.mxu0 0.0
  %6710 = vmatpush1.msra.mxu0 0.0
  %6711 = vmatprep.mubr.f32.mxu0 0.0
  %6712 = vmatmul.mubr.f32.gmra.mrb[0].mxu0 %v6645
  %v6713 = vpop.f32.mrb[0].mxu0
  %v6714 = vadd.f32 0.0, %v6713
  %v6715 = vpop.f32.mrb[0].mxu0
  %6716 = vdwg.mxu0
  %v6717 = vadd.f32 %v6397, %v6714
  %v6718 = vmul.f32 %v6717, %v6430
  %v6719 = vtanh.pop %v6718
  %v6720 = vmul.f32 %v6719, %v6430
  %v6721 = vadd.f32 %v6720, %v6431
  %v6722 = vmul.f32 %v6721, %v6628
  %6724 = vrot.lane.b32.xlu0 %v6721, 64
  %v6725 = vpop.permute.xlu0 %6724
  %v6727 = vmul.f32 %v6721, %v6725
  %6729 = vrot.lane.b32.xlu0 %v6727, 32
  %v6730 = vpop.permute.xlu0 %6729
  %v6732 = vadd.f32 %v6722, %v6730
  %v6733 = vtanh.pop %v6732
  %6735 = vrot.lane.b32.xlu0 %v6733, 64
  %v6736 = vpop.permute.xlu0 %6735
  %v6738 = vmul.f32 %v6721, %v6736
  %v6741 = vunpack.c.l.s4 1983009808
  %v6742 = vunpack.c.0.s8 %v6741
  %v6743 = vlaneseq
  %v6744 = vshrl.u32 %v6743, 7
  %v6745 = vsub.s32 %v6742, %v6744
  %v6746 = vrot.slane %v6738, %v6745
  %6747 = vrot.lane.b32.xlu0 %v6746, 32
  %v6748 = vpop.permute.xlu0 %6747
  %v6749 = vsel %vm858, %v6748, 0
  %6751 = vmatprep.subr.mxu0 0.0
  %6752 = vmatpush1.msra.mxu0 %v6432
  %6753 = vmatprep.subr.mxu0 0.0
  %6754 = vmatpush1.msra.mxu0 %v6433
  %6755 = vmatprep.subr.mxu0 0.0
  %6756 = vmatpush1.msra.mxu0 %v6434
  %6757 = vmatprep.subr.mxu0 0.0
  %6758 = vmatpush1.msra.mxu0 %v6435
  %6759 = vmatprep.subr.mxu0 0.0
  %6760 = vmatpush1.msra.mxu0 0.0
  %6761 = vmatprep.subr.mxu0 0.0
  %6762 = vmatpush1.msra.mxu0 0.0
  %6763 = vmatprep.subr.mxu0 0.0
  %6764 = vmatpush1.msra.mxu0 0.0
  %6765 = vmatprep.subr.mxu0 0.0
  %6766 = vmatpush1.msra.mxu0 0.0
  %6767 = vmatprep.subr.mxu0 0.0
  %6768 = vmatpush1.msra.mxu0 0.0
  %6769 = vmatprep.subr.mxu0 0.0
  %6770 = vmatpush1.msra.mxu0 0.0
  %6771 = vmatprep.subr.mxu0 0.0
  %6772 = vmatpush1.msra.mxu0 0.0
  %6773 = vmatprep.subr.mxu0 0.0
  %6774 = vmatpush1.msra.mxu0 0.0
  %6775 = vmatprep.subr.mxu0 0.0
  %6776 = vmatpush1.msra.mxu0 0.0
  %6777 = vmatprep.subr.mxu0 0.0
  %6778 = vmatpush1.msra.mxu0 0.0
  %6779 = vmatprep.subr.mxu0 0.0
  %6780 = vmatpush1.msra.mxu0 0.0
  %6781 = vmatprep.subr.mxu0 0.0
  %6782 = vmatpush1.msra.mxu0 0.0
  %6783 = vmatprep.subr.mxu0 0.0
  %6784 = vmatpush1.msra.mxu0 0.0
  %6785 = vmatprep.subr.mxu0 0.0
  %6786 = vmatpush1.msra.mxu0 0.0
  %6787 = vmatprep.subr.mxu0 0.0
  %6788 = vmatpush1.msra.mxu0 0.0
  %6789 = vmatprep.subr.mxu0 0.0
  %6790 = vmatpush1.msra.mxu0 0.0
  %6791 = vmatprep.subr.mxu0 0.0
  %6792 = vmatpush1.msra.mxu0 0.0
  %6793 = vmatprep.subr.mxu0 0.0
  %6794 = vmatpush1.msra.mxu0 0.0
  %6795 = vmatprep.subr.mxu0 0.0
  %6796 = vmatpush1.msra.mxu0 0.0
  %6797 = vmatprep.subr.mxu0 0.0
  %6798 = vmatpush1.msra.mxu0 0.0
  %6799 = vmatprep.subr.mxu0 0.0
  %6800 = vmatpush1.msra.mxu0 0.0
  %6801 = vmatprep.subr.mxu0 0.0
  %6802 = vmatpush1.msra.mxu0 0.0
  %6803 = vmatprep.subr.mxu0 0.0
  %6804 = vmatpush1.msra.mxu0 0.0
  %6805 = vmatprep.subr.mxu0 0.0
  %6806 = vmatpush1.msra.mxu0 0.0
  %6807 = vmatprep.subr.mxu0 0.0
  %6808 = vmatpush1.msra.mxu0 0.0
  %6809 = vmatprep.subr.mxu0 0.0
  %6810 = vmatpush1.msra.mxu0 0.0
  %6811 = vmatprep.subr.mxu0 0.0
  %6812 = vmatpush1.msra.mxu0 0.0
  %6813 = vmatprep.subr.mxu0 0.0
  %6814 = vmatpush1.msra.mxu0 0.0
  %6815 = vmatprep.mubr.f32.mxu0 0.0
  %6816 = vmatmul.mubr.f32.gmra.mrb[0].mxu0 %v6749
  %v6817 = vpop.f32.mrb[0].mxu0
  %v6818 = vadd.f32 0.0, %v6817
  %v6819 = vpop.f32.mrb[0].mxu0
  %6820 = vdwg.mxu0
  %v6821 = vadd.f32 %v6399, %v6818
  %v6822 = vmul.f32 %v6821, %v6430
  %v6823 = vtanh.pop %v6822
  %v6824 = vmul.f32 %v6823, %v6430
  %v6825 = vadd.f32 %v6824, %v6431
  %v6826 = vmul.f32 %v6825, %v6732
  %6828 = vrot.lane.b32.xlu0 %v6825, 64
  %v6829 = vpop.permute.xlu0 %6828
  %v6831 = vmul.f32 %v6825, %v6829
  %6833 = vrot.lane.b32.xlu0 %v6831, 32
  %v6834 = vpop.permute.xlu0 %6833
  %v6836 = vadd.f32 %v6826, %v6834
  %v6837 = vtanh.pop %v6836
  %6839 = vrot.lane.b32.xlu0 %v6837, 64
  %v6840 = vpop.permute.xlu0 %6839
  %v6842 = vmul.f32 %v6825, %v6840
  %v6845 = vunpack.c.l.s4 1983009808
  %v6846 = vunpack.c.0.s8 %v6845
  %v6847 = vlaneseq
  %v6848 = vshrl.u32 %v6847, 7
  %v6849 = vsub.s32 %v6846, %v6848
  %v6850 = vrot.slane %v6842, %v6849
  %6851 = vrot.lane.b32.xlu0 %v6850, 32
  %v6852 = vpop.permute.xlu0 %6851
  %v6853 = vsel %vm858, %v6852, 0
  %6855 = vmatprep.subr.mxu0 0.0
  %6856 = vmatpush1.msra.mxu0 %v6432
  %6857 = vmatprep.subr.mxu0 0.0
  %6858 = vmatpush1.msra.mxu0 %v6433
  %6859 = vmatprep.subr.mxu0 0.0
  %6860 = vmatpush1.msra.mxu0 %v6434
  %6861 = vmatprep.subr.mxu0 0.0
  %6862 = vmatpush1.msra.mxu0 %v6435
  %6863 = vmatprep.subr.mxu0 0.0
  %6864 = vmatpush1.msra.mxu0 0.0
  %6865 = vmatprep.subr.mxu0 0.0
  %6866 = vmatpush1.msra.mxu0 0.0
  %6867 = vmatprep.subr.mxu0 0.0
  %6868 = vmatpush1.msra.mxu0 0.0
  %6869 = vmatprep.subr.mxu0 0.0
  %6870 = vmatpush1.msra.mxu0 0.0
  %6871 = vmatprep.subr.mxu0 0.0
  %6872 = vmatpush1.msra.mxu0 0.0
  %6873 = vmatprep.subr.mxu0 0.0
  %6874 = vmatpush1.msra.mxu0 0.0
  %6875 = vmatprep.subr.mxu0 0.0
  %6876 = vmatpush1.msra.mxu0 0.0
  %6877 = vmatprep.subr.mxu0 0.0
  %6878 = vmatpush1.msra.mxu0 0.0
  %6879 = vmatprep.subr.mxu0 0.0
  %6880 = vmatpush1.msra.mxu0 0.0
  %6881 = vmatprep.subr.mxu0 0.0
  %6882 = vmatpush1.msra.mxu0 0.0
  %6883 = vmatprep.subr.mxu0 0.0
  %6884 = vmatpush1.msra.mxu0 0.0
  %6885 = vmatprep.subr.mxu0 0.0
  %6886 = vmatpush1.msra.mxu0 0.0
  %6887 = vmatprep.subr.mxu0 0.0
  %6888 = vmatpush1.msra.mxu0 0.0
  %6889 = vmatprep.subr.mxu0 0.0
  %6890 = vmatpush1.msra.mxu0 0.0
  %6891 = vmatprep.subr.mxu0 0.0
  %6892 = vmatpush1.msra.mxu0 0.0
  %6893 = vmatprep.subr.mxu0 0.0
  %6894 = vmatpush1.msra.mxu0 0.0
  %6895 = vmatprep.subr.mxu0 0.0
  %6896 = vmatpush1.msra.mxu0 0.0
  %6897 = vmatprep.subr.mxu0 0.0
  %6898 = vmatpush1.msra.mxu0 0.0
  %6899 = vmatprep.subr.mxu0 0.0
  %6900 = vmatpush1.msra.mxu0 0.0
  %6901 = vmatprep.subr.mxu0 0.0
  %6902 = vmatpush1.msra.mxu0 0.0
  %6903 = vmatprep.subr.mxu0 0.0
  %6904 = vmatpush1.msra.mxu0 0.0
  %6905 = vmatprep.subr.mxu0 0.0
  %6906 = vmatpush1.msra.mxu0 0.0
  %6907 = vmatprep.subr.mxu0 0.0
  %6908 = vmatpush1.msra.mxu0 0.0
  %6909 = vmatprep.subr.mxu0 0.0
  %6910 = vmatpush1.msra.mxu0 0.0
  %6911 = vmatprep.subr.mxu0 0.0
  %6912 = vmatpush1.msra.mxu0 0.0
  %6913 = vmatprep.subr.mxu0 0.0
  %6914 = vmatpush1.msra.mxu0 0.0
  %6915 = vmatprep.subr.mxu0 0.0
  %6916 = vmatpush1.msra.mxu0 0.0
  %6917 = vmatprep.subr.mxu0 0.0
  %6918 = vmatpush1.msra.mxu0 0.0
  %6919 = vmatprep.mubr.f32.mxu0 0.0
  %6920 = vmatmul.mubr.f32.gmra.mrb[0].mxu0 %v6853
  %v6921 = vpop.f32.mrb[0].mxu0
  %v6922 = vadd.f32 0.0, %v6921
  %v6923 = vpop.f32.mrb[0].mxu0
  %6924 = vdwg.mxu0
  %v6925 = vadd.f32 %v6407, %v6922
  %v6926 = vmul.f32 %v6925, %v6430
  %v6927 = vtanh.pop %v6926
  %v6928 = vmul.f32 %v6927, %v6430
  %v6929 = vadd.f32 %v6928, %v6431
  %v6930 = vmul.f32 %v6929, %v6836
  %6932 = vrot.lane.b32.xlu0 %v6929, 64
  %v6933 = vpop.permute.xlu0 %6932
  %v6935 = vmul.f32 %v6929, %v6933
  %6937 = vrot.lane.b32.xlu0 %v6935, 32
  %v6938 = vpop.permute.xlu0 %6937
  %v6940 = vadd.f32 %v6930, %v6938
  %v6941 = vtanh.pop %v6940
  %6943 = vrot.lane.b32.xlu0 %v6941, 64
  %v6944 = vpop.permute.xlu0 %6943
  %v6946 = vmul.f32 %v6929, %v6944
  %v6949 = vunpack.c.l.s4 1983009808
  %v6950 = vunpack.c.0.s8 %v6949
  %v6951 = vlaneseq
  %v6952 = vshrl.u32 %v6951, 7
  %v6953 = vsub.s32 %v6950, %v6952
  %v6954 = vrot.slane %v6946, %v6953
  %6955 = vrot.lane.b32.xlu0 %v6954, 32
  %v6956 = vpop.permute.xlu0 %6955
  %v6957 = vsel %vm858, %v6956, 0
  %6959 = vmatprep.subr.mxu0 0.0
  %6960 = vmatpush1.msra.mxu0 %v6432
  %6961 = vmatprep.subr.mxu0 0.0
  %6962 = vmatpush1.msra.mxu0 %v6433
  %6963 = vmatprep.subr.mxu0 0.0
  %6964 = vmatpush1.msra.mxu0 %v6434
  %6965 = vmatprep.subr.mxu0 0.0
  %6966 = vmatpush1.msra.mxu0 %v6435
  %6967 = vmatprep.subr.mxu0 0.0
  %6968 = vmatpush1.msra.mxu0 0.0
  %6969 = vmatprep.subr.mxu0 0.0
  %6970 = vmatpush1.msra.mxu0 0.0
  %6971 = vmatprep.subr.mxu0 0.0
  %6972 = vmatpush1.msra.mxu0 0.0
  %6973 = vmatprep.subr.mxu0 0.0
  %6974 = vmatpush1.msra.mxu0 0.0
  %6975 = vmatprep.subr.mxu0 0.0
  %6976 = vmatpush1.msra.mxu0 0.0
  %6977 = vmatprep.subr.mxu0 0.0
  %6978 = vmatpush1.msra.mxu0 0.0
  %6979 = vmatprep.subr.mxu0 0.0
  %6980 = vmatpush1.msra.mxu0 0.0
  %6981 = vmatprep.subr.mxu0 0.0
  %6982 = vmatpush1.msra.mxu0 0.0
  %6983 = vmatprep.subr.mxu0 0.0
  %6984 = vmatpush1.msra.mxu0 0.0
  %6985 = vmatprep.subr.mxu0 0.0
  %6986 = vmatpush1.msra.mxu0 0.0
  %6987 = vmatprep.subr.mxu0 0.0
  %6988 = vmatpush1.msra.mxu0 0.0
  %6989 = vmatprep.subr.mxu0 0.0
  %6990 = vmatpush1.msra.mxu0 0.0
  %6991 = vmatprep.subr.mxu0 0.0
  %6992 = vmatpush1.msra.mxu0 0.0
  %6993 = vmatprep.subr.mxu0 0.0
  %6994 = vmatpush1.msra.mxu0 0.0
  %6995 = vmatprep.subr.mxu0 0.0
  %6996 = vmatpush1.msra.mxu0 0.0
  %6997 = vmatprep.subr.mxu0 0.0
  %6998 = vmatpush1.msra.mxu0 0.0
  %6999 = vmatprep.subr.mxu0 0.0
  %7000 = vmatpush1.msra.mxu0 0.0
  %7001 = vmatprep.subr.mxu0 0.0
  %7002 = vmatpush1.msra.mxu0 0.0
  %7003 = vmatprep.subr.mxu0 0.0
  %7004 = vmatpush1.msra.mxu0 0.0
  %7005 = vmatprep.subr.mxu0 0.0
  %7006 = vmatpush1.msra.mxu0 0.0
  %7007 = vmatprep.subr.mxu0 0.0
  %7008 = vmatpush1.msra.mxu0 0.0
  %7009 = vmatprep.subr.mxu0 0.0
  %7010 = vmatpush1.msra.mxu0 0.0
  %7011 = vmatprep.subr.mxu0 0.0
  %7012 = vmatpush1.msra.mxu0 0.0
  %7013 = vmatprep.subr.mxu0 0.0
  %7014 = vmatpush1.msra.mxu0 0.0
  %7015 = vmatprep.subr.mxu0 0.0
  %7016 = vmatpush1.msra.mxu0 0.0
  %7017 = vmatprep.subr.mxu0 0.0
  %7018 = vmatpush1.msra.mxu0 0.0
  %7019 = vmatprep.subr.mxu0 0.0
  %7020 = vmatpush1.msra.mxu0 0.0
  %7021 = vmatprep.subr.mxu0 0.0
  %7022 = vmatpush1.msra.mxu0 0.0
  %7023 = vmatprep.mubr.f32.mxu0 0.0
  %7024 = vmatmul.mubr.f32.gmra.mrb[0].mxu0 %v6957
  %v7025 = vpop.f32.mrb[0].mxu0
  %v7026 = vadd.f32 0.0, %v7025
  %v7027 = vpop.f32.mrb[0].mxu0
  %7028 = vdwg.mxu0
  %v7029 = vadd.f32 %v6415, %v7026
  %v7030 = vmul.f32 %v7029, %v6430
  %v7031 = vtanh.pop %v7030
  %v7032 = vmul.f32 %v7031, %v6430
  %v7033 = vadd.f32 %v7032, %v6431
  %v7034 = vmul.f32 %v7033, %v6940
  %7036 = vrot.lane.b32.xlu0 %v7033, 64
  %v7037 = vpop.permute.xlu0 %7036
  %v7039 = vmul.f32 %v7033, %v7037
  %7041 = vrot.lane.b32.xlu0 %v7039, 32
  %v7042 = vpop.permute.xlu0 %7041
  %v7044 = vadd.f32 %v7034, %v7042
  %v7045 = vtanh.pop %v7044
  %7047 = vrot.lane.b32.xlu0 %v7045, 64
  %v7048 = vpop.permute.xlu0 %7047
  %v7050 = vmul.f32 %v7033, %v7048
  %v7053 = vunpack.c.l.s4 1983009808
  %v7054 = vunpack.c.0.s8 %v7053
  %v7055 = vlaneseq
  %v7056 = vshrl.u32 %v7055, 7
  %v7057 = vsub.s32 %v7054, %v7056
  %v7058 = vrot.slane %v7050, %v7057
  %7059 = vrot.lane.b32.xlu0 %v7058, 32
  %v7060 = vpop.permute.xlu0 %7059
  %v7061 = vsel %vm858, %v7060, 0
  %7063 = vmatprep.subr.mxu0 0.0
  %7064 = vmatpush1.msra.mxu0 %v6432
  %7065 = vmatprep.subr.mxu0 0.0
  %7066 = vmatpush1.msra.mxu0 %v6433
  %7067 = vmatprep.subr.mxu0 0.0
  %7068 = vmatpush1.msra.mxu0 %v6434
  %7069 = vmatprep.subr.mxu0 0.0
  %7070 = vmatpush1.msra.mxu0 %v6435
  %7071 = vmatprep.subr.mxu0 0.0
  %7072 = vmatpush1.msra.mxu0 0.0
  %7073 = vmatprep.subr.mxu0 0.0
  %7074 = vmatpush1.msra.mxu0 0.0
  %7075 = vmatprep.subr.mxu0 0.0
  %7076 = vmatpush1.msra.mxu0 0.0
  %7077 = vmatprep.subr.mxu0 0.0
  %7078 = vmatpush1.msra.mxu0 0.0
  %7079 = vmatprep.subr.mxu0 0.0
  %7080 = vmatpush1.msra.mxu0 0.0
  %7081 = vmatprep.subr.mxu0 0.0
  %7082 = vmatpush1.msra.mxu0 0.0
  %7083 = vmatprep.subr.mxu0 0.0
  %7084 = vmatpush1.msra.mxu0 0.0
  %7085 = vmatprep.subr.mxu0 0.0
  %7086 = vmatpush1.msra.mxu0 0.0
  %7087 = vmatprep.subr.mxu0 0.0
  %7088 = vmatpush1.msra.mxu0 0.0
  %7089 = vmatprep.subr.mxu0 0.0
  %7090 = vmatpush1.msra.mxu0 0.0
  %7091 = vmatprep.subr.mxu0 0.0
  %7092 = vmatpush1.msra.mxu0 0.0
  %7093 = vmatprep.subr.mxu0 0.0
  %7094 = vmatpush1.msra.mxu0 0.0
  %7095 = vmatprep.subr.mxu0 0.0
  %7096 = vmatpush1.msra.mxu0 0.0
  %7097 = vmatprep.subr.mxu0 0.0
  %7098 = vmatpush1.msra.mxu0 0.0
  %7099 = vmatprep.subr.mxu0 0.0
  %7100 = vmatpush1.msra.mxu0 0.0
  %7101 = vmatprep.subr.mxu0 0.0
  %7102 = vmatpush1.msra.mxu0 0.0
  %7103 = vmatprep.subr.mxu0 0.0
  %7104 = vmatpush1.msra.mxu0 0.0
  %7105 = vmatprep.subr.mxu0 0.0
  %7106 = vmatpush1.msra.mxu0 0.0
  %7107 = vmatprep.subr.mxu0 0.0
  %7108 = vmatpush1.msra.mxu0 0.0
  %7109 = vmatprep.subr.mxu0 0.0
  %7110 = vmatpush1.msra.mxu0 0.0
  %7111 = vmatprep.subr.mxu0 0.0
  %7112 = vmatpush1.msra.mxu0 0.0
  %7113 = vmatprep.subr.mxu0 0.0
  %7114 = vmatpush1.msra.mxu0 0.0
  %7115 = vmatprep.subr.mxu0 0.0
  %7116 = vmatpush1.msra.mxu0 0.0
  %7117 = vmatprep.subr.mxu0 0.0
  %7118 = vmatpush1.msra.mxu0 0.0
  %7119 = vmatprep.subr.mxu0 0.0
  %7120 = vmatpush1.msra.mxu0 0.0
  %7121 = vmatprep.subr.mxu0 0.0
  %7122 = vmatpush1.msra.mxu0 0.0
  %7123 = vmatprep.subr.mxu0 0.0
  %7124 = vmatpush1.msra.mxu0 0.0
  %7125 = vmatprep.subr.mxu0 0.0
  %7126 = vmatpush1.msra.mxu0 0.0
  %7127 = vmatprep.mubr.f32.mxu0 0.0
  %7128 = vmatmul.mubr.f32.gmra.mrb[0].mxu0 %v7061
  %v7129 = vpop.f32.mrb[0].mxu0
  %v7130 = vadd.f32 0.0, %v7129
  %v7131 = vpop.f32.mrb[0].mxu0
  %7132 = vdwg.mxu0
  %v7133 = vadd.f32 %v6414, %v7130
  %v7134 = vmul.f32 %v7133, %v6430
  %v7135 = vtanh.pop %v7134
  %v7136 = vmul.f32 %v7135, %v6430
  %v7137 = vadd.f32 %v7136, %v6431
  %v7138 = vmul.f32 %v7137, %v7044
  %7140 = vrot.lane.b32.xlu0 %v7137, 64
  %v7141 = vpop.permute.xlu0 %7140
  %v7143 = vmul.f32 %v7137, %v7141
  %7145 = vrot.lane.b32.xlu0 %v7143, 32
  %v7146 = vpop.permute.xlu0 %7145
  %v7148 = vadd.f32 %v7138, %v7146
  %v7149 = vtanh.pop %v7148
  %7151 = vrot.lane.b32.xlu0 %v7149, 64
  %v7152 = vpop.permute.xlu0 %7151
  %v7154 = vmul.f32 %v7137, %v7152
  %v7157 = vunpack.c.l.s4 1983009808
  %v7158 = vunpack.c.0.s8 %v7157
  %v7159 = vlaneseq
  %v7160 = vshrl.u32 %v7159, 7
  %v7161 = vsub.s32 %v7158, %v7160
  %v7162 = vrot.slane %v7154, %v7161
  %7163 = vrot.lane.b32.xlu0 %v7162, 32
  %v7164 = vpop.permute.xlu0 %7163
  %v7165 = vsel %vm858, %v7164, 0
  %7167 = vmatprep.subr.mxu0 0.0
  %7168 = vmatpush1.msra.mxu0 %v6432
  %7169 = vmatprep.subr.mxu0 0.0
  %7170 = vmatpush1.msra.mxu0 %v6433
  %7171 = vmatprep.subr.mxu0 0.0
  %7172 = vmatpush1.msra.mxu0 %v6434
  %7173 = vmatprep.subr.mxu0 0.0
  %7174 = vmatpush1.msra.mxu0 %v6435
  %7175 = vmatprep.subr.mxu0 0.0
  %7176 = vmatpush1.msra.mxu0 0.0
  %7177 = vmatprep.subr.mxu0 0.0
  %7178 = vmatpush1.msra.mxu0 0.0
  %7179 = vmatprep.subr.mxu0 0.0
  %7180 = vmatpush1.msra.mxu0 0.0
  %7181 = vmatprep.subr.mxu0 0.0
  %7182 = vmatpush1.msra.mxu0 0.0
  %7183 = vmatprep.subr.mxu0 0.0
  %7184 = vmatpush1.msra.mxu0 0.0
  %7185 = vmatprep.subr.mxu0 0.0
  %7186 = vmatpush1.msra.mxu0 0.0
  %7187 = vmatprep.subr.mxu0 0.0
  %7188 = vmatpush1.msra.mxu0 0.0
  %7189 = vmatprep.subr.mxu0 0.0
  %7190 = vmatpush1.msra.mxu0 0.0
  %7191 = vmatprep.subr.mxu0 0.0
  %7192 = vmatpush1.msra.mxu0 0.0
  %7193 = vmatprep.subr.mxu0 0.0
  %7194 = vmatpush1.msra.mxu0 0.0
  %7195 = vmatprep.subr.mxu0 0.0
  %7196 = vmatpush1.msra.mxu0 0.0
  %7197 = vmatprep.subr.mxu0 0.0
  %7198 = vmatpush1.msra.mxu0 0.0
  %7199 = vmatprep.subr.mxu0 0.0
  %7200 = vmatpush1.msra.mxu0 0.0
  %7201 = vmatprep.subr.mxu0 0.0
  %7202 = vmatpush1.msra.mxu0 0.0
  %7203 = vmatprep.subr.mxu0 0.0
  %7204 = vmatpush1.msra.mxu0 0.0
  %7205 = vmatprep.subr.mxu0 0.0
  %7206 = vmatpush1.msra.mxu0 0.0
  %7207 = vmatprep.subr.mxu0 0.0
  %7208 = vmatpush1.msra.mxu0 0.0
  %7209 = vmatprep.subr.mxu0 0.0
  %7210 = vmatpush1.msra.mxu0 0.0
  %7211 = vmatprep.subr.mxu0 0.0
  %7212 = vmatpush1.msra.mxu0 0.0
  %7213 = vmatprep.subr.mxu0 0.0
  %7214 = vmatpush1.msra.mxu0 0.0
  %7215 = vmatprep.subr.mxu0 0.0
  %7216 = vmatpush1.msra.mxu0 0.0
  %7217 = vmatprep.subr.mxu0 0.0
  %7218 = vmatpush1.msra.mxu0 0.0
  %7219 = vmatprep.subr.mxu0 0.0
  %7220 = vmatpush1.msra.mxu0 0.0
  %7221 = vmatprep.subr.mxu0 0.0
  %7222 = vmatpush1.msra.mxu0 0.0
  %7223 = vmatprep.subr.mxu0 0.0
  %7224 = vmatpush1.msra.mxu0 0.0
  %7225 = vmatprep.subr.mxu0 0.0
  %7226 = vmatpush1.msra.mxu0 0.0
  %7227 = vmatprep.subr.mxu0 0.0
  %7228 = vmatpush1.msra.mxu0 0.0
  %7229 = vmatprep.subr.mxu0 0.0
  %7230 = vmatpush1.msra.mxu0 0.0
  %7231 = vmatprep.mubr.f32.mxu0 0.0
  %7232 = vmatmul.mubr.f32.gmra.mrb[0].mxu0 %v7165
  %v7233 = vpop.f32.mrb[0].mxu0
  %v7234 = vadd.f32 0.0, %v7233
  %v7235 = vpop.f32.mrb[0].mxu0
  %7236 = vdwg.mxu0
  %v7237 = vadd.f32 %v6416, %v7234
  %v7238 = vmul.f32 %v7237, %v6430
  %v7239 = vtanh.pop %v7238
  %v7240 = vmul.f32 %v7239, %v6430
  %v7241 = vadd.f32 %v7240, %v6431
  %v7242 = vmul.f32 %v7241, %v7148
  %7244 = vrot.lane.b32.xlu0 %v7241, 64
  %v7245 = vpop.permute.xlu0 %7244
  %v7247 = vmul.f32 %v7241, %v7245
  %7249 = vrot.lane.b32.xlu0 %v7247, 32
  %v7250 = vpop.permute.xlu0 %7249
  %v7252 = vadd.f32 %v7242, %v7250
  %v7253 = vtanh.pop %v7252
  %7255 = vrot.lane.b32.xlu0 %v7253, 64
  %v7256 = vpop.permute.xlu0 %7255
  %v7258 = vmul.f32 %v7241, %v7256
  %v7259 = vld [vmem:[%s1] sm:$0xff]
  %v7260 = vld [vmem:[%s1 + $0x8] sm:$0xff]
  %7261 = vset.pattern.permute.xlu0 0
  %7262 = vperm.xlu0 %7261, %v7259
  %v7263 = vpop.permute.xlu0 %7262
  %7264 = vset.pattern.permute.xlu0 0
  %7265 = vperm.xlu0 %7264, %v7260
  %v7266 = vpop.permute.xlu0 %7265
  %vm7267 = vcmp.eq.s32.totalorder %v6426, %v7263
  %vm7268 = vcmp.eq.s32.totalorder %v6426, %v7266
  %v7269 = vsel %vm7267, 1, 0
  %v7270 = vsel %vm7268, 1, 0
  %v7271 = vcvt.s32.f32 %v7269
  %v7272 = vcvt.s32.f32 %v7270
  %v7273 = vld [vmem:[%s10] sm:$0xff]
  %v7274 = vld [vmem:[%s11] sm:$0x1]
  %v7276 = vlaneseq
  %v7277 = vshrl.u32 %v7276, 7
  %v7278 = vsub.s32 0, %v7277
  %v7279 = vrot.slane %v7274, %v7278
  %vm7281 = vcmask 64512
  %v7283 = vsel %vm7281, %v7271, 0
  %v7286 = vsel %vm7281, %v7272, 0
  %7288 = vmatprep.subr.mxu0 0.0
  %7289 = vmatpush1.msra.mxu0 %v7273
  %7290 = vmatprep.subr.mxu0 0.0
  %7291 = vmatpush1.msra.mxu0 0.0
  %7292 = vmatprep.subr.mxu0 0.0
  %7293 = vmatpush1.msra.mxu0 0.0
  %7294 = vmatprep.subr.mxu0 0.0
  %7295 = vmatpush1.msra.mxu0 0.0
  %7296 = vmatprep.subr.mxu0 0.0
  %7297 = vmatpush1.msra.mxu0 0.0
  %7298 = vmatprep.subr.mxu0 0.0
  %7299 = vmatpush1.msra.mxu0 0.0
  %7300 = vmatprep.subr.mxu0 0.0
  %7301 = vmatpush1.msra.mxu0 0.0
  %7302 = vmatprep.subr.mxu0 0.0
  %7303 = vmatpush1.msra.mxu0 0.0
  %7304 = vmatprep.subr.mxu0 0.0
  %7305 = vmatpush1.msra.mxu0 0.0
  %7306 = vmatprep.subr.mxu0 0.0
  %7307 = vmatpush1.msra.mxu0 0.0
  %7308 = vmatprep.subr.mxu0 0.0
  %7309 = vmatpush1.msra.mxu0 0.0
  %7310 = vmatprep.subr.mxu0 0.0
  %7311 = vmatpush1.msra.mxu0 0.0
  %7312 = vmatprep.subr.mxu0 0.0
  %7313 = vmatpush1.msra.mxu0 0.0
  %7314 = vmatprep.subr.mxu0 0.0
  %7315 = vmatpush1.msra.mxu0 0.0
  %7316 = vmatprep.subr.mxu0 0.0
  %7317 = vmatpush1.msra.mxu0 0.0
  %7318 = vmatprep.subr.mxu0 0.0
  %7319 = vmatpush1.msra.mxu0 0.0
  %7320 = vmatprep.subr.mxu0 0.0
  %7321 = vmatpush1.msra.mxu0 0.0
  %7322 = vmatprep.subr.mxu0 0.0
  %7323 = vmatpush1.msra.mxu0 0.0
  %7324 = vmatprep.subr.mxu0 0.0
  %7325 = vmatpush1.msra.mxu0 0.0
  %7326 = vmatprep.subr.mxu0 0.0
  %7327 = vmatpush1.msra.mxu0 0.0
  %7328 = vmatprep.subr.mxu0 0.0
  %7329 = vmatpush1.msra.mxu0 0.0
  %7330 = vmatprep.subr.mxu0 0.0
  %7331 = vmatpush1.msra.mxu0 0.0
  %7332 = vmatprep.subr.mxu0 0.0
  %7333 = vmatpush1.msra.mxu0 0.0
  %7334 = vmatprep.subr.mxu0 0.0
  %7335 = vmatpush1.msra.mxu0 0.0
  %7336 = vmatprep.subr.mxu0 0.0
  %7337 = vmatpush1.msra.mxu0 0.0
  %7338 = vmatprep.subr.mxu0 0.0
  %7339 = vmatpush1.msra.mxu0 0.0
  %7340 = vmatprep.subr.mxu0 0.0
  %7341 = vmatpush1.msra.mxu0 0.0
  %7342 = vmatprep.subr.mxu0 0.0
  %7343 = vmatpush1.msra.mxu0 0.0
  %7344 = vmatprep.subr.mxu0 0.0
  %7345 = vmatpush1.msra.mxu0 0.0
  %7346 = vmatprep.subr.mxu0 0.0
  %7347 = vmatpush1.msra.mxu0 0.0
  %7348 = vmatprep.subr.mxu0 0.0
  %7349 = vmatpush1.msra.mxu0 0.0
  %7350 = vmatprep.subr.mxu0 0.0
  %7351 = vmatpush1.msra.mxu0 0.0
  %7352 = vmatprep.mubr.f32.mxu0 0.0
  %7353 = vmatmul.mubr.f32.gmra.mrb[0].mxu0 %v7283
  %v7354 = vpop.f32.mrb[0].mxu0
  %v7355 = vadd.f32 %v7279, %v7354
  %v7356 = vpop.f32.mrb[0].mxu0
  %7357 = vmatprep.mubr.f32.mxu0 0.0
  %7358 = vmatmul.mubr.f32.gmra.mrb[0].mxu0 %v7286
  %v7359 = vpop.f32.mrb[0].mxu0
  %v7360 = vadd.f32 %v7279, %v7359
  %v7361 = vpop.f32.mrb[0].mxu0
  %7362 = vdwg.mxu0
  %v7365 = vcombine.high %v7355, %v7355
  %v7367 = vunpack.c.l.s4 1983009808
  %v7368 = vunpack.c.0.s8 %v7367
  %v7369 = vlaneseq
  %v7370 = vshrl.u32 %v7369, 7
  %v7371 = vsub.s32 %v7368, %v7370
  %v7372 = vrot.slane %v7355, %v7371
  %v7374 = vunpack.c.l.s4 1983009808
  %v7375 = vunpack.c.0.s8 %v7374
  %v7376 = vlaneseq
  %v7377 = vshrl.u32 %v7376, 7
  %v7378 = vsub.s32 %v7375, %v7377
  %v7379 = vrot.slane %v7365, %v7378
  %v7380 = vcombine.high %v7372, %v7372
  %v7381 = vcombine.high %v7379, %v7379
  %v7382 = vcombine.high %v7360, %v7360
  %v7384 = vunpack.c.l.s4 1983009808
  %v7385 = vunpack.c.0.s8 %v7384
  %v7386 = vlaneseq
  %v7387 = vshrl.u32 %v7386, 7
  %v7388 = vsub.s32 %v7385, %v7387
  %v7389 = vrot.slane %v7360, %v7388
  %v7391 = vunpack.c.l.s4 1983009808
  %v7392 = vunpack.c.0.s8 %v7391
  %v7393 = vlaneseq
  %v7394 = vshrl.u32 %v7393, 7
  %v7395 = vsub.s32 %v7392, %v7394
  %v7396 = vrot.slane %v7382, %v7395
  %v7397 = vcombine.high %v7389, %v7389
  %v7398 = vcombine.high %v7396, %v7396
  %v7407 = vld [vmem:[%s12] sm:$0xff]
  %v7408 = vld [vmem:[%s12 + $0x8] sm:$0xff]
  %v7409 = vld [vmem:[%s12 + $0x10] sm:$0xff]
  %v7410 = vld [vmem:[%s12 + $0x18] sm:$0xff]
  %v7413 = vunpack.c.l.s4 1983009808
  %v7414 = vunpack.c.0.s8 %v7413
  %v7415 = vlaneseq
  %v7416 = vshrl.u32 %v7415, 7
  %v7417 = vsub.s32 %v7414, %v7416
  %v7418 = vrot.slane %v7258, %v7417
  %7419 = vrot.lane.b32.xlu0 %v7418, 32
  %v7420 = vpop.permute.xlu0 %7419
  %v7421 = vsel %vm858, %v7420, 0
  %7423 = vmatprep.subr.mxu0 0.0
  %7424 = vmatpush1.msra.mxu0 %v7407
  %7425 = vmatprep.subr.mxu0 0.0
  %7426 = vmatpush1.msra.mxu0 %v7408
  %7427 = vmatprep.subr.mxu0 0.0
  %7428 = vmatpush1.msra.mxu0 %v7409
  %7429 = vmatprep.subr.mxu0 0.0
  %7430 = vmatpush1.msra.mxu0 %v7410
  %7431 = vmatprep.subr.mxu0 0.0
  %7432 = vmatpush1.msra.mxu0 0.0
  %7433 = vmatprep.subr.mxu0 0.0
  %7434 = vmatpush1.msra.mxu0 0.0
  %7435 = vmatprep.subr.mxu0 0.0
  %7436 = vmatpush1.msra.mxu0 0.0
  %7437 = vmatprep.subr.mxu0 0.0
  %7438 = vmatpush1.msra.mxu0 0.0
  %7439 = vmatprep.subr.mxu0 0.0
  %7440 = vmatpush1.msra.mxu0 0.0
  %7441 = vmatprep.subr.mxu0 0.0
  %7442 = vmatpush1.msra.mxu0 0.0
  %7443 = vmatprep.subr.mxu0 0.0
  %7444 = vmatpush1.msra.mxu0 0.0
  %7445 = vmatprep.subr.mxu0 0.0
  %7446 = vmatpush1.msra.mxu0 0.0
  %7447 = vmatprep.subr.mxu0 0.0
  %7448 = vmatpush1.msra.mxu0 0.0
  %7449 = vmatprep.subr.mxu0 0.0
  %7450 = vmatpush1.msra.mxu0 0.0
  %7451 = vmatprep.subr.mxu0 0.0
  %7452 = vmatpush1.msra.mxu0 0.0
  %7453 = vmatprep.subr.mxu0 0.0
  %7454 = vmatpush1.msra.mxu0 0.0
  %7455 = vmatprep.subr.mxu0 0.0
  %7456 = vmatpush1.msra.mxu0 0.0
  %7457 = vmatprep.subr.mxu0 0.0
  %7458 = vmatpush1.msra.mxu0 0.0
  %7459 = vmatprep.subr.mxu0 0.0
  %7460 = vmatpush1.msra.mxu0 0.0
  %7461 = vmatprep.subr.mxu0 0.0
  %7462 = vmatpush1.msra.mxu0 0.0
  %7463 = vmatprep.subr.mxu0 0.0
  %7464 = vmatpush1.msra.mxu0 0.0
  %7465 = vmatprep.subr.mxu0 0.0
  %7466 = vmatpush1.msra.mxu0 0.0
  %7467 = vmatprep.subr.mxu0 0.0
  %7468 = vmatpush1.msra.mxu0 0.0
  %7469 = vmatprep.subr.mxu0 0.0
  %7470 = vmatpush1.msra.mxu0 0.0
  %7471 = vmatprep.subr.mxu0 0.0
  %7472 = vmatpush1.msra.mxu0 0.0
  %7473 = vmatprep.subr.mxu0 0.0
  %7474 = vmatpush1.msra.mxu0 0.0
  %7475 = vmatprep.subr.mxu0 0.0
  %7476 = vmatpush1.msra.mxu0 0.0
  %7477 = vmatprep.subr.mxu0 0.0
  %7478 = vmatpush1.msra.mxu0 0.0
  %7479 = vmatprep.subr.mxu0 0.0
  %7480 = vmatpush1.msra.mxu0 0.0
  %7481 = vmatprep.subr.mxu0 0.0
  %7482 = vmatpush1.msra.mxu0 0.0
  %7483 = vmatprep.subr.mxu0 0.0
  %7484 = vmatpush1.msra.mxu0 0.0
  %7485 = vmatprep.subr.mxu0 0.0
  %7486 = vmatpush1.msra.mxu0 0.0
  %7487 = vmatprep.mubr.f32.mxu0 0.0
  %7488 = vmatmul.mubr.f32.gmra.mrb[0].mxu0 %v7421
  %v7489 = vpop.f32.mrb[0].mxu0
  %v7490 = vadd.f32 0.0, %v7489
  %v7491 = vpop.f32.mrb[0].mxu0
  %7492 = vdwg.mxu0
  %v7493 = vadd.f32 %v7372, %v7490
  %v7494 = vmul.f32 %v7493, %v6430
  %v7495 = vtanh.pop %v7494
  %v7496 = vmul.f32 %v7495, %v6430
  %v7497 = vadd.f32 %v7496, %v6431
  %v7498 = vmul.f32 %v7497, %v7252
  %7500 = vrot.lane.b32.xlu0 %v7497, 64
  %v7501 = vpop.permute.xlu0 %7500
  %v7503 = vmul.f32 %v7497, %v7501
  %7505 = vrot.lane.b32.xlu0 %v7503, 32
  %v7506 = vpop.permute.xlu0 %7505
  %v7508 = vadd.f32 %v7498, %v7506
  %v7509 = vtanh.pop %v7508
  %7511 = vrot.lane.b32.xlu0 %v7509, 64
  %v7512 = vpop.permute.xlu0 %7511
  %v7514 = vmul.f32 %v7497, %v7512
  %v7517 = vunpack.c.l.s4 1983009808
  %v7518 = vunpack.c.0.s8 %v7517
  %v7519 = vlaneseq
  %v7520 = vshrl.u32 %v7519, 7
  %v7521 = vsub.s32 %v7518, %v7520
  %v7522 = vrot.slane %v7514, %v7521
  %7523 = vrot.lane.b32.xlu0 %v7522, 32
  %v7524 = vpop.permute.xlu0 %7523
  %v7525 = vsel %vm858, %v7524, 0
  %7527 = vmatprep.subr.mxu0 0.0
  %7528 = vmatpush1.msra.mxu0 %v7407
  %7529 = vmatprep.subr.mxu0 0.0
  %7530 = vmatpush1.msra.mxu0 %v7408
  %7531 = vmatprep.subr.mxu0 0.0
  %7532 = vmatpush1.msra.mxu0 %v7409
  %7533 = vmatprep.subr.mxu0 0.0
  %7534 = vmatpush1.msra.mxu0 %v7410
  %7535 = vmatprep.subr.mxu0 0.0
  %7536 = vmatpush1.msra.mxu0 0.0
  %7537 = vmatprep.subr.mxu0 0.0
  %7538 = vmatpush1.msra.mxu0 0.0
  %7539 = vmatprep.subr.mxu0 0.0
  %7540 = vmatpush1.msra.mxu0 0.0
  %7541 = vmatprep.subr.mxu0 0.0
  %7542 = vmatpush1.msra.mxu0 0.0
  %7543 = vmatprep.subr.mxu0 0.0
  %7544 = vmatpush1.msra.mxu0 0.0
  %7545 = vmatprep.subr.mxu0 0.0
  %7546 = vmatpush1.msra.mxu0 0.0
  %7547 = vmatprep.subr.mxu0 0.0
  %7548 = vmatpush1.msra.mxu0 0.0
  %7549 = vmatprep.subr.mxu0 0.0
  %7550 = vmatpush1.msra.mxu0 0.0
  %7551 = vmatprep.subr.mxu0 0.0
  %7552 = vmatpush1.msra.mxu0 0.0
  %7553 = vmatprep.subr.mxu0 0.0
  %7554 = vmatpush1.msra.mxu0 0.0
  %7555 = vmatprep.subr.mxu0 0.0
  %7556 = vmatpush1.msra.mxu0 0.0
  %7557 = vmatprep.subr.mxu0 0.0
  %7558 = vmatpush1.msra.mxu0 0.0
  %7559 = vmatprep.subr.mxu0 0.0
  %7560 = vmatpush1.msra.mxu0 0.0
  %7561 = vmatprep.subr.mxu0 0.0
  %7562 = vmatpush1.msra.mxu0 0.0
  %7563 = vmatprep.subr.mxu0 0.0
  %7564 = vmatpush1.msra.mxu0 0.0
  %7565 = vmatprep.subr.mxu0 0.0
  %7566 = vmatpush1.msra.mxu0 0.0
  %7567 = vmatprep.subr.mxu0 0.0
  %7568 = vmatpush1.msra.mxu0 0.0
  %7569 = vmatprep.subr.mxu0 0.0
  %7570 = vmatpush1.msra.mxu0 0.0
  %7571 = vmatprep.subr.mxu0 0.0
  %7572 = vmatpush1.msra.mxu0 0.0
  %7573 = vmatprep.subr.mxu0 0.0
  %7574 = vmatpush1.msra.mxu0 0.0
  %7575 = vmatprep.subr.mxu0 0.0
  %7576 = vmatpush1.msra.mxu0 0.0
  %7577 = vmatprep.subr.mxu0 0.0
  %7578 = vmatpush1.msra.mxu0 0.0
  %7579 = vmatprep.subr.mxu0 0.0
  %7580 = vmatpush1.msra.mxu0 0.0
  %7581 = vmatprep.subr.mxu0 0.0
  %7582 = vmatpush1.msra.mxu0 0.0
  %7583 = vmatprep.subr.mxu0 0.0
  %7584 = vmatpush1.msra.mxu0 0.0
  %7585 = vmatprep.subr.mxu0 0.0
  %7586 = vmatpush1.msra.mxu0 0.0
  %7587 = vmatprep.subr.mxu0 0.0
  %7588 = vmatpush1.msra.mxu0 0.0
  %7589 = vmatprep.subr.mxu0 0.0
  %7590 = vmatpush1.msra.mxu0 0.0
  %7591 = vmatprep.mubr.f32.mxu0 0.0
  %7592 = vmatmul.mubr.f32.gmra.mrb[0].mxu0 %v7525
  %v7593 = vpop.f32.mrb[0].mxu0
  %v7594 = vadd.f32 0.0, %v7593
  %v7595 = vpop.f32.mrb[0].mxu0
  %7596 = vdwg.mxu0
  %v7597 = vadd.f32 %v7380, %v7594
  %v7598 = vmul.f32 %v7597, %v6430
  %v7599 = vtanh.pop %v7598
  %v7600 = vmul.f32 %v7599, %v6430
  %v7601 = vadd.f32 %v7600, %v6431
  %v7602 = vmul.f32 %v7601, %v7508
  %7604 = vrot.lane.b32.xlu0 %v7601, 64
  %v7605 = vpop.permute.xlu0 %7604
  %v7607 = vmul.f32 %v7601, %v7605
  %7609 = vrot.lane.b32.xlu0 %v7607, 32
  %v7610 = vpop.permute.xlu0 %7609
  %v7612 = vadd.f32 %v7602, %v7610
  %v7613 = vtanh.pop %v7612
  %7615 = vrot.lane.b32.xlu0 %v7613, 64
  %v7616 = vpop.permute.xlu0 %7615
  %v7618 = vmul.f32 %v7601, %v7616
  %v7621 = vunpack.c.l.s4 1983009808
  %v7622 = vunpack.c.0.s8 %v7621
  %v7623 = vlaneseq
  %v7624 = vshrl.u32 %v7623, 7
  %v7625 = vsub.s32 %v7622, %v7624
  %v7626 = vrot.slane %v7618, %v7625
  %7627 = vrot.lane.b32.xlu0 %v7626, 32
  %v7628 = vpop.permute.xlu0 %7627
  %v7629 = vsel %vm858, %v7628, 0
  %7631 = vmatprep.subr.mxu0 0.0
  %7632 = vmatpush1.msra.mxu0 %v7407
  %7633 = vmatprep.subr.mxu0 0.0
  %7634 = vmatpush1.msra.mxu0 %v7408
  %7635 = vmatprep.subr.mxu0 0.0
  %7636 = vmatpush1.msra.mxu0 %v7409
  %7637 = vmatprep.subr.mxu0 0.0
  %7638 = vmatpush1.msra.mxu0 %v7410
  %7639 = vmatprep.subr.mxu0 0.0
  %7640 = vmatpush1.msra.mxu0 0.0
  %7641 = vmatprep.subr.mxu0 0.0
  %7642 = vmatpush1.msra.mxu0 0.0
  %7643 = vmatprep.subr.mxu0 0.0
  %7644 = vmatpush1.msra.mxu0 0.0
  %7645 = vmatprep.subr.mxu0 0.0
  %7646 = vmatpush1.msra.mxu0 0.0
  %7647 = vmatprep.subr.mxu0 0.0
  %7648 = vmatpush1.msra.mxu0 0.0
  %7649 = vmatprep.subr.mxu0 0.0
  %7650 = vmatpush1.msra.mxu0 0.0
  %7651 = vmatprep.subr.mxu0 0.0
  %7652 = vmatpush1.msra.mxu0 0.0
  %7653 = vmatprep.subr.mxu0 0.0
  %7654 = vmatpush1.msra.mxu0 0.0
  %7655 = vmatprep.subr.mxu0 0.0
  %7656 = vmatpush1.msra.mxu0 0.0
  %7657 = vmatprep.subr.mxu0 0.0
  %7658 = vmatpush1.msra.mxu0 0.0
  %7659 = vmatprep.subr.mxu0 0.0
  %7660 = vmatpush1.msra.mxu0 0.0
  %7661 = vmatprep.subr.mxu0 0.0
  %7662 = vmatpush1.msra.mxu0 0.0
  %7663 = vmatprep.subr.mxu0 0.0
  %7664 = vmatpush1.msra.mxu0 0.0
  %7665 = vmatprep.subr.mxu0 0.0
  %7666 = vmatpush1.msra.mxu0 0.0
  %7667 = vmatprep.subr.mxu0 0.0
  %7668 = vmatpush1.msra.mxu0 0.0
  %7669 = vmatprep.subr.mxu0 0.0
  %7670 = vmatpush1.msra.mxu0 0.0
  %7671 = vmatprep.subr.mxu0 0.0
  %7672 = vmatpush1.msra.mxu0 0.0
  %7673 = vmatprep.subr.mxu0 0.0
  %7674 = vmatpush1.msra.mxu0 0.0
  %7675 = vmatprep.subr.mxu0 0.0
  %7676 = vmatpush1.msra.mxu0 0.0
  %7677 = vmatprep.subr.mxu0 0.0
  %7678 = vmatpush1.msra.mxu0 0.0
  %7679 = vmatprep.subr.mxu0 0.0
  %7680 = vmatpush1.msra.mxu0 0.0
  %7681 = vmatprep.subr.mxu0 0.0
  %7682 = vmatpush1.msra.mxu0 0.0
  %7683 = vmatprep.subr.mxu0 0.0
  %7684 = vmatpush1.msra.mxu0 0.0
  %7685 = vmatprep.subr.mxu0 0.0
  %7686 = vmatpush1.msra.mxu0 0.0
  %7687 = vmatprep.subr.mxu0 0.0
  %7688 = vmatpush1.msra.mxu0 0.0
  %7689 = vmatprep.subr.mxu0 0.0
  %7690 = vmatpush1.msra.mxu0 0.0
  %7691 = vmatprep.subr.mxu0 0.0
  %7692 = vmatpush1.msra.mxu0 0.0
  %7693 = vmatprep.subr.mxu0 0.0
  %7694 = vmatpush1.msra.mxu0 0.0
  %7695 = vmatprep.mubr.f32.mxu0 0.0
  %7696 = vmatmul.mubr.f32.gmra.mrb[0].mxu0 %v7629
  %v7697 = vpop.f32.mrb[0].mxu0
  %v7698 = vadd.f32 0.0, %v7697
  %v7699 = vpop.f32.mrb[0].mxu0
  %7700 = vdwg.mxu0
  %v7701 = vadd.f32 %v7379, %v7698
  %v7702 = vmul.f32 %v7701, %v6430
  %v7703 = vtanh.pop %v7702
  %v7704 = vmul.f32 %v7703, %v6430
  %v7705 = vadd.f32 %v7704, %v6431
  %v7706 = vmul.f32 %v7705, %v7612
  %7708 = vrot.lane.b32.xlu0 %v7705, 64
  %v7709 = vpop.permute.xlu0 %7708
  %v7711 = vmul.f32 %v7705, %v7709
  %7713 = vrot.lane.b32.xlu0 %v7711, 32
  %v7714 = vpop.permute.xlu0 %7713
  %v7716 = vadd.f32 %v7706, %v7714
  %v7717 = vtanh.pop %v7716
  %7719 = vrot.lane.b32.xlu0 %v7717, 64
  %v7720 = vpop.permute.xlu0 %7719
  %v7722 = vmul.f32 %v7705, %v7720
  %v7725 = vunpack.c.l.s4 1983009808
  %v7726 = vunpack.c.0.s8 %v7725
  %v7727 = vlaneseq
  %v7728 = vshrl.u32 %v7727, 7
  %v7729 = vsub.s32 %v7726, %v7728
  %v7730 = vrot.slane %v7722, %v7729
  %7731 = vrot.lane.b32.xlu0 %v7730, 32
  %v7732 = vpop.permute.xlu0 %7731
  %v7733 = vsel %vm858, %v7732, 0
  %7735 = vmatprep.subr.mxu0 0.0
  %7736 = vmatpush1.msra.mxu0 %v7407
  %7737 = vmatprep.subr.mxu0 0.0
  %7738 = vmatpush1.msra.mxu0 %v7408
  %7739 = vmatprep.subr.mxu0 0.0
  %7740 = vmatpush1.msra.mxu0 %v7409
  %7741 = vmatprep.subr.mxu0 0.0
  %7742 = vmatpush1.msra.mxu0 %v7410
  %7743 = vmatprep.subr.mxu0 0.0
  %7744 = vmatpush1.msra.mxu0 0.0
  %7745 = vmatprep.subr.mxu0 0.0
  %7746 = vmatpush1.msra.mxu0 0.0
  %7747 = vmatprep.subr.mxu0 0.0
  %7748 = vmatpush1.msra.mxu0 0.0
  %7749 = vmatprep.subr.mxu0 0.0
  %7750 = vmatpush1.msra.mxu0 0.0
  %7751 = vmatprep.subr.mxu0 0.0
  %7752 = vmatpush1.msra.mxu0 0.0
  %7753 = vmatprep.subr.mxu0 0.0
  %7754 = vmatpush1.msra.mxu0 0.0
  %7755 = vmatprep.subr.mxu0 0.0
  %7756 = vmatpush1.msra.mxu0 0.0
  %7757 = vmatprep.subr.mxu0 0.0
  %7758 = vmatpush1.msra.mxu0 0.0
  %7759 = vmatprep.subr.mxu0 0.0
  %7760 = vmatpush1.msra.mxu0 0.0
  %7761 = vmatprep.subr.mxu0 0.0
  %7762 = vmatpush1.msra.mxu0 0.0
  %7763 = vmatprep.subr.mxu0 0.0
  %7764 = vmatpush1.msra.mxu0 0.0
  %7765 = vmatprep.subr.mxu0 0.0
  %7766 = vmatpush1.msra.mxu0 0.0
  %7767 = vmatprep.subr.mxu0 0.0
  %7768 = vmatpush1.msra.mxu0 0.0
  %7769 = vmatprep.subr.mxu0 0.0
  %7770 = vmatpush1.msra.mxu0 0.0
  %7771 = vmatprep.subr.mxu0 0.0
  %7772 = vmatpush1.msra.mxu0 0.0
  %7773 = vmatprep.subr.mxu0 0.0
  %7774 = vmatpush1.msra.mxu0 0.0
  %7775 = vmatprep.subr.mxu0 0.0
  %7776 = vmatpush1.msra.mxu0 0.0
  %7777 = vmatprep.subr.mxu0 0.0
  %7778 = vmatpush1.msra.mxu0 0.0
  %7779 = vmatprep.subr.mxu0 0.0
  %7780 = vmatpush1.msra.mxu0 0.0
  %7781 = vmatprep.subr.mxu0 0.0
  %7782 = vmatpush1.msra.mxu0 0.0
  %7783 = vmatprep.subr.mxu0 0.0
  %7784 = vmatpush1.msra.mxu0 0.0
  %7785 = vmatprep.subr.mxu0 0.0
  %7786 = vmatpush1.msra.mxu0 0.0
  %7787 = vmatprep.subr.mxu0 0.0
  %7788 = vmatpush1.msra.mxu0 0.0
  %7789 = vmatprep.subr.mxu0 0.0
  %7790 = vmatpush1.msra.mxu0 0.0
  %7791 = vmatprep.subr.mxu0 0.0
  %7792 = vmatpush1.msra.mxu0 0.0
  %7793 = vmatprep.subr.mxu0 0.0
  %7794 = vmatpush1.msra.mxu0 0.0
  %7795 = vmatprep.subr.mxu0 0.0
  %7796 = vmatpush1.msra.mxu0 0.0
  %7797 = vmatprep.subr.mxu0 0.0
  %7798 = vmatpush1.msra.mxu0 0.0
  %7799 = vmatprep.mubr.f32.mxu0 0.0
  %7800 = vmatmul.mubr.f32.gmra.mrb[0].mxu0 %v7733
  %v7801 = vpop.f32.mrb[0].mxu0
  %v7802 = vadd.f32 0.0, %v7801
  %v7803 = vpop.f32.mrb[0].mxu0
  %7804 = vdwg.mxu0
  %v7805 = vadd.f32 %v7381, %v7802
  %v7806 = vmul.f32 %v7805, %v6430
  %v7807 = vtanh.pop %v7806
  %v7808 = vmul.f32 %v7807, %v6430
  %v7809 = vadd.f32 %v7808, %v6431
  %v7810 = vmul.f32 %v7809, %v7716
  %7812 = vrot.lane.b32.xlu0 %v7809, 64
  %v7813 = vpop.permute.xlu0 %7812
  %v7815 = vmul.f32 %v7809, %v7813
  %7817 = vrot.lane.b32.xlu0 %v7815, 32
  %v7818 = vpop.permute.xlu0 %7817
  %v7820 = vadd.f32 %v7810, %v7818
  %v7821 = vtanh.pop %v7820
  %7823 = vrot.lane.b32.xlu0 %v7821, 64
  %v7824 = vpop.permute.xlu0 %7823
  %v7826 = vmul.f32 %v7809, %v7824
  %v7829 = vunpack.c.l.s4 1983009808
  %v7830 = vunpack.c.0.s8 %v7829
  %v7831 = vlaneseq
  %v7832 = vshrl.u32 %v7831, 7
  %v7833 = vsub.s32 %v7830, %v7832
  %v7834 = vrot.slane %v7826, %v7833
  %7835 = vrot.lane.b32.xlu0 %v7834, 32
  %v7836 = vpop.permute.xlu0 %7835
  %v7837 = vsel %vm858, %v7836, 0
  %7839 = vmatprep.subr.mxu0 0.0
  %7840 = vmatpush1.msra.mxu0 %v7407
  %7841 = vmatprep.subr.mxu0 0.0
  %7842 = vmatpush1.msra.mxu0 %v7408
  %7843 = vmatprep.subr.mxu0 0.0
  %7844 = vmatpush1.msra.mxu0 %v7409
  %7845 = vmatprep.subr.mxu0 0.0
  %7846 = vmatpush1.msra.mxu0 %v7410
  %7847 = vmatprep.subr.mxu0 0.0
  %7848 = vmatpush1.msra.mxu0 0.0
  %7849 = vmatprep.subr.mxu0 0.0
  %7850 = vmatpush1.msra.mxu0 0.0
  %7851 = vmatprep.subr.mxu0 0.0
  %7852 = vmatpush1.msra.mxu0 0.0
  %7853 = vmatprep.subr.mxu0 0.0
  %7854 = vmatpush1.msra.mxu0 0.0
  %7855 = vmatprep.subr.mxu0 0.0
  %7856 = vmatpush1.msra.mxu0 0.0
  %7857 = vmatprep.subr.mxu0 0.0
  %7858 = vmatpush1.msra.mxu0 0.0
  %7859 = vmatprep.subr.mxu0 0.0
  %7860 = vmatpush1.msra.mxu0 0.0
  %7861 = vmatprep.subr.mxu0 0.0
  %7862 = vmatpush1.msra.mxu0 0.0
  %7863 = vmatprep.subr.mxu0 0.0
  %7864 = vmatpush1.msra.mxu0 0.0
  %7865 = vmatprep.subr.mxu0 0.0
  %7866 = vmatpush1.msra.mxu0 0.0
  %7867 = vmatprep.subr.mxu0 0.0
  %7868 = vmatpush1.msra.mxu0 0.0
  %7869 = vmatprep.subr.mxu0 0.0
  %7870 = vmatpush1.msra.mxu0 0.0
  %7871 = vmatprep.subr.mxu0 0.0
  %7872 = vmatpush1.msra.mxu0 0.0
  %7873 = vmatprep.subr.mxu0 0.0
  %7874 = vmatpush1.msra.mxu0 0.0
  %7875 = vmatprep.subr.mxu0 0.0
  %7876 = vmatpush1.msra.mxu0 0.0
  %7877 = vmatprep.subr.mxu0 0.0
  %7878 = vmatpush1.msra.mxu0 0.0
  %7879 = vmatprep.subr.mxu0 0.0
  %7880 = vmatpush1.msra.mxu0 0.0
  %7881 = vmatprep.subr.mxu0 0.0
  %7882 = vmatpush1.msra.mxu0 0.0
  %7883 = vmatprep.subr.mxu0 0.0
  %7884 = vmatpush1.msra.mxu0 0.0
  %7885 = vmatprep.subr.mxu0 0.0
  %7886 = vmatpush1.msra.mxu0 0.0
  %7887 = vmatprep.subr.mxu0 0.0
  %7888 = vmatpush1.msra.mxu0 0.0
  %7889 = vmatprep.subr.mxu0 0.0
  %7890 = vmatpush1.msra.mxu0 0.0
  %7891 = vmatprep.subr.mxu0 0.0
  %7892 = vmatpush1.msra.mxu0 0.0
  %7893 = vmatprep.subr.mxu0 0.0
  %7894 = vmatpush1.msra.mxu0 0.0
  %7895 = vmatprep.subr.mxu0 0.0
  %7896 = vmatpush1.msra.mxu0 0.0
  %7897 = vmatprep.subr.mxu0 0.0
  %7898 = vmatpush1.msra.mxu0 0.0
  %7899 = vmatprep.subr.mxu0 0.0
  %7900 = vmatpush1.msra.mxu0 0.0
  %7901 = vmatprep.subr.mxu0 0.0
  %7902 = vmatpush1.msra.mxu0 0.0
  %7903 = vmatprep.mubr.f32.mxu0 0.0
  %7904 = vmatmul.mubr.f32.gmra.mrb[0].mxu0 %v7837
  %v7905 = vpop.f32.mrb[0].mxu0
  %v7906 = vadd.f32 0.0, %v7905
  %v7907 = vpop.f32.mrb[0].mxu0
  %7908 = vdwg.mxu0
  %v7909 = vadd.f32 %v7389, %v7906
  %v7910 = vmul.f32 %v7909, %v6430
  %v7911 = vtanh.pop %v7910
  %v7912 = vmul.f32 %v7911, %v6430
  %v7913 = vadd.f32 %v7912, %v6431
  %v7914 = vmul.f32 %v7913, %v7820
  %7916 = vrot.lane.b32.xlu0 %v7913, 64
  %v7917 = vpop.permute.xlu0 %7916
  %v7919 = vmul.f32 %v7913, %v7917
  %7921 = vrot.lane.b32.xlu0 %v7919, 32
  %v7922 = vpop.permute.xlu0 %7921
  %v7924 = vadd.f32 %v7914, %v7922
  %v7925 = vtanh.pop %v7924
  %7927 = vrot.lane.b32.xlu0 %v7925, 64
  %v7928 = vpop.permute.xlu0 %7927
  %v7930 = vmul.f32 %v7913, %v7928
  %v7933 = vunpack.c.l.s4 1983009808
  %v7934 = vunpack.c.0.s8 %v7933
  %v7935 = vlaneseq
  %v7936 = vshrl.u32 %v7935, 7
  %v7937 = vsub.s32 %v7934, %v7936
  %v7938 = vrot.slane %v7930, %v7937
  %7939 = vrot.lane.b32.xlu0 %v7938, 32
  %v7940 = vpop.permute.xlu0 %7939
  %v7941 = vsel %vm858, %v7940, 0
  %7943 = vmatprep.subr.mxu0 0.0
  %7944 = vmatpush1.msra.mxu0 %v7407
  %7945 = vmatprep.subr.mxu0 0.0
  %7946 = vmatpush1.msra.mxu0 %v7408
  %7947 = vmatprep.subr.mxu0 0.0
  %7948 = vmatpush1.msra.mxu0 %v7409
  %7949 = vmatprep.subr.mxu0 0.0
  %7950 = vmatpush1.msra.mxu0 %v7410
  %7951 = vmatprep.subr.mxu0 0.0
  %7952 = vmatpush1.msra.mxu0 0.0
  %7953 = vmatprep.subr.mxu0 0.0
  %7954 = vmatpush1.msra.mxu0 0.0
  %7955 = vmatprep.subr.mxu0 0.0
  %7956 = vmatpush1.msra.mxu0 0.0
  %7957 = vmatprep.subr.mxu0 0.0
  %7958 = vmatpush1.msra.mxu0 0.0
  %7959 = vmatprep.subr.mxu0 0.0
  %7960 = vmatpush1.msra.mxu0 0.0
  %7961 = vmatprep.subr.mxu0 0.0
  %7962 = vmatpush1.msra.mxu0 0.0
  %7963 = vmatprep.subr.mxu0 0.0
  %7964 = vmatpush1.msra.mxu0 0.0
  %7965 = vmatprep.subr.mxu0 0.0
  %7966 = vmatpush1.msra.mxu0 0.0
  %7967 = vmatprep.subr.mxu0 0.0
  %7968 = vmatpush1.msra.mxu0 0.0
  %7969 = vmatprep.subr.mxu0 0.0
  %7970 = vmatpush1.msra.mxu0 0.0
  %7971 = vmatprep.subr.mxu0 0.0
  %7972 = vmatpush1.msra.mxu0 0.0
  %7973 = vmatprep.subr.mxu0 0.0
  %7974 = vmatpush1.msra.mxu0 0.0
  %7975 = vmatprep.subr.mxu0 0.0
  %7976 = vmatpush1.msra.mxu0 0.0
  %7977 = vmatprep.subr.mxu0 0.0
  %7978 = vmatpush1.msra.mxu0 0.0
  %7979 = vmatprep.subr.mxu0 0.0
  %7980 = vmatpush1.msra.mxu0 0.0
  %7981 = vmatprep.subr.mxu0 0.0
  %7982 = vmatpush1.msra.mxu0 0.0
  %7983 = vmatprep.subr.mxu0 0.0
  %7984 = vmatpush1.msra.mxu0 0.0
  %7985 = vmatprep.subr.mxu0 0.0
  %7986 = vmatpush1.msra.mxu0 0.0
  %7987 = vmatprep.subr.mxu0 0.0
  %7988 = vmatpush1.msra.mxu0 0.0
  %7989 = vmatprep.subr.mxu0 0.0
  %7990 = vmatpush1.msra.mxu0 0.0
  %7991 = vmatprep.subr.mxu0 0.0
  %7992 = vmatpush1.msra.mxu0 0.0
  %7993 = vmatprep.subr.mxu0 0.0
  %7994 = vmatpush1.msra.mxu0 0.0
  %7995 = vmatprep.subr.mxu0 0.0
  %7996 = vmatpush1.msra.mxu0 0.0
  %7997 = vmatprep.subr.mxu0 0.0
  %7998 = vmatpush1.msra.mxu0 0.0
  %7999 = vmatprep.subr.mxu0 0.0
  %8000 = vmatpush1.msra.mxu0 0.0
  %8001 = vmatprep.subr.mxu0 0.0
  %8002 = vmatpush1.msra.mxu0 0.0
  %8003 = vmatprep.subr.mxu0 0.0
  %8004 = vmatpush1.msra.mxu0 0.0
  %8005 = vmatprep.subr.mxu0 0.0
  %8006 = vmatpush1.msra.mxu0 0.0
  %8007 = vmatprep.mubr.f32.mxu0 0.0
  %8008 = vmatmul.mubr.f32.gmra.mrb[0].mxu0 %v7941
  %v8009 = vpop.f32.mrb[0].mxu0
  %v8010 = vadd.f32 0.0, %v8009
  %v8011 = vpop.f32.mrb[0].mxu0
  %8012 = vdwg.mxu0
  %v8013 = vadd.f32 %v7397, %v8010
  %v8014 = vmul.f32 %v8013, %v6430
  %v8015 = vtanh.pop %v8014
  %v8016 = vmul.f32 %v8015, %v6430
  %v8017 = vadd.f32 %v8016, %v6431
  %v8018 = vmul.f32 %v8017, %v7924
  %8020 = vrot.lane.b32.xlu0 %v8017, 64
  %v8021 = vpop.permute.xlu0 %8020
  %v8023 = vmul.f32 %v8017, %v8021
  %8025 = vrot.lane.b32.xlu0 %v8023, 32
  %v8026 = vpop.permute.xlu0 %8025
  %v8028 = vadd.f32 %v8018, %v8026
  %v8029 = vtanh.pop %v8028
  %8031 = vrot.lane.b32.xlu0 %v8029, 64
  %v8032 = vpop.permute.xlu0 %8031
  %v8034 = vmul.f32 %v8017, %v8032
  %v8037 = vunpack.c.l.s4 1983009808
  %v8038 = vunpack.c.0.s8 %v8037
  %v8039 = vlaneseq
  %v8040 = vshrl.u32 %v8039, 7
  %v8041 = vsub.s32 %v8038, %v8040
  %v8042 = vrot.slane %v8034, %v8041
  %8043 = vrot.lane.b32.xlu0 %v8042, 32
  %v8044 = vpop.permute.xlu0 %8043
  %v8045 = vsel %vm858, %v8044, 0
  %8047 = vmatprep.subr.mxu0 0.0
  %8048 = vmatpush1.msra.mxu0 %v7407
  %8049 = vmatprep.subr.mxu0 0.0
  %8050 = vmatpush1.msra.mxu0 %v7408
  %8051 = vmatprep.subr.mxu0 0.0
  %8052 = vmatpush1.msra.mxu0 %v7409
  %8053 = vmatprep.subr.mxu0 0.0
  %8054 = vmatpush1.msra.mxu0 %v7410
  %8055 = vmatprep.subr.mxu0 0.0
  %8056 = vmatpush1.msra.mxu0 0.0
  %8057 = vmatprep.subr.mxu0 0.0
  %8058 = vmatpush1.msra.mxu0 0.0
  %8059 = vmatprep.subr.mxu0 0.0
  %8060 = vmatpush1.msra.mxu0 0.0
  %8061 = vmatprep.subr.mxu0 0.0
  %8062 = vmatpush1.msra.mxu0 0.0
  %8063 = vmatprep.subr.mxu0 0.0
  %8064 = vmatpush1.msra.mxu0 0.0
  %8065 = vmatprep.subr.mxu0 0.0
  %8066 = vmatpush1.msra.mxu0 0.0
  %8067 = vmatprep.subr.mxu0 0.0
  %8068 = vmatpush1.msra.mxu0 0.0
  %8069 = vmatprep.subr.mxu0 0.0
  %8070 = vmatpush1.msra.mxu0 0.0
  %8071 = vmatprep.subr.mxu0 0.0
  %8072 = vmatpush1.msra.mxu0 0.0
  %8073 = vmatprep.subr.mxu0 0.0
  %8074 = vmatpush1.msra.mxu0 0.0
  %8075 = vmatprep.subr.mxu0 0.0
  %8076 = vmatpush1.msra.mxu0 0.0
  %8077 = vmatprep.subr.mxu0 0.0
  %8078 = vmatpush1.msra.mxu0 0.0
  %8079 = vmatprep.subr.mxu0 0.0
  %8080 = vmatpush1.msra.mxu0 0.0
  %8081 = vmatprep.subr.mxu0 0.0
  %8082 = vmatpush1.msra.mxu0 0.0
  %8083 = vmatprep.subr.mxu0 0.0
  %8084 = vmatpush1.msra.mxu0 0.0
  %8085 = vmatprep.subr.mxu0 0.0
  %8086 = vmatpush1.msra.mxu0 0.0
  %8087 = vmatprep.subr.mxu0 0.0
  %8088 = vmatpush1.msra.mxu0 0.0
  %8089 = vmatprep.subr.mxu0 0.0
  %8090 = vmatpush1.msra.mxu0 0.0
  %8091 = vmatprep.subr.mxu0 0.0
  %8092 = vmatpush1.msra.mxu0 0.0
  %8093 = vmatprep.subr.mxu0 0.0
  %8094 = vmatpush1.msra.mxu0 0.0
  %8095 = vmatprep.subr.mxu0 0.0
  %8096 = vmatpush1.msra.mxu0 0.0
  %8097 = vmatprep.subr.mxu0 0.0
  %8098 = vmatpush1.msra.mxu0 0.0
  %8099 = vmatprep.subr.mxu0 0.0
  %8100 = vmatpush1.msra.mxu0 0.0
  %8101 = vmatprep.subr.mxu0 0.0
  %8102 = vmatpush1.msra.mxu0 0.0
  %8103 = vmatprep.subr.mxu0 0.0
  %8104 = vmatpush1.msra.mxu0 0.0
  %8105 = vmatprep.subr.mxu0 0.0
  %8106 = vmatpush1.msra.mxu0 0.0
  %8107 = vmatprep.subr.mxu0 0.0
  %8108 = vmatpush1.msra.mxu0 0.0
  %8109 = vmatprep.subr.mxu0 0.0
  %8110 = vmatpush1.msra.mxu0 0.0
  %8111 = vmatprep.mubr.f32.mxu0 0.0
  %8112 = vmatmul.mubr.f32.gmra.mrb[0].mxu0 %v8045
  %v8113 = vpop.f32.mrb[0].mxu0
  %v8114 = vadd.f32 0.0, %v8113
  %v8115 = vpop.f32.mrb[0].mxu0
  %8116 = vdwg.mxu0
  %v8117 = vadd.f32 %v7396, %v8114
  %v8118 = vmul.f32 %v8117, %v6430
  %v8119 = vtanh.pop %v8118
  %v8120 = vmul.f32 %v8119, %v6430
  %v8121 = vadd.f32 %v8120, %v6431
  %v8122 = vmul.f32 %v8121, %v8028
  %8124 = vrot.lane.b32.xlu0 %v8121, 64
  %v8125 = vpop.permute.xlu0 %8124
  %v8127 = vmul.f32 %v8121, %v8125
  %8129 = vrot.lane.b32.xlu0 %v8127, 32
  %v8130 = vpop.permute.xlu0 %8129
  %v8132 = vadd.f32 %v8122, %v8130
  %v8133 = vtanh.pop %v8132
  %8135 = vrot.lane.b32.xlu0 %v8133, 64
  %v8136 = vpop.permute.xlu0 %8135
  %v8138 = vmul.f32 %v8121, %v8136
  %v8141 = vunpack.c.l.s4 1983009808
  %v8142 = vunpack.c.0.s8 %v8141
  %v8143 = vlaneseq
  %v8144 = vshrl.u32 %v8143, 7
  %v8145 = vsub.s32 %v8142, %v8144
  %v8146 = vrot.slane %v8138, %v8145
  %8147 = vrot.lane.b32.xlu0 %v8146, 32
  %v8148 = vpop.permute.xlu0 %8147
  %v8149 = vsel %vm858, %v8148, 0
  %8151 = vmatprep.subr.mxu0 0.0
  %8152 = vmatpush1.msra.mxu0 %v7407
  %8153 = vmatprep.subr.mxu0 0.0
  %8154 = vmatpush1.msra.mxu0 %v7408
  %8155 = vmatprep.subr.mxu0 0.0
  %8156 = vmatpush1.msra.mxu0 %v7409
  %8157 = vmatprep.subr.mxu0 0.0
  %8158 = vmatpush1.msra.mxu0 %v7410
  %8159 = vmatprep.subr.mxu0 0.0
  %8160 = vmatpush1.msra.mxu0 0.0
  %8161 = vmatprep.subr.mxu0 0.0
  %8162 = vmatpush1.msra.mxu0 0.0
  %8163 = vmatprep.subr.mxu0 0.0
  %8164 = vmatpush1.msra.mxu0 0.0
  %8165 = vmatprep.subr.mxu0 0.0
  %8166 = vmatpush1.msra.mxu0 0.0
  %8167 = vmatprep.subr.mxu0 0.0
  %8168 = vmatpush1.msra.mxu0 0.0
  %8169 = vmatprep.subr.mxu0 0.0
  %8170 = vmatpush1.msra.mxu0 0.0
  %8171 = vmatprep.subr.mxu0 0.0
  %8172 = vmatpush1.msra.mxu0 0.0
  %8173 = vmatprep.subr.mxu0 0.0
  %8174 = vmatpush1.msra.mxu0 0.0
  %8175 = vmatprep.subr.mxu0 0.0
  %8176 = vmatpush1.msra.mxu0 0.0
  %8177 = vmatprep.subr.mxu0 0.0
  %8178 = vmatpush1.msra.mxu0 0.0
  %8179 = vmatprep.subr.mxu0 0.0
  %8180 = vmatpush1.msra.mxu0 0.0
  %8181 = vmatprep.subr.mxu0 0.0
  %8182 = vmatpush1.msra.mxu0 0.0
  %8183 = vmatprep.subr.mxu0 0.0
  %8184 = vmatpush1.msra.mxu0 0.0
  %8185 = vmatprep.subr.mxu0 0.0
  %8186 = vmatpush1.msra.mxu0 0.0
  %8187 = vmatprep.subr.mxu0 0.0
  %8188 = vmatpush1.msra.mxu0 0.0
  %8189 = vmatprep.subr.mxu0 0.0
  %8190 = vmatpush1.msra.mxu0 0.0
  %8191 = vmatprep.subr.mxu0 0.0
  %8192 = vmatpush1.msra.mxu0 0.0
  %8193 = vmatprep.subr.mxu0 0.0
  %8194 = vmatpush1.msra.mxu0 0.0
  %8195 = vmatprep.subr.mxu0 0.0
  %8196 = vmatpush1.msra.mxu0 0.0
  %8197 = vmatprep.subr.mxu0 0.0
  %8198 = vmatpush1.msra.mxu0 0.0
  %8199 = vmatprep.subr.mxu0 0.0
  %8200 = vmatpush1.msra.mxu0 0.0
  %8201 = vmatprep.subr.mxu0 0.0
  %8202 = vmatpush1.msra.mxu0 0.0
  %8203 = vmatprep.subr.mxu0 0.0
  %8204 = vmatpush1.msra.mxu0 0.0
  %8205 = vmatprep.subr.mxu0 0.0
  %8206 = vmatpush1.msra.mxu0 0.0
  %8207 = vmatprep.subr.mxu0 0.0
  %8208 = vmatpush1.msra.mxu0 0.0
  %8209 = vmatprep.subr.mxu0 0.0
  %8210 = vmatpush1.msra.mxu0 0.0
  %8211 = vmatprep.subr.mxu0 0.0
  %8212 = vmatpush1.msra.mxu0 0.0
  %8213 = vmatprep.subr.mxu0 0.0
  %8214 = vmatpush1.msra.mxu0 0.0
  %8215 = vmatprep.mubr.f32.mxu0 0.0
  %8216 = vmatmul.mubr.f32.gmra.mrb[0].mxu0 %v8149
  %v8217 = vpop.f32.mrb[0].mxu0
  %v8218 = vadd.f32 0.0, %v8217
  %v8219 = vpop.f32.mrb[0].mxu0
  %8220 = vdwg.mxu0
  %v8221 = vadd.f32 %v7398, %v8218
  %v8222 = vmul.f32 %v8221, %v6430
  %v8223 = vtanh.pop %v8222
  %v8224 = vmul.f32 %v8223, %v6430
  %v8225 = vadd.f32 %v8224, %v6431
  %v8226 = vmul.f32 %v8225, %v8132
  %8228 = vrot.lane.b32.xlu0 %v8225, 64
  %v8229 = vpop.permute.xlu0 %8228
  %v8231 = vmul.f32 %v8225, %v8229
  %8233 = vrot.lane.b32.xlu0 %v8231, 32
  %v8234 = vpop.permute.xlu0 %8233
  %v8236 = vadd.f32 %v8226, %v8234
  %v8237 = vtanh.pop %v8236
  %8239 = vrot.lane.b32.xlu0 %v8237, 64
  %v8240 = vpop.permute.xlu0 %8239
  %v8242 = vmul.f32 %v8225, %v8240
  %v8243 = vcombine.low %v7618, %v7618
  %v8245 = vunpack.c.l.s4 1983009808
  %v8246 = vunpack.c.0.s8 %v8245
  %v8247 = vlaneseq
  %v8248 = vshrl.u32 %v8247, 7
  %v8249 = vsub.s32 %v8246, %v8248
  %v8250 = vrot.slane %v8243, %v8249
  %v8252 = vcombine.low %v7730, %v7730
  %v8254 = vcombine.low %v7826, %v7826
  %v8256 = vunpack.c.l.s4 1983009808
  %v8257 = vunpack.c.0.s8 %v8256
  %v8258 = vlaneseq
  %v8259 = vshrl.u32 %v8258, 7
  %v8260 = vsub.s32 %v8257, %v8259
  %v8261 = vrot.slane %v8254, %v8260
  %v8262 = vcombine.low %v8261, %v8261
  %v8264 = vcombine.low %v8034, %v8034
  %v8266 = vunpack.c.l.s4 1983009808
  %v8267 = vunpack.c.0.s8 %v8266
  %v8268 = vlaneseq
  %v8269 = vshrl.u32 %v8268, 7
  %v8270 = vsub.s32 %v8267, %v8269
  %v8271 = vrot.slane %v8264, %v8270
  %v8273 = vcombine.low %v8146, %v8146
  %v8276 = vcombine.low %v8242, %v8242
  %v8278 = vunpack.c.l.s4 1983009808
  %v8279 = vunpack.c.0.s8 %v8278
  %v8280 = vlaneseq
  %v8281 = vshrl.u32 %v8280, 7
  %v8282 = vsub.s32 %v8279, %v8281
  %v8283 = vrot.slane %v8276, %v8282
  %v8284 = vcombine.low %v8283, %v8283
  %vm8286 = vcmask 1041408
  %v8287 = vsel %vm8286, %v7514, %v8250
  %vm8288 = vcmask 1043456
  %v8289 = vsel %vm8288, %v8287, %v8252
  %v8290 = vsel %vm2809, %v8289, %v8262
  %v8291 = vsel %vm8286, %v7930, %v8271
  %v8292 = vsel %vm8288, %v8291, %v8273
  %v8293 = vsel %vm2809, %v8292, %v8284
  %v8294 = vld [vmem:[%s13] sm:$0xff]
  %v8295 = vld [vmem:[%s13 + $0x8] sm:$0xff]
  %v8296 = vld [vmem:[%s13 + $0x10] sm:$0xff]
  %v8297 = vld [vmem:[%s13 + $0x18] sm:$0xff]
  %v8298 = vld [vmem:[%s14] sm:$0x1]
  %v8300 = vlaneseq
  %v8301 = vshrl.u32 %v8300, 7
  %v8302 = vsub.s32 0, %v8301
  %v8303 = vrot.slane %v8298, %v8302
  %8307 = vrot.lane.b32.xlu0 %v8290, 32
  %v8308 = vpop.permute.xlu0 %8307
  %8309 = vrot.lane.b32.xlu0 %v8293, 32
  %v8310 = vpop.permute.xlu0 %8309
  %v8311 = vsel %vm858, %v8308, 0
  %v8313 = vsel %vm858, %v8310, 0
  %8315 = vmatprep.subr.mxu0 0.0
  %8316 = vmatpush1.msra.mxu0 %v8294
  %8317 = vmatprep.subr.mxu0 0.0
  %8318 = vmatpush1.msra.mxu0 %v8295
  %8319 = vmatprep.subr.mxu0 0.0
  %8320 = vmatpush1.msra.mxu0 %v8296
  %8321 = vmatprep.subr.mxu0 0.0
  %8322 = vmatpush1.msra.mxu0 %v8297
  %8323 = vmatprep.subr.mxu0 0.0
  %8324 = vmatpush1.msra.mxu0 0.0
  %8325 = vmatprep.subr.mxu0 0.0
  %8326 = vmatpush1.msra.mxu0 0.0
  %8327 = vmatprep.subr.mxu0 0.0
  %8328 = vmatpush1.msra.mxu0 0.0
  %8329 = vmatprep.subr.mxu0 0.0
  %8330 = vmatpush1.msra.mxu0 0.0
  %8331 = vmatprep.subr.mxu0 0.0
  %8332 = vmatpush1.msra.mxu0 0.0
  %8333 = vmatprep.subr.mxu0 0.0
  %8334 = vmatpush1.msra.mxu0 0.0
  %8335 = vmatprep.subr.mxu0 0.0
  %8336 = vmatpush1.msra.mxu0 0.0
  %8337 = vmatprep.subr.mxu0 0.0
  %8338 = vmatpush1.msra.mxu0 0.0
  %8339 = vmatprep.subr.mxu0 0.0
  %8340 = vmatpush1.msra.mxu0 0.0
  %8341 = vmatprep.subr.mxu0 0.0
  %8342 = vmatpush1.msra.mxu0 0.0
  %8343 = vmatprep.subr.mxu0 0.0
  %8344 = vmatpush1.msra.mxu0 0.0
  %8345 = vmatprep.subr.mxu0 0.0
  %8346 = vmatpush1.msra.mxu0 0.0
  %8347 = vmatprep.subr.mxu0 0.0
  %8348 = vmatpush1.msra.mxu0 0.0
  %8349 = vmatprep.subr.mxu0 0.0
  %8350 = vmatpush1.msra.mxu0 0.0
  %8351 = vmatprep.subr.mxu0 0.0
  %8352 = vmatpush1.msra.mxu0 0.0
  %8353 = vmatprep.subr.mxu0 0.0
  %8354 = vmatpush1.msra.mxu0 0.0
  %8355 = vmatprep.subr.mxu0 0.0
  %8356 = vmatpush1.msra.mxu0 0.0
  %8357 = vmatprep.subr.mxu0 0.0
  %8358 = vmatpush1.msra.mxu0 0.0
  %8359 = vmatprep.subr.mxu0 0.0
  %8360 = vmatpush1.msra.mxu0 0.0
  %8361 = vmatprep.subr.mxu0 0.0
  %8362 = vmatpush1.msra.mxu0 0.0
  %8363 = vmatprep.subr.mxu0 0.0
  %8364 = vmatpush1.msra.mxu0 0.0
  %8365 = vmatprep.subr.mxu0 0.0
  %8366 = vmatpush1.msra.mxu0 0.0
  %8367 = vmatprep.subr.mxu0 0.0
  %8368 = vmatpush1.msra.mxu0 0.0
  %8369 = vmatprep.subr.mxu0 0.0
  %8370 = vmatpush1.msra.mxu0 0.0
  %8371 = vmatprep.subr.mxu0 0.0
  %8372 = vmatpush1.msra.mxu0 0.0
  %8373 = vmatprep.subr.mxu0 0.0
  %8374 = vmatpush1.msra.mxu0 0.0
  %8375 = vmatprep.subr.mxu0 0.0
  %8376 = vmatpush1.msra.mxu0 0.0
  %8377 = vmatprep.subr.mxu0 0.0
  %8378 = vmatpush1.msra.mxu0 0.0
  %8379 = vmatprep.mubr.f32.mxu0 0.0
  %8380 = vmatmul.mubr.f32.gmra.mrb[0].mxu0 %v8311
  %v8381 = vpop.f32.mrb[0].mxu0
  %v8382 = vadd.f32 %v8303, %v8381
  %v8383 = vpop.f32.mrb[0].mxu0
  %8384 = vmatprep.mubr.f32.mxu0 0.0
  %8385 = vmatmul.mubr.f32.gmra.mrb[0].mxu0 %v8313
  %v8386 = vpop.f32.mrb[0].mxu0
  %v8387 = vadd.f32 %v8303, %v8386
  %v8388 = vpop.f32.mrb[0].mxu0
  %8389 = vdwg.mxu0
  %8390 = vst.msk [vmem:[%s15] sm:$0xff] %vm7281, %v8382
  %8391 = vst.msk [vmem:[%s15 + $0x8] sm:$0xff] %vm7281, %v8387
  // Predicated region
  $region62: #{forward.1} parent=0 // pred_check
    _
  $region63: #{forward.1} parent=0 // pred_check_branch
    %8393 = sbr.rel (0) target = $region65
  $region64: #{forward.1} parent=0 // pred_region
    _
  $region65: #{forward.1} parent=0 // pred_fallthru
    _
  // Predicated region
  $region66: #{forward.1} parent=0 // pred_check
    _
  $region67: #{forward.1} parent=0 // pred_check_branch
    %8395 = sbr.rel (0) target = $region69
  $region68: #{forward.1} parent=0 // pred_region
    _
  $region69: #{forward.1} parent=0 // pred_fallthru
    _

</llo_original>
